<compile_context>
chip_gen: v7x
topology: tpu7x:2x2x1
jax: 0.10.0
libtpu: 0.0.40
codegen_flags: <defaults>
</compile_context>

<pallas_src>
import math
from functools import partial

import jax
import jax.numpy as jnp
from jax.experimental import pallas as pl
from jax.experimental.pallas import tpu as pltpu

# ----------------------- small synthetic CLIP config -----------------------
B = 2                 # image batch
IMG_C, IMG_HW = 3, 16
PATCH = 4
V_WIDTH, V_HEADS, V_LAYERS = 64, 4, 1       # visual transformer
T_WIDTH, T_HEADS, T_LAYERS = 64, 4, 1       # text transformer (== ctx_dim)
EMBED = 64                                   # joint embedding dim
N_CLS = 4                                    # number of class names
SEQ = 16                                     # text context length
N_CTX = 4                                    # learnable context tokens
NAME_LENS = [1, 2, 3, 2]                     # synthetic tokenized name lengths
N_PATCH = (IMG_HW // PATCH) ** 2             # 16
V_SEQ = N_PATCH + 1                          # 17 (cls token + patches)
TEXT_GROUP = 2                               # prompts per text grid step (2-wide parallel axis)

MXU_DTYPE = jnp.bfloat16                     # matmul operand dtype (f32 accumulation)
ACT_DTYPE = jnp.bfloat16                     # inter-kernel activation dtype

# --------------------------- in-kernel helpers ------------------------------

def _layernorm(x, g, b, eps=1e-5):
    # x: (R, D) f32; g, b: (1, D) f32
    mu = jnp.mean(x, axis=-1, keepdims=True)
    var = jnp.mean((x - mu) ** 2, axis=-1, keepdims=True)
    return (x - mu) * jax.lax.rsqrt(var + eps) * g + b

# ------------------------------ Pallas kernels ------------------------------

def _patch_embed_kernel(patch_ref, w_ref, prm_ref, o_ref):
    """Fused patch conv + positional add + cls row + ln_pre.  One grid step / image.

    prm_ref rows: [0:NP] pos_rest, [NP] cls+pos0, [NP+1] ln_pre gamma, [NP+2] ln_pre beta.
    """
    np_rows = prm_ref.shape[0] - 3
    pos = prm_ref[0:np_rows, :]
    cls_pos = prm_ref[np_rows:np_rows + 1, :]
    g = prm_ref[np_rows + 1:np_rows + 2, :]
    b = prm_ref[np_rows + 2:np_rows + 3, :]

    pe = jnp.dot(patch_ref[...].astype(w_ref.dtype), w_ref[...],
                 preferred_element_type=jnp.float32) + pos        # (NP, D)
    x = jnp.concatenate([cls_pos, pe], axis=0)                    # (V_SEQ, D)
    # single unmasked full-block store (no sublane-offset masked stores)
    o_ref[...] = _layernorm(x, g, b).astype(o_ref.dtype)


def _resblock_kernel(x_ref, vec_ref, bqkv_ref, bfc_ref,
                     wqkv_ref, wo_ref, wfc_ref, wpj_ref, o_ref,
                     *, n_heads, n_groups, seq, causal):
    """Whole CLIP residual attention block on a (n_groups*seq, D) slab in VMEM."""
    x = x_ref[...].astype(jnp.float32)                            # (G*S, D)
    D = x.shape[-1]
    Dh = D // n_heads

    ln1_g, ln1_b = vec_ref[0:1, :], vec_ref[1:2, :]
    ln2_g, ln2_b = vec_ref[2:3, :], vec_ref[3:4, :]
    bo, bpj = vec_ref[4:5, :], vec_ref[5:6, :]

    # ----- attention branch -----
    xn = _layernorm(x, ln1_g, ln1_b).astype(wqkv_ref.dtype)       # cast once
    # One lane-dense QKV matmul; 1/sqrt(Dh) is pre-folded into q cols of wqkv/bqkv.
    qkv = jnp.dot(xn, wqkv_ref[...], preferred_element_type=jnp.float32) + bqkv_ref[...]

    if causal:
        r = jax.lax.broadcasted_iota(jnp.int32, (seq, seq), 0)
        c = jax.lax.broadcasted_iota(jnp.int32, (seq, seq), 1)
        neg = jnp.where(c > r, -1e9, 0.0).astype(jnp.float32)

    group_outs = []
    for gi in range(n_groups):                                    # static unroll (G<=2, H<=4)
        r0 = gi * seq
        heads = []
        for h in range(n_heads):
            q = qkv[r0:r0 + seq, h * Dh:(h + 1) * Dh]
            k = qkv[r0:r0 + seq, D + h * Dh:D + (h + 1) * Dh]
            v = qkv[r0:r0 + seq, 2 * D + h * Dh:2 * D + (h + 1) * Dh]
            s = jnp.dot(q, k.T, preferred_element_type=jnp.float32)
            if causal:
                s = s + neg
            s = s - jnp.max(s, axis=-1, keepdims=True)
            p = jnp.exp(s)
            p = p * pl.reciprocal(jnp.sum(p, axis=-1, keepdims=True), approx=True)
            heads.append(jnp.dot(p, v, preferred_element_type=jnp.float32))
        group_outs.append(jnp.concatenate(heads, axis=-1))        # (S, D)
    attn = group_outs[0] if n_groups == 1 else jnp.concatenate(group_outs, axis=0)

    # single lane-dense out-projection on the concatenated head outputs
    x = x + jnp.dot(attn.astype(wo_ref.dtype), wo_ref[...],
                    preferred_element_type=jnp.float32) + bo

    # ----- MLP branch (bias + QuickGELU fused as matmul epilogues) -----
    xn2 = _layernorm(x, ln2_g, ln2_b).astype(wfc_ref.dtype)       # cast once
    hdn = jnp.dot(xn2, wfc_ref[...], preferred_element_type=jnp.float32) + bfc_ref[...]
    hdn = hdn * jax.nn.sigmoid(1.702 * hdn)                       # QuickGELU
    out = jnp.dot(hdn.astype(wpj_ref.dtype), wpj_ref[...],
                  preferred_element_type=jnp.float32) + bpj

    o_ref[...] = (x + out).astype(o_ref.dtype)


def _text_head_kernel(x_ref, gb_ref, w_ref, o_ref):
    """ln_final + text_projection + L2-normalize (text features)."""
    xn = _layernorm(x_ref[...].astype(jnp.float32), gb_ref[0:1, :], gb_ref[1:2, :])
    f = jnp.dot(xn.astype(w_ref.dtype), w_ref[...], preferred_element_type=jnp.float32)
    o_ref[...] = f * jax.lax.rsqrt(jnp.sum(f * f, axis=-1, keepdims=True) + 1e-12)


def _visual_head_kernel(cls_ref, gb_ref, w_ref, txt_ref, s_ref, o_ref):
    """ln_post + visual proj + L2-normalize + exp(logit_scale) * img @ txt.T."""
    xn = _layernorm(cls_ref[...].astype(jnp.float32), gb_ref[0:1, :], gb_ref[1:2, :])
    f = jnp.dot(xn.astype(w_ref.dtype), w_ref[...], preferred_element_type=jnp.float32)
    f = f * jax.lax.rsqrt(jnp.sum(f * f, axis=-1, keepdims=True) + 1e-12)
    scale = s_ref[0, 0]                                           # scalar from SMEM
    o_ref[...] = scale * jnp.dot(f, txt_ref[...].T, preferred_element_type=jnp.float32)

# ------------------------------ kernel wrappers ------------------------------

def pl_patch_embed(patches, kp):
    Bn, NP, Cpp = patches.shape
    D = V_WIDTH
    return pl.pallas_call(
        _patch_embed_kernel,
        out_shape=jax.ShapeDtypeStruct((Bn, V_SEQ, D), ACT_DTYPE),
        grid=(Bn,),
        in_specs=[pl.BlockSpec((None, NP, Cpp), lambda b: (b, 0, 0)),
                  pl.BlockSpec((Cpp, D), lambda b: (0, 0)),
                  pl.BlockSpec((NP + 3, D), lambda b: (0, 0))],
        out_specs=pl.BlockSpec((None, V_SEQ, D), lambda b: (b, 0, 0)),
        compiler_params=pltpu.CompilerParams(dimension_semantics=("parallel",)),
    )(patches, kp["w_patch"], kp["patch_params"])


def pl_resblock(x, blk, *, n_heads, n_groups, seq, causal):
    T, GS, D = x.shape
    assert GS == n_groups * seq
    kern = partial(_resblock_kernel, n_heads=n_heads, n_groups=n_groups,
                   seq=seq, causal=causal)

    def const(shape):
        return pl.BlockSpec(shape, lambda t, _n=len(shape): (0,) * _n)

    in_specs = [
        pl.BlockSpec((None, GS, D), lambda t: (t, 0, 0)),   # x (residual stream)
        const((6, D)),                                       # packed ln1g/ln1b/ln2g/ln2b/bo/bpj
        const((1, 3 * D)),                                   # bqkv (q part pre-scaled)
        const((1, 4 * D)),                                   # bfc
        const((D, 3 * D)),                                   # wqkv (q cols pre-scaled), bf16
        const((D, D)),                                       # wo, bf16
        const((D, 4 * D)),                                   # wfc, bf16
        const((4 * D, D)),                                   # wpj, bf16
    ]
    return pl.pallas_call(
        kern,
        out_shape=jax.ShapeDtypeStruct((T, GS, D), x.dtype),
        grid=(T,),
        in_specs=in_specs,
        out_specs=pl.BlockSpec((None, GS, D), lambda t: (t, 0, 0)),
        input_output_aliases={0: 0},                         # reuse residual-stream HBM buffer
        compiler_params=pltpu.CompilerParams(dimension_semantics=("parallel",)),
    )(x, blk["vecs"], blk["bqkv"], blk["bfc"],
      blk["wqkv"], blk["wo"], blk["wfc"], blk["wpj"])


def pl_text_head(x_eot, kp):
    R, D = x_eot.shape
    E = kp["text_projection"].shape[1]
    return pl.pallas_call(
        _text_head_kernel,
        out_shape=jax.ShapeDtypeStruct((R, E), jnp.float32),
        grid=(1,),
        in_specs=[pl.BlockSpec((R, D), lambda i: (0, 0)),
                  pl.BlockSpec((2, D), lambda i: (0, 0)),
                  pl.BlockSpec((D, E), lambda i: (0, 0))],
        out_specs=pl.BlockSpec((R, E), lambda i: (0, 0)),
    )(x_eot, kp["t_head_gb"], kp["text_projection"])


def pl_visual_head_logits(cls_tokens, kp, text_features):
    Bi, D = cls_tokens.shape
    C, E = text_features.shape
    # exp of the scalar is one tiny XLA op (mirrors torch's logit_scale.exp());
    # the scalar rides to the kernel through SMEM, not a VMEM tile.
    scale = jnp.exp(kp["logit_scale"]).reshape(1, 1).astype(jnp.float32)
    return pl.pallas_call(
        _visual_head_kernel,
        out_shape=jax.ShapeDtypeStruct((Bi, C), jnp.float32),
        grid=(1,),
        in_specs=[pl.BlockSpec((Bi, D), lambda i: (0, 0)),
                  pl.BlockSpec((2, D), lambda i: (0, 0)),
                  pl.BlockSpec((D, E), lambda i: (0, 0)),
                  pl.BlockSpec((C, E), lambda i: (0, 0)),
                  pl.BlockSpec(memory_space=pltpu.MemorySpace.SMEM)],
        out_specs=pl.BlockSpec((Bi, C), lambda i: (0, 0)),
    )(cls_tokens, kp["v_head_gb"], kp["v_proj"], text_features, scale)

# ------------------------------ model (glue) --------------------------------

def encode_image_tokens(image, kp):
    # image: NCHW (B, C, H, W) -> patch rows (B, N_PATCH, C*P*P)
    Bn, C, H, W = image.shape
    gh, gw = H // PATCH, W // PATCH
    patches = image.reshape(Bn, C, gh, PATCH, gw, PATCH).transpose(0, 2, 4, 1, 3, 5)
    patches = patches.reshape(Bn, gh * gw, C * PATCH * PATCH).astype(MXU_DTYPE)
    x = pl_patch_embed(patches, kp)                               # (B, V_SEQ, D), ln_pre applied
    for blk in kp["v_blocks"]:
        x = pl_resblock(x, blk, n_heads=V_HEADS, n_groups=1, seq=V_SEQ, causal=False)
    return x                                                      # (B, V_SEQ, D) ACT_DTYPE


def encode_text(kp):
    # prompt learner: class_token_position == 'end'
    ctx = jnp.broadcast_to(kp["ctx"][None], (N_CLS, N_CTX, T_WIDTH))
    prompts = jnp.concatenate([kp["token_prefix"], ctx, kp["token_suffix"]], axis=1)
    x = (prompts + kp["t_pos"][None]).astype(ACT_DTYPE)           # (N_CLS, SEQ, D)
    # batch the prompts: TEXT_GROUP prompts per grid step
    x = x.reshape(N_CLS // TEXT_GROUP, TEXT_GROUP * SEQ, T_WIDTH)
    for blk in kp["t_blocks"]:
        x = pl_resblock(x, blk, n_heads=T_HEADS, n_groups=TEXT_GROUP, seq=SEQ, causal=True)
    x = x.reshape(N_CLS, SEQ, T_WIDTH)
    eot = jnp.argmax(kp["tokenized_prompts"], axis=-1)
    x_eot = x[jnp.arange(N_CLS), eot]                             # (N_CLS, D)
    # ln_final is row-wise, so ln_final(x)[eot] == ln_final(x[eot]).
    return pl_text_head(x_eot, kp)                                # normalized (N_CLS, E) f32


def custom_clip_forward(image, kp):
    text_features = encode_text(kp)                               # already L2-normalized
    x = encode_image_tokens(image, kp)
    cls = x[:, 0, :]                                              # (B, D)
    return pl_visual_head_logits(cls, kp, text_features)


def forward_with_cached_text(image, kp, text_features):
    # Hoisted-text variant: text features depend only on params, compute once.
    x = encode_image_tokens(image, kp)
    return pl_visual_head_logits(x[:, 0, :], kp, text_features)

# ------------------------- deterministic parameters -------------------------

def init_block(keys_it, D):
    def nrm(shape, std):
        return std * jax.random.normal(next(keys_it), shape, dtype=jnp.float32)
    return dict(
        ln1_g=jnp.ones((D,), jnp.float32), ln1_b=jnp.zeros((D,), jnp.float32),
        in_proj_w=nrm((3 * D, D), D ** -0.5),
        in_proj_b=jnp.zeros((3 * D,), jnp.float32),
        out_proj_w=nrm((D, D), D ** -0.5),
        out_proj_b=jnp.zeros((D,), jnp.float32),
        ln2_g=jnp.ones((D,), jnp.float32), ln2_b=jnp.zeros((D,), jnp.float32),
        fc_w=nrm((4 * D, D), D ** -0.5),
        fc_b=jnp.zeros((4 * D,), jnp.float32),
        proj_w=nrm((D, 4 * D), (4 * D) ** -0.5),
        proj_b=jnp.zeros((D,), jnp.float32),
    )


def init_params(key):
    """Parameters in PyTorch conventions (w: (Dout, Din))."""
    keys = iter(jax.random.split(key, 128))

    def nrm(shape, std):
        return std * jax.random.normal(next(keys), shape, dtype=jnp.float32)

    p = {}
    # visual encoder
    p["v_conv_w"] = nrm((V_WIDTH, IMG_C, PATCH, PATCH), 0.02)
    p["v_cls"] = nrm((V_WIDTH,), V_WIDTH ** -0.5)
    p["v_pos"] = nrm((V_SEQ, V_WIDTH), 0.01)
    p["v_ln_pre_g"] = jnp.ones((V_WIDTH,), jnp.float32)
    p["v_ln_pre_b"] = jnp.zeros((V_WIDTH,), jnp.float32)
    p["v_blocks"] = [init_block(keys, V_WIDTH) for _ in range(V_LAYERS)]
    p["v_ln_post_g"] = jnp.ones((V_WIDTH,), jnp.float32)
    p["v_ln_post_b"] = jnp.zeros((V_WIDTH,), jnp.float32)
    p["v_proj"] = nrm((V_WIDTH, EMBED), V_WIDTH ** -0.5)

    # text encoder
    p["t_pos"] = nrm((SEQ, T_WIDTH), 0.01)
    p["t_blocks"] = [init_block(keys, T_WIDTH) for _ in range(T_LAYERS)]
    p["t_ln_final_g"] = jnp.ones((T_WIDTH,), jnp.float32)
    p["t_ln_final_b"] = jnp.zeros((T_WIDTH,), jnp.float32)
    p["text_projection"] = nrm((T_WIDTH, EMBED), T_WIDTH ** -0.5)

    # prompt learner (generic context, class_token_position='end')
    p["ctx"] = nrm((N_CTX, T_WIDTH), 0.02)
    p["token_prefix"] = nrm((N_CLS, 1, T_WIDTH), 0.02)                 # SOS embedding
    p["token_suffix"] = nrm((N_CLS, SEQ - 1 - N_CTX, T_WIDTH), 0.02)   # class + EOS + pad

    # TODO(synk): real CLIP BPE tokenization / token_embedding of class names has
    # no Pallas/JAX equivalent; token ids are synthesized with EOT at 1+n_ctx+len.
    rows = []
    for nl in NAME_LENS:
        eot = 1 + N_CTX + nl
        row = [49406] + [400 + i for i in range(eot - 1)] + [49407] + [0] * (SEQ - eot - 1)
        rows.append(row)
    p["tokenized_prompts"] = jnp.array(rows, dtype=jnp.int32)

    p["logit_scale"] = jnp.array(math.log(1.0 / 0.07), dtype=jnp.float32)
    return p


def _prep_block(bp, D, H, wdt):
    """One-time layout prep: fused QKV / out-proj weights, packed small params,
    attention scale folded into q columns, bf16 weights."""
    Dh = D // H
    scale = 1.0 / math.sqrt(Dh)
    # torch in_proj rows are [q; k; v]; transpose -> columns [q | k | v]
    wqkv = bp["in_proj_w"].T                                  # (D, 3D)
    bqkv = bp["in_proj_b"]                                    # (3D,)
    col_scale = jnp.concatenate(
        [jnp.full((D,), scale, dtype=jnp.float32), jnp.ones((2 * D,), jnp.float32)])
    wqkv = (wqkv * col_scale[None, :]).astype(wdt)
    bqkv = (bqkv * col_scale).reshape(1, 3 * D)
    vecs = jnp.stack([bp["ln1_g"], bp["ln1_b"], bp["ln2_g"], bp["ln2_b"],
                      bp["out_proj_b"], bp["proj_b"]], axis=0)  # (6, D) f32
    return dict(
        vecs=vecs,
        bqkv=bqkv,
        bfc=bp["fc_b"].reshape(1, 4 * D),
        wqkv=wqkv,                                            # (D, 3D) bf16, q pre-scaled
        wo=bp["out_proj_w"].T.astype(wdt),                    # (D, D) bf16
        wfc=bp["fc_w"].T.astype(wdt),                         # (D, 4D) bf16
        wpj=bp["proj_w"].T.astype(wdt),                       # (4D, D) bf16
    )


def prepare_params(p, wdt=MXU_DTYPE):
    """Convert torch-convention params into kernel-ready layouts (call once, outside jit)."""
    Cpp = IMG_C * PATCH * PATCH
    kp = {}
    kp["w_patch"] = p["v_conv_w"].reshape(V_WIDTH, Cpp).T.astype(wdt)       # (Cpp, D)
    # packed patch params: rows [0:NP]=pos_rest, [NP]=cls+pos0, [NP+1]=ln_pre_g, [NP+2]=ln_pre_b
    kp["patch_params"] = jnp.concatenate(
        [p["v_pos"][1:],
         (p["v_cls"] + p["v_pos"][0]).reshape(1, V_WIDTH),
         p["v_ln_pre_g"].reshape(1, V_WIDTH),
         p["v_ln_pre_b"].reshape(1, V_WIDTH)], axis=0)                      # (NP+3, D) f32
    kp["v_blocks"] = [_prep_block(b, V_WIDTH, V_HEADS, wdt) for b in p["v_blocks"]]
    kp["v_head_gb"] = jnp.stack([p["v_ln_post_g"], p["v_ln_post_b"]], axis=0)  # (2, D)
    kp["v_proj"] = p["v_proj"].astype(wdt)

    kp["t_pos"] = p["t_pos"]
    kp["t_blocks"] = [_prep_block(b, T_WIDTH, T_HEADS, wdt) for b in p["t_blocks"]]
    kp["t_head_gb"] = jnp.stack([p["t_ln_final_g"], p["t_ln_final_b"]], axis=0)  # (2, D)
    kp["text_projection"] = p["text_projection"].astype(wdt)

    kp["ctx"] = p["ctx"]
    kp["token_prefix"] = p["token_prefix"]
    kp["token_suffix"] = p["token_suffix"]
    kp["tokenized_prompts"] = p["tokenized_prompts"]
    kp["logit_scale"] = p["logit_scale"]
    return kp

# ---------------------------------- main ------------------------------------

if __name__ == "__main__":
    key = jax.random.PRNGKey(0)
    pkey, ikey = jax.random.split(key)
    params = init_params(pkey)
    kparams = prepare_params(params)     # one-time: fused / pre-transposed / packed weights
    image = jax.random.normal(ikey, (B, IMG_C, IMG_HW, IMG_HW), dtype=jnp.float32)

    # Full forward (same semantics as CustomCLIP.forward): 5 pallas_calls total.
    fwd = jax.jit(custom_clip_forward)
    logits = fwd(image, kparams)
    jax.block_until_ready(logits)
    assert logits.shape == (B, N_CLS), logits.shape
    assert bool(jnp.all(jnp.isfinite(logits)))

    # Hoisted text branch: text features depend only on params; compute once and reuse.
    text_features = jax.jit(encode_text)(kparams)
    fwd_cached = jax.jit(forward_with_cached_text)
    logits2 = fwd_cached(image, kparams, text_features)
    jax.block_until_ready(logits2)
    assert logits2.shape == (B, N_CLS)
    assert bool(jnp.allclose(logits, logits2, atol=1e-4, rtol=1e-4))

    print("KERNEL_OK")
</pallas_src>

<mosaic_0001>
module attributes {stable_mosaic.version = 11 : i64} {
  func.func @_patch_embed_kernel(%arg0: i32, %arg1: memref<1x16x48xbf16, #tpu.memory_space<vmem>>, %arg2: memref<48x64xbf16, #tpu.memory_space<vmem>>, %arg3: memref<19x64xf32, #tpu.memory_space<vmem>>, %arg4: memref<1x17x64xbf16, #tpu.memory_space<vmem>>) attributes {dimension_semantics = [#tpu.dimension_semantics<parallel>], iteration_bounds = array<i64: 2>, scalar_prefetch = 0 : i64, scratch_operands = 0 : i64, tpu.core_type = #tpu.core_type<tc>, window_params = [{transform_indices = @transform_0, window_bounds = array<i64: 1, 16, 48>}, {pipeline_mode = #tpu.pipeline_mode<synchronous>, transform_indices = @transform_1, window_bounds = array<i64: 48, 64>}, {pipeline_mode = #tpu.pipeline_mode<synchronous>, transform_indices = @transform_2, window_bounds = array<i64: 19, 64>}, {transform_indices = @transform_3, window_bounds = array<i64: 1, 17, 64>}]} {
    %c0 = arith.constant 0 : index
    %c0_0 = arith.constant 0 : index
    %0 = vector.load %arg3[%c0, %c0_0] : memref<19x64xf32, #tpu.memory_space<vmem>>, vector<16x64xf32>
    %c16 = arith.constant 16 : index
    %c0_1 = arith.constant 0 : index
    %1 = vector.load %arg3[%c16, %c0_1] : memref<19x64xf32, #tpu.memory_space<vmem>>, vector<1x64xf32>
    %c17 = arith.constant 17 : index
    %c0_2 = arith.constant 0 : index
    %2 = vector.load %arg3[%c17, %c0_2] : memref<19x64xf32, #tpu.memory_space<vmem>>, vector<1x64xf32>
    %c18 = arith.constant 18 : index
    %c0_3 = arith.constant 0 : index
    %3 = vector.load %arg3[%c18, %c0_3] : memref<19x64xf32, #tpu.memory_space<vmem>>, vector<1x64xf32>
    %c0_4 = arith.constant 0 : index
    %c0_5 = arith.constant 0 : index
    %c0_6 = arith.constant 0 : index
    %4 = vector.load %arg1[%c0_4, %c0_5, %c0_6] : memref<1x16x48xbf16, #tpu.memory_space<vmem>>, vector<1x16x48xbf16>
    %5 = vector.shape_cast %4 : vector<1x16x48xbf16> to vector<16x48xbf16>
    %c0_7 = arith.constant 0 : index
    %c0_8 = arith.constant 0 : index
    %6 = vector.load %arg2[%c0_7, %c0_8] : memref<48x64xbf16, #tpu.memory_space<vmem>>, vector<48x64xbf16>
    %cst = arith.constant dense<0.000000e+00> : vector<16x64xf32>
    %7 = tpu.matmul %5, %6, %cst {dimension_numbers = #tpu.dot_dimension_numbers<[1], [0], [0], [1], [0, 0, 1, 1], [], []>} : vector<16x48xbf16>, vector<48x64xbf16>, vector<16x64xf32> -> vector<16x64xf32>
    %8 = arith.addf %7, %0 : vector<16x64xf32>
    %9 = tpu.concatenate %1, %8 in 0 : vector<1x64xf32>, vector<16x64xf32> -> vector<17x64xf32>
    %cst_9 = arith.constant dense<0.000000e+00> : vector<17xf32>
    %10 = vector.multi_reduction <add>, %9, %cst_9 [1] : vector<17x64xf32> to vector<17xf32>
    %11 = vector.shape_cast %10 : vector<17xf32> to vector<17x1xf32>
    %cst_10 = arith.constant 6.400000e+01 : f32
    %12 = vector.broadcast %cst_10 : f32 to vector<17x1xf32>
    %13 = arith.divf %11, %12 : vector<17x1xf32>
    %14 = vector.broadcast %13 : vector<17x1xf32> to vector<17x64xf32>
    %15 = arith.subf %9, %14 : vector<17x64xf32>
    %16 = arith.mulf %15, %15 : vector<17x64xf32>
    %cst_11 = arith.constant dense<0.000000e+00> : vector<17xf32>
    %17 = vector.multi_reduction <add>, %16, %cst_11 [1] : vector<17x64xf32> to vector<17xf32>
    %18 = vector.shape_cast %17 : vector<17xf32> to vector<17x1xf32>
    %cst_12 = arith.constant 6.400000e+01 : f32
    %19 = vector.broadcast %cst_12 : f32 to vector<17x1xf32>
    %20 = arith.divf %18, %19 : vector<17x1xf32>
    %21 = vector.broadcast %13 : vector<17x1xf32> to vector<17x64xf32>
    %22 = arith.subf %9, %21 : vector<17x64xf32>
    %cst_13 = arith.constant 9.99999974E-6 : f32
    %23 = vector.broadcast %cst_13 : f32 to vector<17x1xf32>
    %24 = arith.addf %20, %23 : vector<17x1xf32>
    %25 = math.rsqrt %24 : vector<17x1xf32>
    %26 = vector.broadcast %25 : vector<17x1xf32> to vector<17x64xf32>
    %27 = arith.mulf %22, %26 : vector<17x64xf32>
    %28 = vector.broadcast %2 : vector<1x64xf32> to vector<17x64xf32>
    %29 = arith.mulf %27, %28 : vector<17x64xf32>
    %30 = vector.broadcast %3 : vector<1x64xf32> to vector<17x64xf32>
    %31 = arith.addf %29, %30 : vector<17x64xf32>
    %32 = arith.truncf %31 : vector<17x64xf32> to vector<17x64xbf16>
    %c0_14 = arith.constant 0 : index
    %c0_15 = arith.constant 0 : index
    %c0_16 = arith.constant 0 : index
    %33 = vector.load %arg4[%c0_14, %c0_15, %c0_16] : memref<1x17x64xbf16, #tpu.memory_space<vmem>>, vector<1x17x64xbf16>
    %34 = vector.shape_cast %33 : vector<1x17x64xbf16> to vector<17x64xbf16>
    %35 = vector.shape_cast %32 : vector<17x64xbf16> to vector<1x17x64xbf16>
    tpu.vector_store %arg4[%c0_14, %c0_15, %c0_16], %35 {strides = array<i32>} : memref<1x17x64xbf16, #tpu.memory_space<vmem>>, vector<1x17x64xbf16>,
    return
  }
  func.func @transform_0(%arg0: i32) -> (i32, i32, i32) {
    %c0_i32 = arith.constant 0 : i32
    %c0_i32_0 = arith.constant 0 : i32
    %c0_i32_1 = arith.constant 0 : i32
    return %arg0, %c0_i32, %c0_i32_0 : i32, i32, i32
  }
  func.func @transform_1(%arg0: i32) -> (i32, i32) {
    %c0_i32 = arith.constant 0 : i32
    %c0_i32_0 = arith.constant 0 : i32
    %c0_i32_1 = arith.constant 0 : i32
    return %c0_i32, %c0_i32_0 : i32, i32
  }
  func.func @transform_2(%arg0: i32) -> (i32, i32) {
    %c0_i32 = arith.constant 0 : i32
    %c0_i32_0 = arith.constant 0 : i32
    %c0_i32_1 = arith.constant 0 : i32
    return %c0_i32, %c0_i32_0 : i32, i32
  }
  func.func @transform_3(%arg0: i32) -> (i32, i32, i32) {
    %c0_i32 = arith.constant 0 : i32
    %c0_i32_0 = arith.constant 0 : i32
    %c0_i32_1 = arith.constant 0 : i32
    return %arg0, %c0_i32, %c0_i32_0 : i32, i32, i32
  }
}

module attributes {stable_mosaic.version = 11 : i64} {
  func.func @_resblock_kernel(%arg0: i32, %arg1: memref<1x17x64xbf16, #tpu.memory_space<vmem>>, %arg2: memref<6x64xf32, #tpu.memory_space<vmem>>, %arg3: memref<1x192xf32, #tpu.memory_space<vmem>>, %arg4: memref<1x256xf32, #tpu.memory_space<vmem>>, %arg5: memref<64x192xbf16, #tpu.memory_space<vmem>>, %arg6: memref<64x64xbf16, #tpu.memory_space<vmem>>, %arg7: memref<64x256xbf16, #tpu.memory_space<vmem>>, %arg8: memref<256x64xbf16, #tpu.memory_space<vmem>>, %arg9: memref<1x17x64xbf16, #tpu.memory_space<vmem>>) attributes {dimension_semantics = [#tpu.dimension_semantics<parallel>], iteration_bounds = array<i64: 2>, scalar_prefetch = 0 : i64, scratch_operands = 0 : i64, tpu.core_type = #tpu.core_type<tc>, window_params = [{transform_indices = @transform_0, window_bounds = array<i64: 1, 17, 64>}, {pipeline_mode = #tpu.pipeline_mode<synchronous>, transform_indices = @transform_1, window_bounds = array<i64: 6, 64>}, {pipeline_mode = #tpu.pipeline_mode<synchronous>, transform_indices = @transform_2, window_bounds = array<i64: 1, 192>}, {pipeline_mode = #tpu.pipeline_mode<synchronous>, transform_indices = @transform_3, window_bounds = array<i64: 1, 256>}, {pipeline_mode = #tpu.pipeline_mode<synchronous>, transform_indices = @transform_4, window_bounds = array<i64: 64, 192>}, {pipeline_mode = #tpu.pipeline_mode<synchronous>, transform_indices = @transform_5, window_bounds = array<i64: 64, 64>}, {pipeline_mode = #tpu.pipeline_mode<synchronous>, transform_indices = @transform_6, window_bounds = array<i64: 64, 256>}, {pipeline_mode = #tpu.pipeline_mode<synchronous>, transform_indices = @transform_7, window_bounds = array<i64: 256, 64>}, {transform_indices = @transform_8, window_bounds = array<i64: 1, 17, 64>}]} {
    %c0 = arith.constant 0 : index
    %c0_0 = arith.constant 0 : index
    %c0_1 = arith.constant 0 : index
    %0 = vector.load %arg1[%c0, %c0_0, %c0_1] : memref<1x17x64xbf16, #tpu.memory_space<vmem>>, vector<1x17x64xbf16>
    %1 = vector.shape_cast %0 : vector<1x17x64xbf16> to vector<17x64xbf16>
    %2 = arith.extf %1 : vector<17x64xbf16> to vector<17x64xf32>
    %c0_2 = arith.constant 0 : index
    %c0_3 = arith.constant 0 : index
    %3 = vector.load %arg2[%c0_2, %c0_3] : memref<6x64xf32, #tpu.memory_space<vmem>>, vector<1x64xf32>
    %c1 = arith.constant 1 : index
    %c0_4 = arith.constant 0 : index
    %4 = vector.load %arg2[%c1, %c0_4] : memref<6x64xf32, #tpu.memory_space<vmem>>, vector<1x64xf32>
    %c2 = arith.constant 2 : index
    %c0_5 = arith.constant 0 : index
    %5 = vector.load %arg2[%c2, %c0_5] : memref<6x64xf32, #tpu.memory_space<vmem>>, vector<1x64xf32>
    %c3 = arith.constant 3 : index
    %c0_6 = arith.constant 0 : index
    %6 = vector.load %arg2[%c3, %c0_6] : memref<6x64xf32, #tpu.memory_space<vmem>>, vector<1x64xf32>
    %c4 = arith.constant 4 : index
    %c0_7 = arith.constant 0 : index
    %7 = vector.load %arg2[%c4, %c0_7] : memref<6x64xf32, #tpu.memory_space<vmem>>, vector<1x64xf32>
    %c5 = arith.constant 5 : index
    %c0_8 = arith.constant 0 : index
    %8 = vector.load %arg2[%c5, %c0_8] : memref<6x64xf32, #tpu.memory_space<vmem>>, vector<1x64xf32>
    %cst = arith.constant dense<0.000000e+00> : vector<17xf32>
    %9 = vector.multi_reduction <add>, %2, %cst [1] : vector<17x64xf32> to vector<17xf32>
    %10 = vector.shape_cast %9 : vector<17xf32> to vector<17x1xf32>
    %cst_9 = arith.constant 6.400000e+01 : f32
    %11 = vector.broadcast %cst_9 : f32 to vector<17x1xf32>
    %12 = arith.divf %10, %11 : vector<17x1xf32>
    %13 = vector.broadcast %12 : vector<17x1xf32> to vector<17x64xf32>
    %14 = arith.subf %2, %13 : vector<17x64xf32>
    %15 = arith.mulf %14, %14 : vector<17x64xf32>
    %cst_10 = arith.constant dense<0.000000e+00> : vector<17xf32>
    %16 = vector.multi_reduction <add>, %15, %cst_10 [1] : vector<17x64xf32> to vector<17xf32>
    %17 = vector.shape_cast %16 : vector<17xf32> to vector<17x1xf32>
    %cst_11 = arith.constant 6.400000e+01 : f32
    %18 = vector.broadcast %cst_11 : f32 to vector<17x1xf32>
    %19 = arith.divf %17, %18 : vector<17x1xf32>
    %20 = vector.broadcast %12 : vector<17x1xf32> to vector<17x64xf32>
    %21 = arith.subf %2, %20 : vector<17x64xf32>
    %cst_12 = arith.constant 9.99999974E-6 : f32
    %22 = vector.broadcast %cst_12 : f32 to vector<17x1xf32>
    %23 = arith.addf %19, %22 : vector<17x1xf32>
    %24 = math.rsqrt %23 : vector<17x1xf32>
    %25 = vector.broadcast %24 : vector<17x1xf32> to vector<17x64xf32>
    %26 = arith.mulf %21, %25 : vector<17x64xf32>
    %27 = vector.broadcast %3 : vector<1x64xf32> to vector<17x64xf32>
    %28 = arith.mulf %26, %27 : vector<17x64xf32>
    %29 = vector.broadcast %4 : vector<1x64xf32> to vector<17x64xf32>
    %30 = arith.addf %28, %29 : vector<17x64xf32>
    %31 = arith.truncf %30 : vector<17x64xf32> to vector<17x64xbf16>
    %c0_13 = arith.constant 0 : index
    %c0_14 = arith.constant 0 : index
    %32 = vector.load %arg5[%c0_13, %c0_14] : memref<64x192xbf16, #tpu.memory_space<vmem>>, vector<64x192xbf16>
    %cst_15 = arith.constant dense<0.000000e+00> : vector<17x192xf32>
    %33 = tpu.matmul %31, %32, %cst_15 {dimension_numbers = #tpu.dot_dimension_numbers<[1], [0], [0], [1], [0, 0, 1, 1], [], []>} : vector<17x64xbf16>, vector<64x192xbf16>, vector<17x192xf32> -> vector<17x192xf32>
    %c0_16 = arith.constant 0 : index
    %c0_17 = arith.constant 0 : index
    %34 = vector.load %arg3[%c0_16, %c0_17] : memref<1x192xf32, #tpu.memory_space<vmem>>, vector<1x192xf32>
    %35 = vector.broadcast %34 : vector<1x192xf32> to vector<17x192xf32>
    %36 = arith.addf %33, %35 : vector<17x192xf32>
    %37 = vector.extract_strided_slice %36 {offsets = [0, 0], sizes = [17, 16], strides = [1, 1]} : vector<17x192xf32> to vector<17x16xf32>
    %38 = vector.extract_strided_slice %36 {offsets = [0, 64], sizes = [17, 16], strides = [1, 1]} : vector<17x192xf32> to vector<17x16xf32>
    %39 = vector.extract_strided_slice %36 {offsets = [0, 128], sizes = [17, 16], strides = [1, 1]} : vector<17x192xf32> to vector<17x16xf32>
    %40 = tpu.transpose %38, [1, 0] : vector<17x16xf32> -> vector<16x17xf32>
    %cst_18 = arith.constant dense<0.000000e+00> : vector<17x17xf32>
    %41 = tpu.matmul %37, %40, %cst_18 {dimension_numbers = #tpu.dot_dimension_numbers<[1], [0], [0], [1], [0, 0, 1, 1], [], []>} : vector<17x16xf32>, vector<16x17xf32>, vector<17x17xf32> -> vector<17x17xf32>
    %cst_19 = arith.constant dense<0xFF800000> : vector<17xf32>
    %42 = vector.multi_reduction <maximumf>, %41, %cst_19 [1] : vector<17x17xf32> to vector<17xf32>
    %43 = vector.shape_cast %42 : vector<17xf32> to vector<17x1xf32>
    %44 = vector.broadcast %43 : vector<17x1xf32> to vector<17x17xf32>
    %45 = arith.subf %41, %44 : vector<17x17xf32>
    %46 = math.exp %45 : vector<17x17xf32>
    %cst_20 = arith.constant dense<0.000000e+00> : vector<17xf32>
    %47 = vector.multi_reduction <add>, %46, %cst_20 [1] : vector<17x17xf32> to vector<17xf32>
    %48 = vector.shape_cast %47 : vector<17xf32> to vector<17x1xf32>
    %49 = tpu.reciprocal %48 {approx = true} : vector<17x1xf32> -> vector<17x1xf32>
    %50 = vector.broadcast %49 : vector<17x1xf32> to vector<17x17xf32>
    %51 = arith.mulf %46, %50 : vector<17x17xf32>
    %cst_21 = arith.constant dense<0.000000e+00> : vector<17x16xf32>
    %52 = tpu.matmul %51, %39, %cst_21 {dimension_numbers = #tpu.dot_dimension_numbers<[1], [0], [0], [1], [0, 0, 1, 1], [], []>} : vector<17x17xf32>, vector<17x16xf32>, vector<17x16xf32> -> vector<17x16xf32>
    %53 = vector.extract_strided_slice %36 {offsets = [0, 16], sizes = [17, 16], strides = [1, 1]} : vector<17x192xf32> to vector<17x16xf32>
    %54 = vector.extract_strided_slice %36 {offsets = [0, 80], sizes = [17, 16], strides = [1, 1]} : vector<17x192xf32> to vector<17x16xf32>
    %55 = vector.extract_strided_slice %36 {offsets = [0, 144], sizes = [17, 16], strides = [1, 1]} : vector<17x192xf32> to vector<17x16xf32>
    %56 = tpu.transpose %54, [1, 0] : vector<17x16xf32> -> vector<16x17xf32>
    %cst_22 = arith.constant dense<0.000000e+00> : vector<17x17xf32>
    %57 = tpu.matmul %53, %56, %cst_22 {dimension_numbers = #tpu.dot_dimension_numbers<[1], [0], [0], [1], [0, 0, 1, 1], [], []>} : vector<17x16xf32>, vector<16x17xf32>, vector<17x17xf32> -> vector<17x17xf32>
    %cst_23 = arith.constant dense<0xFF800000> : vector<17xf32>
    %58 = vector.multi_reduction <maximumf>, %57, %cst_23 [1] : vector<17x17xf32> to vector<17xf32>
    %59 = vector.shape_cast %58 : vector<17xf32> to vector<17x1xf32>
    %60 = vector.broadcast %59 : vector<17x1xf32> to vector<17x17xf32>
    %61 = arith.subf %57, %60 : vector<17x17xf32>
    %62 = math.exp %61 : vector<17x17xf32>
    %cst_24 = arith.constant dense<0.000000e+00> : vector<17xf32>
    %63 = vector.multi_reduction <add>, %62, %cst_24 [1] : vector<17x17xf32> to vector<17xf32>
    %64 = vector.shape_cast %63 : vector<17xf32> to vector<17x1xf32>
    %65 = tpu.reciprocal %64 {approx = true} : vector<17x1xf32> -> vector<17x1xf32>
    %66 = vector.broadcast %65 : vector<17x1xf32> to vector<17x17xf32>
    %67 = arith.mulf %62, %66 : vector<17x17xf32>
    %cst_25 = arith.constant dense<0.000000e+00> : vector<17x16xf32>
    %68 = tpu.matmul %67, %55, %cst_25 {dimension_numbers = #tpu.dot_dimension_numbers<[1], [0], [0], [1], [0, 0, 1, 1], [], []>} : vector<17x17xf32>, vector<17x16xf32>, vector<17x16xf32> -> vector<17x16xf32>
    %69 = vector.extract_strided_slice %36 {offsets = [0, 32], sizes = [17, 16], strides = [1, 1]} : vector<17x192xf32> to vector<17x16xf32>
    %70 = vector.extract_strided_slice %36 {offsets = [0, 96], sizes = [17, 16], strides = [1, 1]} : vector<17x192xf32> to vector<17x16xf32>
    %71 = vector.extract_strided_slice %36 {offsets = [0, 160], sizes = [17, 16], strides = [1, 1]} : vector<17x192xf32> to vector<17x16xf32>
    %72 = tpu.transpose %70, [1, 0] : vector<17x16xf32> -> vector<16x17xf32>
    %cst_26 = arith.constant dense<0.000000e+00> : vector<17x17xf32>
    %73 = tpu.matmul %69, %72, %cst_26 {dimension_numbers = #tpu.dot_dimension_numbers<[1], [0], [0], [1], [0, 0, 1, 1], [], []>} : vector<17x16xf32>, vector<16x17xf32>, vector<17x17xf32> -> vector<17x17xf32>
    %cst_27 = arith.constant dense<0xFF800000> : vector<17xf32>
    %74 = vector.multi_reduction <maximumf>, %73, %cst_27 [1] : vector<17x17xf32> to vector<17xf32>
    %75 = vector.shape_cast %74 : vector<17xf32> to vector<17x1xf32>
    %76 = vector.broadcast %75 : vector<17x1xf32> to vector<17x17xf32>
    %77 = arith.subf %73, %76 : vector<17x17xf32>
    %78 = math.exp %77 : vector<17x17xf32>
    %cst_28 = arith.constant dense<0.000000e+00> : vector<17xf32>
    %79 = vector.multi_reduction <add>, %78, %cst_28 [1] : vector<17x17xf32> to vector<17xf32>
    %80 = vector.shape_cast %79 : vector<17xf32> to vector<17x1xf32>
    %81 = tpu.reciprocal %80 {approx = true} : vector<17x1xf32> -> vector<17x1xf32>
    %82 = vector.broadcast %81 : vector<17x1xf32> to vector<17x17xf32>
    %83 = arith.mulf %78, %82 : vector<17x17xf32>
    %cst_29 = arith.constant dense<0.000000e+00> : vector<17x16xf32>
    %84 = tpu.matmul %83, %71, %cst_29 {dimension_numbers = #tpu.dot_dimension_numbers<[1], [0], [0], [1], [0, 0, 1, 1], [], []>} : vector<17x17xf32>, vector<17x16xf32>, vector<17x16xf32> -> vector<17x16xf32>
    %85 = vector.extract_strided_slice %36 {offsets = [0, 48], sizes = [17, 16], strides = [1, 1]} : vector<17x192xf32> to vector<17x16xf32>
    %86 = vector.extract_strided_slice %36 {offsets = [0, 112], sizes = [17, 16], strides = [1, 1]} : vector<17x192xf32> to vector<17x16xf32>
    %87 = vector.extract_strided_slice %36 {offsets = [0, 176], sizes = [17, 16], strides = [1, 1]} : vector<17x192xf32> to vector<17x16xf32>
    %88 = tpu.transpose %86, [1, 0] : vector<17x16xf32> -> vector<16x17xf32>
    %cst_30 = arith.constant dense<0.000000e+00> : vector<17x17xf32>
    %89 = tpu.matmul %85, %88, %cst_30 {dimension_numbers = #tpu.dot_dimension_numbers<[1], [0], [0], [1], [0, 0, 1, 1], [], []>} : vector<17x16xf32>, vector<16x17xf32>, vector<17x17xf32> -> vector<17x17xf32>
    %cst_31 = arith.constant dense<0xFF800000> : vector<17xf32>
    %90 = vector.multi_reduction <maximumf>, %89, %cst_31 [1] : vector<17x17xf32> to vector<17xf32>
    %91 = vector.shape_cast %90 : vector<17xf32> to vector<17x1xf32>
    %92 = vector.broadcast %91 : vector<17x1xf32> to vector<17x17xf32>
    %93 = arith.subf %89, %92 : vector<17x17xf32>
    %94 = math.exp %93 : vector<17x17xf32>
    %cst_32 = arith.constant dense<0.000000e+00> : vector<17xf32>
    %95 = vector.multi_reduction <add>, %94, %cst_32 [1] : vector<17x17xf32> to vector<17xf32>
    %96 = vector.shape_cast %95 : vector<17xf32> to vector<17x1xf32>
    %97 = tpu.reciprocal %96 {approx = true} : vector<17x1xf32> -> vector<17x1xf32>
    %98 = vector.broadcast %97 : vector<17x1xf32> to vector<17x17xf32>
    %99 = arith.mulf %94, %98 : vector<17x17xf32>
    %cst_33 = arith.constant dense<0.000000e+00> : vector<17x16xf32>
    %100 = tpu.matmul %99, %87, %cst_33 {dimension_numbers = #tpu.dot_dimension_numbers<[1], [0], [0], [1], [0, 0, 1, 1], [], []>} : vector<17x17xf32>, vector<17x16xf32>, vector<17x16xf32> -> vector<17x16xf32>
    %101 = tpu.concatenate %52, %68, %84, %100 in 1 : vector<17x16xf32>, vector<17x16xf32>, vector<17x16xf32>, vector<17x16xf32> -> vector<17x64xf32>
    %102 = arith.truncf %101 : vector<17x64xf32> to vector<17x64xbf16>
    %c0_34 = arith.constant 0 : index
    %c0_35 = arith.constant 0 : index
    %103 = vector.load %arg6[%c0_34, %c0_35] : memref<64x64xbf16, #tpu.memory_space<vmem>>, vector<64x64xbf16>
    %cst_36 = arith.constant dense<0.000000e+00> : vector<17x64xf32>
    %104 = tpu.matmul %102, %103, %cst_36 {dimension_numbers = #tpu.dot_dimension_numbers<[1], [0], [0], [1], [0, 0, 1, 1], [], []>} : vector<17x64xbf16>, vector<64x64xbf16>, vector<17x64xf32> -> vector<17x64xf32>
    %105 = arith.addf %2, %104 : vector<17x64xf32>
    %106 = vector.broadcast %7 : vector<1x64xf32> to vector<17x64xf32>
    %107 = arith.addf %105, %106 : vector<17x64xf32>
    %cst_37 = arith.constant dense<0.000000e+00> : vector<17xf32>
    %108 = vector.multi_reduction <add>, %107, %cst_37 [1] : vector<17x64xf32> to vector<17xf32>
    %109 = vector.shape_cast %108 : vector<17xf32> to vector<17x1xf32>
    %cst_38 = arith.constant 6.400000e+01 : f32
    %110 = vector.broadcast %cst_38 : f32 to vector<17x1xf32>
    %111 = arith.divf %109, %110 : vector<17x1xf32>
    %112 = vector.broadcast %111 : vector<17x1xf32> to vector<17x64xf32>
    %113 = arith.subf %107, %112 : vector<17x64xf32>
    %114 = arith.mulf %113, %113 : vector<17x64xf32>
    %cst_39 = arith.constant dense<0.000000e+00> : vector<17xf32>
    %115 = vector.multi_reduction <add>, %114, %cst_39 [1] : vector<17x64xf32> to vector<17xf32>
    %116 = vector.shape_cast %115 : vector<17xf32> to vector<17x1xf32>
    %cst_40 = arith.constant 6.400000e+01 : f32
    %117 = vector.broadcast %cst_40 : f32 to vector<17x1xf32>
    %118 = arith.divf %116, %117 : vector<17x1xf32>
    %119 = vector.broadcast %111 : vector<17x1xf32> to vector<17x64xf32>
    %120 = arith.subf %107, %119 : vector<17x64xf32>
    %cst_41 = arith.constant 9.99999974E-6 : f32
    %121 = vector.broadcast %cst_41 : f32 to vector<17x1xf32>
    %122 = arith.addf %118, %121 : vector<17x1xf32>
    %123 = math.rsqrt %122 : vector<17x1xf32>
    %124 = vector.broadcast %123 : vector<17x1xf32> to vector<17x64xf32>
    %125 = arith.mulf %120, %124 : vector<17x64xf32>
    %126 = vector.broadcast %5 : vector<1x64xf32> to vector<17x64xf32>
    %127 = arith.mulf %125, %126 : vector<17x64xf32>
    %128 = vector.broadcast %6 : vector<1x64xf32> to vector<17x64xf32>
    %129 = arith.addf %127, %128 : vector<17x64xf32>
    %130 = arith.truncf %129 : vector<17x64xf32> to vector<17x64xbf16>
    %c0_42 = arith.constant 0 : index
    %c0_43 = arith.constant 0 : index
    %131 = vector.load %arg7[%c0_42, %c0_43] : memref<64x256xbf16, #tpu.memory_space<vmem>>, vector<64x256xbf16>
    %cst_44 = arith.constant dense<0.000000e+00> : vector<17x256xf32>
    %132 = tpu.matmul %130, %131, %cst_44 {dimension_numbers = #tpu.dot_dimension_numbers<[1], [0], [0], [1], [0, 0, 1, 1], [], []>} : vector<17x64xbf16>, vector<64x256xbf16>, vector<17x256xf32> -> vector<17x256xf32>
    %c0_45 = arith.constant 0 : index
    %c0_46 = arith.constant 0 : index
    %133 = vector.load %arg4[%c0_45, %c0_46] : memref<1x256xf32, #tpu.memory_space<vmem>>, vector<1x256xf32>
    %134 = vector.broadcast %133 : vector<1x256xf32> to vector<17x256xf32>
    %135 = arith.addf %132, %134 : vector<17x256xf32>
    %cst_47 = arith.constant 1.702000e+00 : f32
    %136 = vector.broadcast %cst_47 : f32 to vector<17x256xf32>
    %137 = arith.mulf %136, %135 : vector<17x256xf32>
    %138 = arith.negf %137 : vector<17x256xf32>
    %139 = math.exp %138 : vector<17x256xf32>
    %cst_48 = arith.constant 1.000000e+00 : f32
    %140 = vector.broadcast %cst_48 : f32 to vector<17x256xf32>
    %141 = arith.addf %140, %139 : vector<17x256xf32>
    %142 = arith.divf %140, %141 : vector<17x256xf32>
    %143 = arith.mulf %135, %142 : vector<17x256xf32>
    %144 = arith.truncf %143 : vector<17x256xf32> to vector<17x256xbf16>
    %c0_49 = arith.constant 0 : index
    %c0_50 = arith.constant 0 : index
    %145 = vector.load %arg8[%c0_49, %c0_50] : memref<256x64xbf16, #tpu.memory_space<vmem>>, vector<256x64xbf16>
    %cst_51 = arith.constant dense<0.000000e+00> : vector<17x64xf32>
    %146 = tpu.matmul %144, %145, %cst_51 {dimension_numbers = #tpu.dot_dimension_numbers<[1], [0], [0], [1], [0, 0, 1, 1], [], []>} : vector<17x256xbf16>, vector<256x64xbf16>, vector<17x64xf32> -> vector<17x64xf32>
    %147 = vector.broadcast %8 : vector<1x64xf32> to vector<17x64xf32>
    %148 = arith.addf %146, %147 : vector<17x64xf32>
    %149 = arith.addf %107, %148 : vector<17x64xf32>
    %150 = arith.truncf %149 : vector<17x64xf32> to vector<17x64xbf16>
    %c0_52 = arith.constant 0 : index
    %c0_53 = arith.constant 0 : index
    %c0_54 = arith.constant 0 : index
    %151 = vector.load %arg9[%c0_52, %c0_53, %c0_54] : memref<1x17x64xbf16, #tpu.memory_space<vmem>>, vector<1x17x64xbf16>
    %152 = vector.shape_cast %151 : vector<1x17x64xbf16> to vector<17x64xbf16>
    %153 = vector.shape_cast %150 : vector<17x64xbf16> to vector<1x17x64xbf16>
    tpu.vector_store %arg9[%c0_52, %c0_53, %c0_54], %153 {strides = array<i32>} : memref<1x17x64xbf16, #tpu.memory_space<vmem>>, vector<1x17x64xbf16>,
    return
  }
  func.func @transform_0(%arg0: i32) -> (i32, i32, i32) {
    %c0_i32 = arith.constant 0 : i32
    %c0_i32_0 = arith.constant 0 : i32
    %c0_i32_1 = arith.constant 0 : i32
    return %arg0, %c0_i32, %c0_i32_0 : i32, i32, i32
  }
  func.func @transform_1(%arg0: i32) -> (i32, i32) {
    %c0_i32 = arith.constant 0 : i32
    %c0_i32_0 = arith.constant 0 : i32
    %c0_i32_1 = arith.constant 0 : i32
    return %c0_i32, %c0_i32_0 : i32, i32
  }
  func.func @transform_2(%arg0: i32) -> (i32, i32) {
    %c0_i32 = arith.constant 0 : i32
    %c0_i32_0 = arith.constant 0 : i32
    %c0_i32_1 = arith.constant 0 : i32
    return %c0_i32, %c0_i32_0 : i32, i32
  }
  func.func @transform_3(%arg0: i32) -> (i32, i32) {
    %c0_i32 = arith.constant 0 : i32
    %c0_i32_0 = arith.constant 0 : i32
    %c0_i32_1 = arith.constant 0 : i32
    return %c0_i32, %c0_i32_0 : i32, i32
  }
  func.func @transform_4(%arg0: i32) -> (i32, i32) {
    %c0_i32 = arith.constant 0 : i32
    %c0_i32_0 = arith.constant 0 : i32
    %c0_i32_1 = arith.constant 0 : i32
    return %c0_i32, %c0_i32_0 : i32, i32
  }
  func.func @transform_5(%arg0: i32) -> (i32, i32) {
    %c0_i32 = arith.constant 0 : i32
    %c0_i32_0 = arith.constant 0 : i32
    %c0_i32_1 = arith.constant 0 : i32
    return %c0_i32, %c0_i32_0 : i32, i32
  }
  func.func @transform_6(%arg0: i32) -> (i32, i32) {
    %c0_i32 = arith.constant 0 : i32
    %c0_i32_0 = arith.constant 0 : i32
    %c0_i32_1 = arith.constant 0 : i32
    return %c0_i32, %c0_i32_0 : i32, i32
  }
  func.func @transform_7(%arg0: i32) -> (i32, i32) {
    %c0_i32 = arith.constant 0 : i32
    %c0_i32_0 = arith.constant 0 : i32
    %c0_i32_1 = arith.constant 0 : i32
    return %c0_i32, %c0_i32_0 : i32, i32
  }
  func.func @transform_8(%arg0: i32) -> (i32, i32, i32) {
    %c0_i32 = arith.constant 0 : i32
    %c0_i32_0 = arith.constant 0 : i32
    %c0_i32_1 = arith.constant 0 : i32
    return %arg0, %c0_i32, %c0_i32_0 : i32, i32, i32
  }
}

module attributes {stable_mosaic.version = 11 : i64} {
  func.func @_resblock_kernel(%arg0: i32, %arg1: memref<1x32x64xbf16, #tpu.memory_space<vmem>>, %arg2: memref<6x64xf32, #tpu.memory_space<vmem>>, %arg3: memref<1x192xf32, #tpu.memory_space<vmem>>, %arg4: memref<1x256xf32, #tpu.memory_space<vmem>>, %arg5: memref<64x192xbf16, #tpu.memory_space<vmem>>, %arg6: memref<64x64xbf16, #tpu.memory_space<vmem>>, %arg7: memref<64x256xbf16, #tpu.memory_space<vmem>>, %arg8: memref<256x64xbf16, #tpu.memory_space<vmem>>, %arg9: memref<1x32x64xbf16, #tpu.memory_space<vmem>>) attributes {dimension_semantics = [#tpu.dimension_semantics<parallel>], iteration_bounds = array<i64: 2>, scalar_prefetch = 0 : i64, scratch_operands = 0 : i64, tpu.core_type = #tpu.core_type<tc>, window_params = [{transform_indices = @transform_0, window_bounds = array<i64: 1, 32, 64>}, {pipeline_mode = #tpu.pipeline_mode<synchronous>, transform_indices = @transform_1, window_bounds = array<i64: 6, 64>}, {pipeline_mode = #tpu.pipeline_mode<synchronous>, transform_indices = @transform_2, window_bounds = array<i64: 1, 192>}, {pipeline_mode = #tpu.pipeline_mode<synchronous>, transform_indices = @transform_3, window_bounds = array<i64: 1, 256>}, {pipeline_mode = #tpu.pipeline_mode<synchronous>, transform_indices = @transform_4, window_bounds = array<i64: 64, 192>}, {pipeline_mode = #tpu.pipeline_mode<synchronous>, transform_indices = @transform_5, window_bounds = array<i64: 64, 64>}, {pipeline_mode = #tpu.pipeline_mode<synchronous>, transform_indices = @transform_6, window_bounds = array<i64: 64, 256>}, {pipeline_mode = #tpu.pipeline_mode<synchronous>, transform_indices = @transform_7, window_bounds = array<i64: 256, 64>}, {transform_indices = @transform_8, window_bounds = array<i64: 1, 32, 64>}]} {
    %c0 = arith.constant 0 : index
    %c0_0 = arith.constant 0 : index
    %c0_1 = arith.constant 0 : index
    %0 = vector.load %arg1[%c0, %c0_0, %c0_1] : memref<1x32x64xbf16, #tpu.memory_space<vmem>>, vector<1x32x64xbf16>
    %1 = vector.shape_cast %0 : vector<1x32x64xbf16> to vector<32x64xbf16>
    %2 = arith.extf %1 : vector<32x64xbf16> to vector<32x64xf32>
    %c0_2 = arith.constant 0 : index
    %c0_3 = arith.constant 0 : index
    %3 = vector.load %arg2[%c0_2, %c0_3] : memref<6x64xf32, #tpu.memory_space<vmem>>, vector<1x64xf32>
    %c1 = arith.constant 1 : index
    %c0_4 = arith.constant 0 : index
    %4 = vector.load %arg2[%c1, %c0_4] : memref<6x64xf32, #tpu.memory_space<vmem>>, vector<1x64xf32>
    %c2 = arith.constant 2 : index
    %c0_5 = arith.constant 0 : index
    %5 = vector.load %arg2[%c2, %c0_5] : memref<6x64xf32, #tpu.memory_space<vmem>>, vector<1x64xf32>
    %c3 = arith.constant 3 : index
    %c0_6 = arith.constant 0 : index
    %6 = vector.load %arg2[%c3, %c0_6] : memref<6x64xf32, #tpu.memory_space<vmem>>, vector<1x64xf32>
    %c4 = arith.constant 4 : index
    %c0_7 = arith.constant 0 : index
    %7 = vector.load %arg2[%c4, %c0_7] : memref<6x64xf32, #tpu.memory_space<vmem>>, vector<1x64xf32>
    %c5 = arith.constant 5 : index
    %c0_8 = arith.constant 0 : index
    %8 = vector.load %arg2[%c5, %c0_8] : memref<6x64xf32, #tpu.memory_space<vmem>>, vector<1x64xf32>
    %cst = arith.constant dense<0.000000e+00> : vector<32xf32>
    %9 = vector.multi_reduction <add>, %2, %cst [1] : vector<32x64xf32> to vector<32xf32>
    %10 = vector.shape_cast %9 : vector<32xf32> to vector<32x1xf32>
    %cst_9 = arith.constant 6.400000e+01 : f32
    %11 = vector.broadcast %cst_9 : f32 to vector<32x1xf32>
    %12 = arith.divf %10, %11 : vector<32x1xf32>
    %13 = vector.broadcast %12 : vector<32x1xf32> to vector<32x64xf32>
    %14 = arith.subf %2, %13 : vector<32x64xf32>
    %15 = arith.mulf %14, %14 : vector<32x64xf32>
    %cst_10 = arith.constant dense<0.000000e+00> : vector<32xf32>
    %16 = vector.multi_reduction <add>, %15, %cst_10 [1] : vector<32x64xf32> to vector<32xf32>
    %17 = vector.shape_cast %16 : vector<32xf32> to vector<32x1xf32>
    %cst_11 = arith.constant 6.400000e+01 : f32
    %18 = vector.broadcast %cst_11 : f32 to vector<32x1xf32>
    %19 = arith.divf %17, %18 : vector<32x1xf32>
    %20 = vector.broadcast %12 : vector<32x1xf32> to vector<32x64xf32>
    %21 = arith.subf %2, %20 : vector<32x64xf32>
    %cst_12 = arith.constant 9.99999974E-6 : f32
    %22 = vector.broadcast %cst_12 : f32 to vector<32x1xf32>
    %23 = arith.addf %19, %22 : vector<32x1xf32>
    %24 = math.rsqrt %23 : vector<32x1xf32>
    %25 = vector.broadcast %24 : vector<32x1xf32> to vector<32x64xf32>
    %26 = arith.mulf %21, %25 : vector<32x64xf32>
    %27 = vector.broadcast %3 : vector<1x64xf32> to vector<32x64xf32>
    %28 = arith.mulf %26, %27 : vector<32x64xf32>
    %29 = vector.broadcast %4 : vector<1x64xf32> to vector<32x64xf32>
    %30 = arith.addf %28, %29 : vector<32x64xf32>
    %31 = arith.truncf %30 : vector<32x64xf32> to vector<32x64xbf16>
    %c0_13 = arith.constant 0 : index
    %c0_14 = arith.constant 0 : index
    %32 = vector.load %arg5[%c0_13, %c0_14] : memref<64x192xbf16, #tpu.memory_space<vmem>>, vector<64x192xbf16>
    %cst_15 = arith.constant dense<0.000000e+00> : vector<32x192xf32>
    %33 = tpu.matmul %31, %32, %cst_15 {dimension_numbers = #tpu.dot_dimension_numbers<[1], [0], [0], [1], [0, 0, 1, 1], [], []>} : vector<32x64xbf16>, vector<64x192xbf16>, vector<32x192xf32> -> vector<32x192xf32>
    %c0_16 = arith.constant 0 : index
    %c0_17 = arith.constant 0 : index
    %34 = vector.load %arg3[%c0_16, %c0_17] : memref<1x192xf32, #tpu.memory_space<vmem>>, vector<1x192xf32>
    %35 = vector.broadcast %34 : vector<1x192xf32> to vector<32x192xf32>
    %36 = arith.addf %33, %35 : vector<32x192xf32>
    %37 = tpu.iota {dimensions = array<i32: 0>} : vector<16x16xi32>
    %38 = tpu.iota {dimensions = array<i32: 1>} : vector<16x16xi32>
    %39 = arith.cmpi sgt, %38, %37 : vector<16x16xi32>
    %cst_18 = arith.constant -1.000000e+09 : f32
    %cst_19 = arith.constant 0.000000e+00 : f32
    %40 = vector.broadcast %cst_18 : f32 to vector<16x16xf32>
    %41 = vector.broadcast %cst_19 : f32 to vector<16x16xf32>
    %42 = arith.select %39, %40, %41 : vector<16x16xi1>, vector<16x16xf32>
    %43 = vector.extract_strided_slice %36 {offsets = [0, 0], sizes = [16, 16], strides = [1, 1]} : vector<32x192xf32> to vector<16x16xf32>
    %44 = vector.extract_strided_slice %36 {offsets = [0, 64], sizes = [16, 16], strides = [1, 1]} : vector<32x192xf32> to vector<16x16xf32>
    %45 = vector.extract_strided_slice %36 {offsets = [0, 128], sizes = [16, 16], strides = [1, 1]} : vector<32x192xf32> to vector<16x16xf32>
    %46 = tpu.transpose %44, [1, 0] : vector<16x16xf32> -> vector<16x16xf32>
    %cst_20 = arith.constant dense<0.000000e+00> : vector<16x16xf32>
    %47 = tpu.matmul %43, %46, %cst_20 {dimension_numbers = #tpu.dot_dimension_numbers<[1], [0], [0], [1], [0, 0, 1, 1], [], []>} : vector<16x16xf32>, vector<16x16xf32>, vector<16x16xf32> -> vector<16x16xf32>
    %48 = arith.addf %47, %42 : vector<16x16xf32>
    %cst_21 = arith.constant dense<0xFF800000> : vector<16xf32>
    %49 = vector.multi_reduction <maximumf>, %48, %cst_21 [1] : vector<16x16xf32> to vector<16xf32>
    %50 = vector.shape_cast %49 : vector<16xf32> to vector<16x1xf32>
    %51 = vector.broadcast %50 : vector<16x1xf32> to vector<16x16xf32>
    %52 = arith.subf %48, %51 : vector<16x16xf32>
    %53 = math.exp %52 : vector<16x16xf32>
    %cst_22 = arith.constant dense<0.000000e+00> : vector<16xf32>
    %54 = vector.multi_reduction <add>, %53, %cst_22 [1] : vector<16x16xf32> to vector<16xf32>
    %55 = vector.shape_cast %54 : vector<16xf32> to vector<16x1xf32>
    %56 = tpu.reciprocal %55 {approx = true} : vector<16x1xf32> -> vector<16x1xf32>
    %57 = vector.broadcast %56 : vector<16x1xf32> to vector<16x16xf32>
    %58 = arith.mulf %53, %57 : vector<16x16xf32>
    %cst_23 = arith.constant dense<0.000000e+00> : vector<16x16xf32>
    %59 = tpu.matmul %58, %45, %cst_23 {dimension_numbers = #tpu.dot_dimension_numbers<[1], [0], [0], [1], [0, 0, 1, 1], [], []>} : vector<16x16xf32>, vector<16x16xf32>, vector<16x16xf32> -> vector<16x16xf32>
    %60 = vector.extract_strided_slice %36 {offsets = [0, 16], sizes = [16, 16], strides = [1, 1]} : vector<32x192xf32> to vector<16x16xf32>
    %61 = vector.extract_strided_slice %36 {offsets = [0, 80], sizes = [16, 16], strides = [1, 1]} : vector<32x192xf32> to vector<16x16xf32>
    %62 = vector.extract_strided_slice %36 {offsets = [0, 144], sizes = [16, 16], strides = [1, 1]} : vector<32x192xf32> to vector<16x16xf32>
    %63 = tpu.transpose %61, [1, 0] : vector<16x16xf32> -> vector<16x16xf32>
    %cst_24 = arith.constant dense<0.000000e+00> : vector<16x16xf32>
    %64 = tpu.matmul %60, %63, %cst_24 {dimension_numbers = #tpu.dot_dimension_numbers<[1], [0], [0], [1], [0, 0, 1, 1], [], []>} : vector<16x16xf32>, vector<16x16xf32>, vector<16x16xf32> -> vector<16x16xf32>
    %65 = arith.addf %64, %42 : vector<16x16xf32>
    %cst_25 = arith.constant dense<0xFF800000> : vector<16xf32>
    %66 = vector.multi_reduction <maximumf>, %65, %cst_25 [1] : vector<16x16xf32> to vector<16xf32>
    %67 = vector.shape_cast %66 : vector<16xf32> to vector<16x1xf32>
    %68 = vector.broadcast %67 : vector<16x1xf32> to vector<16x16xf32>
    %69 = arith.subf %65, %68 : vector<16x16xf32>
    %70 = math.exp %69 : vector<16x16xf32>
    %cst_26 = arith.constant dense<0.000000e+00> : vector<16xf32>
    %71 = vector.multi_reduction <add>, %70, %cst_26 [1] : vector<16x16xf32> to vector<16xf32>
    %72 = vector.shape_cast %71 : vector<16xf32> to vector<16x1xf32>
    %73 = tpu.reciprocal %72 {approx = true} : vector<16x1xf32> -> vector<16x1xf32>
    %74 = vector.broadcast %73 : vector<16x1xf32> to vector<16x16xf32>
    %75 = arith.mulf %70, %74 : vector<16x16xf32>
    %cst_27 = arith.constant dense<0.000000e+00> : vector<16x16xf32>
    %76 = tpu.matmul %75, %62, %cst_27 {dimension_numbers = #tpu.dot_dimension_numbers<[1], [0], [0], [1], [0, 0, 1, 1], [], []>} : vector<16x16xf32>, vector<16x16xf32>, vector<16x16xf32> -> vector<16x16xf32>
    %77 = vector.extract_strided_slice %36 {offsets = [0, 32], sizes = [16, 16], strides = [1, 1]} : vector<32x192xf32> to vector<16x16xf32>
    %78 = vector.extract_strided_slice %36 {offsets = [0, 96], sizes = [16, 16], strides = [1, 1]} : vector<32x192xf32> to vector<16x16xf32>
    %79 = vector.extract_strided_slice %36 {offsets = [0, 160], sizes = [16, 16], strides = [1, 1]} : vector<32x192xf32> to vector<16x16xf32>
    %80 = tpu.transpose %78, [1, 0] : vector<16x16xf32> -> vector<16x16xf32>
    %cst_28 = arith.constant dense<0.000000e+00> : vector<16x16xf32>
    %81 = tpu.matmul %77, %80, %cst_28 {dimension_numbers = #tpu.dot_dimension_numbers<[1], [0], [0], [1], [0, 0, 1, 1], [], []>} : vector<16x16xf32>, vector<16x16xf32>, vector<16x16xf32> -> vector<16x16xf32>
    %82 = arith.addf %81, %42 : vector<16x16xf32>
    %cst_29 = arith.constant dense<0xFF800000> : vector<16xf32>
    %83 = vector.multi_reduction <maximumf>, %82, %cst_29 [1] : vector<16x16xf32> to vector<16xf32>
    %84 = vector.shape_cast %83 : vector<16xf32> to vector<16x1xf32>
    %85 = vector.broadcast %84 : vector<16x1xf32> to vector<16x16xf32>
    %86 = arith.subf %82, %85 : vector<16x16xf32>
    %87 = math.exp %86 : vector<16x16xf32>
    %cst_30 = arith.constant dense<0.000000e+00> : vector<16xf32>
    %88 = vector.multi_reduction <add>, %87, %cst_30 [1] : vector<16x16xf32> to vector<16xf32>
    %89 = vector.shape_cast %88 : vector<16xf32> to vector<16x1xf32>
    %90 = tpu.reciprocal %89 {approx = true} : vector<16x1xf32> -> vector<16x1xf32>
    %91 = vector.broadcast %90 : vector<16x1xf32> to vector<16x16xf32>
    %92 = arith.mulf %87, %91 : vector<16x16xf32>
    %cst_31 = arith.constant dense<0.000000e+00> : vector<16x16xf32>
    %93 = tpu.matmul %92, %79, %cst_31 {dimension_numbers = #tpu.dot_dimension_numbers<[1], [0], [0], [1], [0, 0, 1, 1], [], []>} : vector<16x16xf32>, vector<16x16xf32>, vector<16x16xf32> -> vector<16x16xf32>
    %94 = vector.extract_strided_slice %36 {offsets = [0, 48], sizes = [16, 16], strides = [1, 1]} : vector<32x192xf32> to vector<16x16xf32>
    %95 = vector.extract_strided_slice %36 {offsets = [0, 112], sizes = [16, 16], strides = [1, 1]} : vector<32x192xf32> to vector<16x16xf32>
    %96 = vector.extract_strided_slice %36 {offsets = [0, 176], sizes = [16, 16], strides = [1, 1]} : vector<32x192xf32> to vector<16x16xf32>
    %97 = tpu.transpose %95, [1, 0] : vector<16x16xf32> -> vector<16x16xf32>
    %cst_32 = arith.constant dense<0.000000e+00> : vector<16x16xf32>
    %98 = tpu.matmul %94, %97, %cst_32 {dimension_numbers = #tpu.dot_dimension_numbers<[1], [0], [0], [1], [0, 0, 1, 1], [], []>} : vector<16x16xf32>, vector<16x16xf32>, vector<16x16xf32> -> vector<16x16xf32>
    %99 = arith.addf %98, %42 : vector<16x16xf32>
    %cst_33 = arith.constant dense<0xFF800000> : vector<16xf32>
    %100 = vector.multi_reduction <maximumf>, %99, %cst_33 [1] : vector<16x16xf32> to vector<16xf32>
    %101 = vector.shape_cast %100 : vector<16xf32> to vector<16x1xf32>
    %102 = vector.broadcast %101 : vector<16x1xf32> to vector<16x16xf32>
    %103 = arith.subf %99, %102 : vector<16x16xf32>
    %104 = math.exp %103 : vector<16x16xf32>
    %cst_34 = arith.constant dense<0.000000e+00> : vector<16xf32>
    %105 = vector.multi_reduction <add>, %104, %cst_34 [1] : vector<16x16xf32> to vector<16xf32>
    %106 = vector.shape_cast %105 : vector<16xf32> to vector<16x1xf32>
    %107 = tpu.reciprocal %106 {approx = true} : vector<16x1xf32> -> vector<16x1xf32>
    %108 = vector.broadcast %107 : vector<16x1xf32> to vector<16x16xf32>
    %109 = arith.mulf %104, %108 : vector<16x16xf32>
    %cst_35 = arith.constant dense<0.000000e+00> : vector<16x16xf32>
    %110 = tpu.matmul %109, %96, %cst_35 {dimension_numbers = #tpu.dot_dimension_numbers<[1], [0], [0], [1], [0, 0, 1, 1], [], []>} : vector<16x16xf32>, vector<16x16xf32>, vector<16x16xf32> -> vector<16x16xf32>
    %111 = tpu.concatenate %59, %76, %93, %110 in 1 : vector<16x16xf32>, vector<16x16xf32>, vector<16x16xf32>, vector<16x16xf32> -> vector<16x64xf32>
    %112 = vector.extract_strided_slice %36 {offsets = [16, 0], sizes = [16, 16], strides = [1, 1]} : vector<32x192xf32> to vector<16x16xf32>
    %113 = vector.extract_strided_slice %36 {offsets = [16, 64], sizes = [16, 16], strides = [1, 1]} : vector<32x192xf32> to vector<16x16xf32>
    %114 = vector.extract_strided_slice %36 {offsets = [16, 128], sizes = [16, 16], strides = [1, 1]} : vector<32x192xf32> to vector<16x16xf32>
    %115 = tpu.transpose %113, [1, 0] : vector<16x16xf32> -> vector<16x16xf32>
    %cst_36 = arith.constant dense<0.000000e+00> : vector<16x16xf32>
    %116 = tpu.matmul %112, %115, %cst_36 {dimension_numbers = #tpu.dot_dimension_numbers<[1], [0], [0], [1], [0, 0, 1, 1], [], []>} : vector<16x16xf32>, vector<16x16xf32>, vector<16x16xf32> -> vector<16x16xf32>
    %117 = arith.addf %116, %42 : vector<16x16xf32>
    %cst_37 = arith.constant dense<0xFF800000> : vector<16xf32>
    %118 = vector.multi_reduction <maximumf>, %117, %cst_37 [1] : vector<16x16xf32> to vector<16xf32>
    %119 = vector.shape_cast %118 : vector<16xf32> to vector<16x1xf32>
    %120 = vector.broadcast %119 : vector<16x1xf32> to vector<16x16xf32>
    %121 = arith.subf %117, %120 : vector<16x16xf32>
    %122 = math.exp %121 : vector<16x16xf32>
    %cst_38 = arith.constant dense<0.000000e+00> : vector<16xf32>
    %123 = vector.multi_reduction <add>, %122, %cst_38 [1] : vector<16x16xf32> to vector<16xf32>
    %124 = vector.shape_cast %123 : vector<16xf32> to vector<16x1xf32>
    %125 = tpu.reciprocal %124 {approx = true} : vector<16x1xf32> -> vector<16x1xf32>
    %126 = vector.broadcast %125 : vector<16x1xf32> to vector<16x16xf32>
    %127 = arith.mulf %122, %126 : vector<16x16xf32>
    %cst_39 = arith.constant dense<0.000000e+00> : vector<16x16xf32>
    %128 = tpu.matmul %127, %114, %cst_39 {dimension_numbers = #tpu.dot_dimension_numbers<[1], [0], [0], [1], [0, 0, 1, 1], [], []>} : vector<16x16xf32>, vector<16x16xf32>, vector<16x16xf32> -> vector<16x16xf32>
    %129 = vector.extract_strided_slice %36 {offsets = [16, 16], sizes = [16, 16], strides = [1, 1]} : vector<32x192xf32> to vector<16x16xf32>
    %130 = vector.extract_strided_slice %36 {offsets = [16, 80], sizes = [16, 16], strides = [1, 1]} : vector<32x192xf32> to vector<16x16xf32>
    %131 = vector.extract_strided_slice %36 {offsets = [16, 144], sizes = [16, 16], strides = [1, 1]} : vector<32x192xf32> to vector<16x16xf32>
    %132 = tpu.transpose %130, [1, 0] : vector<16x16xf32> -> vector<16x16xf32>
    %cst_40 = arith.constant dense<0.000000e+00> : vector<16x16xf32>
    %133 = tpu.matmul %129, %132, %cst_40 {dimension_numbers = #tpu.dot_dimension_numbers<[1], [0], [0], [1], [0, 0, 1, 1], [], []>} : vector<16x16xf32>, vector<16x16xf32>, vector<16x16xf32> -> vector<16x16xf32>
    %134 = arith.addf %133, %42 : vector<16x16xf32>
    %cst_41 = arith.constant dense<0xFF800000> : vector<16xf32>
    %135 = vector.multi_reduction <maximumf>, %134, %cst_41 [1] : vector<16x16xf32> to vector<16xf32>
    %136 = vector.shape_cast %135 : vector<16xf32> to vector<16x1xf32>
    %137 = vector.broadcast %136 : vector<16x1xf32> to vector<16x16xf32>
    %138 = arith.subf %134, %137 : vector<16x16xf32>
    %139 = math.exp %138 : vector<16x16xf32>
    %cst_42 = arith.constant dense<0.000000e+00> : vector<16xf32>
    %140 = vector.multi_reduction <add>, %139, %cst_42 [1] : vector<16x16xf32> to vector<16xf32>
    %141 = vector.shape_cast %140 : vector<16xf32> to vector<16x1xf32>
    %142 = tpu.reciprocal %141 {approx = true} : vector<16x1xf32> -> vector<16x1xf32>
    %143 = vector.broadcast %142 : vector<16x1xf32> to vector<16x16xf32>
    %144 = arith.mulf %139, %143 : vector<16x16xf32>
    %cst_43 = arith.constant dense<0.000000e+00> : vector<16x16xf32>
    %145 = tpu.matmul %144, %131, %cst_43 {dimension_numbers = #tpu.dot_dimension_numbers<[1], [0], [0], [1], [0, 0, 1, 1], [], []>} : vector<16x16xf32>, vector<16x16xf32>, vector<16x16xf32> -> vector<16x16xf32>
    %146 = vector.extract_strided_slice %36 {offsets = [16, 32], sizes = [16, 16], strides = [1, 1]} : vector<32x192xf32> to vector<16x16xf32>
    %147 = vector.extract_strided_slice %36 {offsets = [16, 96], sizes = [16, 16], strides = [1, 1]} : vector<32x192xf32> to vector<16x16xf32>
    %148 = vector.extract_strided_slice %36 {offsets = [16, 160], sizes = [16, 16], strides = [1, 1]} : vector<32x192xf32> to vector<16x16xf32>
    %149 = tpu.transpose %147, [1, 0] : vector<16x16xf32> -> vector<16x16xf32>
    %cst_44 = arith.constant dense<0.000000e+00> : vector<16x16xf32>
    %150 = tpu.matmul %146, %149, %cst_44 {dimension_numbers = #tpu.dot_dimension_numbers<[1], [0], [0], [1], [0, 0, 1, 1], [], []>} : vector<16x16xf32>, vector<16x16xf32>, vector<16x16xf32> -> vector<16x16xf32>
    %151 = arith.addf %150, %42 : vector<16x16xf32>
    %cst_45 = arith.constant dense<0xFF800000> : vector<16xf32>
    %152 = vector.multi_reduction <maximumf>, %151, %cst_45 [1] : vector<16x16xf32> to vector<16xf32>
    %153 = vector.shape_cast %152 : vector<16xf32> to vector<16x1xf32>
    %154 = vector.broadcast %153 : vector<16x1xf32> to vector<16x16xf32>
    %155 = arith.subf %151, %154 : vector<16x16xf32>
    %156 = math.exp %155 : vector<16x16xf32>
    %cst_46 = arith.constant dense<0.000000e+00> : vector<16xf32>
    %157 = vector.multi_reduction <add>, %156, %cst_46 [1] : vector<16x16xf32> to vector<16xf32>
    %158 = vector.shape_cast %157 : vector<16xf32> to vector<16x1xf32>
    %159 = tpu.reciprocal %158 {approx = true} : vector<16x1xf32> -> vector<16x1xf32>
    %160 = vector.broadcast %159 : vector<16x1xf32> to vector<16x16xf32>
    %161 = arith.mulf %156, %160 : vector<16x16xf32>
    %cst_47 = arith.constant dense<0.000000e+00> : vector<16x16xf32>
    %162 = tpu.matmul %161, %148, %cst_47 {dimension_numbers = #tpu.dot_dimension_numbers<[1], [0], [0], [1], [0, 0, 1, 1], [], []>} : vector<16x16xf32>, vector<16x16xf32>, vector<16x16xf32> -> vector<16x16xf32>
    %163 = vector.extract_strided_slice %36 {offsets = [16, 48], sizes = [16, 16], strides = [1, 1]} : vector<32x192xf32> to vector<16x16xf32>
    %164 = vector.extract_strided_slice %36 {offsets = [16, 112], sizes = [16, 16], strides = [1, 1]} : vector<32x192xf32> to vector<16x16xf32>
    %165 = vector.extract_strided_slice %36 {offsets = [16, 176], sizes = [16, 16], strides = [1, 1]} : vector<32x192xf32> to vector<16x16xf32>
    %166 = tpu.transpose %164, [1, 0] : vector<16x16xf32> -> vector<16x16xf32>
    %cst_48 = arith.constant dense<0.000000e+00> : vector<16x16xf32>
    %167 = tpu.matmul %163, %166, %cst_48 {dimension_numbers = #tpu.dot_dimension_numbers<[1], [0], [0], [1], [0, 0, 1, 1], [], []>} : vector<16x16xf32>, vector<16x16xf32>, vector<16x16xf32> -> vector<16x16xf32>
    %168 = arith.addf %167, %42 : vector<16x16xf32>
    %cst_49 = arith.constant dense<0xFF800000> : vector<16xf32>
    %169 = vector.multi_reduction <maximumf>, %168, %cst_49 [1] : vector<16x16xf32> to vector<16xf32>
    %170 = vector.shape_cast %169 : vector<16xf32> to vector<16x1xf32>
    %171 = vector.broadcast %170 : vector<16x1xf32> to vector<16x16xf32>
    %172 = arith.subf %168, %171 : vector<16x16xf32>
    %173 = math.exp %172 : vector<16x16xf32>
    %cst_50 = arith.constant dense<0.000000e+00> : vector<16xf32>
    %174 = vector.multi_reduction <add>, %173, %cst_50 [1] : vector<16x16xf32> to vector<16xf32>
    %175 = vector.shape_cast %174 : vector<16xf32> to vector<16x1xf32>
    %176 = tpu.reciprocal %175 {approx = true} : vector<16x1xf32> -> vector<16x1xf32>
    %177 = vector.broadcast %176 : vector<16x1xf32> to vector<16x16xf32>
    %178 = arith.mulf %173, %177 : vector<16x16xf32>
    %cst_51 = arith.constant dense<0.000000e+00> : vector<16x16xf32>
    %179 = tpu.matmul %178, %165, %cst_51 {dimension_numbers = #tpu.dot_dimension_numbers<[1], [0], [0], [1], [0, 0, 1, 1], [], []>} : vector<16x16xf32>, vector<16x16xf32>, vector<16x16xf32> -> vector<16x16xf32>
    %180 = tpu.concatenate %128, %145, %162, %179 in 1 : vector<16x16xf32>, vector<16x16xf32>, vector<16x16xf32>, vector<16x16xf32> -> vector<16x64xf32>
    %181 = tpu.concatenate %111, %180 in 0 : vector<16x64xf32>, vector<16x64xf32> -> vector<32x64xf32>
    %182 = arith.truncf %181 : vector<32x64xf32> to vector<32x64xbf16>
    %c0_52 = arith.constant 0 : index
    %c0_53 = arith.constant 0 : index
    %183 = vector.load %arg6[%c0_52, %c0_53] : memref<64x64xbf16, #tpu.memory_space<vmem>>, vector<64x64xbf16>
    %cst_54 = arith.constant dense<0.000000e+00> : vector<32x64xf32>
    %184 = tpu.matmul %182, %183, %cst_54 {dimension_numbers = #tpu.dot_dimension_numbers<[1], [0], [0], [1], [0, 0, 1, 1], [], []>} : vector<32x64xbf16>, vector<64x64xbf16>, vector<32x64xf32> -> vector<32x64xf32>
    %185 = arith.addf %2, %184 : vector<32x64xf32>
    %186 = vector.broadcast %7 : vector<1x64xf32> to vector<32x64xf32>
    %187 = arith.addf %185, %186 : vector<32x64xf32>
    %cst_55 = arith.constant dense<0.000000e+00> : vector<32xf32>
    %188 = vector.multi_reduction <add>, %187, %cst_55 [1] : vector<32x64xf32> to vector<32xf32>
    %189 = vector.shape_cast %188 : vector<32xf32> to vector<32x1xf32>
    %cst_56 = arith.constant 6.400000e+01 : f32
    %190 = vector.broadcast %cst_56 : f32 to vector<32x1xf32>
    %191 = arith.divf %189, %190 : vector<32x1xf32>
    %192 = vector.broadcast %191 : vector<32x1xf32> to vector<32x64xf32>
    %193 = arith.subf %187, %192 : vector<32x64xf32>
    %194 = arith.mulf %193, %193 : vector<32x64xf32>
    %cst_57 = arith.constant dense<0.000000e+00> : vector<32xf32>
    %195 = vector.multi_reduction <add>, %194, %cst_57 [1] : vector<32x64xf32> to vector<32xf32>
    %196 = vector.shape_cast %195 : vector<32xf32> to vector<32x1xf32>
    %cst_58 = arith.constant 6.400000e+01 : f32
    %197 = vector.broadcast %cst_58 : f32 to vector<32x1xf32>
    %198 = arith.divf %196, %197 : vector<32x1xf32>
    %199 = vector.broadcast %191 : vector<32x1xf32> to vector<32x64xf32>
    %200 = arith.subf %187, %199 : vector<32x64xf32>
    %cst_59 = arith.constant 9.99999974E-6 : f32
    %201 = vector.broadcast %cst_59 : f32 to vector<32x1xf32>
    %202 = arith.addf %198, %201 : vector<32x1xf32>
    %203 = math.rsqrt %202 : vector<32x1xf32>
    %204 = vector.broadcast %203 : vector<32x1xf32> to vector<32x64xf32>
    %205 = arith.mulf %200, %204 : vector<32x64xf32>
    %206 = vector.broadcast %5 : vector<1x64xf32> to vector<32x64xf32>
    %207 = arith.mulf %205, %206 : vector<32x64xf32>
    %208 = vector.broadcast %6 : vector<1x64xf32> to vector<32x64xf32>
    %209 = arith.addf %207, %208 : vector<32x64xf32>
    %210 = arith.truncf %209 : vector<32x64xf32> to vector<32x64xbf16>
    %c0_60 = arith.constant 0 : index
    %c0_61 = arith.constant 0 : index
    %211 = vector.load %arg7[%c0_60, %c0_61] : memref<64x256xbf16, #tpu.memory_space<vmem>>, vector<64x256xbf16>
    %cst_62 = arith.constant dense<0.000000e+00> : vector<32x256xf32>
    %212 = tpu.matmul %210, %211, %cst_62 {dimension_numbers = #tpu.dot_dimension_numbers<[1], [0], [0], [1], [0, 0, 1, 1], [], []>} : vector<32x64xbf16>, vector<64x256xbf16>, vector<32x256xf32> -> vector<32x256xf32>
    %c0_63 = arith.constant 0 : index
    %c0_64 = arith.constant 0 : index
    %213 = vector.load %arg4[%c0_63, %c0_64] : memref<1x256xf32, #tpu.memory_space<vmem>>, vector<1x256xf32>
    %214 = vector.broadcast %213 : vector<1x256xf32> to vector<32x256xf32>
    %215 = arith.addf %212, %214 : vector<32x256xf32>
    %cst_65 = arith.constant 1.702000e+00 : f32
    %216 = vector.broadcast %cst_65 : f32 to vector<32x256xf32>
    %217 = arith.mulf %216, %215 : vector<32x256xf32>
    %218 = arith.negf %217 : vector<32x256xf32>
    %219 = math.exp %218 : vector<32x256xf32>
    %cst_66 = arith.constant 1.000000e+00 : f32
    %220 = vector.broadcast %cst_66 : f32 to vector<32x256xf32>
    %221 = arith.addf %220, %219 : vector<32x256xf32>
    %222 = arith.divf %220, %221 : vector<32x256xf32>
    %223 = arith.mulf %215, %222 : vector<32x256xf32>
    %224 = arith.truncf %223 : vector<32x256xf32> to vector<32x256xbf16>
    %c0_67 = arith.constant 0 : index
    %c0_68 = arith.constant 0 : index
    %225 = vector.load %arg8[%c0_67, %c0_68] : memref<256x64xbf16, #tpu.memory_space<vmem>>, vector<256x64xbf16>
    %cst_69 = arith.constant dense<0.000000e+00> : vector<32x64xf32>
    %226 = tpu.matmul %224, %225, %cst_69 {dimension_numbers = #tpu.dot_dimension_numbers<[1], [0], [0], [1], [0, 0, 1, 1], [], []>} : vector<32x256xbf16>, vector<256x64xbf16>, vector<32x64xf32> -> vector<32x64xf32>
    %227 = vector.broadcast %8 : vector<1x64xf32> to vector<32x64xf32>
    %228 = arith.addf %226, %227 : vector<32x64xf32>
    %229 = arith.addf %187, %228 : vector<32x64xf32>
    %230 = arith.truncf %229 : vector<32x64xf32> to vector<32x64xbf16>
    %c0_70 = arith.constant 0 : index
    %c0_71 = arith.constant 0 : index
    %c0_72 = arith.constant 0 : index
    %231 = vector.load %arg9[%c0_70, %c0_71, %c0_72] : memref<1x32x64xbf16, #tpu.memory_space<vmem>>, vector<1x32x64xbf16>
    %232 = vector.shape_cast %231 : vector<1x32x64xbf16> to vector<32x64xbf16>
    %233 = vector.shape_cast %230 : vector<32x64xbf16> to vector<1x32x64xbf16>
    tpu.vector_store %arg9[%c0_70, %c0_71, %c0_72], %233 {strides = array<i32>} : memref<1x32x64xbf16, #tpu.memory_space<vmem>>, vector<1x32x64xbf16>,
    return
  }
  func.func @transform_0(%arg0: i32) -> (i32, i32, i32) {
    %c0_i32 = arith.constant 0 : i32
    %c0_i32_0 = arith.constant 0 : i32
    %c0_i32_1 = arith.constant 0 : i32
    return %arg0, %c0_i32, %c0_i32_0 : i32, i32, i32
  }
  func.func @transform_1(%arg0: i32) -> (i32, i32) {
    %c0_i32 = arith.constant 0 : i32
    %c0_i32_0 = arith.constant 0 : i32
    %c0_i32_1 = arith.constant 0 : i32
    return %c0_i32, %c0_i32_0 : i32, i32
  }
  func.func @transform_2(%arg0: i32) -> (i32, i32) {
    %c0_i32 = arith.constant 0 : i32
    %c0_i32_0 = arith.constant 0 : i32
    %c0_i32_1 = arith.constant 0 : i32
    return %c0_i32, %c0_i32_0 : i32, i32
  }
  func.func @transform_3(%arg0: i32) -> (i32, i32) {
    %c0_i32 = arith.constant 0 : i32
    %c0_i32_0 = arith.constant 0 : i32
    %c0_i32_1 = arith.constant 0 : i32
    return %c0_i32, %c0_i32_0 : i32, i32
  }
  func.func @transform_4(%arg0: i32) -> (i32, i32) {
    %c0_i32 = arith.constant 0 : i32
    %c0_i32_0 = arith.constant 0 : i32
    %c0_i32_1 = arith.constant 0 : i32
    return %c0_i32, %c0_i32_0 : i32, i32
  }
  func.func @transform_5(%arg0: i32) -> (i32, i32) {
    %c0_i32 = arith.constant 0 : i32
    %c0_i32_0 = arith.constant 0 : i32
    %c0_i32_1 = arith.constant 0 : i32
    return %c0_i32, %c0_i32_0 : i32, i32
  }
  func.func @transform_6(%arg0: i32) -> (i32, i32) {
    %c0_i32 = arith.constant 0 : i32
    %c0_i32_0 = arith.constant 0 : i32
    %c0_i32_1 = arith.constant 0 : i32
    return %c0_i32, %c0_i32_0 : i32, i32
  }
  func.func @transform_7(%arg0: i32) -> (i32, i32) {
    %c0_i32 = arith.constant 0 : i32
    %c0_i32_0 = arith.constant 0 : i32
    %c0_i32_1 = arith.constant 0 : i32
    return %c0_i32, %c0_i32_0 : i32, i32
  }
  func.func @transform_8(%arg0: i32) -> (i32, i32, i32) {
    %c0_i32 = arith.constant 0 : i32
    %c0_i32_0 = arith.constant 0 : i32
    %c0_i32_1 = arith.constant 0 : i32
    return %arg0, %c0_i32, %c0_i32_0 : i32, i32, i32
  }
}

module attributes {stable_mosaic.version = 11 : i64} {
  func.func @_text_head_kernel(%arg0: i32, %arg1: memref<4x64xbf16, #tpu.memory_space<vmem>>, %arg2: memref<2x64xf32, #tpu.memory_space<vmem>>, %arg3: memref<64x64xbf16, #tpu.memory_space<vmem>>, %arg4: memref<4x64xf32, #tpu.memory_space<vmem>>) attributes {dimension_semantics = [#tpu.dimension_semantics<arbitrary>], iteration_bounds = array<i64: 1>, scalar_prefetch = 0 : i64, scratch_operands = 0 : i64, tpu.core_type = #tpu.core_type<tc>, window_params = [{pipeline_mode = #tpu.pipeline_mode<synchronous>, transform_indices = @transform_0, window_bounds = array<i64: 4, 64>}, {pipeline_mode = #tpu.pipeline_mode<synchronous>, transform_indices = @transform_1, window_bounds = array<i64: 2, 64>}, {pipeline_mode = #tpu.pipeline_mode<synchronous>, transform_indices = @transform_2, window_bounds = array<i64: 64, 64>}, {pipeline_mode = #tpu.pipeline_mode<synchronous>, transform_indices = @transform_3, window_bounds = array<i64: 4, 64>}]} {
    %c0 = arith.constant 0 : index
    %c0_0 = arith.constant 0 : index
    %0 = vector.load %arg1[%c0, %c0_0] : memref<4x64xbf16, #tpu.memory_space<vmem>>, vector<4x64xbf16>
    %1 = arith.extf %0 : vector<4x64xbf16> to vector<4x64xf32>
    %c0_1 = arith.constant 0 : index
    %c0_2 = arith.constant 0 : index
    %2 = vector.load %arg2[%c0_1, %c0_2] : memref<2x64xf32, #tpu.memory_space<vmem>>, vector<1x64xf32>
    %c1 = arith.constant 1 : index
    %c0_3 = arith.constant 0 : index
    %3 = vector.load %arg2[%c1, %c0_3] : memref<2x64xf32, #tpu.memory_space<vmem>>, vector<1x64xf32>
    %cst = arith.constant dense<0.000000e+00> : vector<4xf32>
    %4 = vector.multi_reduction <add>, %1, %cst [1] : vector<4x64xf32> to vector<4xf32>
    %5 = vector.shape_cast %4 : vector<4xf32> to vector<4x1xf32>
    %cst_4 = arith.constant 6.400000e+01 : f32
    %6 = vector.broadcast %cst_4 : f32 to vector<4x1xf32>
    %7 = arith.divf %5, %6 : vector<4x1xf32>
    %8 = vector.broadcast %7 : vector<4x1xf32> to vector<4x64xf32>
    %9 = arith.subf %1, %8 : vector<4x64xf32>
    %10 = arith.mulf %9, %9 : vector<4x64xf32>
    %cst_5 = arith.constant dense<0.000000e+00> : vector<4xf32>
    %11 = vector.multi_reduction <add>, %10, %cst_5 [1] : vector<4x64xf32> to vector<4xf32>
    %12 = vector.shape_cast %11 : vector<4xf32> to vector<4x1xf32>
    %cst_6 = arith.constant 6.400000e+01 : f32
    %13 = vector.broadcast %cst_6 : f32 to vector<4x1xf32>
    %14 = arith.divf %12, %13 : vector<4x1xf32>
    %15 = vector.broadcast %7 : vector<4x1xf32> to vector<4x64xf32>
    %16 = arith.subf %1, %15 : vector<4x64xf32>
    %cst_7 = arith.constant 9.99999974E-6 : f32
    %17 = vector.broadcast %cst_7 : f32 to vector<4x1xf32>
    %18 = arith.addf %14, %17 : vector<4x1xf32>
    %19 = math.rsqrt %18 : vector<4x1xf32>
    %20 = vector.broadcast %19 : vector<4x1xf32> to vector<4x64xf32>
    %21 = arith.mulf %16, %20 : vector<4x64xf32>
    %22 = vector.broadcast %2 : vector<1x64xf32> to vector<4x64xf32>
    %23 = arith.mulf %21, %22 : vector<4x64xf32>
    %24 = vector.broadcast %3 : vector<1x64xf32> to vector<4x64xf32>
    %25 = arith.addf %23, %24 : vector<4x64xf32>
    %26 = arith.truncf %25 : vector<4x64xf32> to vector<4x64xbf16>
    %c0_8 = arith.constant 0 : index
    %c0_9 = arith.constant 0 : index
    %27 = vector.load %arg3[%c0_8, %c0_9] : memref<64x64xbf16, #tpu.memory_space<vmem>>, vector<64x64xbf16>
    %cst_10 = arith.constant dense<0.000000e+00> : vector<4x64xf32>
    %28 = tpu.matmul %26, %27, %cst_10 {dimension_numbers = #tpu.dot_dimension_numbers<[1], [0], [0], [1], [0, 0, 1, 1], [], []>} : vector<4x64xbf16>, vector<64x64xbf16>, vector<4x64xf32> -> vector<4x64xf32>
    %29 = arith.mulf %28, %28 : vector<4x64xf32>
    %cst_11 = arith.constant dense<0.000000e+00> : vector<4xf32>
    %30 = vector.multi_reduction <add>, %29, %cst_11 [1] : vector<4x64xf32> to vector<4xf32>
    %31 = vector.shape_cast %30 : vector<4xf32> to vector<4x1xf32>
    %cst_12 = arith.constant 9.99999996E-13 : f32
    %32 = vector.broadcast %cst_12 : f32 to vector<4x1xf32>
    %33 = arith.addf %31, %32 : vector<4x1xf32>
    %34 = math.rsqrt %33 : vector<4x1xf32>
    %35 = vector.broadcast %34 : vector<4x1xf32> to vector<4x64xf32>
    %36 = arith.mulf %28, %35 : vector<4x64xf32>
    %c0_13 = arith.constant 0 : index
    %c0_14 = arith.constant 0 : index
    %37 = vector.load %arg4[%c0_13, %c0_14] : memref<4x64xf32, #tpu.memory_space<vmem>>, vector<4x64xf32>
    tpu.vector_store %arg4[%c0_13, %c0_14], %36 {strides = array<i32>} : memref<4x64xf32, #tpu.memory_space<vmem>>, vector<4x64xf32>,
    return
  }
  func.func @transform_0(%arg0: i32) -> (i32, i32) {
    %c0_i32 = arith.constant 0 : i32
    %c0_i32_0 = arith.constant 0 : i32
    %c0_i32_1 = arith.constant 0 : i32
    return %c0_i32, %c0_i32_0 : i32, i32
  }
  func.func @transform_1(%arg0: i32) -> (i32, i32) {
    %c0_i32 = arith.constant 0 : i32
    %c0_i32_0 = arith.constant 0 : i32
    %c0_i32_1 = arith.constant 0 : i32
    return %c0_i32, %c0_i32_0 : i32, i32
  }
  func.func @transform_2(%arg0: i32) -> (i32, i32) {
    %c0_i32 = arith.constant 0 : i32
    %c0_i32_0 = arith.constant 0 : i32
    %c0_i32_1 = arith.constant 0 : i32
    return %c0_i32, %c0_i32_0 : i32, i32
  }
  func.func @transform_3(%arg0: i32) -> (i32, i32) {
    %c0_i32 = arith.constant 0 : i32
    %c0_i32_0 = arith.constant 0 : i32
    %c0_i32_1 = arith.constant 0 : i32
    return %c0_i32, %c0_i32_0 : i32, i32
  }
}

module attributes {stable_mosaic.version = 11 : i64} {
  func.func @_visual_head_kernel(%arg0: i32, %arg1: memref<2x64xbf16, #tpu.memory_space<vmem>>, %arg2: memref<2x64xf32, #tpu.memory_space<vmem>>, %arg3: memref<64x64xbf16, #tpu.memory_space<vmem>>, %arg4: memref<4x64xf32, #tpu.memory_space<vmem>>, %arg5: memref<1x1xf32, #tpu.memory_space<smem>>, %arg6: memref<2x4xf32, #tpu.memory_space<vmem>>) attributes {dimension_semantics = [#tpu.dimension_semantics<arbitrary>], iteration_bounds = array<i64: 1>, scalar_prefetch = 0 : i64, scratch_operands = 0 : i64, tpu.core_type = #tpu.core_type<tc>, window_params = [{pipeline_mode = #tpu.pipeline_mode<synchronous>, transform_indices = @transform_0, window_bounds = array<i64: 2, 64>}, {pipeline_mode = #tpu.pipeline_mode<synchronous>, transform_indices = @transform_1, window_bounds = array<i64: 2, 64>}, {pipeline_mode = #tpu.pipeline_mode<synchronous>, transform_indices = @transform_2, window_bounds = array<i64: 64, 64>}, {pipeline_mode = #tpu.pipeline_mode<synchronous>, transform_indices = @transform_3, window_bounds = array<i64: 4, 64>}, {transform_indices = @transform_4, window_bounds = array<i64: 1, 1>}, {pipeline_mode = #tpu.pipeline_mode<synchronous>, transform_indices = @transform_5, window_bounds = array<i64: 2, 4>}]} {
    %c0 = arith.constant 0 : index
    %c0_0 = arith.constant 0 : index
    %0 = vector.load %arg1[%c0, %c0_0] : memref<2x64xbf16, #tpu.memory_space<vmem>>, vector<2x64xbf16>
    %1 = arith.extf %0 : vector<2x64xbf16> to vector<2x64xf32>
    %c0_1 = arith.constant 0 : index
    %c0_2 = arith.constant 0 : index
    %2 = vector.load %arg2[%c0_1, %c0_2] : memref<2x64xf32, #tpu.memory_space<vmem>>, vector<1x64xf32>
    %c1 = arith.constant 1 : index
    %c0_3 = arith.constant 0 : index
    %3 = vector.load %arg2[%c1, %c0_3] : memref<2x64xf32, #tpu.memory_space<vmem>>, vector<1x64xf32>
    %cst = arith.constant dense<0.000000e+00> : vector<2xf32>
    %4 = vector.multi_reduction <add>, %1, %cst [1] : vector<2x64xf32> to vector<2xf32>
    %5 = vector.shape_cast %4 : vector<2xf32> to vector<2x1xf32>
    %cst_4 = arith.constant 6.400000e+01 : f32
    %6 = vector.broadcast %cst_4 : f32 to vector<2x1xf32>
    %7 = arith.divf %5, %6 : vector<2x1xf32>
    %8 = vector.broadcast %7 : vector<2x1xf32> to vector<2x64xf32>
    %9 = arith.subf %1, %8 : vector<2x64xf32>
    %10 = arith.mulf %9, %9 : vector<2x64xf32>
    %cst_5 = arith.constant dense<0.000000e+00> : vector<2xf32>
    %11 = vector.multi_reduction <add>, %10, %cst_5 [1] : vector<2x64xf32> to vector<2xf32>
    %12 = vector.shape_cast %11 : vector<2xf32> to vector<2x1xf32>
    %cst_6 = arith.constant 6.400000e+01 : f32
    %13 = vector.broadcast %cst_6 : f32 to vector<2x1xf32>
    %14 = arith.divf %12, %13 : vector<2x1xf32>
    %15 = vector.broadcast %7 : vector<2x1xf32> to vector<2x64xf32>
    %16 = arith.subf %1, %15 : vector<2x64xf32>
    %cst_7 = arith.constant 9.99999974E-6 : f32
    %17 = vector.broadcast %cst_7 : f32 to vector<2x1xf32>
    %18 = arith.addf %14, %17 : vector<2x1xf32>
    %19 = math.rsqrt %18 : vector<2x1xf32>
    %20 = vector.broadcast %19 : vector<2x1xf32> to vector<2x64xf32>
    %21 = arith.mulf %16, %20 : vector<2x64xf32>
    %22 = vector.broadcast %2 : vector<1x64xf32> to vector<2x64xf32>
    %23 = arith.mulf %21, %22 : vector<2x64xf32>
    %24 = vector.broadcast %3 : vector<1x64xf32> to vector<2x64xf32>
    %25 = arith.addf %23, %24 : vector<2x64xf32>
    %26 = arith.truncf %25 : vector<2x64xf32> to vector<2x64xbf16>
    %c0_8 = arith.constant 0 : index
    %c0_9 = arith.constant 0 : index
    %27 = vector.load %arg3[%c0_8, %c0_9] : memref<64x64xbf16, #tpu.memory_space<vmem>>, vector<64x64xbf16>
    %cst_10 = arith.constant dense<0.000000e+00> : vector<2x64xf32>
    %28 = tpu.matmul %26, %27, %cst_10 {dimension_numbers = #tpu.dot_dimension_numbers<[1], [0], [0], [1], [0, 0, 1, 1], [], []>} : vector<2x64xbf16>, vector<64x64xbf16>, vector<2x64xf32> -> vector<2x64xf32>
    %29 = arith.mulf %28, %28 : vector<2x64xf32>
    %cst_11 = arith.constant dense<0.000000e+00> : vector<2xf32>
    %30 = vector.multi_reduction <add>, %29, %cst_11 [1] : vector<2x64xf32> to vector<2xf32>
    %31 = vector.shape_cast %30 : vector<2xf32> to vector<2x1xf32>
    %cst_12 = arith.constant 9.99999996E-13 : f32
    %32 = vector.broadcast %cst_12 : f32 to vector<2x1xf32>
    %33 = arith.addf %31, %32 : vector<2x1xf32>
    %34 = math.rsqrt %33 : vector<2x1xf32>
    %35 = vector.broadcast %34 : vector<2x1xf32> to vector<2x64xf32>
    %36 = arith.mulf %28, %35 : vector<2x64xf32>
    %c0_13 = arith.constant 0 : index
    %c0_14 = arith.constant 0 : index
    %37 = memref.load %arg5[%c0_13, %c0_14] : memref<1x1xf32, #tpu.memory_space<smem>>
    %c0_15 = arith.constant 0 : index
    %c0_16 = arith.constant 0 : index
    %38 = vector.load %arg4[%c0_15, %c0_16] : memref<4x64xf32, #tpu.memory_space<vmem>>, vector<4x64xf32>
    %39 = tpu.transpose %38, [1, 0] : vector<4x64xf32> -> vector<64x4xf32>
    %cst_17 = arith.constant dense<0.000000e+00> : vector<2x4xf32>
    %40 = tpu.matmul %36, %39, %cst_17 {dimension_numbers = #tpu.dot_dimension_numbers<[1], [0], [0], [1], [0, 0, 1, 1], [], []>} : vector<2x64xf32>, vector<64x4xf32>, vector<2x4xf32> -> vector<2x4xf32>
    %41 = vector.broadcast %37 : f32 to vector<2x4xf32>
    %42 = arith.mulf %41, %40 : vector<2x4xf32>
    %c0_18 = arith.constant 0 : index
    %c0_19 = arith.constant 0 : index
    %43 = vector.load %arg6[%c0_18, %c0_19] : memref<2x4xf32, #tpu.memory_space<vmem>>, vector<2x4xf32>
    tpu.vector_store %arg6[%c0_18, %c0_19], %42 {strides = array<i32>} : memref<2x4xf32, #tpu.memory_space<vmem>>, vector<2x4xf32>,
    return
  }
  func.func @transform_0(%arg0: i32) -> (i32, i32) {
    %c0_i32 = arith.constant 0 : i32
    %c0_i32_0 = arith.constant 0 : i32
    %c0_i32_1 = arith.constant 0 : i32
    return %c0_i32, %c0_i32_0 : i32, i32
  }
  func.func @transform_1(%arg0: i32) -> (i32, i32) {
    %c0_i32 = arith.constant 0 : i32
    %c0_i32_0 = arith.constant 0 : i32
    %c0_i32_1 = arith.constant 0 : i32
    return %c0_i32, %c0_i32_0 : i32, i32
  }
  func.func @transform_2(%arg0: i32) -> (i32, i32) {
    %c0_i32 = arith.constant 0 : i32
    %c0_i32_0 = arith.constant 0 : i32
    %c0_i32_1 = arith.constant 0 : i32
    return %c0_i32, %c0_i32_0 : i32, i32
  }
  func.func @transform_3(%arg0: i32) -> (i32, i32) {
    %c0_i32 = arith.constant 0 : i32
    %c0_i32_0 = arith.constant 0 : i32
    %c0_i32_1 = arith.constant 0 : i32
    return %c0_i32, %c0_i32_0 : i32, i32
  }
  func.func @transform_4(%arg0: i32) -> (i32, i32) {
    %c0_i32 = arith.constant 0 : i32
    %c0_i32_0 = arith.constant 0 : i32
    %c0_i32_1 = arith.constant 0 : i32
    return %c0_i32, %c0_i32_0 : i32, i32
  }
  func.func @transform_5(%arg0: i32) -> (i32, i32) {
    %c0_i32 = arith.constant 0 : i32
    %c0_i32_0 = arith.constant 0 : i32
    %c0_i32_1 = arith.constant 0 : i32
    return %c0_i32, %c0_i32_0 : i32, i32
  }
}

</mosaic_0001>

<llo_original>
// kernel: custom_clip_forward.7
$region0: #{custom_clip_forward.7}
  #allocation0 [shape = 'u32[]', space=smem, size = 0x4, offset = 0x4, fixed_abs, tag = 'smem constant byte address 0x4 - core index']
  #allocation1 [shape = 'u32[144,128]{1,0:T(1,128)}', space=vmem, size = 0x12000, scoped, tag = 'internal scratch']
  %s0 = inlined_call_operand.vmem [shape: bf16[2,16,48], index: 0, kind: input, shape index: {}]
  %s1 = inlined_call_operand.vmem [shape: bf16[48,64], index: 1, kind: input, shape index: {}]
  %s2 = inlined_call_operand.vmem [shape: f32[19,64], index: 2, kind: input, shape index: {}]
  %s3 = inlined_call_operand.vmem [shape: bf16[2,17,64], index: 3, kind: output, shape index: {}]
  %s4 = sld [smem:[#allocation0]]
  $region45: #{custom_clip_forward.7} parent=0
    _
  %s6 = ssub.s32 1, %s4
  %s7 = scalar_select 0, %s6, %s4
  loop: start=0, step=1, limit=4
  $region2: #{custom_clip_forward.7} parent=0 // loop_pre_header
    _
  $region3: #{custom_clip_forward.7} parent=0 // loop_header
    %s9 = sphi 0, %s13
    %p10 = scmp.ge.s32.totalorder %s9, 4
    %s19 = sphi 0, %s21
    %s22 = sphi 0, %s19
    %s23 = sphi 0, %s22
    %s39 = sphi 0, %s23
    %s43 = sphi 0, %s43
    %s45 = sphi 0, %s43
    %s46 = sphi 0, %s45
    %s60 = sphi 0, %s46
    %s64 = sphi 0, %s64
    %s66 = sphi 0, %s64
    %s67 = sphi 0, %s66
    %s81 = sphi 0, %s67
    %s87 = sphi 0, %s89
    %s90 = sphi 0, %s87
    %s91 = sphi 0, %s90
    %s107 = sphi 0, %s91
  $region4: #{custom_clip_forward.7} parent=0 // loop_header_branch
    %12 = sbr.rel (%p10) target = $region8
  $region5: #{custom_clip_forward.7} parent=0 // loop_body
    %s14 = ssub.s32 %s9, 1
    %s15 = ssub.s32 %s9, 2
    %s16 = sadd.s32 %s9, 1
    %s17 = ssub.s32 %s9, %s16
    %p18 = scmp.eq.s32.totalorder %s17, 0
    %s20 = sadd.s32 %s19, 1
    %s21 = scalar_select %p18, %s19, %s20
    %p24 = pneg %p18
    %p25 = scmp.eq.s32.totalorder %s9, 1
    %p26 = por %p24, %p25
    %p27 = scmp.ne.s32.totalorder %s19, %s22
    %p28 = scmp.eq.s32.totalorder %s9, 0
    %p29 = por %p27, %p28
    %p30 = scmp.ne.s32.totalorder %s19, %s22
    %p31 = scmp.eq.s32.totalorder %s14, 1
    %p32 = por %p30, %p31
    %p33 = scmp.ne.s32.totalorder %s22, %s23
    %p34 = scmp.eq.s32.totalorder %s14, 0
    %p35 = por %p33, %p34
    %p36 = scmp.ne.s32.totalorder %s22, %s23
    %p37 = scmp.eq.s32.totalorder %s15, 1
    %p38 = por %p36, %p37
    %p40 = scmp.ne.s32.totalorder %s23, %s39
    %p41 = scmp.eq.s32.totalorder %s15, 0
    %p42 = por %p40, %p41
    %s44 = sadd.s32 %s43, 1
    %p47 = scmp.eq.s32.totalorder %s9, 1
    %p48 = scmp.ne.s32.totalorder %s43, %s45
    %p49 = scmp.eq.s32.totalorder %s9, 0
    %p50 = por %p48, %p49
    %p51 = scmp.ne.s32.totalorder %s43, %s45
    %p52 = scmp.eq.s32.totalorder %s14, 1
    %p53 = por %p51, %p52
    %p54 = scmp.ne.s32.totalorder %s45, %s46
    %p55 = scmp.eq.s32.totalorder %s14, 0
    %p56 = por %p54, %p55
    %p57 = scmp.ne.s32.totalorder %s45, %s46
    %p58 = scmp.eq.s32.totalorder %s15, 1
    %p59 = por %p57, %p58
    %p61 = scmp.ne.s32.totalorder %s46, %s60
    %p62 = scmp.eq.s32.totalorder %s15, 0
    %p63 = por %p61, %p62
    %s65 = sadd.s32 %s64, 1
    %p68 = scmp.eq.s32.totalorder %s9, 1
    %p69 = scmp.ne.s32.totalorder %s64, %s66
    %p70 = scmp.eq.s32.totalorder %s9, 0
    %p71 = por %p69, %p70
    %p72 = scmp.ne.s32.totalorder %s64, %s66
    %p73 = scmp.eq.s32.totalorder %s14, 1
    %p74 = por %p72, %p73
    %p75 = scmp.ne.s32.totalorder %s66, %s67
    %p76 = scmp.eq.s32.totalorder %s14, 0
    %p77 = por %p75, %p76
    %p78 = scmp.ne.s32.totalorder %s66, %s67
    %p79 = scmp.eq.s32.totalorder %s15, 1
    %p80 = por %p78, %p79
    %p82 = scmp.ne.s32.totalorder %s67, %s81
    %p83 = scmp.eq.s32.totalorder %s15, 0
    %p84 = por %p82, %p83
    %s85 = ssub.s32 %s9, %s16
    %p86 = scmp.eq.s32.totalorder %s85, 0
    %s88 = sadd.s32 %s87, 1
    %s89 = scalar_select %p86, %s87, %s88
    %p92 = pneg %p86
    %p93 = scmp.eq.s32.totalorder %s9, 1
    %p94 = por %p92, %p93
    %p95 = scmp.ne.s32.totalorder %s87, %s90
    %p96 = scmp.eq.s32.totalorder %s9, 0
    %p97 = por %p95, %p96
    %p98 = scmp.ne.s32.totalorder %s87, %s90
    %p99 = scmp.eq.s32.totalorder %s14, 1
    %p100 = por %p98, %p99
    %p101 = scmp.ne.s32.totalorder %s90, %s91
    %p102 = scmp.eq.s32.totalorder %s14, 0
    %p103 = por %p101, %p102
    %p104 = scmp.ne.s32.totalorder %s90, %s91
    %p105 = scmp.eq.s32.totalorder %s15, 1
    %p106 = por %p104, %p105
    %p108 = scmp.ne.s32.totalorder %s91, %s107
    %p109 = scmp.eq.s32.totalorder %s15, 0
    %p110 = por %p108, %p109
    %p111 = scmp.le.s32.totalorder 1, %s9
    %p112 = scmp.lt.s32.totalorder %s9, 3
    %p113 = pnand %p111, %p112
    %p114 = pneg %p113
    // Predicated region
    $region9: #{custom_clip_forward.7} parent=5 // pred_check
      _
    $region10: #{custom_clip_forward.7} parent=5 // pred_check_branch
      %116 = sbr.rel (%p113) target = $region12
    $region11: #{custom_clip_forward.7} parent=5 // pred_region
      %s117 = ssub.s32 %s9, 1
      // Predicated region
      $region13: #{custom_clip_forward.7} parent=11 // pred_check
        %p118 = pneg %p56
      $region14: #{custom_clip_forward.7} parent=11 // pred_check_branch
        %120 = sbr.rel (%p118) target = $region16
      $region15: #{custom_clip_forward.7} parent=11 // pred_region
        _
      $region16: #{custom_clip_forward.7} parent=11 // pred_fallthru
        _
      // Predicated region
      $region17: #{custom_clip_forward.7} parent=11 // pred_check
        %p121 = pneg %p77
      $region18: #{custom_clip_forward.7} parent=11 // pred_check_branch
        %123 = sbr.rel (%p121) target = $region20
      $region19: #{custom_clip_forward.7} parent=11 // pred_region
        _
      $region20: #{custom_clip_forward.7} parent=11 // pred_fallthru
        _
    $region12: #{custom_clip_forward.7} parent=5 // pred_fallthru
      _
    %p124 = scmp.lt.s32.totalorder %s9, 2
    // Predicated region
    $region21: #{custom_clip_forward.7} parent=5 // pred_check
      %p125 = pneg %p124
    $region22: #{custom_clip_forward.7} parent=5 // pred_check_branch
      %127 = sbr.rel (%p125) target = $region24
    $region23: #{custom_clip_forward.7} parent=5 // pred_region
      // Predicated region
      $region25: #{custom_clip_forward.7} parent=23 // pred_check
        %p128 = pneg %p29
      $region26: #{custom_clip_forward.7} parent=23 // pred_check_branch
        %130 = sbr.rel (%p128) target = $region28
      $region27: #{custom_clip_forward.7} parent=23 // pred_region
        %p131 = scmp.lt.s32.totalorder %s9, 1
        %s132 = scalar_select %p131, %s9, 1
        %s133 = smul.addr %s132, 2
        %s134 = smul.addr %s133, 4
        %s135 = scalar_lea.vmem %s0, %s134
      $region28: #{custom_clip_forward.7} parent=23 // pred_fallthru
        _
    $region24: #{custom_clip_forward.7} parent=5 // pred_fallthru
      _
    %p136 = scmp.le.s32.totalorder 1, %s9
    %p137 = scmp.lt.s32.totalorder %s9, 3
    %p138 = pnand %p136, %p137
    %p139 = pneg %p138
    // Predicated region
    $region29: #{custom_clip_forward.7} parent=5 // pred_check
      _
    $region30: #{custom_clip_forward.7} parent=5 // pred_check_branch
      %141 = sbr.rel (%p138) target = $region32
    $region31: #{custom_clip_forward.7} parent=5 // pred_region
      %s142 = ssub.s32 %s9, 1
      %p143 = scmp.lt.s32.totalorder %s14, 1
      %s144 = scalar_select %p143, %s14, 1
      %s145 = smul.addr %s144, 2
      %s146 = smul.addr %s145, 4
      %s147 = scalar_lea.vmem %s0, %s146
      %p148 = pneg %p35
      %p149 = pneg %p32
      %p150 = pneg %p56
      %p151 = pneg %p53
      %p152 = pneg %p77
      %p153 = pneg %p74
      %p154 = pneg %p103
      %p155 = pneg %p100
      %p156 = scmp.lt.s32.totalorder %s14, 1
      %s157 = scalar_select %p156, %s14, 1
      %s158 = smul.addr %s157, 3
      %s159 = smul.addr %s158, 4
      %s160 = scalar_lea.vmem %s3, %s159
      %p161 = scmp.lt.s32.totalorder %s14, 1
      %s162 = scalar_select %p161, %s14, 1
      %s163 = smul.addr %s162, 2
      %s164 = smul.addr %s163, 4
      %s165 = scalar_lea.vmem %s0, %s164
      %p166 = scmp.lt.s32.totalorder %s14, 1
      %s167 = scalar_select %p166, %s14, 1
      %s168 = smul.addr %s167, 3
      %s169 = smul.addr %s168, 4
      %s170 = scalar_lea.vmem %s3, %s169
      %v172 = vld [vmem:[%s2] sm:$0xff]
      %v173 = vld [vmem:[%s2 + $0x8] sm:$0xff]
      %v174 = vld [vmem:[%s2 + $0x10] sm:$0x1]
      %v175 = vld [vmem:[%s2 + $0x11] sm:$0x1]
      %v176 = vld [vmem:[%s2 + $0x12] sm:$0x1]
      %v177 = vld [vmem:[%s165] sm:$0xf]
      %v178 = vld [vmem:[%s165 + $0x4] sm:$0xf]
      %v179 = vld [vmem:[%s1] sm:$0xf]
      %v180 = vld [vmem:[%s1 + $0x4] sm:$0xf]
      %v181 = vld [vmem:[%s1 + $0x8] sm:$0xf]
      %v182 = vld [vmem:[%s1 + $0xc] sm:$0xf]
      %v183 = vld [vmem:[%s1 + $0x10] sm:$0xf]
      %v184 = vld [vmem:[%s1 + $0x14] sm:$0xf]
      %v187 = vunpack.c.l.b16 %v177
      %v188 = vunpack.c.l.b16 %v178
      %v189 = vpack.c.b16 %v188, %v187
      %v196 = vunpack.c.l.b16 %v179
      %v197 = vunpack.c.l.b16 %v180
      %v198 = vunpack.c.l.b16 %v181
      %v199 = vunpack.c.l.b16 %v182
      %v200 = vunpack.c.l.b16 %v183
      %v201 = vunpack.c.l.b16 %v184
      %v202 = vpack.c.b16 %v197, %v196
      %v203 = vpack.c.b16 %v199, %v198
      %v204 = vpack.c.b16 %v201, %v200
      %vm208 = vcmask 392192
      %v210 = vsel %vm208, %v189, 0
      %212 = vmatprep.subr.bf16.mxu0 0
      %213 = vmatpush1.bf16.msra.mxu0 %v202
      %214 = vmatprep.subr.bf16.mxu0 0
      %215 = vmatpush1.bf16.msra.mxu0 %v203
      %216 = vmatprep.subr.bf16.mxu0 0
      %217 = vmatpush1.bf16.msra.mxu0 %v204
      %218 = vmatprep.subr.bf16.mxu0 0
      %219 = vmatpush1.bf16.msra.mxu0 0
      %220 = vmatprep.subr.bf16.mxu0 0
      %221 = vmatpush1.bf16.msra.mxu0 0
      %222 = vmatprep.subr.bf16.mxu0 0
      %223 = vmatpush1.bf16.msra.mxu0 0
      %224 = vmatprep.subr.bf16.mxu0 0
      %225 = vmatpush1.bf16.msra.mxu0 0
      %226 = vmatprep.subr.bf16.mxu0 0
      %227 = vmatpush1.bf16.msra.mxu0 0
      %228 = vmatprep.subr.bf16.mxu0 0
      %229 = vmatpush1.bf16.msra.mxu0 0
      %230 = vmatprep.subr.bf16.mxu0 0
      %231 = vmatpush1.bf16.msra.mxu0 0
      %232 = vmatprep.subr.bf16.mxu0 0
      %233 = vmatpush1.bf16.msra.mxu0 0
      %234 = vmatprep.subr.bf16.mxu0 0
      %235 = vmatpush1.bf16.msra.mxu0 0
      %236 = vmatprep.subr.bf16.mxu0 0
      %237 = vmatpush1.bf16.msra.mxu0 0
      %238 = vmatprep.subr.bf16.mxu0 0
      %239 = vmatpush1.bf16.msra.mxu0 0
      %240 = vmatprep.subr.bf16.mxu0 0
      %241 = vmatpush1.bf16.msra.mxu0 0
      %242 = vmatprep.subr.bf16.mxu0 0
      %243 = vmatpush1.bf16.msra.mxu0 0
      %244 = vmatprep.mubr.bf16.mxu0 0
      %245 = vmatmul.mubr.bf16.gmra.mrb[0].mxu0 %v210
      %v246 = vpop.f32.mrb[0].mxu0
      %v247 = vadd.f32 %v172, %v246
      %v248 = vpop.f32.mrb[0].mxu0
      %v249 = vpop.f32.mrb[0].mxu0
      %v250 = vadd.f32 %v173, %v249
      %v251 = vpop.f32.mrb[0].mxu0
      %252 = vdwg.mxu0
      %vm255 = vcmask 1040384
      %v256 = vrot.slane %v247, 7
      %v257 = vrot.slane %v250, 7
      %v258 = vsel %vm255, %v256, %v257
      %v262 = vsel %vm255, %v174, %v256
      %vm263 = vcmask 523264
      %v264 = vsel %vm263, %v262, 0.0
      %265 = vadd.xlane.f32.xlu0 %v264
      %v266 = vpop.xlane.xlu0 %265
      %v267 = vsel %vm263, %v258, 0.0
      %268 = vadd.xlane.f32.xlu0 %v267
      %v269 = vpop.xlane.xlu0 %268
      %vm270 = vcmask 516096
      %v271 = vsel %vm270, %v257, 0.0
      %272 = vadd.xlane.f32.xlu0 %v271
      %v273 = vpop.xlane.xlu0 %272
      %v274 = vrcp.pop 64.0
      %v275 = vmul.f32 %v266, %v274
      %v276 = vmul.f32 %v269, %v274
      %v277 = vmul.f32 %v273, %v274
      %v278 = vsub.f32 %v262, %v275
      %v279 = vsub.f32 %v258, %v276
      %v280 = vsub.f32 %v257, %v277
      %v281 = vmul.f32 %v278, %v278
      %v282 = vmul.f32 %v279, %v279
      %v283 = vmul.f32 %v280, %v280
      %v284 = vsel %vm263, %v281, 0.0
      %285 = vadd.xlane.f32.xlu0 %v284
      %v286 = vpop.xlane.xlu0 %285
      %v287 = vsel %vm263, %v282, 0.0
      %288 = vadd.xlane.f32.xlu0 %v287
      %v289 = vpop.xlane.xlu0 %288
      %v290 = vsel %vm270, %v283, 0.0
      %291 = vadd.xlane.f32.xlu0 %v290
      %v292 = vpop.xlane.xlu0 %291
      %v293 = vmul.f32 %v286, %v274
      %v294 = vmul.f32 %v289, %v274
      %v295 = vmul.f32 %v292, %v274
      %v296 = vadd.f32 %v293, 1e-05
      %v297 = vadd.f32 %v294, 1e-05
      %v298 = vadd.f32 %v295, 1e-05
      %v299 = vrsqrt.pop %v296
      %v300 = vrsqrt.pop %v297
      %v301 = vrsqrt.pop %v298
      %v302 = vmul.f32 %v278, %v299
      %v303 = vmul.f32 %v279, %v300
      %v304 = vmul.f32 %v280, %v301
      %v305 = vlaneseq
      %v306 = vshrl.u32 %v305, 7
      %v307 = vsub.s32 0, %v306
      %v308 = vrot.slane %v175, %v307
      %v309 = vmul.f32 %v302, %v308
      %v310 = vmul.f32 %v303, %v308
      %v311 = vmul.f32 %v304, %v308
      %v312 = vlaneseq
      %v313 = vshrl.u32 %v312, 7
      %v314 = vsub.s32 0, %v313
      %v315 = vrot.slane %v176, %v314
      %v316 = vadd.f32 %v309, %v315
      %v317 = vadd.f32 %v310, %v315
      %v318 = vadd.f32 %v311, %v315
      %v319 = vpack.c.bf16 %v317, %v316
      %v320 = vpack.c.bf16 %v318, %v318
      %v323 = vunpack.c.l.b16 %v319
      %v324 = vunpack.c.h.b16 %v319
      %v325 = vunpack.c.l.b16 %v320
      %v326 = vpack.c.b16 %v323, %v323
      %v327 = vpack.c.b16 %v324, %v324
      %v328 = vpack.c.b16 %v325, %v325
      %vm332 = vcmask 519168
      %333 = vst.msk [vmem:[%s170] sm:$0xf] %vm332, %v326
      %334 = vst.msk [vmem:[%s170 + $0x4] sm:$0xf] %vm332, %v327
      %vm335 = vcmask 516096
      %vm336 = vsmask.f32 256
      %vm337 = vmand %vm335, %vm336
      %v338 = vld [vmem:[%s170 + $0x8] sm:$0x1]
      %v339 = vsel %vm337, %v328, %v338
      %340 = vst [vmem:[%s170 + $0x8] sm:$0x1] %v339
      %p341 = scmp.lt.s32.totalorder %s14, 1
      %s342 = scalar_select %p341, %s14, 1
      %s343 = smul.addr %s342, 3
      %s344 = smul.addr %s343, 4
      %s345 = scalar_lea.vmem %s3, %s344
      // Predicated region
      $region33: #{custom_clip_forward.7} parent=31 // pred_check
        %p346 = pneg %p100
      $region34: #{custom_clip_forward.7} parent=31 // pred_check_branch
        %348 = sbr.rel (%p346) target = $region36
      $region35: #{custom_clip_forward.7} parent=31 // pred_region
        _
      $region36: #{custom_clip_forward.7} parent=31 // pred_fallthru
        _
    $region32: #{custom_clip_forward.7} parent=5 // pred_fallthru
      _
    %p349 = scmp.le.s32.totalorder 2, %s9
    // Predicated region
    $region37: #{custom_clip_forward.7} parent=5 // pred_check
      %p350 = pneg %p349
    $region38: #{custom_clip_forward.7} parent=5 // pred_check_branch
      %352 = sbr.rel (%p350) target = $region40
    $region39: #{custom_clip_forward.7} parent=5 // pred_region
      %s353 = ssub.s32 %s9, 2
      // Predicated region
      $region41: #{custom_clip_forward.7} parent=39 // pred_check
        %p354 = pneg %p106
      $region42: #{custom_clip_forward.7} parent=39 // pred_check_branch
        %356 = sbr.rel (%p354) target = $region44
      $region43: #{custom_clip_forward.7} parent=39 // pred_region
        %p357 = scmp.lt.s32.totalorder %s15, 1
        %s358 = scalar_select %p357, %s15, 1
        %s359 = smul.addr %s358, 3
        %s360 = smul.addr %s359, 4
        %s361 = scalar_lea.vmem %s3, %s360
      $region44: #{custom_clip_forward.7} parent=39 // pred_fallthru
        _
    $region40: #{custom_clip_forward.7} parent=5 // pred_fallthru
      _
  $region6: #{custom_clip_forward.7} parent=0 // loop_footer
    %s13 = sadd.s32 1, %s9
  $region7: #{custom_clip_forward.7} parent=0 // loop_footer_branch
    %8 = sbr.rel target = $region3
  $region8: #{custom_clip_forward.7} parent=0 // loop_exit
    _

// kernel: custom_clip_forward.6
$region0: #{custom_clip_forward.6}
  #allocation0 [shape = 'u32[]', space=smem, size = 0x4, offset = 0x4, fixed_abs, tag = 'smem constant byte address 0x4 - core index']
  #allocation1 [shape = 'u32[144,128]{1,0:T(1,128)}', space=vmem, size = 0x12000, scoped, tag = 'internal scratch']
  %s0 = inlined_call_operand.vmem [shape: bf16[4,64], index: 0, kind: input, shape index: {}]
  %s1 = inlined_call_operand.vmem [shape: f32[2,64], index: 1, kind: input, shape index: {}]
  %s2 = inlined_call_operand.vmem [shape: bf16[64,64], index: 2, kind: input, shape index: {}]
  %s3 = inlined_call_operand.vmem [shape: f32[4,64], index: 3, kind: output, shape index: {}]
  %s4 = sld [smem:[#allocation0]]
  $region22: #{custom_clip_forward.6} parent=0
    _
  %s6 = ssub.s32 1, %s4
  %s7 = scalar_select 0, %s6, %s4
  // Predicated region
  $region2: #{custom_clip_forward.6} parent=0 // pred_check
    _
  $region3: #{custom_clip_forward.6} parent=0 // pred_check_branch
    %9 = sbr.rel (0) target = $region5
  $region4: #{custom_clip_forward.6} parent=0 // pred_region
    _
  $region5: #{custom_clip_forward.6} parent=0 // pred_fallthru
    _
  // Predicated region
  $region6: #{custom_clip_forward.6} parent=0 // pred_check
    _
  $region7: #{custom_clip_forward.6} parent=0 // pred_check_branch
    %11 = sbr.rel (0) target = $region9
  $region8: #{custom_clip_forward.6} parent=0 // pred_region
    _
  $region9: #{custom_clip_forward.6} parent=0 // pred_fallthru
    _
  // Predicated region
  $region10: #{custom_clip_forward.6} parent=0 // pred_check
    _
  $region11: #{custom_clip_forward.6} parent=0 // pred_check_branch
    %13 = sbr.rel (0) target = $region13
  $region12: #{custom_clip_forward.6} parent=0 // pred_region
    _
  $region13: #{custom_clip_forward.6} parent=0 // pred_fallthru
    _
  %v15 = vld [vmem:[%s0] sm:$0x3]
  %v16 = vunpack.c.l.bf16 %v15
  %v17 = vld [vmem:[%s1] sm:$0x1]
  %v18 = vld [vmem:[%s1 + $0x1] sm:$0x1]
  %vm19 = vcmask 519168
  %v20 = vsel %vm19, %v16, 0.0
  %21 = vadd.xlane.f32.xlu0 %v20
  %v22 = vpop.xlane.xlu0 %21
  %v23 = vrcp.pop 64.0
  %v24 = vmul.f32 %v22, %v23
  %v25 = vsub.f32 %v16, %v24
  %v26 = vmul.f32 %v25, %v25
  %v27 = vsel %vm19, %v26, 0.0
  %28 = vadd.xlane.f32.xlu0 %v27
  %v29 = vpop.xlane.xlu0 %28
  %v30 = vmul.f32 %v29, %v23
  %v31 = vadd.f32 %v30, 1e-05
  %v32 = vrsqrt.pop %v31
  %v33 = vmul.f32 %v25, %v32
  %v34 = vlaneseq
  %v35 = vshrl.u32 %v34, 7
  %v36 = vsub.s32 0, %v35
  %v37 = vrot.slane %v17, %v36
  %v38 = vmul.f32 %v33, %v37
  %v39 = vlaneseq
  %v40 = vshrl.u32 %v39, 7
  %v41 = vsub.s32 0, %v40
  %v42 = vrot.slane %v18, %v41
  %v43 = vadd.f32 %v38, %v42
  %v44 = vpack.c.bf16 %v43, %v43
  %v45 = vld [vmem:[%s2] sm:$0xf]
  %v46 = vld [vmem:[%s2 + $0x4] sm:$0xf]
  %v47 = vld [vmem:[%s2 + $0x8] sm:$0xf]
  %v48 = vld [vmem:[%s2 + $0xc] sm:$0xf]
  %v49 = vld [vmem:[%s2 + $0x10] sm:$0xf]
  %v50 = vld [vmem:[%s2 + $0x14] sm:$0xf]
  %v51 = vld [vmem:[%s2 + $0x18] sm:$0xf]
  %v52 = vld [vmem:[%s2 + $0x1c] sm:$0xf]
  %v61 = vunpack.c.l.b16 %v45
  %v62 = vunpack.c.l.b16 %v46
  %v63 = vunpack.c.l.b16 %v47
  %v64 = vunpack.c.l.b16 %v48
  %v65 = vunpack.c.l.b16 %v49
  %v66 = vunpack.c.l.b16 %v50
  %v67 = vunpack.c.l.b16 %v51
  %v68 = vunpack.c.l.b16 %v52
  %v69 = vpack.c.b16 %v62, %v61
  %v70 = vpack.c.b16 %v64, %v63
  %v71 = vpack.c.b16 %v66, %v65
  %v72 = vpack.c.b16 %v68, %v67
  %vm77 = vcmask 523264
  %v79 = vsel %vm77, %v44, 0
  %81 = vmatprep.subr.bf16.mxu0 0
  %82 = vmatpush1.bf16.msra.mxu0 %v69
  %83 = vmatprep.subr.bf16.mxu0 0
  %84 = vmatpush1.bf16.msra.mxu0 %v70
  %85 = vmatprep.subr.bf16.mxu0 0
  %86 = vmatpush1.bf16.msra.mxu0 %v71
  %87 = vmatprep.subr.bf16.mxu0 0
  %88 = vmatpush1.bf16.msra.mxu0 %v72
  %89 = vmatprep.subr.bf16.mxu0 0
  %90 = vmatpush1.bf16.msra.mxu0 0
  %91 = vmatprep.subr.bf16.mxu0 0
  %92 = vmatpush1.bf16.msra.mxu0 0
  %93 = vmatprep.subr.bf16.mxu0 0
  %94 = vmatpush1.bf16.msra.mxu0 0
  %95 = vmatprep.subr.bf16.mxu0 0
  %96 = vmatpush1.bf16.msra.mxu0 0
  %97 = vmatprep.subr.bf16.mxu0 0
  %98 = vmatpush1.bf16.msra.mxu0 0
  %99 = vmatprep.subr.bf16.mxu0 0
  %100 = vmatpush1.bf16.msra.mxu0 0
  %101 = vmatprep.subr.bf16.mxu0 0
  %102 = vmatpush1.bf16.msra.mxu0 0
  %103 = vmatprep.subr.bf16.mxu0 0
  %104 = vmatpush1.bf16.msra.mxu0 0
  %105 = vmatprep.subr.bf16.mxu0 0
  %106 = vmatpush1.bf16.msra.mxu0 0
  %107 = vmatprep.subr.bf16.mxu0 0
  %108 = vmatpush1.bf16.msra.mxu0 0
  %109 = vmatprep.subr.bf16.mxu0 0
  %110 = vmatpush1.bf16.msra.mxu0 0
  %111 = vmatprep.subr.bf16.mxu0 0
  %112 = vmatpush1.bf16.msra.mxu0 0
  %113 = vmatprep.mubr.bf16.mxu0 0
  %114 = vmatmul.mubr.bf16.gmra.mrb[0].mxu0 %v79
  %v115 = vpop.f32.mrb[0].mxu0
  %v116 = vadd.f32 0.0, %v115
  %v117 = vpop.f32.mrb[0].mxu0
  %v118 = vpop.f32.mrb[0].mxu0
  %v119 = vpop.f32.mrb[0].mxu0
  %120 = vdwg.mxu0
  %v121 = vmul.f32 %v116, %v116
  %v122 = vsel %vm19, %v121, 0.0
  %123 = vadd.xlane.f32.xlu0 %v122
  %v124 = vpop.xlane.xlu0 %123
  %v125 = vadd.f32 %v124, 1e-12
  %v126 = vrsqrt.pop %v125
  %v127 = vmul.f32 %v116, %v126
  %128 = vst.msk [vmem:[%s3] sm:$0xf] %vm19, %v127
  // Predicated region
  $region14: #{custom_clip_forward.6} parent=0 // pred_check
    _
  $region15: #{custom_clip_forward.6} parent=0 // pred_check_branch
    %130 = sbr.rel (0) target = $region17
  $region16: #{custom_clip_forward.6} parent=0 // pred_region
    _
  $region17: #{custom_clip_forward.6} parent=0 // pred_fallthru
    _
  // Predicated region
  $region18: #{custom_clip_forward.6} parent=0 // pred_check
    _
  $region19: #{custom_clip_forward.6} parent=0 // pred_check_branch
    %132 = sbr.rel (0) target = $region21
  $region20: #{custom_clip_forward.6} parent=0 // pred_region
    _
  $region21: #{custom_clip_forward.6} parent=0 // pred_fallthru
    _

// kernel: custom_clip_forward.8
$region0: #{custom_clip_forward.8}
  #allocation0 [shape = 'u32[]', space=smem, size = 0x4, offset = 0x4, fixed_abs, tag = 'smem constant byte address 0x4 - core index']
  #allocation1 [shape = 'u32[144,128]{1,0:T(1,128)}', space=vmem, size = 0x12000, scoped, tag = 'internal scratch']
  %s0 = inlined_call_operand.vmem [shape: bf16[2,17,64], index: 0, kind: input, shape index: {}, may-alias: {0,8}]
  %s1 = inlined_call_operand.vmem [shape: f32[6,64], index: 1, kind: input, shape index: {}]
  %s2 = inlined_call_operand.vmem [shape: f32[1,192], index: 2, kind: input, shape index: {}]
  %s3 = inlined_call_operand.vmem [shape: f32[1,256], index: 3, kind: input, shape index: {}]
  %s4 = inlined_call_operand.vmem [shape: bf16[64,192], index: 4, kind: input, shape index: {}]
  %s5 = inlined_call_operand.vmem [shape: bf16[64,64], index: 5, kind: input, shape index: {}]
  %s6 = inlined_call_operand.vmem [shape: bf16[64,256], index: 6, kind: input, shape index: {}]
  %s7 = inlined_call_operand.vmem [shape: bf16[256,64], index: 7, kind: input, shape index: {}]
  %s8 = inlined_call_operand.vmem [shape: bf16[2,17,64], index: 8, kind: output, shape index: {}, may-alias: {0,8}]
  %s9 = sld [smem:[#allocation0]]
  $region65: #{custom_clip_forward.8} parent=0
    _
  %s11 = ssub.s32 1, %s9
  %s12 = scalar_select 0, %s11, %s9
  loop: start=0, step=1, limit=4
  $region2: #{custom_clip_forward.8} parent=0 // loop_pre_header
    _
  $region3: #{custom_clip_forward.8} parent=0 // loop_header
    %s14 = sphi 0, %s18
    %p15 = scmp.ge.s32.totalorder %s14, 4
    %s24 = sphi 0, %s26
    %s27 = sphi 0, %s24
    %s28 = sphi 0, %s27
    %s44 = sphi 0, %s28
    %s48 = sphi 0, %s48
    %s50 = sphi 0, %s48
    %s51 = sphi 0, %s50
    %s65 = sphi 0, %s51
    %s69 = sphi 0, %s69
    %s71 = sphi 0, %s69
    %s72 = sphi 0, %s71
    %s86 = sphi 0, %s72
    %s90 = sphi 0, %s90
    %s92 = sphi 0, %s90
    %s93 = sphi 0, %s92
    %s107 = sphi 0, %s93
    %s111 = sphi 0, %s111
    %s113 = sphi 0, %s111
    %s114 = sphi 0, %s113
    %s128 = sphi 0, %s114
    %s132 = sphi 0, %s132
    %s134 = sphi 0, %s132
    %s135 = sphi 0, %s134
    %s149 = sphi 0, %s135
    %s153 = sphi 0, %s153
    %s155 = sphi 0, %s153
    %s156 = sphi 0, %s155
    %s170 = sphi 0, %s156
    %s174 = sphi 0, %s174
    %s176 = sphi 0, %s174
    %s177 = sphi 0, %s176
    %s191 = sphi 0, %s177
    %s197 = sphi 0, %s199
    %s200 = sphi 0, %s197
    %s201 = sphi 0, %s200
    %s217 = sphi 0, %s201
  $region4: #{custom_clip_forward.8} parent=0 // loop_header_branch
    %17 = sbr.rel (%p15) target = $region8
  $region5: #{custom_clip_forward.8} parent=0 // loop_body
    %s19 = ssub.s32 %s14, 1
    %s20 = ssub.s32 %s14, 2
    %s21 = sadd.s32 %s14, 1
    %s22 = ssub.s32 %s14, %s21
    %p23 = scmp.eq.s32.totalorder %s22, 0
    %s25 = sadd.s32 %s24, 1
    %s26 = scalar_select %p23, %s24, %s25
    %p29 = pneg %p23
    %p30 = scmp.eq.s32.totalorder %s14, 1
    %p31 = por %p29, %p30
    %p32 = scmp.ne.s32.totalorder %s24, %s27
    %p33 = scmp.eq.s32.totalorder %s14, 0
    %p34 = por %p32, %p33
    %p35 = scmp.ne.s32.totalorder %s24, %s27
    %p36 = scmp.eq.s32.totalorder %s19, 1
    %p37 = por %p35, %p36
    %p38 = scmp.ne.s32.totalorder %s27, %s28
    %p39 = scmp.eq.s32.totalorder %s19, 0
    %p40 = por %p38, %p39
    %p41 = scmp.ne.s32.totalorder %s27, %s28
    %p42 = scmp.eq.s32.totalorder %s20, 1
    %p43 = por %p41, %p42
    %p45 = scmp.ne.s32.totalorder %s28, %s44
    %p46 = scmp.eq.s32.totalorder %s20, 0
    %p47 = por %p45, %p46
    %s49 = sadd.s32 %s48, 1
    %p52 = scmp.eq.s32.totalorder %s14, 1
    %p53 = scmp.ne.s32.totalorder %s48, %s50
    %p54 = scmp.eq.s32.totalorder %s14, 0
    %p55 = por %p53, %p54
    %p56 = scmp.ne.s32.totalorder %s48, %s50
    %p57 = scmp.eq.s32.totalorder %s19, 1
    %p58 = por %p56, %p57
    %p59 = scmp.ne.s32.totalorder %s50, %s51
    %p60 = scmp.eq.s32.totalorder %s19, 0
    %p61 = por %p59, %p60
    %p62 = scmp.ne.s32.totalorder %s50, %s51
    %p63 = scmp.eq.s32.totalorder %s20, 1
    %p64 = por %p62, %p63
    %p66 = scmp.ne.s32.totalorder %s51, %s65
    %p67 = scmp.eq.s32.totalorder %s20, 0
    %p68 = por %p66, %p67
    %s70 = sadd.s32 %s69, 1
    %p73 = scmp.eq.s32.totalorder %s14, 1
    %p74 = scmp.ne.s32.totalorder %s69, %s71
    %p75 = scmp.eq.s32.totalorder %s14, 0
    %p76 = por %p74, %p75
    %p77 = scmp.ne.s32.totalorder %s69, %s71
    %p78 = scmp.eq.s32.totalorder %s19, 1
    %p79 = por %p77, %p78
    %p80 = scmp.ne.s32.totalorder %s71, %s72
    %p81 = scmp.eq.s32.totalorder %s19, 0
    %p82 = por %p80, %p81
    %p83 = scmp.ne.s32.totalorder %s71, %s72
    %p84 = scmp.eq.s32.totalorder %s20, 1
    %p85 = por %p83, %p84
    %p87 = scmp.ne.s32.totalorder %s72, %s86
    %p88 = scmp.eq.s32.totalorder %s20, 0
    %p89 = por %p87, %p88
    %s91 = sadd.s32 %s90, 1
    %p94 = scmp.eq.s32.totalorder %s14, 1
    %p95 = scmp.ne.s32.totalorder %s90, %s92
    %p96 = scmp.eq.s32.totalorder %s14, 0
    %p97 = por %p95, %p96
    %p98 = scmp.ne.s32.totalorder %s90, %s92
    %p99 = scmp.eq.s32.totalorder %s19, 1
    %p100 = por %p98, %p99
    %p101 = scmp.ne.s32.totalorder %s92, %s93
    %p102 = scmp.eq.s32.totalorder %s19, 0
    %p103 = por %p101, %p102
    %p104 = scmp.ne.s32.totalorder %s92, %s93
    %p105 = scmp.eq.s32.totalorder %s20, 1
    %p106 = por %p104, %p105
    %p108 = scmp.ne.s32.totalorder %s93, %s107
    %p109 = scmp.eq.s32.totalorder %s20, 0
    %p110 = por %p108, %p109
    %s112 = sadd.s32 %s111, 1
    %p115 = scmp.eq.s32.totalorder %s14, 1
    %p116 = scmp.ne.s32.totalorder %s111, %s113
    %p117 = scmp.eq.s32.totalorder %s14, 0
    %p118 = por %p116, %p117
    %p119 = scmp.ne.s32.totalorder %s111, %s113
    %p120 = scmp.eq.s32.totalorder %s19, 1
    %p121 = por %p119, %p120
    %p122 = scmp.ne.s32.totalorder %s113, %s114
    %p123 = scmp.eq.s32.totalorder %s19, 0
    %p124 = por %p122, %p123
    %p125 = scmp.ne.s32.totalorder %s113, %s114
    %p126 = scmp.eq.s32.totalorder %s20, 1
    %p127 = por %p125, %p126
    %p129 = scmp.ne.s32.totalorder %s114, %s128
    %p130 = scmp.eq.s32.totalorder %s20, 0
    %p131 = por %p129, %p130
    %s133 = sadd.s32 %s132, 1
    %p136 = scmp.eq.s32.totalorder %s14, 1
    %p137 = scmp.ne.s32.totalorder %s132, %s134
    %p138 = scmp.eq.s32.totalorder %s14, 0
    %p139 = por %p137, %p138
    %p140 = scmp.ne.s32.totalorder %s132, %s134
    %p141 = scmp.eq.s32.totalorder %s19, 1
    %p142 = por %p140, %p141
    %p143 = scmp.ne.s32.totalorder %s134, %s135
    %p144 = scmp.eq.s32.totalorder %s19, 0
    %p145 = por %p143, %p144
    %p146 = scmp.ne.s32.totalorder %s134, %s135
    %p147 = scmp.eq.s32.totalorder %s20, 1
    %p148 = por %p146, %p147
    %p150 = scmp.ne.s32.totalorder %s135, %s149
    %p151 = scmp.eq.s32.totalorder %s20, 0
    %p152 = por %p150, %p151
    %s154 = sadd.s32 %s153, 1
    %p157 = scmp.eq.s32.totalorder %s14, 1
    %p158 = scmp.ne.s32.totalorder %s153, %s155
    %p159 = scmp.eq.s32.totalorder %s14, 0
    %p160 = por %p158, %p159
    %p161 = scmp.ne.s32.totalorder %s153, %s155
    %p162 = scmp.eq.s32.totalorder %s19, 1
    %p163 = por %p161, %p162
    %p164 = scmp.ne.s32.totalorder %s155, %s156
    %p165 = scmp.eq.s32.totalorder %s19, 0
    %p166 = por %p164, %p165
    %p167 = scmp.ne.s32.totalorder %s155, %s156
    %p168 = scmp.eq.s32.totalorder %s20, 1
    %p169 = por %p167, %p168
    %p171 = scmp.ne.s32.totalorder %s156, %s170
    %p172 = scmp.eq.s32.totalorder %s20, 0
    %p173 = por %p171, %p172
    %s175 = sadd.s32 %s174, 1
    %p178 = scmp.eq.s32.totalorder %s14, 1
    %p179 = scmp.ne.s32.totalorder %s174, %s176
    %p180 = scmp.eq.s32.totalorder %s14, 0
    %p181 = por %p179, %p180
    %p182 = scmp.ne.s32.totalorder %s174, %s176
    %p183 = scmp.eq.s32.totalorder %s19, 1
    %p184 = por %p182, %p183
    %p185 = scmp.ne.s32.totalorder %s176, %s177
    %p186 = scmp.eq.s32.totalorder %s19, 0
    %p187 = por %p185, %p186
    %p188 = scmp.ne.s32.totalorder %s176, %s177
    %p189 = scmp.eq.s32.totalorder %s20, 1
    %p190 = por %p188, %p189
    %p192 = scmp.ne.s32.totalorder %s177, %s191
    %p193 = scmp.eq.s32.totalorder %s20, 0
    %p194 = por %p192, %p193
    %s195 = ssub.s32 %s14, %s21
    %p196 = scmp.eq.s32.totalorder %s195, 0
    %s198 = sadd.s32 %s197, 1
    %s199 = scalar_select %p196, %s197, %s198
    %p202 = pneg %p196
    %p203 = scmp.eq.s32.totalorder %s14, 1
    %p204 = por %p202, %p203
    %p205 = scmp.ne.s32.totalorder %s197, %s200
    %p206 = scmp.eq.s32.totalorder %s14, 0
    %p207 = por %p205, %p206
    %p208 = scmp.ne.s32.totalorder %s197, %s200
    %p209 = scmp.eq.s32.totalorder %s19, 1
    %p210 = por %p208, %p209
    %p211 = scmp.ne.s32.totalorder %s200, %s201
    %p212 = scmp.eq.s32.totalorder %s19, 0
    %p213 = por %p211, %p212
    %p214 = scmp.ne.s32.totalorder %s200, %s201
    %p215 = scmp.eq.s32.totalorder %s20, 1
    %p216 = por %p214, %p215
    %p218 = scmp.ne.s32.totalorder %s201, %s217
    %p219 = scmp.eq.s32.totalorder %s20, 0
    %p220 = por %p218, %p219
    %p221 = scmp.le.s32.totalorder 1, %s14
    %p222 = scmp.lt.s32.totalorder %s14, 3
    %p223 = pnand %p221, %p222
    %p224 = pneg %p223
    // Predicated region
    $region9: #{custom_clip_forward.8} parent=5 // pred_check
      _
    $region10: #{custom_clip_forward.8} parent=5 // pred_check_branch
      %226 = sbr.rel (%p223) target = $region12
    $region11: #{custom_clip_forward.8} parent=5 // pred_region
      %s227 = ssub.s32 %s14, 1
      // Predicated region
      $region13: #{custom_clip_forward.8} parent=11 // pred_check
        %p228 = pneg %p61
      $region14: #{custom_clip_forward.8} parent=11 // pred_check_branch
        %230 = sbr.rel (%p228) target = $region16
      $region15: #{custom_clip_forward.8} parent=11 // pred_region
        _
      $region16: #{custom_clip_forward.8} parent=11 // pred_fallthru
        _
      // Predicated region
      $region17: #{custom_clip_forward.8} parent=11 // pred_check
        %p231 = pneg %p82
      $region18: #{custom_clip_forward.8} parent=11 // pred_check_branch
        %233 = sbr.rel (%p231) target = $region20
      $region19: #{custom_clip_forward.8} parent=11 // pred_region
        _
      $region20: #{custom_clip_forward.8} parent=11 // pred_fallthru
        _
      // Predicated region
      $region21: #{custom_clip_forward.8} parent=11 // pred_check
        %p234 = pneg %p103
      $region22: #{custom_clip_forward.8} parent=11 // pred_check_branch
        %236 = sbr.rel (%p234) target = $region24
      $region23: #{custom_clip_forward.8} parent=11 // pred_region
        _
      $region24: #{custom_clip_forward.8} parent=11 // pred_fallthru
        _
      // Predicated region
      $region25: #{custom_clip_forward.8} parent=11 // pred_check
        %p237 = pneg %p124
      $region26: #{custom_clip_forward.8} parent=11 // pred_check_branch
        %239 = sbr.rel (%p237) target = $region28
      $region27: #{custom_clip_forward.8} parent=11 // pred_region
        _
      $region28: #{custom_clip_forward.8} parent=11 // pred_fallthru
        _
      // Predicated region
      $region29: #{custom_clip_forward.8} parent=11 // pred_check
        %p240 = pneg %p145
      $region30: #{custom_clip_forward.8} parent=11 // pred_check_branch
        %242 = sbr.rel (%p240) target = $region32
      $region31: #{custom_clip_forward.8} parent=11 // pred_region
        _
      $region32: #{custom_clip_forward.8} parent=11 // pred_fallthru
        _
      // Predicated region
      $region33: #{custom_clip_forward.8} parent=11 // pred_check
        %p243 = pneg %p166
      $region34: #{custom_clip_forward.8} parent=11 // pred_check_branch
        %245 = sbr.rel (%p243) target = $region36
      $region35: #{custom_clip_forward.8} parent=11 // pred_region
        _
      $region36: #{custom_clip_forward.8} parent=11 // pred_fallthru
        _
      // Predicated region
      $region37: #{custom_clip_forward.8} parent=11 // pred_check
        %p246 = pneg %p187
      $region38: #{custom_clip_forward.8} parent=11 // pred_check_branch
        %248 = sbr.rel (%p246) target = $region40
      $region39: #{custom_clip_forward.8} parent=11 // pred_region
        _
      $region40: #{custom_clip_forward.8} parent=11 // pred_fallthru
        _
    $region12: #{custom_clip_forward.8} parent=5 // pred_fallthru
      _
    %p249 = scmp.lt.s32.totalorder %s14, 2
    // Predicated region
    $region41: #{custom_clip_forward.8} parent=5 // pred_check
      %p250 = pneg %p249
    $region42: #{custom_clip_forward.8} parent=5 // pred_check_branch
      %252 = sbr.rel (%p250) target = $region44
    $region43: #{custom_clip_forward.8} parent=5 // pred_region
      // Predicated region
      $region45: #{custom_clip_forward.8} parent=43 // pred_check
        %p253 = pneg %p34
      $region46: #{custom_clip_forward.8} parent=43 // pred_check_branch
        %255 = sbr.rel (%p253) target = $region48
      $region47: #{custom_clip_forward.8} parent=43 // pred_region
        %p256 = scmp.lt.s32.totalorder %s14, 1
        %s257 = scalar_select %p256, %s14, 1
        %s258 = smul.addr %s257, 3
        %s259 = smul.addr %s258, 4
        %s260 = scalar_lea.vmem %s0, %s259
      $region48: #{custom_clip_forward.8} parent=43 // pred_fallthru
        _
    $region44: #{custom_clip_forward.8} parent=5 // pred_fallthru
      _
    %p261 = scmp.le.s32.totalorder 1, %s14
    %p262 = scmp.lt.s32.totalorder %s14, 3
    %p263 = pnand %p261, %p262
    %p264 = pneg %p263
    // Predicated region
    $region49: #{custom_clip_forward.8} parent=5 // pred_check
      _
    $region50: #{custom_clip_forward.8} parent=5 // pred_check_branch
      %266 = sbr.rel (%p263) target = $region52
    $region51: #{custom_clip_forward.8} parent=5 // pred_region
      %s267 = ssub.s32 %s14, 1
      %p268 = scmp.lt.s32.totalorder %s19, 1
      %s269 = scalar_select %p268, %s19, 1
      %s270 = smul.addr %s269, 3
      %s271 = smul.addr %s270, 4
      %s272 = scalar_lea.vmem %s0, %s271
      %p273 = pneg %p40
      %p274 = pneg %p37
      %p275 = pneg %p61
      %p276 = pneg %p58
      %p277 = pneg %p82
      %p278 = pneg %p79
      %p279 = pneg %p103
      %p280 = pneg %p100
      %p281 = pneg %p124
      %p282 = pneg %p121
      %p283 = pneg %p145
      %p284 = pneg %p142
      %p285 = pneg %p166
      %p286 = pneg %p163
      %p287 = pneg %p187
      %p288 = pneg %p184
      %p289 = pneg %p213
      %p290 = pneg %p210
      %p291 = scmp.lt.s32.totalorder %s19, 1
      %s292 = scalar_select %p291, %s19, 1
      %s293 = smul.addr %s292, 3
      %s294 = smul.addr %s293, 4
      %s295 = scalar_lea.vmem %s8, %s294
      %p296 = scmp.lt.s32.totalorder %s19, 1
      %s297 = scalar_select %p296, %s19, 1
      %s298 = smul.addr %s297, 3
      %s299 = smul.addr %s298, 4
      %s300 = scalar_lea.vmem %s0, %s299
      %p301 = scmp.lt.s32.totalorder %s19, 1
      %s302 = scalar_select %p301, %s19, 1
      %s303 = smul.addr %s302, 3
      %s304 = smul.addr %s303, 4
      %s305 = scalar_lea.vmem %s8, %s304
      %v307 = vld [vmem:[%s300] sm:$0xf]
      %v308 = vld [vmem:[%s300 + $0x4] sm:$0xf]
      %v309 = vld [vmem:[%s300 + $0x8] sm:$0x1]
      %v310 = vunpack.c.l.bf16 %v307
      %v311 = vunpack.c.l.bf16 %v308
      %v312 = vunpack.c.l.bf16 %v309
      %v313 = vld [vmem:[%s1] sm:$0x1]
      %v314 = vld [vmem:[%s1 + $0x1] sm:$0x1]
      %v315 = vld [vmem:[%s1 + $0x2] sm:$0x1]
      %v316 = vld [vmem:[%s1 + $0x3] sm:$0x1]
      %v317 = vld [vmem:[%s1 + $0x4] sm:$0x1]
      %v318 = vld [vmem:[%s1 + $0x5] sm:$0x1]
      %vm319 = vcmask 523264
      %v320 = vsel %vm319, %v310, 0.0
      %321 = vadd.xlane.f32.xlu0 %v320
      %v322 = vpop.xlane.xlu0 %321
      %v323 = vsel %vm319, %v311, 0.0
      %324 = vadd.xlane.f32.xlu0 %v323
      %v325 = vpop.xlane.xlu0 %324
      %vm326 = vcmask 516096
      %v327 = vsel %vm326, %v312, 0.0
      %328 = vadd.xlane.f32.xlu0 %v327
      %v329 = vpop.xlane.xlu0 %328
      %v330 = vrcp.pop 64.0
      %v331 = vmul.f32 %v322, %v330
      %v332 = vmul.f32 %v325, %v330
      %v333 = vmul.f32 %v329, %v330
      %v334 = vsub.f32 %v310, %v331
      %v335 = vsub.f32 %v311, %v332
      %v336 = vsub.f32 %v312, %v333
      %v337 = vmul.f32 %v334, %v334
      %v338 = vmul.f32 %v335, %v335
      %v339 = vmul.f32 %v336, %v336
      %v340 = vsel %vm319, %v337, 0.0
      %341 = vadd.xlane.f32.xlu0 %v340
      %v342 = vpop.xlane.xlu0 %341
      %v343 = vsel %vm319, %v338, 0.0
      %344 = vadd.xlane.f32.xlu0 %v343
      %v345 = vpop.xlane.xlu0 %344
      %v346 = vsel %vm326, %v339, 0.0
      %347 = vadd.xlane.f32.xlu0 %v346
      %v348 = vpop.xlane.xlu0 %347
      %v349 = vmul.f32 %v342, %v330
      %v350 = vmul.f32 %v345, %v330
      %v351 = vmul.f32 %v348, %v330
      %v352 = vadd.f32 %v349, 1e-05
      %v353 = vadd.f32 %v350, 1e-05
      %v354 = vadd.f32 %v351, 1e-05
      %v355 = vrsqrt.pop %v352
      %v356 = vrsqrt.pop %v353
      %v357 = vrsqrt.pop %v354
      %v358 = vmul.f32 %v334, %v355
      %v359 = vmul.f32 %v335, %v356
      %v360 = vmul.f32 %v336, %v357
      %v361 = vlaneseq
      %v362 = vshrl.u32 %v361, 7
      %v363 = vsub.s32 0, %v362
      %v364 = vrot.slane %v313, %v363
      %v365 = vmul.f32 %v358, %v364
      %v366 = vmul.f32 %v359, %v364
      %v367 = vmul.f32 %v360, %v364
      %v368 = vlaneseq
      %v369 = vshrl.u32 %v368, 7
      %v370 = vsub.s32 0, %v369
      %v371 = vrot.slane %v314, %v370
      %v372 = vadd.f32 %v365, %v371
      %v373 = vadd.f32 %v366, %v371
      %v374 = vadd.f32 %v367, %v371
      %v375 = vpack.c.bf16 %v373, %v372
      %v376 = vpack.c.bf16 %v374, %v374
      %v377 = vld [vmem:[%s4] sm:$0xff]
      %v378 = vld [vmem:[%s4 + $0x8] sm:$0xff]
      %v379 = vld [vmem:[%s4 + $0x10] sm:$0xff]
      %v380 = vld [vmem:[%s4 + $0x18] sm:$0xff]
      %v381 = vld [vmem:[%s4 + $0x20] sm:$0xff]
      %v382 = vld [vmem:[%s4 + $0x28] sm:$0xff]
      %v383 = vld [vmem:[%s4 + $0x30] sm:$0xff]
      %v384 = vld [vmem:[%s4 + $0x38] sm:$0xff]
      %v385 = vld [vmem:[%s2] sm:$0x3]
      %v387 = vlaneseq
      %v388 = vshrl.u32 %v387, 7
      %v389 = vsub.s32 0, %v388
      %v390 = vrot.slane %v385, %v389
      %v391 = vlaneseq
      %v392 = vshrl.u32 %v391, 7
      %v393 = vsub.s32 1, %v392
      %v394 = vrot.slane %v385, %v393
      %v405 = vunpack.c.l.b16 %v377
      %v406 = vunpack.c.h.b16 %v377
      %v407 = vunpack.c.l.b16 %v378
      %v408 = vunpack.c.h.b16 %v378
      %v409 = vunpack.c.l.b16 %v379
      %v410 = vunpack.c.h.b16 %v379
      %v411 = vunpack.c.l.b16 %v380
      %v412 = vunpack.c.h.b16 %v380
      %v413 = vunpack.c.l.b16 %v381
      %v414 = vunpack.c.h.b16 %v381
      %v415 = vunpack.c.l.b16 %v382
      %v416 = vunpack.c.h.b16 %v382
      %v417 = vunpack.c.l.b16 %v383
      %v418 = vunpack.c.h.b16 %v383
      %v419 = vunpack.c.l.b16 %v384
      %v420 = vunpack.c.h.b16 %v384
      %v421 = vpack.c.b16 %v407, %v405
      %v422 = vpack.c.b16 %v408, %v406
      %v423 = vpack.c.b16 %v411, %v409
      %v424 = vpack.c.b16 %v412, %v410
      %v425 = vpack.c.b16 %v415, %v413
      %v426 = vpack.c.b16 %v416, %v414
      %v427 = vpack.c.b16 %v419, %v417
      %v428 = vpack.c.b16 %v420, %v418
      %v438 = vsel %vm319, %v375, 0
      %v441 = vsel %vm319, %v376, 0
      %443 = vmatprep.subr.bf16.mxu0 %v422
      %444 = vmatpush1.bf16.msra.mxu0 %v421
      %445 = vmatprep.subr.bf16.mxu0 %v424
      %446 = vmatpush1.bf16.msra.mxu0 %v423
      %447 = vmatprep.subr.bf16.mxu0 %v426
      %448 = vmatpush1.bf16.msra.mxu0 %v425
      %449 = vmatprep.subr.bf16.mxu0 %v428
      %450 = vmatpush1.bf16.msra.mxu0 %v427
      %451 = vmatprep.subr.bf16.mxu0 0
      %452 = vmatpush1.bf16.msra.mxu0 0
      %453 = vmatprep.subr.bf16.mxu0 0
      %454 = vmatpush1.bf16.msra.mxu0 0
      %455 = vmatprep.subr.bf16.mxu0 0
      %456 = vmatpush1.bf16.msra.mxu0 0
      %457 = vmatprep.subr.bf16.mxu0 0
      %458 = vmatpush1.bf16.msra.mxu0 0
      %459 = vmatprep.subr.bf16.mxu0 0
      %460 = vmatpush1.bf16.msra.mxu0 0
      %461 = vmatprep.subr.bf16.mxu0 0
      %462 = vmatpush1.bf16.msra.mxu0 0
      %463 = vmatprep.subr.bf16.mxu0 0
      %464 = vmatpush1.bf16.msra.mxu0 0
      %465 = vmatprep.subr.bf16.mxu0 0
      %466 = vmatpush1.bf16.msra.mxu0 0
      %467 = vmatprep.subr.bf16.mxu0 0
      %468 = vmatpush1.bf16.msra.mxu0 0
      %469 = vmatprep.subr.bf16.mxu0 0
      %470 = vmatpush1.bf16.msra.mxu0 0
      %471 = vmatprep.subr.bf16.mxu0 0
      %472 = vmatpush1.bf16.msra.mxu0 0
      %473 = vmatprep.subr.bf16.mxu0 0
      %474 = vmatpush1.bf16.msra.mxu0 0
      %475 = vmatprep.mubr.bf16.mxu0 0
      %476 = vmatmul.mubr.bf16.gmra.mrb[0].mxu0 %v438
      %v477 = vpop.f32.mrb[0].mxu0
      %v478 = vadd.f32 %v390, %v477
      %v479 = vpop.f32.mrb[0].mxu0
      %v480 = vadd.f32 %v394, %v479
      %v481 = vpop.f32.mrb[0].mxu0
      %v482 = vadd.f32 %v390, %v481
      %v483 = vpop.f32.mrb[0].mxu0
      %v484 = vadd.f32 %v394, %v483
      %485 = vmatprep.mubr.bf16.mxu0 0
      %486 = vmatmul.mubr.bf16.gmra.mrb[0].mxu0 %v441
      %v487 = vpop.f32.mrb[0].mxu0
      %v488 = vadd.f32 %v390, %v487
      %v489 = vpop.f32.mrb[0].mxu0
      %v490 = vadd.f32 %v394, %v489
      %v491 = vpop.f32.mrb[0].mxu0
      %v492 = vpop.f32.mrb[0].mxu0
      %493 = vdwg.mxu0
      %497 = vrot.lane.b32.xlu0 %v478, 64
      %v498 = vpop.permute.xlu0 %497
      %499 = vrot.lane.b32.xlu0 %v482, 64
      %v500 = vpop.permute.xlu0 %499
      %501 = vrot.lane.b32.xlu0 %v488, 64
      %v502 = vpop.permute.xlu0 %501
      %vm503 = vcmask 130048
      %v504 = vsel %vm503, %v478, 0
      %v506 = vsel %vm503, %v482, 0
      %v508 = vsel %vm503, %v488, 0
      %v510 = vsel %vm503, %v498, 0
      %v512 = vsel %vm503, %v500, 0
      %v514 = vsel %vm503, %v502, 0
      %516 = vmatprep.subr.mxu0 0.0
      %517 = vmatpush1.xpose.msra.mxu0 %v510
      %518 = vmatprep.subr.mxu0 0.0
      %519 = vmatpush1.xpose.msra.mxu0 %v512
      %520 = vmatprep.subr.mxu0 0.0
      %521 = vmatpush1.xpose.msra.mxu0 %v514
      %522 = vmatprep.subr.mxu0 0.0
      %523 = vmatpush1.xpose.msra.mxu0 0.0
      %524 = vmatprep.subr.mxu0 0.0
      %525 = vmatpush1.xpose.msra.mxu0 0.0
      %526 = vmatprep.subr.mxu0 0.0
      %527 = vmatpush1.xpose.msra.mxu0 0.0
      %528 = vmatprep.subr.mxu0 0.0
      %529 = vmatpush1.xpose.msra.mxu0 0.0
      %530 = vmatprep.subr.mxu0 0.0
      %531 = vmatpush1.xpose.msra.mxu0 0.0
      %532 = vmatprep.subr.mxu0 0.0
      %533 = vmatpush1.xpose.msra.mxu0 0.0
      %534 = vmatprep.subr.mxu0 0.0
      %535 = vmatpush1.xpose.msra.mxu0 0.0
      %536 = vmatprep.subr.mxu0 0.0
      %537 = vmatpush1.xpose.msra.mxu0 0.0
      %538 = vmatprep.subr.mxu0 0.0
      %539 = vmatpush1.xpose.msra.mxu0 0.0
      %540 = vmatprep.subr.mxu0 0.0
      %541 = vmatpush1.xpose.msra.mxu0 0.0
      %542 = vmatprep.subr.mxu0 0.0
      %543 = vmatpush1.xpose.msra.mxu0 0.0
      %544 = vmatprep.subr.mxu0 0.0
      %545 = vmatpush1.xpose.msra.mxu0 0.0
      %546 = vmatprep.subr.mxu0 0.0
      %547 = vmatpush1.xpose.msra.mxu0 0.0
      %548 = vmatprep.subr.mxu0 0.0
      %549 = vmatpush1.xpose.msra.mxu0 0.0
      %550 = vmatprep.subr.mxu0 0.0
      %551 = vmatpush1.xpose.msra.mxu0 0.0
      %552 = vmatprep.subr.mxu0 0.0
      %553 = vmatpush1.xpose.msra.mxu0 0.0
      %554 = vmatprep.subr.mxu0 0.0
      %555 = vmatpush1.xpose.msra.mxu0 0.0
      %556 = vmatprep.subr.mxu0 0.0
      %557 = vmatpush1.xpose.msra.mxu0 0.0
      %558 = vmatprep.subr.mxu0 0.0
      %559 = vmatpush1.xpose.msra.mxu0 0.0
      %560 = vmatprep.subr.mxu0 0.0
      %561 = vmatpush1.xpose.msra.mxu0 0.0
      %562 = vmatprep.subr.mxu0 0.0
      %563 = vmatpush1.xpose.msra.mxu0 0.0
      %564 = vmatprep.subr.mxu0 0.0
      %565 = vmatpush1.xpose.msra.mxu0 0.0
      %566 = vmatprep.subr.mxu0 0.0
      %567 = vmatpush1.xpose.msra.mxu0 0.0
      %568 = vmatprep.subr.mxu0 0.0
      %569 = vmatpush1.xpose.msra.mxu0 0.0
      %570 = vmatprep.subr.mxu0 0.0
      %571 = vmatpush1.xpose.msra.mxu0 0.0
      %572 = vmatprep.subr.mxu0 0.0
      %573 = vmatpush1.xpose.msra.mxu0 0.0
      %574 = vmatprep.subr.mxu0 0.0
      %575 = vmatpush1.xpose.msra.mxu0 0.0
      %576 = vmatprep.subr.mxu0 0.0
      %577 = vmatpush1.xpose.msra.mxu0 0.0
      %578 = vmatprep.subr.mxu0 0.0
      %579 = vmatpush1.xpose.msra.mxu0 0.0
      %580 = vmatprep.mubr.f32.mxu0 0.0
      %581 = vmatmul.mubr.f32.gmra.mrb[0].mxu0 %v504
      %v582 = vpop.f32.mrb[0].mxu0
      %v583 = vadd.f32 0.0, %v582
      %v584 = vpop.f32.mrb[0].mxu0
      %585 = vmatprep.mubr.f32.mxu0 0.0
      %586 = vmatmul.mubr.f32.gmra.mrb[0].mxu0 %v506
      %v587 = vpop.f32.mrb[0].mxu0
      %v588 = vadd.f32 0.0, %v587
      %v589 = vpop.f32.mrb[0].mxu0
      %590 = vmatprep.mubr.f32.mxu0 0.0
      %591 = vmatmul.mubr.f32.gmra.mrb[0].mxu0 %v508
      %v592 = vpop.f32.mrb[0].mxu0
      %v593 = vadd.f32 0.0, %v592
      %v594 = vpop.f32.mrb[0].mxu0
      %595 = vdwg.mxu0
      %vm596 = vcmask 138240
      %v597 = vsel %vm596, %v583, -inf
      %598 = vmax.xlane.f32.xlu0 %v597
      %v599 = vpop.xlane.xlu0 %598
      %v600 = vsel %vm596, %v588, -inf
      %601 = vmax.xlane.f32.xlu0 %v600
      %v602 = vpop.xlane.xlu0 %601
      %vm603 = vcmask 131072
      %v604 = vsel %vm603, %v593, -inf
      %605 = vmax.xlane.f32.xlu0 %v604
      %v606 = vpop.xlane.xlu0 %605
      %v607 = vsub.f32 %v583, %v599
      %v608 = vsub.f32 %v588, %v602
      %v609 = vsub.f32 %v593, %v606
      %v610 = vmul.f32 %v607, 1.442695
      %v611 = vpow.pop %v610
      %v612 = vmul.f32 %v608, 1.442695
      %v613 = vpow.pop %v612
      %v614 = vmul.f32 %v609, 1.442695
      %v615 = vpow.pop %v614
      %v616 = vsel %vm596, %v611, 0.0
      %617 = vadd.xlane.f32.xlu0 %v616
      %v618 = vpop.xlane.xlu0 %617
      %v619 = vsel %vm596, %v613, 0.0
      %620 = vadd.xlane.f32.xlu0 %v619
      %v621 = vpop.xlane.xlu0 %620
      %v622 = vsel %vm603, %v615, 0.0
      %623 = vadd.xlane.f32.xlu0 %v622
      %v624 = vpop.xlane.xlu0 %623
      %v625 = vrcp.pop %v618
      %v626 = vrcp.pop %v621
      %v627 = vrcp.pop %v624
      %v628 = vmul.f32 %v611, %v625
      %v629 = vmul.f32 %v613, %v626
      %v630 = vmul.f32 %v615, %v627
      %v632 = vsel %vm596, %v628, 0
      %v635 = vsel %vm596, %v629, 0
      %v638 = vsel %vm596, %v630, 0
      %vm640 = vcmask 1040384
      %v642 = vsel %vm640, %v490, 0
      %644 = vmatprep.subr.mxu0 0.0
      %645 = vmatpush1.msra.mxu0 %v480
      %646 = vmatprep.subr.mxu0 0.0
      %647 = vmatpush1.msra.mxu0 %v484
      %648 = vmatprep.subr.mxu0 0.0
      %649 = vmatpush1.msra.mxu0 %v642
      %650 = vmatprep.subr.mxu0 0.0
      %651 = vmatpush1.msra.mxu0 0.0
      %652 = vmatprep.subr.mxu0 0.0
      %653 = vmatpush1.msra.mxu0 0.0
      %654 = vmatprep.subr.mxu0 0.0
      %655 = vmatpush1.msra.mxu0 0.0
      %656 = vmatprep.subr.mxu0 0.0
      %657 = vmatpush1.msra.mxu0 0.0
      %658 = vmatprep.subr.mxu0 0.0
      %659 = vmatpush1.msra.mxu0 0.0
      %660 = vmatprep.subr.mxu0 0.0
      %661 = vmatpush1.msra.mxu0 0.0
      %662 = vmatprep.subr.mxu0 0.0
      %663 = vmatpush1.msra.mxu0 0.0
      %664 = vmatprep.subr.mxu0 0.0
      %665 = vmatpush1.msra.mxu0 0.0
      %666 = vmatprep.subr.mxu0 0.0
      %667 = vmatpush1.msra.mxu0 0.0
      %668 = vmatprep.subr.mxu0 0.0
      %669 = vmatpush1.msra.mxu0 0.0
      %670 = vmatprep.subr.mxu0 0.0
      %671 = vmatpush1.msra.mxu0 0.0
      %672 = vmatprep.subr.mxu0 0.0
      %673 = vmatpush1.msra.mxu0 0.0
      %674 = vmatprep.subr.mxu0 0.0
      %675 = vmatpush1.msra.mxu0 0.0
      %676 = vmatprep.subr.mxu0 0.0
      %677 = vmatpush1.msra.mxu0 0.0
      %678 = vmatprep.subr.mxu0 0.0
      %679 = vmatpush1.msra.mxu0 0.0
      %680 = vmatprep.subr.mxu0 0.0
      %681 = vmatpush1.msra.mxu0 0.0
      %682 = vmatprep.subr.mxu0 0.0
      %683 = vmatpush1.msra.mxu0 0.0
      %684 = vmatprep.subr.mxu0 0.0
      %685 = vmatpush1.msra.mxu0 0.0
      %686 = vmatprep.subr.mxu0 0.0
      %687 = vmatpush1.msra.mxu0 0.0
      %688 = vmatprep.subr.mxu0 0.0
      %689 = vmatpush1.msra.mxu0 0.0
      %690 = vmatprep.subr.mxu0 0.0
      %691 = vmatpush1.msra.mxu0 0.0
      %692 = vmatprep.subr.mxu0 0.0
      %693 = vmatpush1.msra.mxu0 0.0
      %694 = vmatprep.subr.mxu0 0.0
      %695 = vmatpush1.msra.mxu0 0.0
      %696 = vmatprep.subr.mxu0 0.0
      %697 = vmatpush1.msra.mxu0 0.0
      %698 = vmatprep.subr.mxu0 0.0
      %699 = vmatpush1.msra.mxu0 0.0
      %700 = vmatprep.subr.mxu0 0.0
      %701 = vmatpush1.msra.mxu0 0.0
      %702 = vmatprep.subr.mxu0 0.0
      %703 = vmatpush1.msra.mxu0 0.0
      %704 = vmatprep.subr.mxu0 0.0
      %705 = vmatpush1.msra.mxu0 0.0
      %706 = vmatprep.subr.mxu0 0.0
      %707 = vmatpush1.msra.mxu0 0.0
      %708 = vmatprep.mubr.f32.mxu0 0.0
      %709 = vmatmul.mubr.f32.gmra.mrb[0].mxu0 %v632
      %v710 = vpop.f32.mrb[0].mxu0
      %v711 = vadd.f32 0.0, %v710
      %v712 = vpop.f32.mrb[0].mxu0
      %713 = vmatprep.mubr.f32.mxu0 0.0
      %714 = vmatmul.mubr.f32.gmra.mrb[0].mxu0 %v635
      %v715 = vpop.f32.mrb[0].mxu0
      %v716 = vadd.f32 0.0, %v715
      %v717 = vpop.f32.mrb[0].mxu0
      %718 = vmatprep.mubr.f32.mxu0 0.0
      %719 = vmatmul.mubr.f32.gmra.mrb[0].mxu0 %v638
      %v720 = vpop.f32.mrb[0].mxu0
      %v721 = vadd.f32 0.0, %v720
      %v722 = vpop.f32.mrb[0].mxu0
      %723 = vdwg.mxu0
      %724 = vrot.lane.b32.xlu0 %v478, 112
      %v725 = vpop.permute.xlu0 %724
      %726 = vrot.lane.b32.xlu0 %v482, 112
      %v727 = vpop.permute.xlu0 %726
      %728 = vrot.lane.b32.xlu0 %v488, 112
      %v729 = vpop.permute.xlu0 %728
      %730 = vrot.lane.b32.xlu0 %v478, 48
      %v731 = vpop.permute.xlu0 %730
      %732 = vrot.lane.b32.xlu0 %v482, 48
      %v733 = vpop.permute.xlu0 %732
      %734 = vrot.lane.b32.xlu0 %v488, 48
      %v735 = vpop.permute.xlu0 %734
      %v736 = vsel %vm503, %v725, 0
      %v738 = vsel %vm503, %v727, 0
      %v740 = vsel %vm503, %v729, 0
      %v742 = vsel %vm503, %v731, 0
      %v744 = vsel %vm503, %v733, 0
      %v746 = vsel %vm503, %v735, 0
      %748 = vmatprep.subr.mxu0 0.0
      %749 = vmatpush1.xpose.msra.mxu0 %v742
      %750 = vmatprep.subr.mxu0 0.0
      %751 = vmatpush1.xpose.msra.mxu0 %v744
      %752 = vmatprep.subr.mxu0 0.0
      %753 = vmatpush1.xpose.msra.mxu0 %v746
      %754 = vmatprep.subr.mxu0 0.0
      %755 = vmatpush1.xpose.msra.mxu0 0.0
      %756 = vmatprep.subr.mxu0 0.0
      %757 = vmatpush1.xpose.msra.mxu0 0.0
      %758 = vmatprep.subr.mxu0 0.0
      %759 = vmatpush1.xpose.msra.mxu0 0.0
      %760 = vmatprep.subr.mxu0 0.0
      %761 = vmatpush1.xpose.msra.mxu0 0.0
      %762 = vmatprep.subr.mxu0 0.0
      %763 = vmatpush1.xpose.msra.mxu0 0.0
      %764 = vmatprep.subr.mxu0 0.0
      %765 = vmatpush1.xpose.msra.mxu0 0.0
      %766 = vmatprep.subr.mxu0 0.0
      %767 = vmatpush1.xpose.msra.mxu0 0.0
      %768 = vmatprep.subr.mxu0 0.0
      %769 = vmatpush1.xpose.msra.mxu0 0.0
      %770 = vmatprep.subr.mxu0 0.0
      %771 = vmatpush1.xpose.msra.mxu0 0.0
      %772 = vmatprep.subr.mxu0 0.0
      %773 = vmatpush1.xpose.msra.mxu0 0.0
      %774 = vmatprep.subr.mxu0 0.0
      %775 = vmatpush1.xpose.msra.mxu0 0.0
      %776 = vmatprep.subr.mxu0 0.0
      %777 = vmatpush1.xpose.msra.mxu0 0.0
      %778 = vmatprep.subr.mxu0 0.0
      %779 = vmatpush1.xpose.msra.mxu0 0.0
      %780 = vmatprep.subr.mxu0 0.0
      %781 = vmatpush1.xpose.msra.mxu0 0.0
      %782 = vmatprep.subr.mxu0 0.0
      %783 = vmatpush1.xpose.msra.mxu0 0.0
      %784 = vmatprep.subr.mxu0 0.0
      %785 = vmatpush1.xpose.msra.mxu0 0.0
      %786 = vmatprep.subr.mxu0 0.0
      %787 = vmatpush1.xpose.msra.mxu0 0.0
      %788 = vmatprep.subr.mxu0 0.0
      %789 = vmatpush1.xpose.msra.mxu0 0.0
      %790 = vmatprep.subr.mxu0 0.0
      %791 = vmatpush1.xpose.msra.mxu0 0.0
      %792 = vmatprep.subr.mxu0 0.0
      %793 = vmatpush1.xpose.msra.mxu0 0.0
      %794 = vmatprep.subr.mxu0 0.0
      %795 = vmatpush1.xpose.msra.mxu0 0.0
      %796 = vmatprep.subr.mxu0 0.0
      %797 = vmatpush1.xpose.msra.mxu0 0.0
      %798 = vmatprep.subr.mxu0 0.0
      %799 = vmatpush1.xpose.msra.mxu0 0.0
      %800 = vmatprep.subr.mxu0 0.0
      %801 = vmatpush1.xpose.msra.mxu0 0.0
      %802 = vmatprep.subr.mxu0 0.0
      %803 = vmatpush1.xpose.msra.mxu0 0.0
      %804 = vmatprep.subr.mxu0 0.0
      %805 = vmatpush1.xpose.msra.mxu0 0.0
      %806 = vmatprep.subr.mxu0 0.0
      %807 = vmatpush1.xpose.msra.mxu0 0.0
      %808 = vmatprep.subr.mxu0 0.0
      %809 = vmatpush1.xpose.msra.mxu0 0.0
      %810 = vmatprep.subr.mxu0 0.0
      %811 = vmatpush1.xpose.msra.mxu0 0.0
      %812 = vmatprep.mubr.f32.mxu0 0.0
      %813 = vmatmul.mubr.f32.gmra.mrb[0].mxu0 %v736
      %v814 = vpop.f32.mrb[0].mxu0
      %v815 = vadd.f32 0.0, %v814
      %v816 = vpop.f32.mrb[0].mxu0
      %817 = vmatprep.mubr.f32.mxu0 0.0
      %818 = vmatmul.mubr.f32.gmra.mrb[0].mxu0 %v738
      %v819 = vpop.f32.mrb[0].mxu0
      %v820 = vadd.f32 0.0, %v819
      %v821 = vpop.f32.mrb[0].mxu0
      %822 = vmatprep.mubr.f32.mxu0 0.0
      %823 = vmatmul.mubr.f32.gmra.mrb[0].mxu0 %v740
      %v824 = vpop.f32.mrb[0].mxu0
      %v825 = vadd.f32 0.0, %v824
      %v826 = vpop.f32.mrb[0].mxu0
      %827 = vdwg.mxu0
      %v828 = vsel %vm596, %v815, -inf
      %829 = vmax.xlane.f32.xlu0 %v828
      %v830 = vpop.xlane.xlu0 %829
      %v831 = vsel %vm596, %v820, -inf
      %832 = vmax.xlane.f32.xlu0 %v831
      %v833 = vpop.xlane.xlu0 %832
      %v834 = vsel %vm603, %v825, -inf
      %835 = vmax.xlane.f32.xlu0 %v834
      %v836 = vpop.xlane.xlu0 %835
      %v837 = vsub.f32 %v815, %v830
      %v838 = vsub.f32 %v820, %v833
      %v839 = vsub.f32 %v825, %v836
      %v840 = vmul.f32 %v837, 1.442695
      %v841 = vpow.pop %v840
      %v842 = vmul.f32 %v838, 1.442695
      %v843 = vpow.pop %v842
      %v844 = vmul.f32 %v839, 1.442695
      %v845 = vpow.pop %v844
      %v846 = vsel %vm596, %v841, 0.0
      %847 = vadd.xlane.f32.xlu0 %v846
      %v848 = vpop.xlane.xlu0 %847
      %v849 = vsel %vm596, %v843, 0.0
      %850 = vadd.xlane.f32.xlu0 %v849
      %v851 = vpop.xlane.xlu0 %850
      %v852 = vsel %vm603, %v845, 0.0
      %853 = vadd.xlane.f32.xlu0 %v852
      %v854 = vpop.xlane.xlu0 %853
      %v855 = vrcp.pop %v848
      %v856 = vrcp.pop %v851
      %v857 = vrcp.pop %v854
      %v858 = vmul.f32 %v841, %v855
      %v859 = vmul.f32 %v843, %v856
      %v860 = vmul.f32 %v845, %v857
      %863 = vrot.lane.b32.xlu0 %v480, 112
      %v864 = vpop.permute.xlu0 %863
      %865 = vrot.lane.b32.xlu0 %v484, 112
      %v866 = vpop.permute.xlu0 %865
      %867 = vrot.lane.b32.xlu0 %v490, 112
      %v868 = vpop.permute.xlu0 %867
      %v872 = vsel %vm596, %v858, 0
      %v875 = vsel %vm596, %v859, 0
      %v878 = vsel %vm596, %v860, 0
      %v880 = vsel %vm640, %v868, 0
      %882 = vmatprep.subr.mxu0 0.0
      %883 = vmatpush1.msra.mxu0 %v864
      %884 = vmatprep.subr.mxu0 0.0
      %885 = vmatpush1.msra.mxu0 %v866
      %886 = vmatprep.subr.mxu0 0.0
      %887 = vmatpush1.msra.mxu0 %v880
      %888 = vmatprep.subr.mxu0 0.0
      %889 = vmatpush1.msra.mxu0 0.0
      %890 = vmatprep.subr.mxu0 0.0
      %891 = vmatpush1.msra.mxu0 0.0
      %892 = vmatprep.subr.mxu0 0.0
      %893 = vmatpush1.msra.mxu0 0.0
      %894 = vmatprep.subr.mxu0 0.0
      %895 = vmatpush1.msra.mxu0 0.0
      %896 = vmatprep.subr.mxu0 0.0
      %897 = vmatpush1.msra.mxu0 0.0
      %898 = vmatprep.subr.mxu0 0.0
      %899 = vmatpush1.msra.mxu0 0.0
      %900 = vmatprep.subr.mxu0 0.0
      %901 = vmatpush1.msra.mxu0 0.0
      %902 = vmatprep.subr.mxu0 0.0
      %903 = vmatpush1.msra.mxu0 0.0
      %904 = vmatprep.subr.mxu0 0.0
      %905 = vmatpush1.msra.mxu0 0.0
      %906 = vmatprep.subr.mxu0 0.0
      %907 = vmatpush1.msra.mxu0 0.0
      %908 = vmatprep.subr.mxu0 0.0
      %909 = vmatpush1.msra.mxu0 0.0
      %910 = vmatprep.subr.mxu0 0.0
      %911 = vmatpush1.msra.mxu0 0.0
      %912 = vmatprep.subr.mxu0 0.0
      %913 = vmatpush1.msra.mxu0 0.0
      %914 = vmatprep.subr.mxu0 0.0
      %915 = vmatpush1.msra.mxu0 0.0
      %916 = vmatprep.subr.mxu0 0.0
      %917 = vmatpush1.msra.mxu0 0.0
      %918 = vmatprep.subr.mxu0 0.0
      %919 = vmatpush1.msra.mxu0 0.0
      %920 = vmatprep.subr.mxu0 0.0
      %921 = vmatpush1.msra.mxu0 0.0
      %922 = vmatprep.subr.mxu0 0.0
      %923 = vmatpush1.msra.mxu0 0.0
      %924 = vmatprep.subr.mxu0 0.0
      %925 = vmatpush1.msra.mxu0 0.0
      %926 = vmatprep.subr.mxu0 0.0
      %927 = vmatpush1.msra.mxu0 0.0
      %928 = vmatprep.subr.mxu0 0.0
      %929 = vmatpush1.msra.mxu0 0.0
      %930 = vmatprep.subr.mxu0 0.0
      %931 = vmatpush1.msra.mxu0 0.0
      %932 = vmatprep.subr.mxu0 0.0
      %933 = vmatpush1.msra.mxu0 0.0
      %934 = vmatprep.subr.mxu0 0.0
      %935 = vmatpush1.msra.mxu0 0.0
      %936 = vmatprep.subr.mxu0 0.0
      %937 = vmatpush1.msra.mxu0 0.0
      %938 = vmatprep.subr.mxu0 0.0
      %939 = vmatpush1.msra.mxu0 0.0
      %940 = vmatprep.subr.mxu0 0.0
      %941 = vmatpush1.msra.mxu0 0.0
      %942 = vmatprep.subr.mxu0 0.0
      %943 = vmatpush1.msra.mxu0 0.0
      %944 = vmatprep.subr.mxu0 0.0
      %945 = vmatpush1.msra.mxu0 0.0
      %946 = vmatprep.mubr.f32.mxu0 0.0
      %947 = vmatmul.mubr.f32.gmra.mrb[0].mxu0 %v872
      %v948 = vpop.f32.mrb[0].mxu0
      %v949 = vadd.f32 0.0, %v948
      %v950 = vpop.f32.mrb[0].mxu0
      %951 = vmatprep.mubr.f32.mxu0 0.0
      %952 = vmatmul.mubr.f32.gmra.mrb[0].mxu0 %v875
      %v953 = vpop.f32.mrb[0].mxu0
      %v954 = vadd.f32 0.0, %v953
      %v955 = vpop.f32.mrb[0].mxu0
      %956 = vmatprep.mubr.f32.mxu0 0.0
      %957 = vmatmul.mubr.f32.gmra.mrb[0].mxu0 %v878
      %v958 = vpop.f32.mrb[0].mxu0
      %v959 = vadd.f32 0.0, %v958
      %v960 = vpop.f32.mrb[0].mxu0
      %961 = vdwg.mxu0
      %962 = vrot.lane.b32.xlu0 %v478, 96
      %v963 = vpop.permute.xlu0 %962
      %964 = vrot.lane.b32.xlu0 %v482, 96
      %v965 = vpop.permute.xlu0 %964
      %966 = vrot.lane.b32.xlu0 %v488, 96
      %v967 = vpop.permute.xlu0 %966
      %968 = vrot.lane.b32.xlu0 %v478, 32
      %v969 = vpop.permute.xlu0 %968
      %970 = vrot.lane.b32.xlu0 %v482, 32
      %v971 = vpop.permute.xlu0 %970
      %972 = vrot.lane.b32.xlu0 %v488, 32
      %v973 = vpop.permute.xlu0 %972
      %v974 = vsel %vm503, %v963, 0
      %v976 = vsel %vm503, %v965, 0
      %v978 = vsel %vm503, %v967, 0
      %v980 = vsel %vm503, %v969, 0
      %v982 = vsel %vm503, %v971, 0
      %v984 = vsel %vm503, %v973, 0
      %986 = vmatprep.subr.mxu0 0.0
      %987 = vmatpush1.xpose.msra.mxu0 %v980
      %988 = vmatprep.subr.mxu0 0.0
      %989 = vmatpush1.xpose.msra.mxu0 %v982
      %990 = vmatprep.subr.mxu0 0.0
      %991 = vmatpush1.xpose.msra.mxu0 %v984
      %992 = vmatprep.subr.mxu0 0.0
      %993 = vmatpush1.xpose.msra.mxu0 0.0
      %994 = vmatprep.subr.mxu0 0.0
      %995 = vmatpush1.xpose.msra.mxu0 0.0
      %996 = vmatprep.subr.mxu0 0.0
      %997 = vmatpush1.xpose.msra.mxu0 0.0
      %998 = vmatprep.subr.mxu0 0.0
      %999 = vmatpush1.xpose.msra.mxu0 0.0
      %1000 = vmatprep.subr.mxu0 0.0
      %1001 = vmatpush1.xpose.msra.mxu0 0.0
      %1002 = vmatprep.subr.mxu0 0.0
      %1003 = vmatpush1.xpose.msra.mxu0 0.0
      %1004 = vmatprep.subr.mxu0 0.0
      %1005 = vmatpush1.xpose.msra.mxu0 0.0
      %1006 = vmatprep.subr.mxu0 0.0
      %1007 = vmatpush1.xpose.msra.mxu0 0.0
      %1008 = vmatprep.subr.mxu0 0.0
      %1009 = vmatpush1.xpose.msra.mxu0 0.0
      %1010 = vmatprep.subr.mxu0 0.0
      %1011 = vmatpush1.xpose.msra.mxu0 0.0
      %1012 = vmatprep.subr.mxu0 0.0
      %1013 = vmatpush1.xpose.msra.mxu0 0.0
      %1014 = vmatprep.subr.mxu0 0.0
      %1015 = vmatpush1.xpose.msra.mxu0 0.0
      %1016 = vmatprep.subr.mxu0 0.0
      %1017 = vmatpush1.xpose.msra.mxu0 0.0
      %1018 = vmatprep.subr.mxu0 0.0
      %1019 = vmatpush1.xpose.msra.mxu0 0.0
      %1020 = vmatprep.subr.mxu0 0.0
      %1021 = vmatpush1.xpose.msra.mxu0 0.0
      %1022 = vmatprep.subr.mxu0 0.0
      %1023 = vmatpush1.xpose.msra.mxu0 0.0
      %1024 = vmatprep.subr.mxu0 0.0
      %1025 = vmatpush1.xpose.msra.mxu0 0.0
      %1026 = vmatprep.subr.mxu0 0.0
      %1027 = vmatpush1.xpose.msra.mxu0 0.0
      %1028 = vmatprep.subr.mxu0 0.0
      %1029 = vmatpush1.xpose.msra.mxu0 0.0
      %1030 = vmatprep.subr.mxu0 0.0
      %1031 = vmatpush1.xpose.msra.mxu0 0.0
      %1032 = vmatprep.subr.mxu0 0.0
      %1033 = vmatpush1.xpose.msra.mxu0 0.0
      %1034 = vmatprep.subr.mxu0 0.0
      %1035 = vmatpush1.xpose.msra.mxu0 0.0
      %1036 = vmatprep.subr.mxu0 0.0
      %1037 = vmatpush1.xpose.msra.mxu0 0.0
      %1038 = vmatprep.subr.mxu0 0.0
      %1039 = vmatpush1.xpose.msra.mxu0 0.0
      %1040 = vmatprep.subr.mxu0 0.0
      %1041 = vmatpush1.xpose.msra.mxu0 0.0
      %1042 = vmatprep.subr.mxu0 0.0
      %1043 = vmatpush1.xpose.msra.mxu0 0.0
      %1044 = vmatprep.subr.mxu0 0.0
      %1045 = vmatpush1.xpose.msra.mxu0 0.0
      %1046 = vmatprep.subr.mxu0 0.0
      %1047 = vmatpush1.xpose.msra.mxu0 0.0
      %1048 = vmatprep.subr.mxu0 0.0
      %1049 = vmatpush1.xpose.msra.mxu0 0.0
      %1050 = vmatprep.mubr.f32.mxu0 0.0
      %1051 = vmatmul.mubr.f32.gmra.mrb[0].mxu0 %v974
      %v1052 = vpop.f32.mrb[0].mxu0
      %v1053 = vadd.f32 0.0, %v1052
      %v1054 = vpop.f32.mrb[0].mxu0
      %1055 = vmatprep.mubr.f32.mxu0 0.0
      %1056 = vmatmul.mubr.f32.gmra.mrb[0].mxu0 %v976
      %v1057 = vpop.f32.mrb[0].mxu0
      %v1058 = vadd.f32 0.0, %v1057
      %v1059 = vpop.f32.mrb[0].mxu0
      %1060 = vmatprep.mubr.f32.mxu0 0.0
      %1061 = vmatmul.mubr.f32.gmra.mrb[0].mxu0 %v978
      %v1062 = vpop.f32.mrb[0].mxu0
      %v1063 = vadd.f32 0.0, %v1062
      %v1064 = vpop.f32.mrb[0].mxu0
      %1065 = vdwg.mxu0
      %v1066 = vsel %vm596, %v1053, -inf
      %1067 = vmax.xlane.f32.xlu0 %v1066
      %v1068 = vpop.xlane.xlu0 %1067
      %v1069 = vsel %vm596, %v1058, -inf
      %1070 = vmax.xlane.f32.xlu0 %v1069
      %v1071 = vpop.xlane.xlu0 %1070
      %v1072 = vsel %vm603, %v1063, -inf
      %1073 = vmax.xlane.f32.xlu0 %v1072
      %v1074 = vpop.xlane.xlu0 %1073
      %v1075 = vsub.f32 %v1053, %v1068
      %v1076 = vsub.f32 %v1058, %v1071
      %v1077 = vsub.f32 %v1063, %v1074
      %v1078 = vmul.f32 %v1075, 1.442695
      %v1079 = vpow.pop %v1078
      %v1080 = vmul.f32 %v1076, 1.442695
      %v1081 = vpow.pop %v1080
      %v1082 = vmul.f32 %v1077, 1.442695
      %v1083 = vpow.pop %v1082
      %v1084 = vsel %vm596, %v1079, 0.0
      %1085 = vadd.xlane.f32.xlu0 %v1084
      %v1086 = vpop.xlane.xlu0 %1085
      %v1087 = vsel %vm596, %v1081, 0.0
      %1088 = vadd.xlane.f32.xlu0 %v1087
      %v1089 = vpop.xlane.xlu0 %1088
      %v1090 = vsel %vm603, %v1083, 0.0
      %1091 = vadd.xlane.f32.xlu0 %v1090
      %v1092 = vpop.xlane.xlu0 %1091
      %v1093 = vrcp.pop %v1086
      %v1094 = vrcp.pop %v1089
      %v1095 = vrcp.pop %v1092
      %v1096 = vmul.f32 %v1079, %v1093
      %v1097 = vmul.f32 %v1081, %v1094
      %v1098 = vmul.f32 %v1083, %v1095
      %1099 = vrot.lane.b32.xlu0 %v480, 96
      %v1100 = vpop.permute.xlu0 %1099
      %1101 = vrot.lane.b32.xlu0 %v484, 96
      %v1102 = vpop.permute.xlu0 %1101
      %1103 = vrot.lane.b32.xlu0 %v490, 96
      %v1104 = vpop.permute.xlu0 %1103
      %v1108 = vsel %vm596, %v1096, 0
      %v1111 = vsel %vm596, %v1097, 0
      %v1114 = vsel %vm596, %v1098, 0
      %v1116 = vsel %vm640, %v1104, 0
      %1118 = vmatprep.subr.mxu0 0.0
      %1119 = vmatpush1.msra.mxu0 %v1100
      %1120 = vmatprep.subr.mxu0 0.0
      %1121 = vmatpush1.msra.mxu0 %v1102
      %1122 = vmatprep.subr.mxu0 0.0
      %1123 = vmatpush1.msra.mxu0 %v1116
      %1124 = vmatprep.subr.mxu0 0.0
      %1125 = vmatpush1.msra.mxu0 0.0
      %1126 = vmatprep.subr.mxu0 0.0
      %1127 = vmatpush1.msra.mxu0 0.0
      %1128 = vmatprep.subr.mxu0 0.0
      %1129 = vmatpush1.msra.mxu0 0.0
      %1130 = vmatprep.subr.mxu0 0.0
      %1131 = vmatpush1.msra.mxu0 0.0
      %1132 = vmatprep.subr.mxu0 0.0
      %1133 = vmatpush1.msra.mxu0 0.0
      %1134 = vmatprep.subr.mxu0 0.0
      %1135 = vmatpush1.msra.mxu0 0.0
      %1136 = vmatprep.subr.mxu0 0.0
      %1137 = vmatpush1.msra.mxu0 0.0
      %1138 = vmatprep.subr.mxu0 0.0
      %1139 = vmatpush1.msra.mxu0 0.0
      %1140 = vmatprep.subr.mxu0 0.0
      %1141 = vmatpush1.msra.mxu0 0.0
      %1142 = vmatprep.subr.mxu0 0.0
      %1143 = vmatpush1.msra.mxu0 0.0
      %1144 = vmatprep.subr.mxu0 0.0
      %1145 = vmatpush1.msra.mxu0 0.0
      %1146 = vmatprep.subr.mxu0 0.0
      %1147 = vmatpush1.msra.mxu0 0.0
      %1148 = vmatprep.subr.mxu0 0.0
      %1149 = vmatpush1.msra.mxu0 0.0
      %1150 = vmatprep.subr.mxu0 0.0
      %1151 = vmatpush1.msra.mxu0 0.0
      %1152 = vmatprep.subr.mxu0 0.0
      %1153 = vmatpush1.msra.mxu0 0.0
      %1154 = vmatprep.subr.mxu0 0.0
      %1155 = vmatpush1.msra.mxu0 0.0
      %1156 = vmatprep.subr.mxu0 0.0
      %1157 = vmatpush1.msra.mxu0 0.0
      %1158 = vmatprep.subr.mxu0 0.0
      %1159 = vmatpush1.msra.mxu0 0.0
      %1160 = vmatprep.subr.mxu0 0.0
      %1161 = vmatpush1.msra.mxu0 0.0
      %1162 = vmatprep.subr.mxu0 0.0
      %1163 = vmatpush1.msra.mxu0 0.0
      %1164 = vmatprep.subr.mxu0 0.0
      %1165 = vmatpush1.msra.mxu0 0.0
      %1166 = vmatprep.subr.mxu0 0.0
      %1167 = vmatpush1.msra.mxu0 0.0
      %1168 = vmatprep.subr.mxu0 0.0
      %1169 = vmatpush1.msra.mxu0 0.0
      %1170 = vmatprep.subr.mxu0 0.0
      %1171 = vmatpush1.msra.mxu0 0.0
      %1172 = vmatprep.subr.mxu0 0.0
      %1173 = vmatpush1.msra.mxu0 0.0
      %1174 = vmatprep.subr.mxu0 0.0
      %1175 = vmatpush1.msra.mxu0 0.0
      %1176 = vmatprep.subr.mxu0 0.0
      %1177 = vmatpush1.msra.mxu0 0.0
      %1178 = vmatprep.subr.mxu0 0.0
      %1179 = vmatpush1.msra.mxu0 0.0
      %1180 = vmatprep.subr.mxu0 0.0
      %1181 = vmatpush1.msra.mxu0 0.0
      %1182 = vmatprep.mubr.f32.mxu0 0.0
      %1183 = vmatmul.mubr.f32.gmra.mrb[0].mxu0 %v1108
      %v1184 = vpop.f32.mrb[0].mxu0
      %v1185 = vadd.f32 0.0, %v1184
      %v1186 = vpop.f32.mrb[0].mxu0
      %1187 = vmatprep.mubr.f32.mxu0 0.0
      %1188 = vmatmul.mubr.f32.gmra.mrb[0].mxu0 %v1111
      %v1189 = vpop.f32.mrb[0].mxu0
      %v1190 = vadd.f32 0.0, %v1189
      %v1191 = vpop.f32.mrb[0].mxu0
      %1192 = vmatprep.mubr.f32.mxu0 0.0
      %1193 = vmatmul.mubr.f32.gmra.mrb[0].mxu0 %v1114
      %v1194 = vpop.f32.mrb[0].mxu0
      %v1195 = vadd.f32 0.0, %v1194
      %v1196 = vpop.f32.mrb[0].mxu0
      %1197 = vdwg.mxu0
      %1198 = vrot.lane.b32.xlu0 %v478, 80
      %v1199 = vpop.permute.xlu0 %1198
      %1200 = vrot.lane.b32.xlu0 %v482, 80
      %v1201 = vpop.permute.xlu0 %1200
      %1202 = vrot.lane.b32.xlu0 %v488, 80
      %v1203 = vpop.permute.xlu0 %1202
      %1204 = vrot.lane.b32.xlu0 %v478, 16
      %v1205 = vpop.permute.xlu0 %1204
      %1206 = vrot.lane.b32.xlu0 %v482, 16
      %v1207 = vpop.permute.xlu0 %1206
      %1208 = vrot.lane.b32.xlu0 %v488, 16
      %v1209 = vpop.permute.xlu0 %1208
      %v1210 = vsel %vm503, %v1199, 0
      %v1212 = vsel %vm503, %v1201, 0
      %v1214 = vsel %vm503, %v1203, 0
      %v1216 = vsel %vm503, %v1205, 0
      %v1218 = vsel %vm503, %v1207, 0
      %v1220 = vsel %vm503, %v1209, 0
      %1222 = vmatprep.subr.mxu0 0.0
      %1223 = vmatpush1.xpose.msra.mxu0 %v1216
      %1224 = vmatprep.subr.mxu0 0.0
      %1225 = vmatpush1.xpose.msra.mxu0 %v1218
      %1226 = vmatprep.subr.mxu0 0.0
      %1227 = vmatpush1.xpose.msra.mxu0 %v1220
      %1228 = vmatprep.subr.mxu0 0.0
      %1229 = vmatpush1.xpose.msra.mxu0 0.0
      %1230 = vmatprep.subr.mxu0 0.0
      %1231 = vmatpush1.xpose.msra.mxu0 0.0
      %1232 = vmatprep.subr.mxu0 0.0
      %1233 = vmatpush1.xpose.msra.mxu0 0.0
      %1234 = vmatprep.subr.mxu0 0.0
      %1235 = vmatpush1.xpose.msra.mxu0 0.0
      %1236 = vmatprep.subr.mxu0 0.0
      %1237 = vmatpush1.xpose.msra.mxu0 0.0
      %1238 = vmatprep.subr.mxu0 0.0
      %1239 = vmatpush1.xpose.msra.mxu0 0.0
      %1240 = vmatprep.subr.mxu0 0.0
      %1241 = vmatpush1.xpose.msra.mxu0 0.0
      %1242 = vmatprep.subr.mxu0 0.0
      %1243 = vmatpush1.xpose.msra.mxu0 0.0
      %1244 = vmatprep.subr.mxu0 0.0
      %1245 = vmatpush1.xpose.msra.mxu0 0.0
      %1246 = vmatprep.subr.mxu0 0.0
      %1247 = vmatpush1.xpose.msra.mxu0 0.0
      %1248 = vmatprep.subr.mxu0 0.0
      %1249 = vmatpush1.xpose.msra.mxu0 0.0
      %1250 = vmatprep.subr.mxu0 0.0
      %1251 = vmatpush1.xpose.msra.mxu0 0.0
      %1252 = vmatprep.subr.mxu0 0.0
      %1253 = vmatpush1.xpose.msra.mxu0 0.0
      %1254 = vmatprep.subr.mxu0 0.0
      %1255 = vmatpush1.xpose.msra.mxu0 0.0
      %1256 = vmatprep.subr.mxu0 0.0
      %1257 = vmatpush1.xpose.msra.mxu0 0.0
      %1258 = vmatprep.subr.mxu0 0.0
      %1259 = vmatpush1.xpose.msra.mxu0 0.0
      %1260 = vmatprep.subr.mxu0 0.0
      %1261 = vmatpush1.xpose.msra.mxu0 0.0
      %1262 = vmatprep.subr.mxu0 0.0
      %1263 = vmatpush1.xpose.msra.mxu0 0.0
      %1264 = vmatprep.subr.mxu0 0.0
      %1265 = vmatpush1.xpose.msra.mxu0 0.0
      %1266 = vmatprep.subr.mxu0 0.0
      %1267 = vmatpush1.xpose.msra.mxu0 0.0
      %1268 = vmatprep.subr.mxu0 0.0
      %1269 = vmatpush1.xpose.msra.mxu0 0.0
      %1270 = vmatprep.subr.mxu0 0.0
      %1271 = vmatpush1.xpose.msra.mxu0 0.0
      %1272 = vmatprep.subr.mxu0 0.0
      %1273 = vmatpush1.xpose.msra.mxu0 0.0
      %1274 = vmatprep.subr.mxu0 0.0
      %1275 = vmatpush1.xpose.msra.mxu0 0.0
      %1276 = vmatprep.subr.mxu0 0.0
      %1277 = vmatpush1.xpose.msra.mxu0 0.0
      %1278 = vmatprep.subr.mxu0 0.0
      %1279 = vmatpush1.xpose.msra.mxu0 0.0
      %1280 = vmatprep.subr.mxu0 0.0
      %1281 = vmatpush1.xpose.msra.mxu0 0.0
      %1282 = vmatprep.subr.mxu0 0.0
      %1283 = vmatpush1.xpose.msra.mxu0 0.0
      %1284 = vmatprep.subr.mxu0 0.0
      %1285 = vmatpush1.xpose.msra.mxu0 0.0
      %1286 = vmatprep.mubr.f32.mxu0 0.0
      %1287 = vmatmul.mubr.f32.gmra.mrb[0].mxu0 %v1210
      %v1288 = vpop.f32.mrb[0].mxu0
      %v1289 = vadd.f32 0.0, %v1288
      %v1290 = vpop.f32.mrb[0].mxu0
      %1291 = vmatprep.mubr.f32.mxu0 0.0
      %1292 = vmatmul.mubr.f32.gmra.mrb[0].mxu0 %v1212
      %v1293 = vpop.f32.mrb[0].mxu0
      %v1294 = vadd.f32 0.0, %v1293
      %v1295 = vpop.f32.mrb[0].mxu0
      %1296 = vmatprep.mubr.f32.mxu0 0.0
      %1297 = vmatmul.mubr.f32.gmra.mrb[0].mxu0 %v1214
      %v1298 = vpop.f32.mrb[0].mxu0
      %v1299 = vadd.f32 0.0, %v1298
      %v1300 = vpop.f32.mrb[0].mxu0
      %1301 = vdwg.mxu0
      %v1302 = vsel %vm596, %v1289, -inf
      %1303 = vmax.xlane.f32.xlu0 %v1302
      %v1304 = vpop.xlane.xlu0 %1303
      %v1305 = vsel %vm596, %v1294, -inf
      %1306 = vmax.xlane.f32.xlu0 %v1305
      %v1307 = vpop.xlane.xlu0 %1306
      %v1308 = vsel %vm603, %v1299, -inf
      %1309 = vmax.xlane.f32.xlu0 %v1308
      %v1310 = vpop.xlane.xlu0 %1309
      %v1311 = vsub.f32 %v1289, %v1304
      %v1312 = vsub.f32 %v1294, %v1307
      %v1313 = vsub.f32 %v1299, %v1310
      %v1314 = vmul.f32 %v1311, 1.442695
      %v1315 = vpow.pop %v1314
      %v1316 = vmul.f32 %v1312, 1.442695
      %v1317 = vpow.pop %v1316
      %v1318 = vmul.f32 %v1313, 1.442695
      %v1319 = vpow.pop %v1318
      %v1320 = vsel %vm596, %v1315, 0.0
      %1321 = vadd.xlane.f32.xlu0 %v1320
      %v1322 = vpop.xlane.xlu0 %1321
      %v1323 = vsel %vm596, %v1317, 0.0
      %1324 = vadd.xlane.f32.xlu0 %v1323
      %v1325 = vpop.xlane.xlu0 %1324
      %v1326 = vsel %vm603, %v1319, 0.0
      %1327 = vadd.xlane.f32.xlu0 %v1326
      %v1328 = vpop.xlane.xlu0 %1327
      %v1329 = vrcp.pop %v1322
      %v1330 = vrcp.pop %v1325
      %v1331 = vrcp.pop %v1328
      %v1332 = vmul.f32 %v1315, %v1329
      %v1333 = vmul.f32 %v1317, %v1330
      %v1334 = vmul.f32 %v1319, %v1331
      %1335 = vrot.lane.b32.xlu0 %v480, 80
      %v1336 = vpop.permute.xlu0 %1335
      %1337 = vrot.lane.b32.xlu0 %v484, 80
      %v1338 = vpop.permute.xlu0 %1337
      %1339 = vrot.lane.b32.xlu0 %v490, 80
      %v1340 = vpop.permute.xlu0 %1339
      %v1344 = vsel %vm596, %v1332, 0
      %v1347 = vsel %vm596, %v1333, 0
      %v1350 = vsel %vm596, %v1334, 0
      %v1352 = vsel %vm640, %v1340, 0
      %1354 = vmatprep.subr.mxu0 0.0
      %1355 = vmatpush1.msra.mxu0 %v1336
      %1356 = vmatprep.subr.mxu0 0.0
      %1357 = vmatpush1.msra.mxu0 %v1338
      %1358 = vmatprep.subr.mxu0 0.0
      %1359 = vmatpush1.msra.mxu0 %v1352
      %1360 = vmatprep.subr.mxu0 0.0
      %1361 = vmatpush1.msra.mxu0 0.0
      %1362 = vmatprep.subr.mxu0 0.0
      %1363 = vmatpush1.msra.mxu0 0.0
      %1364 = vmatprep.subr.mxu0 0.0
      %1365 = vmatpush1.msra.mxu0 0.0
      %1366 = vmatprep.subr.mxu0 0.0
      %1367 = vmatpush1.msra.mxu0 0.0
      %1368 = vmatprep.subr.mxu0 0.0
      %1369 = vmatpush1.msra.mxu0 0.0
      %1370 = vmatprep.subr.mxu0 0.0
      %1371 = vmatpush1.msra.mxu0 0.0
      %1372 = vmatprep.subr.mxu0 0.0
      %1373 = vmatpush1.msra.mxu0 0.0
      %1374 = vmatprep.subr.mxu0 0.0
      %1375 = vmatpush1.msra.mxu0 0.0
      %1376 = vmatprep.subr.mxu0 0.0
      %1377 = vmatpush1.msra.mxu0 0.0
      %1378 = vmatprep.subr.mxu0 0.0
      %1379 = vmatpush1.msra.mxu0 0.0
      %1380 = vmatprep.subr.mxu0 0.0
      %1381 = vmatpush1.msra.mxu0 0.0
      %1382 = vmatprep.subr.mxu0 0.0
      %1383 = vmatpush1.msra.mxu0 0.0
      %1384 = vmatprep.subr.mxu0 0.0
      %1385 = vmatpush1.msra.mxu0 0.0
      %1386 = vmatprep.subr.mxu0 0.0
      %1387 = vmatpush1.msra.mxu0 0.0
      %1388 = vmatprep.subr.mxu0 0.0
      %1389 = vmatpush1.msra.mxu0 0.0
      %1390 = vmatprep.subr.mxu0 0.0
      %1391 = vmatpush1.msra.mxu0 0.0
      %1392 = vmatprep.subr.mxu0 0.0
      %1393 = vmatpush1.msra.mxu0 0.0
      %1394 = vmatprep.subr.mxu0 0.0
      %1395 = vmatpush1.msra.mxu0 0.0
      %1396 = vmatprep.subr.mxu0 0.0
      %1397 = vmatpush1.msra.mxu0 0.0
      %1398 = vmatprep.subr.mxu0 0.0
      %1399 = vmatpush1.msra.mxu0 0.0
      %1400 = vmatprep.subr.mxu0 0.0
      %1401 = vmatpush1.msra.mxu0 0.0
      %1402 = vmatprep.subr.mxu0 0.0
      %1403 = vmatpush1.msra.mxu0 0.0
      %1404 = vmatprep.subr.mxu0 0.0
      %1405 = vmatpush1.msra.mxu0 0.0
      %1406 = vmatprep.subr.mxu0 0.0
      %1407 = vmatpush1.msra.mxu0 0.0
      %1408 = vmatprep.subr.mxu0 0.0
      %1409 = vmatpush1.msra.mxu0 0.0
      %1410 = vmatprep.subr.mxu0 0.0
      %1411 = vmatpush1.msra.mxu0 0.0
      %1412 = vmatprep.subr.mxu0 0.0
      %1413 = vmatpush1.msra.mxu0 0.0
      %1414 = vmatprep.subr.mxu0 0.0
      %1415 = vmatpush1.msra.mxu0 0.0
      %1416 = vmatprep.subr.mxu0 0.0
      %1417 = vmatpush1.msra.mxu0 0.0
      %1418 = vmatprep.mubr.f32.mxu0 0.0
      %1419 = vmatmul.mubr.f32.gmra.mrb[0].mxu0 %v1344
      %v1420 = vpop.f32.mrb[0].mxu0
      %v1421 = vadd.f32 0.0, %v1420
      %v1422 = vpop.f32.mrb[0].mxu0
      %1423 = vmatprep.mubr.f32.mxu0 0.0
      %1424 = vmatmul.mubr.f32.gmra.mrb[0].mxu0 %v1347
      %v1425 = vpop.f32.mrb[0].mxu0
      %v1426 = vadd.f32 0.0, %v1425
      %v1427 = vpop.f32.mrb[0].mxu0
      %1428 = vmatprep.mubr.f32.mxu0 0.0
      %1429 = vmatmul.mubr.f32.gmra.mrb[0].mxu0 %v1350
      %v1430 = vpop.f32.mrb[0].mxu0
      %v1431 = vadd.f32 0.0, %v1430
      %v1432 = vpop.f32.mrb[0].mxu0
      %1433 = vdwg.mxu0
      %1437 = vrot.lane.b32.xlu0 %v949, 16
      %v1438 = vpop.permute.xlu0 %1437
      %1439 = vrot.lane.b32.xlu0 %v954, 16
      %v1440 = vpop.permute.xlu0 %1439
      %1441 = vrot.lane.b32.xlu0 %v959, 16
      %v1442 = vpop.permute.xlu0 %1441
      %1449 = vrot.lane.b32.xlu0 %v1185, 32
      %v1450 = vpop.permute.xlu0 %1449
      %1451 = vrot.lane.b32.xlu0 %v1190, 32
      %v1452 = vpop.permute.xlu0 %1451
      %1453 = vrot.lane.b32.xlu0 %v1195, 32
      %v1454 = vpop.permute.xlu0 %1453
      %1461 = vrot.lane.b32.xlu0 %v1421, 48
      %v1462 = vpop.permute.xlu0 %1461
      %1463 = vrot.lane.b32.xlu0 %v1426, 48
      %v1464 = vpop.permute.xlu0 %1463
      %1465 = vrot.lane.b32.xlu0 %v1431, 48
      %v1466 = vpop.permute.xlu0 %1465
      %v1470 = vsel %vm503, %v711, %v1438
      %v1471 = vsel %vm503, %v716, %v1440
      %v1472 = vsel %vm503, %v721, %v1442
      %vm1473 = vcmask 261120
      %v1474 = vsel %vm1473, %v1470, %v1450
      %v1475 = vsel %vm1473, %v1471, %v1452
      %v1476 = vsel %vm1473, %v1472, %v1454
      %vm1477 = vcmask 392192
      %v1478 = vsel %vm1477, %v1474, %v1462
      %v1479 = vsel %vm1477, %v1475, %v1464
      %v1480 = vsel %vm1477, %v1476, %v1466
      %v1481 = vpack.c.bf16 %v1479, %v1478
      %v1482 = vpack.c.bf16 %v1480, %v1480
      %v1483 = vld [vmem:[%s5] sm:$0xf]
      %v1484 = vld [vmem:[%s5 + $0x4] sm:$0xf]
      %v1485 = vld [vmem:[%s5 + $0x8] sm:$0xf]
      %v1486 = vld [vmem:[%s5 + $0xc] sm:$0xf]
      %v1487 = vld [vmem:[%s5 + $0x10] sm:$0xf]
      %v1488 = vld [vmem:[%s5 + $0x14] sm:$0xf]
      %v1489 = vld [vmem:[%s5 + $0x18] sm:$0xf]
      %v1490 = vld [vmem:[%s5 + $0x1c] sm:$0xf]
      %v1499 = vunpack.c.l.b16 %v1483
      %v1500 = vunpack.c.l.b16 %v1484
      %v1501 = vunpack.c.l.b16 %v1485
      %v1502 = vunpack.c.l.b16 %v1486
      %v1503 = vunpack.c.l.b16 %v1487
      %v1504 = vunpack.c.l.b16 %v1488
      %v1505 = vunpack.c.l.b16 %v1489
      %v1506 = vunpack.c.l.b16 %v1490
      %v1507 = vpack.c.b16 %v1500, %v1499
      %v1508 = vpack.c.b16 %v1502, %v1501
      %v1509 = vpack.c.b16 %v1504, %v1503
      %v1510 = vpack.c.b16 %v1506, %v1505
      %v1516 = vsel %vm319, %v1481, 0
      %v1519 = vsel %vm319, %v1482, 0
      %1521 = vmatprep.subr.bf16.mxu0 0
      %1522 = vmatpush1.bf16.msra.mxu0 %v1507
      %1523 = vmatprep.subr.bf16.mxu0 0
      %1524 = vmatpush1.bf16.msra.mxu0 %v1508
      %1525 = vmatprep.subr.bf16.mxu0 0
      %1526 = vmatpush1.bf16.msra.mxu0 %v1509
      %1527 = vmatprep.subr.bf16.mxu0 0
      %1528 = vmatpush1.bf16.msra.mxu0 %v1510
      %1529 = vmatprep.subr.bf16.mxu0 0
      %1530 = vmatpush1.bf16.msra.mxu0 0
      %1531 = vmatprep.subr.bf16.mxu0 0
      %1532 = vmatpush1.bf16.msra.mxu0 0
      %1533 = vmatprep.subr.bf16.mxu0 0
      %1534 = vmatpush1.bf16.msra.mxu0 0
      %1535 = vmatprep.subr.bf16.mxu0 0
      %1536 = vmatpush1.bf16.msra.mxu0 0
      %1537 = vmatprep.subr.bf16.mxu0 0
      %1538 = vmatpush1.bf16.msra.mxu0 0
      %1539 = vmatprep.subr.bf16.mxu0 0
      %1540 = vmatpush1.bf16.msra.mxu0 0
      %1541 = vmatprep.subr.bf16.mxu0 0
      %1542 = vmatpush1.bf16.msra.mxu0 0
      %1543 = vmatprep.subr.bf16.mxu0 0
      %1544 = vmatpush1.bf16.msra.mxu0 0
      %1545 = vmatprep.subr.bf16.mxu0 0
      %1546 = vmatpush1.bf16.msra.mxu0 0
      %1547 = vmatprep.subr.bf16.mxu0 0
      %1548 = vmatpush1.bf16.msra.mxu0 0
      %1549 = vmatprep.subr.bf16.mxu0 0
      %1550 = vmatpush1.bf16.msra.mxu0 0
      %1551 = vmatprep.subr.bf16.mxu0 0
      %1552 = vmatpush1.bf16.msra.mxu0 0
      %1553 = vmatprep.mubr.bf16.mxu0 0
      %1554 = vmatmul.mubr.bf16.gmra.mrb[0].mxu0 %v1516
      %v1555 = vpop.f32.mrb[0].mxu0
      %v1556 = vadd.f32 0.0, %v1555
      %v1557 = vpop.f32.mrb[0].mxu0
      %v1558 = vpop.f32.mrb[0].mxu0
      %v1559 = vadd.f32 0.0, %v1558
      %v1560 = vpop.f32.mrb[0].mxu0
      %1561 = vmatprep.mubr.bf16.mxu0 0
      %1562 = vmatmul.mubr.bf16.gmra.mrb[0].mxu0 %v1519
      %v1563 = vpop.f32.mrb[0].mxu0
      %v1564 = vadd.f32 0.0, %v1563
      %v1565 = vpop.f32.mrb[0].mxu0
      %v1566 = vpop.f32.mrb[0].mxu0
      %v1567 = vpop.f32.mrb[0].mxu0
      %1568 = vdwg.mxu0
      %v1569 = vadd.f32 %v310, %v1556
      %v1570 = vadd.f32 %v311, %v1559
      %v1571 = vadd.f32 %v312, %v1564
      %v1572 = vlaneseq
      %v1573 = vshrl.u32 %v1572, 7
      %v1574 = vsub.s32 0, %v1573
      %v1575 = vrot.slane %v317, %v1574
      %v1576 = vadd.f32 %v1569, %v1575
      %v1577 = vadd.f32 %v1570, %v1575
      %v1578 = vadd.f32 %v1571, %v1575
      %v1579 = vsel %vm319, %v1576, 0.0
      %1580 = vadd.xlane.f32.xlu0 %v1579
      %v1581 = vpop.xlane.xlu0 %1580
      %v1582 = vsel %vm319, %v1577, 0.0
      %1583 = vadd.xlane.f32.xlu0 %v1582
      %v1584 = vpop.xlane.xlu0 %1583
      %v1585 = vsel %vm326, %v1578, 0.0
      %1586 = vadd.xlane.f32.xlu0 %v1585
      %v1587 = vpop.xlane.xlu0 %1586
      %v1588 = vmul.f32 %v1581, %v330
      %v1589 = vmul.f32 %v1584, %v330
      %v1590 = vmul.f32 %v1587, %v330
      %v1591 = vsub.f32 %v1576, %v1588
      %v1592 = vsub.f32 %v1577, %v1589
      %v1593 = vsub.f32 %v1578, %v1590
      %v1594 = vmul.f32 %v1591, %v1591
      %v1595 = vmul.f32 %v1592, %v1592
      %v1596 = vmul.f32 %v1593, %v1593
      %v1597 = vsel %vm319, %v1594, 0.0
      %1598 = vadd.xlane.f32.xlu0 %v1597
      %v1599 = vpop.xlane.xlu0 %1598
      %v1600 = vsel %vm319, %v1595, 0.0
      %1601 = vadd.xlane.f32.xlu0 %v1600
      %v1602 = vpop.xlane.xlu0 %1601
      %v1603 = vsel %vm326, %v1596, 0.0
      %1604 = vadd.xlane.f32.xlu0 %v1603
      %v1605 = vpop.xlane.xlu0 %1604
      %v1606 = vmul.f32 %v1599, %v330
      %v1607 = vmul.f32 %v1602, %v330
      %v1608 = vmul.f32 %v1605, %v330
      %v1609 = vadd.f32 %v1606, 1e-05
      %v1610 = vadd.f32 %v1607, 1e-05
      %v1611 = vadd.f32 %v1608, 1e-05
      %v1612 = vrsqrt.pop %v1609
      %v1613 = vrsqrt.pop %v1610
      %v1614 = vrsqrt.pop %v1611
      %v1615 = vmul.f32 %v1591, %v1612
      %v1616 = vmul.f32 %v1592, %v1613
      %v1617 = vmul.f32 %v1593, %v1614
      %v1618 = vlaneseq
      %v1619 = vshrl.u32 %v1618, 7
      %v1620 = vsub.s32 0, %v1619
      %v1621 = vrot.slane %v315, %v1620
      %v1622 = vmul.f32 %v1615, %v1621
      %v1623 = vmul.f32 %v1616, %v1621
      %v1624 = vmul.f32 %v1617, %v1621
      %v1625 = vlaneseq
      %v1626 = vshrl.u32 %v1625, 7
      %v1627 = vsub.s32 0, %v1626
      %v1628 = vrot.slane %v316, %v1627
      %v1629 = vadd.f32 %v1622, %v1628
      %v1630 = vadd.f32 %v1623, %v1628
      %v1631 = vadd.f32 %v1624, %v1628
      %v1632 = vpack.c.bf16 %v1630, %v1629
      %v1633 = vpack.c.bf16 %v1631, %v1631
      %v1634 = vld [vmem:[%s6] sm:$0xff]
      %v1635 = vld [vmem:[%s6 + $0x8] sm:$0xff]
      %v1636 = vld [vmem:[%s6 + $0x10] sm:$0xff]
      %v1637 = vld [vmem:[%s6 + $0x18] sm:$0xff]
      %v1638 = vld [vmem:[%s6 + $0x20] sm:$0xff]
      %v1639 = vld [vmem:[%s6 + $0x28] sm:$0xff]
      %v1640 = vld [vmem:[%s6 + $0x30] sm:$0xff]
      %v1641 = vld [vmem:[%s6 + $0x38] sm:$0xff]
      %v1642 = vld [vmem:[%s3] sm:$0x3]
      %v1644 = vlaneseq
      %v1645 = vshrl.u32 %v1644, 7
      %v1646 = vsub.s32 0, %v1645
      %v1647 = vrot.slane %v1642, %v1646
      %v1648 = vlaneseq
      %v1649 = vshrl.u32 %v1648, 7
      %v1650 = vsub.s32 1, %v1649
      %v1651 = vrot.slane %v1642, %v1650
      %v1662 = vunpack.c.l.b16 %v1634
      %v1663 = vunpack.c.h.b16 %v1634
      %v1664 = vunpack.c.l.b16 %v1635
      %v1665 = vunpack.c.h.b16 %v1635
      %v1666 = vunpack.c.l.b16 %v1636
      %v1667 = vunpack.c.h.b16 %v1636
      %v1668 = vunpack.c.l.b16 %v1637
      %v1669 = vunpack.c.h.b16 %v1637
      %v1670 = vunpack.c.l.b16 %v1638
      %v1671 = vunpack.c.h.b16 %v1638
      %v1672 = vunpack.c.l.b16 %v1639
      %v1673 = vunpack.c.h.b16 %v1639
      %v1674 = vunpack.c.l.b16 %v1640
      %v1675 = vunpack.c.h.b16 %v1640
      %v1676 = vunpack.c.l.b16 %v1641
      %v1677 = vunpack.c.h.b16 %v1641
      %v1678 = vpack.c.b16 %v1664, %v1662
      %v1679 = vpack.c.b16 %v1665, %v1663
      %v1680 = vpack.c.b16 %v1668, %v1666
      %v1681 = vpack.c.b16 %v1669, %v1667
      %v1682 = vpack.c.b16 %v1672, %v1670
      %v1683 = vpack.c.b16 %v1673, %v1671
      %v1684 = vpack.c.b16 %v1676, %v1674
      %v1685 = vpack.c.b16 %v1677, %v1675
      %v1695 = vsel %vm319, %v1632, 0
      %v1698 = vsel %vm319, %v1633, 0
      %1700 = vmatprep.subr.bf16.mxu0 %v1679
      %1701 = vmatpush1.bf16.msra.mxu0 %v1678
      %1702 = vmatprep.subr.bf16.mxu0 %v1681
      %1703 = vmatpush1.bf16.msra.mxu0 %v1680
      %1704 = vmatprep.subr.bf16.mxu0 %v1683
      %1705 = vmatpush1.bf16.msra.mxu0 %v1682
      %1706 = vmatprep.subr.bf16.mxu0 %v1685
      %1707 = vmatpush1.bf16.msra.mxu0 %v1684
      %1708 = vmatprep.subr.bf16.mxu0 0
      %1709 = vmatpush1.bf16.msra.mxu0 0
      %1710 = vmatprep.subr.bf16.mxu0 0
      %1711 = vmatpush1.bf16.msra.mxu0 0
      %1712 = vmatprep.subr.bf16.mxu0 0
      %1713 = vmatpush1.bf16.msra.mxu0 0
      %1714 = vmatprep.subr.bf16.mxu0 0
      %1715 = vmatpush1.bf16.msra.mxu0 0
      %1716 = vmatprep.subr.bf16.mxu0 0
      %1717 = vmatpush1.bf16.msra.mxu0 0
      %1718 = vmatprep.subr.bf16.mxu0 0
      %1719 = vmatpush1.bf16.msra.mxu0 0
      %1720 = vmatprep.subr.bf16.mxu0 0
      %1721 = vmatpush1.bf16.msra.mxu0 0
      %1722 = vmatprep.subr.bf16.mxu0 0
      %1723 = vmatpush1.bf16.msra.mxu0 0
      %1724 = vmatprep.subr.bf16.mxu0 0
      %1725 = vmatpush1.bf16.msra.mxu0 0
      %1726 = vmatprep.subr.bf16.mxu0 0
      %1727 = vmatpush1.bf16.msra.mxu0 0
      %1728 = vmatprep.subr.bf16.mxu0 0
      %1729 = vmatpush1.bf16.msra.mxu0 0
      %1730 = vmatprep.subr.bf16.mxu0 0
      %1731 = vmatpush1.bf16.msra.mxu0 0
      %1732 = vmatprep.mubr.bf16.mxu0 0
      %1733 = vmatmul.mubr.bf16.gmra.mrb[0].mxu0 %v1695
      %v1734 = vpop.f32.mrb[0].mxu0
      %v1735 = vadd.f32 %v1647, %v1734
      %v1736 = vpop.f32.mrb[0].mxu0
      %v1737 = vadd.f32 %v1651, %v1736
      %v1738 = vpop.f32.mrb[0].mxu0
      %v1739 = vadd.f32 %v1647, %v1738
      %v1740 = vpop.f32.mrb[0].mxu0
      %v1741 = vadd.f32 %v1651, %v1740
      %1742 = vmatprep.mubr.bf16.mxu0 0
      %1743 = vmatmul.mubr.bf16.gmra.mrb[0].mxu0 %v1698
      %v1744 = vpop.f32.mrb[0].mxu0
      %v1745 = vadd.f32 %v1647, %v1744
      %v1746 = vpop.f32.mrb[0].mxu0
      %v1747 = vadd.f32 %v1651, %v1746
      %v1748 = vpop.f32.mrb[0].mxu0
      %v1749 = vpop.f32.mrb[0].mxu0
      %1750 = vdwg.mxu0
      %v1751 = vmul.f32 %v1735, 1.702
      %v1752 = vmul.f32 %v1737, 1.702
      %v1753 = vmul.f32 %v1739, 1.702
      %v1754 = vmul.f32 %v1741, 1.702
      %v1755 = vmul.f32 %v1745, 1.702
      %v1756 = vmul.f32 %v1747, 1.702
      %v1757 = vxor.u32 %v1751, 2147483648
      %v1758 = vxor.u32 %v1752, 2147483648
      %v1759 = vxor.u32 %v1753, 2147483648
      %v1760 = vxor.u32 %v1754, 2147483648
      %v1761 = vxor.u32 %v1755, 2147483648
      %v1762 = vxor.u32 %v1756, 2147483648
      %v1763 = vmul.f32 %v1757, 1.442695
      %v1764 = vpow.pop %v1763
      %v1765 = vmul.f32 %v1758, 1.442695
      %v1766 = vpow.pop %v1765
      %v1767 = vmul.f32 %v1759, 1.442695
      %v1768 = vpow.pop %v1767
      %v1769 = vmul.f32 %v1760, 1.442695
      %v1770 = vpow.pop %v1769
      %v1771 = vmul.f32 %v1761, 1.442695
      %v1772 = vpow.pop %v1771
      %v1773 = vmul.f32 %v1762, 1.442695
      %v1774 = vpow.pop %v1773
      %v1775 = vadd.f32 %v1764, 1.0
      %v1776 = vadd.f32 %v1766, 1.0
      %v1777 = vadd.f32 %v1768, 1.0
      %v1778 = vadd.f32 %v1770, 1.0
      %v1779 = vadd.f32 %v1772, 1.0
      %v1780 = vadd.f32 %v1774, 1.0
      %v1781 = vrcp.pop %v1775
      %v1782 = vmul.f32 1.0, %v1781
      %v1783 = vrcp.pop %v1776
      %v1784 = vmul.f32 1.0, %v1783
      %v1785 = vrcp.pop %v1777
      %v1786 = vmul.f32 1.0, %v1785
      %v1787 = vrcp.pop %v1778
      %v1788 = vmul.f32 1.0, %v1787
      %v1789 = vrcp.pop %v1779
      %v1790 = vmul.f32 1.0, %v1789
      %v1791 = vrcp.pop %v1780
      %v1792 = vmul.f32 1.0, %v1791
      %v1793 = vmul.f32 %v1735, %v1782
      %v1794 = vmul.f32 %v1737, %v1784
      %v1795 = vmul.f32 %v1739, %v1786
      %v1796 = vmul.f32 %v1741, %v1788
      %v1797 = vmul.f32 %v1745, %v1790
      %v1798 = vmul.f32 %v1747, %v1792
      %v1799 = vpack.c.bf16 %v1795, %v1793
      %v1800 = vpack.c.bf16 %v1796, %v1794
      %v1801 = vpack.c.bf16 %v1797, %v1797
      %v1802 = vpack.c.bf16 %v1798, %v1798
      %v1803 = vld [vmem:[%s7] sm:$0xf]
      %v1804 = vld [vmem:[%s7 + $0x4] sm:$0xf]
      %v1805 = vld [vmem:[%s7 + $0x8] sm:$0xf]
      %v1806 = vld [vmem:[%s7 + $0xc] sm:$0xf]
      %v1807 = vld [vmem:[%s7 + $0x10] sm:$0xf]
      %v1808 = vld [vmem:[%s7 + $0x14] sm:$0xf]
      %v1809 = vld [vmem:[%s7 + $0x18] sm:$0xf]
      %v1810 = vld [vmem:[%s7 + $0x1c] sm:$0xf]
      %v1811 = vld [vmem:[%s7 + $0x20] sm:$0xf]
      %v1812 = vld [vmem:[%s7 + $0x24] sm:$0xf]
      %v1813 = vld [vmem:[%s7 + $0x28] sm:$0xf]
      %v1814 = vld [vmem:[%s7 + $0x2c] sm:$0xf]
      %v1815 = vld [vmem:[%s7 + $0x30] sm:$0xf]
      %v1816 = vld [vmem:[%s7 + $0x34] sm:$0xf]
      %v1817 = vld [vmem:[%s7 + $0x38] sm:$0xf]
      %v1818 = vld [vmem:[%s7 + $0x3c] sm:$0xf]
      %v1819 = vld [vmem:[%s7 + $0x40] sm:$0xf]
      %v1820 = vld [vmem:[%s7 + $0x44] sm:$0xf]
      %v1821 = vld [vmem:[%s7 + $0x48] sm:$0xf]
      %v1822 = vld [vmem:[%s7 + $0x4c] sm:$0xf]
      %v1823 = vld [vmem:[%s7 + $0x50] sm:$0xf]
      %v1824 = vld [vmem:[%s7 + $0x54] sm:$0xf]
      %v1825 = vld [vmem:[%s7 + $0x58] sm:$0xf]
      %v1826 = vld [vmem:[%s7 + $0x5c] sm:$0xf]
      %v1827 = vld [vmem:[%s7 + $0x60] sm:$0xf]
      %v1828 = vld [vmem:[%s7 + $0x64] sm:$0xf]
      %v1829 = vld [vmem:[%s7 + $0x68] sm:$0xf]
      %v1830 = vld [vmem:[%s7 + $0x6c] sm:$0xf]
      %v1831 = vld [vmem:[%s7 + $0x70] sm:$0xf]
      %v1832 = vld [vmem:[%s7 + $0x74] sm:$0xf]
      %v1833 = vld [vmem:[%s7 + $0x78] sm:$0xf]
      %v1834 = vld [vmem:[%s7 + $0x7c] sm:$0xf]
      %v1835 = vlaneseq
      %v1836 = vshrl.u32 %v1835, 7
      %v1837 = vsub.s32 0, %v1836
      %v1838 = vrot.slane %v318, %v1837
      %v1871 = vunpack.c.l.b16 %v1803
      %v1872 = vunpack.c.l.b16 %v1804
      %v1873 = vunpack.c.l.b16 %v1805
      %v1874 = vunpack.c.l.b16 %v1806
      %v1875 = vunpack.c.l.b16 %v1807
      %v1876 = vunpack.c.l.b16 %v1808
      %v1877 = vunpack.c.l.b16 %v1809
      %v1878 = vunpack.c.l.b16 %v1810
      %v1879 = vunpack.c.l.b16 %v1811
      %v1880 = vunpack.c.l.b16 %v1812
      %v1881 = vunpack.c.l.b16 %v1813
      %v1882 = vunpack.c.l.b16 %v1814
      %v1883 = vunpack.c.l.b16 %v1815
      %v1884 = vunpack.c.l.b16 %v1816
      %v1885 = vunpack.c.l.b16 %v1817
      %v1886 = vunpack.c.l.b16 %v1818
      %v1887 = vunpack.c.l.b16 %v1819
      %v1888 = vunpack.c.l.b16 %v1820
      %v1889 = vunpack.c.l.b16 %v1821
      %v1890 = vunpack.c.l.b16 %v1822
      %v1891 = vunpack.c.l.b16 %v1823
      %v1892 = vunpack.c.l.b16 %v1824
      %v1893 = vunpack.c.l.b16 %v1825
      %v1894 = vunpack.c.l.b16 %v1826
      %v1895 = vunpack.c.l.b16 %v1827
      %v1896 = vunpack.c.l.b16 %v1828
      %v1897 = vunpack.c.l.b16 %v1829
      %v1898 = vunpack.c.l.b16 %v1830
      %v1899 = vunpack.c.l.b16 %v1831
      %v1900 = vunpack.c.l.b16 %v1832
      %v1901 = vunpack.c.l.b16 %v1833
      %v1902 = vunpack.c.l.b16 %v1834
      %v1903 = vpack.c.b16 %v1872, %v1871
      %v1904 = vpack.c.b16 %v1874, %v1873
      %v1905 = vpack.c.b16 %v1876, %v1875
      %v1906 = vpack.c.b16 %v1878, %v1877
      %v1907 = vpack.c.b16 %v1880, %v1879
      %v1908 = vpack.c.b16 %v1882, %v1881
      %v1909 = vpack.c.b16 %v1884, %v1883
      %v1910 = vpack.c.b16 %v1886, %v1885
      %v1911 = vpack.c.b16 %v1888, %v1887
      %v1912 = vpack.c.b16 %v1890, %v1889
      %v1913 = vpack.c.b16 %v1892, %v1891
      %v1914 = vpack.c.b16 %v1894, %v1893
      %v1915 = vpack.c.b16 %v1896, %v1895
      %v1916 = vpack.c.b16 %v1898, %v1897
      %v1917 = vpack.c.b16 %v1900, %v1899
      %v1918 = vpack.c.b16 %v1902, %v1901
      %1935 = vmatprep.subr.bf16.mxu0 0
      %1936 = vmatpush1.bf16.msra.mxu0 %v1903
      %1937 = vmatprep.subr.bf16.mxu0 0
      %1938 = vmatpush1.bf16.msra.mxu0 %v1904
      %1939 = vmatprep.subr.bf16.mxu0 0
      %1940 = vmatpush1.bf16.msra.mxu0 %v1905
      %1941 = vmatprep.subr.bf16.mxu0 0
      %1942 = vmatpush1.bf16.msra.mxu0 %v1906
      %1943 = vmatprep.subr.bf16.mxu0 0
      %1944 = vmatpush1.bf16.msra.mxu0 %v1907
      %1945 = vmatprep.subr.bf16.mxu0 0
      %1946 = vmatpush1.bf16.msra.mxu0 %v1908
      %1947 = vmatprep.subr.bf16.mxu0 0
      %1948 = vmatpush1.bf16.msra.mxu0 %v1909
      %1949 = vmatprep.subr.bf16.mxu0 0
      %1950 = vmatpush1.bf16.msra.mxu0 %v1910
      %1951 = vmatprep.subr.bf16.mxu0 0
      %1952 = vmatpush1.bf16.msra.mxu0 %v1911
      %1953 = vmatprep.subr.bf16.mxu0 0
      %1954 = vmatpush1.bf16.msra.mxu0 %v1912
      %1955 = vmatprep.subr.bf16.mxu0 0
      %1956 = vmatpush1.bf16.msra.mxu0 %v1913
      %1957 = vmatprep.subr.bf16.mxu0 0
      %1958 = vmatpush1.bf16.msra.mxu0 %v1914
      %1959 = vmatprep.subr.bf16.mxu0 0
      %1960 = vmatpush1.bf16.msra.mxu0 %v1915
      %1961 = vmatprep.subr.bf16.mxu0 0
      %1962 = vmatpush1.bf16.msra.mxu0 %v1916
      %1963 = vmatprep.subr.bf16.mxu0 0
      %1964 = vmatpush1.bf16.msra.mxu0 %v1917
      %1965 = vmatprep.subr.bf16.mxu0 0
      %1966 = vmatpush1.bf16.msra.mxu0 %v1918
      %1967 = vmatprep.mubr.bf16.mxu0 %v1800
      %1968 = vmatmul.mubr.bf16.gmra.mrb[0].mxu0 %v1799
      %v1969 = vpop.f32.mrb[0].mxu0
      %v1970 = vadd.f32 %v1838, %v1969
      %v1971 = vpop.f32.mrb[0].mxu0
      %v1972 = vpop.f32.mrb[0].mxu0
      %v1973 = vadd.f32 %v1838, %v1972
      %v1974 = vpop.f32.mrb[0].mxu0
      %1975 = vmatprep.mubr.bf16.mxu0 %v1802
      %1976 = vmatmul.mubr.bf16.gmra.mrb[0].mxu0 %v1801
      %v1977 = vpop.f32.mrb[0].mxu0
      %v1978 = vadd.f32 %v1838, %v1977
      %v1979 = vpop.f32.mrb[0].mxu0
      %v1980 = vpop.f32.mrb[0].mxu0
      %v1981 = vpop.f32.mrb[0].mxu0
      %1982 = vdwg.mxu0
      %v1983 = vadd.f32 %v1576, %v1970
      %v1984 = vadd.f32 %v1577, %v1973
      %v1985 = vadd.f32 %v1578, %v1978
      %v1986 = vpack.c.bf16 %v1984, %v1983
      %v1987 = vpack.c.bf16 %v1985, %v1985
      %v1990 = vunpack.c.l.b16 %v1986
      %v1991 = vunpack.c.h.b16 %v1986
      %v1992 = vunpack.c.l.b16 %v1987
      %v1993 = vpack.c.b16 %v1990, %v1990
      %v1994 = vpack.c.b16 %v1991, %v1991
      %v1995 = vpack.c.b16 %v1992, %v1992
      %vm1999 = vcmask 519168
      %2000 = vst.msk [vmem:[%s305] sm:$0xf] %vm1999, %v1993
      %2001 = vst.msk [vmem:[%s305 + $0x4] sm:$0xf] %vm1999, %v1994
      %vm2002 = vcmask 516096
      %vm2003 = vsmask.f32 256
      %vm2004 = vmand %vm2002, %vm2003
      %v2005 = vld [vmem:[%s305 + $0x8] sm:$0x1]
      %v2006 = vsel %vm2004, %v1995, %v2005
      %2007 = vst [vmem:[%s305 + $0x8] sm:$0x1] %v2006
      %p2008 = scmp.lt.s32.totalorder %s19, 1
      %s2009 = scalar_select %p2008, %s19, 1
      %s2010 = smul.addr %s2009, 3
      %s2011 = smul.addr %s2010, 4
      %s2012 = scalar_lea.vmem %s8, %s2011
      // Predicated region
      $region53: #{custom_clip_forward.8} parent=51 // pred_check
        %p2013 = pneg %p210
      $region54: #{custom_clip_forward.8} parent=51 // pred_check_branch
        %2015 = sbr.rel (%p2013) target = $region56
      $region55: #{custom_clip_forward.8} parent=51 // pred_region
        _
      $region56: #{custom_clip_forward.8} parent=51 // pred_fallthru
        _
    $region52: #{custom_clip_forward.8} parent=5 // pred_fallthru
      _
    %p2016 = scmp.le.s32.totalorder 2, %s14
    // Predicated region
    $region57: #{custom_clip_forward.8} parent=5 // pred_check
      %p2017 = pneg %p2016
    $region58: #{custom_clip_forward.8} parent=5 // pred_check_branch
      %2019 = sbr.rel (%p2017) target = $region60
    $region59: #{custom_clip_forward.8} parent=5 // pred_region
      %s2020 = ssub.s32 %s14, 2
      // Predicated region
      $region61: #{custom_clip_forward.8} parent=59 // pred_check
        %p2021 = pneg %p216
      $region62: #{custom_clip_forward.8} parent=59 // pred_check_branch
        %2023 = sbr.rel (%p2021) target = $region64
      $region63: #{custom_clip_forward.8} parent=59 // pred_region
        %p2024 = scmp.lt.s32.totalorder %s20, 1
        %s2025 = scalar_select %p2024, %s20, 1
        %s2026 = smul.addr %s2025, 3
        %s2027 = smul.addr %s2026, 4
        %s2028 = scalar_lea.vmem %s8, %s2027
      $region64: #{custom_clip_forward.8} parent=59 // pred_fallthru
        _
    $region60: #{custom_clip_forward.8} parent=5 // pred_fallthru
      _
  $region6: #{custom_clip_forward.8} parent=0 // loop_footer
    %s18 = sadd.s32 1, %s14
  $region7: #{custom_clip_forward.8} parent=0 // loop_footer_branch
    %13 = sbr.rel target = $region3
  $region8: #{custom_clip_forward.8} parent=0 // loop_exit
    _

// kernel: custom_clip_forward.5
$region0: #{custom_clip_forward.5}
  #allocation0 [shape = 'u32[]', space=smem, size = 0x4, offset = 0x4, fixed_abs, tag = 'smem constant byte address 0x4 - core index']
  #allocation1 [shape = 'u32[144,128]{1,0:T(1,128)}', space=vmem, size = 0x12000, scoped, tag = 'internal scratch']
  %s0 = inlined_call_operand.vmem [shape: bf16[2,32,64], index: 0, kind: input, shape index: {}, may-alias: {0,8}]
  %s1 = inlined_call_operand.vmem [shape: f32[6,64], index: 1, kind: input, shape index: {}]
  %s2 = inlined_call_operand.vmem [shape: f32[1,192], index: 2, kind: input, shape index: {}]
  %s3 = inlined_call_operand.vmem [shape: f32[1,256], index: 3, kind: input, shape index: {}]
  %s4 = inlined_call_operand.vmem [shape: bf16[64,192], index: 4, kind: input, shape index: {}]
  %s5 = inlined_call_operand.vmem [shape: bf16[64,64], index: 5, kind: input, shape index: {}]
  %s6 = inlined_call_operand.vmem [shape: bf16[64,256], index: 6, kind: input, shape index: {}]
  %s7 = inlined_call_operand.vmem [shape: bf16[256,64], index: 7, kind: input, shape index: {}]
  %s8 = inlined_call_operand.vmem [shape: bf16[2,32,64], index: 8, kind: output, shape index: {}, may-alias: {0,8}]
  %s9 = sld [smem:[#allocation0]]
  $region65: #{custom_clip_forward.5} parent=0
    _
  %s11 = ssub.s32 1, %s9
  %s12 = scalar_select 0, %s11, %s9
  loop: start=0, step=1, limit=4
  $region2: #{custom_clip_forward.5} parent=0 // loop_pre_header
    _
  $region3: #{custom_clip_forward.5} parent=0 // loop_header
    %s14 = sphi 0, %s18
    %p15 = scmp.ge.s32.totalorder %s14, 4
    %s24 = sphi 0, %s26
    %s27 = sphi 0, %s24
    %s28 = sphi 0, %s27
    %s44 = sphi 0, %s28
    %s48 = sphi 0, %s48
    %s50 = sphi 0, %s48
    %s51 = sphi 0, %s50
    %s65 = sphi 0, %s51
    %s69 = sphi 0, %s69
    %s71 = sphi 0, %s69
    %s72 = sphi 0, %s71
    %s86 = sphi 0, %s72
    %s90 = sphi 0, %s90
    %s92 = sphi 0, %s90
    %s93 = sphi 0, %s92
    %s107 = sphi 0, %s93
    %s111 = sphi 0, %s111
    %s113 = sphi 0, %s111
    %s114 = sphi 0, %s113
    %s128 = sphi 0, %s114
    %s132 = sphi 0, %s132
    %s134 = sphi 0, %s132
    %s135 = sphi 0, %s134
    %s149 = sphi 0, %s135
    %s153 = sphi 0, %s153
    %s155 = sphi 0, %s153
    %s156 = sphi 0, %s155
    %s170 = sphi 0, %s156
    %s174 = sphi 0, %s174
    %s176 = sphi 0, %s174
    %s177 = sphi 0, %s176
    %s191 = sphi 0, %s177
    %s197 = sphi 0, %s199
    %s200 = sphi 0, %s197
    %s201 = sphi 0, %s200
    %s217 = sphi 0, %s201
  $region4: #{custom_clip_forward.5} parent=0 // loop_header_branch
    %17 = sbr.rel (%p15) target = $region8
  $region5: #{custom_clip_forward.5} parent=0 // loop_body
    %s19 = ssub.s32 %s14, 1
    %s20 = ssub.s32 %s14, 2
    %s21 = sadd.s32 %s14, 1
    %s22 = ssub.s32 %s14, %s21
    %p23 = scmp.eq.s32.totalorder %s22, 0
    %s25 = sadd.s32 %s24, 1
    %s26 = scalar_select %p23, %s24, %s25
    %p29 = pneg %p23
    %p30 = scmp.eq.s32.totalorder %s14, 1
    %p31 = por %p29, %p30
    %p32 = scmp.ne.s32.totalorder %s24, %s27
    %p33 = scmp.eq.s32.totalorder %s14, 0
    %p34 = por %p32, %p33
    %p35 = scmp.ne.s32.totalorder %s24, %s27
    %p36 = scmp.eq.s32.totalorder %s19, 1
    %p37 = por %p35, %p36
    %p38 = scmp.ne.s32.totalorder %s27, %s28
    %p39 = scmp.eq.s32.totalorder %s19, 0
    %p40 = por %p38, %p39
    %p41 = scmp.ne.s32.totalorder %s27, %s28
    %p42 = scmp.eq.s32.totalorder %s20, 1
    %p43 = por %p41, %p42
    %p45 = scmp.ne.s32.totalorder %s28, %s44
    %p46 = scmp.eq.s32.totalorder %s20, 0
    %p47 = por %p45, %p46
    %s49 = sadd.s32 %s48, 1
    %p52 = scmp.eq.s32.totalorder %s14, 1
    %p53 = scmp.ne.s32.totalorder %s48, %s50
    %p54 = scmp.eq.s32.totalorder %s14, 0
    %p55 = por %p53, %p54
    %p56 = scmp.ne.s32.totalorder %s48, %s50
    %p57 = scmp.eq.s32.totalorder %s19, 1
    %p58 = por %p56, %p57
    %p59 = scmp.ne.s32.totalorder %s50, %s51
    %p60 = scmp.eq.s32.totalorder %s19, 0
    %p61 = por %p59, %p60
    %p62 = scmp.ne.s32.totalorder %s50, %s51
    %p63 = scmp.eq.s32.totalorder %s20, 1
    %p64 = por %p62, %p63
    %p66 = scmp.ne.s32.totalorder %s51, %s65
    %p67 = scmp.eq.s32.totalorder %s20, 0
    %p68 = por %p66, %p67
    %s70 = sadd.s32 %s69, 1
    %p73 = scmp.eq.s32.totalorder %s14, 1
    %p74 = scmp.ne.s32.totalorder %s69, %s71
    %p75 = scmp.eq.s32.totalorder %s14, 0
    %p76 = por %p74, %p75
    %p77 = scmp.ne.s32.totalorder %s69, %s71
    %p78 = scmp.eq.s32.totalorder %s19, 1
    %p79 = por %p77, %p78
    %p80 = scmp.ne.s32.totalorder %s71, %s72
    %p81 = scmp.eq.s32.totalorder %s19, 0
    %p82 = por %p80, %p81
    %p83 = scmp.ne.s32.totalorder %s71, %s72
    %p84 = scmp.eq.s32.totalorder %s20, 1
    %p85 = por %p83, %p84
    %p87 = scmp.ne.s32.totalorder %s72, %s86
    %p88 = scmp.eq.s32.totalorder %s20, 0
    %p89 = por %p87, %p88
    %s91 = sadd.s32 %s90, 1
    %p94 = scmp.eq.s32.totalorder %s14, 1
    %p95 = scmp.ne.s32.totalorder %s90, %s92
    %p96 = scmp.eq.s32.totalorder %s14, 0
    %p97 = por %p95, %p96
    %p98 = scmp.ne.s32.totalorder %s90, %s92
    %p99 = scmp.eq.s32.totalorder %s19, 1
    %p100 = por %p98, %p99
    %p101 = scmp.ne.s32.totalorder %s92, %s93
    %p102 = scmp.eq.s32.totalorder %s19, 0
    %p103 = por %p101, %p102
    %p104 = scmp.ne.s32.totalorder %s92, %s93
    %p105 = scmp.eq.s32.totalorder %s20, 1
    %p106 = por %p104, %p105
    %p108 = scmp.ne.s32.totalorder %s93, %s107
    %p109 = scmp.eq.s32.totalorder %s20, 0
    %p110 = por %p108, %p109
    %s112 = sadd.s32 %s111, 1
    %p115 = scmp.eq.s32.totalorder %s14, 1
    %p116 = scmp.ne.s32.totalorder %s111, %s113
    %p117 = scmp.eq.s32.totalorder %s14, 0
    %p118 = por %p116, %p117
    %p119 = scmp.ne.s32.totalorder %s111, %s113
    %p120 = scmp.eq.s32.totalorder %s19, 1
    %p121 = por %p119, %p120
    %p122 = scmp.ne.s32.totalorder %s113, %s114
    %p123 = scmp.eq.s32.totalorder %s19, 0
    %p124 = por %p122, %p123
    %p125 = scmp.ne.s32.totalorder %s113, %s114
    %p126 = scmp.eq.s32.totalorder %s20, 1
    %p127 = por %p125, %p126
    %p129 = scmp.ne.s32.totalorder %s114, %s128
    %p130 = scmp.eq.s32.totalorder %s20, 0
    %p131 = por %p129, %p130
    %s133 = sadd.s32 %s132, 1
    %p136 = scmp.eq.s32.totalorder %s14, 1
    %p137 = scmp.ne.s32.totalorder %s132, %s134
    %p138 = scmp.eq.s32.totalorder %s14, 0
    %p139 = por %p137, %p138
    %p140 = scmp.ne.s32.totalorder %s132, %s134
    %p141 = scmp.eq.s32.totalorder %s19, 1
    %p142 = por %p140, %p141
    %p143 = scmp.ne.s32.totalorder %s134, %s135
    %p144 = scmp.eq.s32.totalorder %s19, 0
    %p145 = por %p143, %p144
    %p146 = scmp.ne.s32.totalorder %s134, %s135
    %p147 = scmp.eq.s32.totalorder %s20, 1
    %p148 = por %p146, %p147
    %p150 = scmp.ne.s32.totalorder %s135, %s149
    %p151 = scmp.eq.s32.totalorder %s20, 0
    %p152 = por %p150, %p151
    %s154 = sadd.s32 %s153, 1
    %p157 = scmp.eq.s32.totalorder %s14, 1
    %p158 = scmp.ne.s32.totalorder %s153, %s155
    %p159 = scmp.eq.s32.totalorder %s14, 0
    %p160 = por %p158, %p159
    %p161 = scmp.ne.s32.totalorder %s153, %s155
    %p162 = scmp.eq.s32.totalorder %s19, 1
    %p163 = por %p161, %p162
    %p164 = scmp.ne.s32.totalorder %s155, %s156
    %p165 = scmp.eq.s32.totalorder %s19, 0
    %p166 = por %p164, %p165
    %p167 = scmp.ne.s32.totalorder %s155, %s156
    %p168 = scmp.eq.s32.totalorder %s20, 1
    %p169 = por %p167, %p168
    %p171 = scmp.ne.s32.totalorder %s156, %s170
    %p172 = scmp.eq.s32.totalorder %s20, 0
    %p173 = por %p171, %p172
    %s175 = sadd.s32 %s174, 1
    %p178 = scmp.eq.s32.totalorder %s14, 1
    %p179 = scmp.ne.s32.totalorder %s174, %s176
    %p180 = scmp.eq.s32.totalorder %s14, 0
    %p181 = por %p179, %p180
    %p182 = scmp.ne.s32.totalorder %s174, %s176
    %p183 = scmp.eq.s32.totalorder %s19, 1
    %p184 = por %p182, %p183
    %p185 = scmp.ne.s32.totalorder %s176, %s177
    %p186 = scmp.eq.s32.totalorder %s19, 0
    %p187 = por %p185, %p186
    %p188 = scmp.ne.s32.totalorder %s176, %s177
    %p189 = scmp.eq.s32.totalorder %s20, 1
    %p190 = por %p188, %p189
    %p192 = scmp.ne.s32.totalorder %s177, %s191
    %p193 = scmp.eq.s32.totalorder %s20, 0
    %p194 = por %p192, %p193
    %s195 = ssub.s32 %s14, %s21
    %p196 = scmp.eq.s32.totalorder %s195, 0
    %s198 = sadd.s32 %s197, 1
    %s199 = scalar_select %p196, %s197, %s198
    %p202 = pneg %p196
    %p203 = scmp.eq.s32.totalorder %s14, 1
    %p204 = por %p202, %p203
    %p205 = scmp.ne.s32.totalorder %s197, %s200
    %p206 = scmp.eq.s32.totalorder %s14, 0
    %p207 = por %p205, %p206
    %p208 = scmp.ne.s32.totalorder %s197, %s200
    %p209 = scmp.eq.s32.totalorder %s19, 1
    %p210 = por %p208, %p209
    %p211 = scmp.ne.s32.totalorder %s200, %s201
    %p212 = scmp.eq.s32.totalorder %s19, 0
    %p213 = por %p211, %p212
    %p214 = scmp.ne.s32.totalorder %s200, %s201
    %p215 = scmp.eq.s32.totalorder %s20, 1
    %p216 = por %p214, %p215
    %p218 = scmp.ne.s32.totalorder %s201, %s217
    %p219 = scmp.eq.s32.totalorder %s20, 0
    %p220 = por %p218, %p219
    %p221 = scmp.le.s32.totalorder 1, %s14
    %p222 = scmp.lt.s32.totalorder %s14, 3
    %p223 = pnand %p221, %p222
    %p224 = pneg %p223
    // Predicated region
    $region9: #{custom_clip_forward.5} parent=5 // pred_check
      _
    $region10: #{custom_clip_forward.5} parent=5 // pred_check_branch
      %226 = sbr.rel (%p223) target = $region12
    $region11: #{custom_clip_forward.5} parent=5 // pred_region
      %s227 = ssub.s32 %s14, 1
      // Predicated region
      $region13: #{custom_clip_forward.5} parent=11 // pred_check
        %p228 = pneg %p61
      $region14: #{custom_clip_forward.5} parent=11 // pred_check_branch
        %230 = sbr.rel (%p228) target = $region16
      $region15: #{custom_clip_forward.5} parent=11 // pred_region
        _
      $region16: #{custom_clip_forward.5} parent=11 // pred_fallthru
        _
      // Predicated region
      $region17: #{custom_clip_forward.5} parent=11 // pred_check
        %p231 = pneg %p82
      $region18: #{custom_clip_forward.5} parent=11 // pred_check_branch
        %233 = sbr.rel (%p231) target = $region20
      $region19: #{custom_clip_forward.5} parent=11 // pred_region
        _
      $region20: #{custom_clip_forward.5} parent=11 // pred_fallthru
        _
      // Predicated region
      $region21: #{custom_clip_forward.5} parent=11 // pred_check
        %p234 = pneg %p103
      $region22: #{custom_clip_forward.5} parent=11 // pred_check_branch
        %236 = sbr.rel (%p234) target = $region24
      $region23: #{custom_clip_forward.5} parent=11 // pred_region
        _
      $region24: #{custom_clip_forward.5} parent=11 // pred_fallthru
        _
      // Predicated region
      $region25: #{custom_clip_forward.5} parent=11 // pred_check
        %p237 = pneg %p124
      $region26: #{custom_clip_forward.5} parent=11 // pred_check_branch
        %239 = sbr.rel (%p237) target = $region28
      $region27: #{custom_clip_forward.5} parent=11 // pred_region
        _
      $region28: #{custom_clip_forward.5} parent=11 // pred_fallthru
        _
      // Predicated region
      $region29: #{custom_clip_forward.5} parent=11 // pred_check
        %p240 = pneg %p145
      $region30: #{custom_clip_forward.5} parent=11 // pred_check_branch
        %242 = sbr.rel (%p240) target = $region32
      $region31: #{custom_clip_forward.5} parent=11 // pred_region
        _
      $region32: #{custom_clip_forward.5} parent=11 // pred_fallthru
        _
      // Predicated region
      $region33: #{custom_clip_forward.5} parent=11 // pred_check
        %p243 = pneg %p166
      $region34: #{custom_clip_forward.5} parent=11 // pred_check_branch
        %245 = sbr.rel (%p243) target = $region36
      $region35: #{custom_clip_forward.5} parent=11 // pred_region
        _
      $region36: #{custom_clip_forward.5} parent=11 // pred_fallthru
        _
      // Predicated region
      $region37: #{custom_clip_forward.5} parent=11 // pred_check
        %p246 = pneg %p187
      $region38: #{custom_clip_forward.5} parent=11 // pred_check_branch
        %248 = sbr.rel (%p246) target = $region40
      $region39: #{custom_clip_forward.5} parent=11 // pred_region
        _
      $region40: #{custom_clip_forward.5} parent=11 // pred_fallthru
        _
    $region12: #{custom_clip_forward.5} parent=5 // pred_fallthru
      _
    %p249 = scmp.lt.s32.totalorder %s14, 2
    // Predicated region
    $region41: #{custom_clip_forward.5} parent=5 // pred_check
      %p250 = pneg %p249
    $region42: #{custom_clip_forward.5} parent=5 // pred_check_branch
      %252 = sbr.rel (%p250) target = $region44
    $region43: #{custom_clip_forward.5} parent=5 // pred_region
      // Predicated region
      $region45: #{custom_clip_forward.5} parent=43 // pred_check
        %p253 = pneg %p34
      $region46: #{custom_clip_forward.5} parent=43 // pred_check_branch
        %255 = sbr.rel (%p253) target = $region48
      $region47: #{custom_clip_forward.5} parent=43 // pred_region
        %p256 = scmp.lt.s32.totalorder %s14, 1
        %s257 = scalar_select %p256, %s14, 1
        %s258 = smul.addr %s257, 4
        %s259 = smul.addr %s258, 4
        %s260 = scalar_lea.vmem %s0, %s259
      $region48: #{custom_clip_forward.5} parent=43 // pred_fallthru
        _
    $region44: #{custom_clip_forward.5} parent=5 // pred_fallthru
      _
    %p261 = scmp.le.s32.totalorder 1, %s14
    %p262 = scmp.lt.s32.totalorder %s14, 3
    %p263 = pnand %p261, %p262
    %p264 = pneg %p263
    // Predicated region
    $region49: #{custom_clip_forward.5} parent=5 // pred_check
      _
    $region50: #{custom_clip_forward.5} parent=5 // pred_check_branch
      %266 = sbr.rel (%p263) target = $region52
    $region51: #{custom_clip_forward.5} parent=5 // pred_region
      %s267 = ssub.s32 %s14, 1
      %p268 = scmp.lt.s32.totalorder %s19, 1
      %s269 = scalar_select %p268, %s19, 1
      %s270 = smul.addr %s269, 4
      %s271 = smul.addr %s270, 4
      %s272 = scalar_lea.vmem %s0, %s271
      %p273 = pneg %p40
      %p274 = pneg %p37
      %p275 = pneg %p61
      %p276 = pneg %p58
      %p277 = pneg %p82
      %p278 = pneg %p79
      %p279 = pneg %p103
      %p280 = pneg %p100
      %p281 = pneg %p124
      %p282 = pneg %p121
      %p283 = pneg %p145
      %p284 = pneg %p142
      %p285 = pneg %p166
      %p286 = pneg %p163
      %p287 = pneg %p187
      %p288 = pneg %p184
      %p289 = pneg %p213
      %p290 = pneg %p210
      %p291 = scmp.lt.s32.totalorder %s19, 1
      %s292 = scalar_select %p291, %s19, 1
      %s293 = smul.addr %s292, 4
      %s294 = smul.addr %s293, 4
      %s295 = scalar_lea.vmem %s8, %s294
      %p296 = scmp.lt.s32.totalorder %s19, 1
      %s297 = scalar_select %p296, %s19, 1
      %s298 = smul.addr %s297, 4
      %s299 = smul.addr %s298, 4
      %s300 = scalar_lea.vmem %s0, %s299
      %p301 = scmp.lt.s32.totalorder %s19, 1
      %s302 = scalar_select %p301, %s19, 1
      %s303 = smul.addr %s302, 4
      %s304 = smul.addr %s303, 4
      %s305 = scalar_lea.vmem %s8, %s304
      %v307 = vld [vmem:[%s300] sm:$0xf]
      %v308 = vld [vmem:[%s300 + $0x4] sm:$0xf]
      %v309 = vld [vmem:[%s300 + $0x8] sm:$0xf]
      %v310 = vld [vmem:[%s300 + $0xc] sm:$0xf]
      %v311 = vunpack.c.l.bf16 %v307
      %v312 = vunpack.c.l.bf16 %v308
      %v313 = vunpack.c.l.bf16 %v309
      %v314 = vunpack.c.l.bf16 %v310
      %v315 = vld [vmem:[%s1] sm:$0x1]
      %v316 = vld [vmem:[%s1 + $0x1] sm:$0x1]
      %v317 = vld [vmem:[%s1 + $0x2] sm:$0x1]
      %v318 = vld [vmem:[%s1 + $0x3] sm:$0x1]
      %v319 = vld [vmem:[%s1 + $0x4] sm:$0x1]
      %v320 = vld [vmem:[%s1 + $0x5] sm:$0x1]
      %vm321 = vcmask 523264
      %v322 = vsel %vm321, %v311, 0.0
      %323 = vadd.xlane.f32.xlu0 %v322
      %v324 = vpop.xlane.xlu0 %323
      %v325 = vsel %vm321, %v312, 0.0
      %326 = vadd.xlane.f32.xlu0 %v325
      %v327 = vpop.xlane.xlu0 %326
      %v328 = vsel %vm321, %v313, 0.0
      %329 = vadd.xlane.f32.xlu0 %v328
      %v330 = vpop.xlane.xlu0 %329
      %v331 = vsel %vm321, %v314, 0.0
      %332 = vadd.xlane.f32.xlu0 %v331
      %v333 = vpop.xlane.xlu0 %332
      %v334 = vrcp.pop 64.0
      %v335 = vmul.f32 %v324, %v334
      %v336 = vmul.f32 %v327, %v334
      %v337 = vmul.f32 %v330, %v334
      %v338 = vmul.f32 %v333, %v334
      %v339 = vsub.f32 %v311, %v335
      %v340 = vsub.f32 %v312, %v336
      %v341 = vsub.f32 %v313, %v337
      %v342 = vsub.f32 %v314, %v338
      %v343 = vmul.f32 %v339, %v339
      %v344 = vmul.f32 %v340, %v340
      %v345 = vmul.f32 %v341, %v341
      %v346 = vmul.f32 %v342, %v342
      %v347 = vsel %vm321, %v343, 0.0
      %348 = vadd.xlane.f32.xlu0 %v347
      %v349 = vpop.xlane.xlu0 %348
      %v350 = vsel %vm321, %v344, 0.0
      %351 = vadd.xlane.f32.xlu0 %v350
      %v352 = vpop.xlane.xlu0 %351
      %v353 = vsel %vm321, %v345, 0.0
      %354 = vadd.xlane.f32.xlu0 %v353
      %v355 = vpop.xlane.xlu0 %354
      %v356 = vsel %vm321, %v346, 0.0
      %357 = vadd.xlane.f32.xlu0 %v356
      %v358 = vpop.xlane.xlu0 %357
      %v359 = vmul.f32 %v349, %v334
      %v360 = vmul.f32 %v352, %v334
      %v361 = vmul.f32 %v355, %v334
      %v362 = vmul.f32 %v358, %v334
      %v363 = vadd.f32 %v359, 1e-05
      %v364 = vadd.f32 %v360, 1e-05
      %v365 = vadd.f32 %v361, 1e-05
      %v366 = vadd.f32 %v362, 1e-05
      %v367 = vrsqrt.pop %v363
      %v368 = vrsqrt.pop %v364
      %v369 = vrsqrt.pop %v365
      %v370 = vrsqrt.pop %v366
      %v371 = vmul.f32 %v339, %v367
      %v372 = vmul.f32 %v340, %v368
      %v373 = vmul.f32 %v341, %v369
      %v374 = vmul.f32 %v342, %v370
      %v375 = vlaneseq
      %v376 = vshrl.u32 %v375, 7
      %v377 = vsub.s32 0, %v376
      %v378 = vrot.slane %v315, %v377
      %v379 = vmul.f32 %v371, %v378
      %v380 = vmul.f32 %v372, %v378
      %v381 = vmul.f32 %v373, %v378
      %v382 = vmul.f32 %v374, %v378
      %v383 = vlaneseq
      %v384 = vshrl.u32 %v383, 7
      %v385 = vsub.s32 0, %v384
      %v386 = vrot.slane %v316, %v385
      %v387 = vadd.f32 %v379, %v386
      %v388 = vadd.f32 %v380, %v386
      %v389 = vadd.f32 %v381, %v386
      %v390 = vadd.f32 %v382, %v386
      %v391 = vpack.c.bf16 %v388, %v387
      %v392 = vpack.c.bf16 %v390, %v389
      %v393 = vld [vmem:[%s4] sm:$0xff]
      %v394 = vld [vmem:[%s4 + $0x8] sm:$0xff]
      %v395 = vld [vmem:[%s4 + $0x10] sm:$0xff]
      %v396 = vld [vmem:[%s4 + $0x18] sm:$0xff]
      %v397 = vld [vmem:[%s4 + $0x20] sm:$0xff]
      %v398 = vld [vmem:[%s4 + $0x28] sm:$0xff]
      %v399 = vld [vmem:[%s4 + $0x30] sm:$0xff]
      %v400 = vld [vmem:[%s4 + $0x38] sm:$0xff]
      %v401 = vld [vmem:[%s2] sm:$0x3]
      %v403 = vlaneseq
      %v404 = vshrl.u32 %v403, 7
      %v405 = vsub.s32 0, %v404
      %v406 = vrot.slane %v401, %v405
      %v407 = vlaneseq
      %v408 = vshrl.u32 %v407, 7
      %v409 = vsub.s32 1, %v408
      %v410 = vrot.slane %v401, %v409
      %v421 = vunpack.c.l.b16 %v393
      %v422 = vunpack.c.h.b16 %v393
      %v423 = vunpack.c.l.b16 %v394
      %v424 = vunpack.c.h.b16 %v394
      %v425 = vunpack.c.l.b16 %v395
      %v426 = vunpack.c.h.b16 %v395
      %v427 = vunpack.c.l.b16 %v396
      %v428 = vunpack.c.h.b16 %v396
      %v429 = vunpack.c.l.b16 %v397
      %v430 = vunpack.c.h.b16 %v397
      %v431 = vunpack.c.l.b16 %v398
      %v432 = vunpack.c.h.b16 %v398
      %v433 = vunpack.c.l.b16 %v399
      %v434 = vunpack.c.h.b16 %v399
      %v435 = vunpack.c.l.b16 %v400
      %v436 = vunpack.c.h.b16 %v400
      %v437 = vpack.c.b16 %v423, %v421
      %v438 = vpack.c.b16 %v424, %v422
      %v439 = vpack.c.b16 %v427, %v425
      %v440 = vpack.c.b16 %v428, %v426
      %v441 = vpack.c.b16 %v431, %v429
      %v442 = vpack.c.b16 %v432, %v430
      %v443 = vpack.c.b16 %v435, %v433
      %v444 = vpack.c.b16 %v436, %v434
      %v454 = vsel %vm321, %v391, 0
      %v457 = vsel %vm321, %v392, 0
      %459 = vmatprep.subr.bf16.mxu0 %v438
      %460 = vmatpush1.bf16.msra.mxu0 %v437
      %461 = vmatprep.subr.bf16.mxu0 %v440
      %462 = vmatpush1.bf16.msra.mxu0 %v439
      %463 = vmatprep.subr.bf16.mxu0 %v442
      %464 = vmatpush1.bf16.msra.mxu0 %v441
      %465 = vmatprep.subr.bf16.mxu0 %v444
      %466 = vmatpush1.bf16.msra.mxu0 %v443
      %467 = vmatprep.subr.bf16.mxu0 0
      %468 = vmatpush1.bf16.msra.mxu0 0
      %469 = vmatprep.subr.bf16.mxu0 0
      %470 = vmatpush1.bf16.msra.mxu0 0
      %471 = vmatprep.subr.bf16.mxu0 0
      %472 = vmatpush1.bf16.msra.mxu0 0
      %473 = vmatprep.subr.bf16.mxu0 0
      %474 = vmatpush1.bf16.msra.mxu0 0
      %475 = vmatprep.subr.bf16.mxu0 0
      %476 = vmatpush1.bf16.msra.mxu0 0
      %477 = vmatprep.subr.bf16.mxu0 0
      %478 = vmatpush1.bf16.msra.mxu0 0
      %479 = vmatprep.subr.bf16.mxu0 0
      %480 = vmatpush1.bf16.msra.mxu0 0
      %481 = vmatprep.subr.bf16.mxu0 0
      %482 = vmatpush1.bf16.msra.mxu0 0
      %483 = vmatprep.subr.bf16.mxu0 0
      %484 = vmatpush1.bf16.msra.mxu0 0
      %485 = vmatprep.subr.bf16.mxu0 0
      %486 = vmatpush1.bf16.msra.mxu0 0
      %487 = vmatprep.subr.bf16.mxu0 0
      %488 = vmatpush1.bf16.msra.mxu0 0
      %489 = vmatprep.subr.bf16.mxu0 0
      %490 = vmatpush1.bf16.msra.mxu0 0
      %491 = vmatprep.mubr.bf16.mxu0 0
      %492 = vmatmul.mubr.bf16.gmra.mrb[0].mxu0 %v454
      %v493 = vpop.f32.mrb[0].mxu0
      %v494 = vadd.f32 %v406, %v493
      %v495 = vpop.f32.mrb[0].mxu0
      %v496 = vadd.f32 %v410, %v495
      %v497 = vpop.f32.mrb[0].mxu0
      %v498 = vadd.f32 %v406, %v497
      %v499 = vpop.f32.mrb[0].mxu0
      %v500 = vadd.f32 %v410, %v499
      %501 = vmatprep.mubr.bf16.mxu0 0
      %502 = vmatmul.mubr.bf16.gmra.mrb[0].mxu0 %v457
      %v503 = vpop.f32.mrb[0].mxu0
      %v504 = vadd.f32 %v406, %v503
      %v505 = vpop.f32.mrb[0].mxu0
      %v506 = vadd.f32 %v410, %v505
      %v507 = vpop.f32.mrb[0].mxu0
      %v508 = vadd.f32 %v406, %v507
      %v509 = vpop.f32.mrb[0].mxu0
      %v510 = vadd.f32 %v410, %v509
      %511 = vdwg.mxu0
      %v512 = vlaneseq
      %v513 = vshrl.u32 %v512, 7
      %v514 = vadd.s32 %v513, 8
      %v515 = vlaneseq
      %v516 = vand.u32 %v515, 127
      %vm517 = vcmp.gt.s32.totalorder %v516, %v513
      %vm518 = vcmp.gt.s32.totalorder %v516, %v514
      %v519 = vsel %vm517, -1e+09, 0.0
      %v520 = vsel %vm518, -1e+09, 0.0
      %523 = vrot.lane.b32.xlu0 %v494, 64
      %v524 = vpop.permute.xlu0 %523
      %525 = vrot.lane.b32.xlu0 %v498, 64
      %v526 = vpop.permute.xlu0 %525
      %vm527 = vcmask 130048
      %v528 = vsel %vm527, %v494, 0
      %v530 = vsel %vm527, %v498, 0
      %v532 = vsel %vm527, %v524, 0
      %v534 = vsel %vm527, %v526, 0
      %536 = vmatprep.subr.mxu0 0.0
      %537 = vmatpush1.xpose.msra.mxu0 %v532
      %538 = vmatprep.subr.mxu0 0.0
      %539 = vmatpush1.xpose.msra.mxu0 %v534
      %540 = vmatprep.subr.mxu0 0.0
      %541 = vmatpush1.xpose.msra.mxu0 0.0
      %542 = vmatprep.subr.mxu0 0.0
      %543 = vmatpush1.xpose.msra.mxu0 0.0
      %544 = vmatprep.subr.mxu0 0.0
      %545 = vmatpush1.xpose.msra.mxu0 0.0
      %546 = vmatprep.subr.mxu0 0.0
      %547 = vmatpush1.xpose.msra.mxu0 0.0
      %548 = vmatprep.subr.mxu0 0.0
      %549 = vmatpush1.xpose.msra.mxu0 0.0
      %550 = vmatprep.subr.mxu0 0.0
      %551 = vmatpush1.xpose.msra.mxu0 0.0
      %552 = vmatprep.subr.mxu0 0.0
      %553 = vmatpush1.xpose.msra.mxu0 0.0
      %554 = vmatprep.subr.mxu0 0.0
      %555 = vmatpush1.xpose.msra.mxu0 0.0
      %556 = vmatprep.subr.mxu0 0.0
      %557 = vmatpush1.xpose.msra.mxu0 0.0
      %558 = vmatprep.subr.mxu0 0.0
      %559 = vmatpush1.xpose.msra.mxu0 0.0
      %560 = vmatprep.subr.mxu0 0.0
      %561 = vmatpush1.xpose.msra.mxu0 0.0
      %562 = vmatprep.subr.mxu0 0.0
      %563 = vmatpush1.xpose.msra.mxu0 0.0
      %564 = vmatprep.subr.mxu0 0.0
      %565 = vmatpush1.xpose.msra.mxu0 0.0
      %566 = vmatprep.subr.mxu0 0.0
      %567 = vmatpush1.xpose.msra.mxu0 0.0
      %568 = vmatprep.subr.mxu0 0.0
      %569 = vmatpush1.xpose.msra.mxu0 0.0
      %570 = vmatprep.subr.mxu0 0.0
      %571 = vmatpush1.xpose.msra.mxu0 0.0
      %572 = vmatprep.subr.mxu0 0.0
      %573 = vmatpush1.xpose.msra.mxu0 0.0
      %574 = vmatprep.subr.mxu0 0.0
      %575 = vmatpush1.xpose.msra.mxu0 0.0
      %576 = vmatprep.subr.mxu0 0.0
      %577 = vmatpush1.xpose.msra.mxu0 0.0
      %578 = vmatprep.subr.mxu0 0.0
      %579 = vmatpush1.xpose.msra.mxu0 0.0
      %580 = vmatprep.subr.mxu0 0.0
      %581 = vmatpush1.xpose.msra.mxu0 0.0
      %582 = vmatprep.subr.mxu0 0.0
      %583 = vmatpush1.xpose.msra.mxu0 0.0
      %584 = vmatprep.subr.mxu0 0.0
      %585 = vmatpush1.xpose.msra.mxu0 0.0
      %586 = vmatprep.subr.mxu0 0.0
      %587 = vmatpush1.xpose.msra.mxu0 0.0
      %588 = vmatprep.subr.mxu0 0.0
      %589 = vmatpush1.xpose.msra.mxu0 0.0
      %590 = vmatprep.subr.mxu0 0.0
      %591 = vmatpush1.xpose.msra.mxu0 0.0
      %592 = vmatprep.subr.mxu0 0.0
      %593 = vmatpush1.xpose.msra.mxu0 0.0
      %594 = vmatprep.subr.mxu0 0.0
      %595 = vmatpush1.xpose.msra.mxu0 0.0
      %596 = vmatprep.subr.mxu0 0.0
      %597 = vmatpush1.xpose.msra.mxu0 0.0
      %598 = vmatprep.subr.mxu0 0.0
      %599 = vmatpush1.xpose.msra.mxu0 0.0
      %600 = vmatprep.mubr.f32.mxu0 0.0
      %601 = vmatmul.mubr.f32.gmra.mrb[0].mxu0 %v528
      %v602 = vpop.f32.mrb[0].mxu0
      %v603 = vadd.f32 %v519, %v602
      %v604 = vpop.f32.mrb[0].mxu0
      %605 = vmatprep.mubr.f32.mxu0 0.0
      %606 = vmatmul.mubr.f32.gmra.mrb[0].mxu0 %v530
      %v607 = vpop.f32.mrb[0].mxu0
      %v608 = vadd.f32 %v520, %v607
      %v609 = vpop.f32.mrb[0].mxu0
      %610 = vdwg.mxu0
      %v611 = vsel %vm527, %v603, -inf
      %612 = vmax.xlane.f32.xlu0 %v611
      %v613 = vpop.xlane.xlu0 %612
      %v614 = vsel %vm527, %v608, -inf
      %615 = vmax.xlane.f32.xlu0 %v614
      %v616 = vpop.xlane.xlu0 %615
      %v617 = vsub.f32 %v603, %v613
      %v618 = vsub.f32 %v608, %v616
      %v619 = vmul.f32 %v617, 1.442695
      %v620 = vpow.pop %v619
      %v621 = vmul.f32 %v618, 1.442695
      %v622 = vpow.pop %v621
      %v623 = vsel %vm527, %v620, 0.0
      %624 = vadd.xlane.f32.xlu0 %v623
      %v625 = vpop.xlane.xlu0 %624
      %v626 = vsel %vm527, %v622, 0.0
      %627 = vadd.xlane.f32.xlu0 %v626
      %v628 = vpop.xlane.xlu0 %627
      %v629 = vrcp.pop %v625
      %v630 = vrcp.pop %v628
      %v631 = vmul.f32 %v620, %v629
      %v632 = vmul.f32 %v622, %v630
      %v634 = vsel %vm527, %v631, 0
      %v637 = vsel %vm527, %v632, 0
      %639 = vmatprep.subr.mxu0 0.0
      %640 = vmatpush1.msra.mxu0 %v496
      %641 = vmatprep.subr.mxu0 0.0
      %642 = vmatpush1.msra.mxu0 %v500
      %643 = vmatprep.subr.mxu0 0.0
      %644 = vmatpush1.msra.mxu0 0.0
      %645 = vmatprep.subr.mxu0 0.0
      %646 = vmatpush1.msra.mxu0 0.0
      %647 = vmatprep.subr.mxu0 0.0
      %648 = vmatpush1.msra.mxu0 0.0
      %649 = vmatprep.subr.mxu0 0.0
      %650 = vmatpush1.msra.mxu0 0.0
      %651 = vmatprep.subr.mxu0 0.0
      %652 = vmatpush1.msra.mxu0 0.0
      %653 = vmatprep.subr.mxu0 0.0
      %654 = vmatpush1.msra.mxu0 0.0
      %655 = vmatprep.subr.mxu0 0.0
      %656 = vmatpush1.msra.mxu0 0.0
      %657 = vmatprep.subr.mxu0 0.0
      %658 = vmatpush1.msra.mxu0 0.0
      %659 = vmatprep.subr.mxu0 0.0
      %660 = vmatpush1.msra.mxu0 0.0
      %661 = vmatprep.subr.mxu0 0.0
      %662 = vmatpush1.msra.mxu0 0.0
      %663 = vmatprep.subr.mxu0 0.0
      %664 = vmatpush1.msra.mxu0 0.0
      %665 = vmatprep.subr.mxu0 0.0
      %666 = vmatpush1.msra.mxu0 0.0
      %667 = vmatprep.subr.mxu0 0.0
      %668 = vmatpush1.msra.mxu0 0.0
      %669 = vmatprep.subr.mxu0 0.0
      %670 = vmatpush1.msra.mxu0 0.0
      %671 = vmatprep.subr.mxu0 0.0
      %672 = vmatpush1.msra.mxu0 0.0
      %673 = vmatprep.subr.mxu0 0.0
      %674 = vmatpush1.msra.mxu0 0.0
      %675 = vmatprep.subr.mxu0 0.0
      %676 = vmatpush1.msra.mxu0 0.0
      %677 = vmatprep.subr.mxu0 0.0
      %678 = vmatpush1.msra.mxu0 0.0
      %679 = vmatprep.subr.mxu0 0.0
      %680 = vmatpush1.msra.mxu0 0.0
      %681 = vmatprep.subr.mxu0 0.0
      %682 = vmatpush1.msra.mxu0 0.0
      %683 = vmatprep.subr.mxu0 0.0
      %684 = vmatpush1.msra.mxu0 0.0
      %685 = vmatprep.subr.mxu0 0.0
      %686 = vmatpush1.msra.mxu0 0.0
      %687 = vmatprep.subr.mxu0 0.0
      %688 = vmatpush1.msra.mxu0 0.0
      %689 = vmatprep.subr.mxu0 0.0
      %690 = vmatpush1.msra.mxu0 0.0
      %691 = vmatprep.subr.mxu0 0.0
      %692 = vmatpush1.msra.mxu0 0.0
      %693 = vmatprep.subr.mxu0 0.0
      %694 = vmatpush1.msra.mxu0 0.0
      %695 = vmatprep.subr.mxu0 0.0
      %696 = vmatpush1.msra.mxu0 0.0
      %697 = vmatprep.subr.mxu0 0.0
      %698 = vmatpush1.msra.mxu0 0.0
      %699 = vmatprep.subr.mxu0 0.0
      %700 = vmatpush1.msra.mxu0 0.0
      %701 = vmatprep.subr.mxu0 0.0
      %702 = vmatpush1.msra.mxu0 0.0
      %703 = vmatprep.mubr.f32.mxu0 0.0
      %704 = vmatmul.mubr.f32.gmra.mrb[0].mxu0 %v634
      %v705 = vpop.f32.mrb[0].mxu0
      %v706 = vadd.f32 0.0, %v705
      %v707 = vpop.f32.mrb[0].mxu0
      %708 = vmatprep.mubr.f32.mxu0 0.0
      %709 = vmatmul.mubr.f32.gmra.mrb[0].mxu0 %v637
      %v710 = vpop.f32.mrb[0].mxu0
      %v711 = vadd.f32 0.0, %v710
      %v712 = vpop.f32.mrb[0].mxu0
      %713 = vdwg.mxu0
      %714 = vrot.lane.b32.xlu0 %v494, 112
      %v715 = vpop.permute.xlu0 %714
      %716 = vrot.lane.b32.xlu0 %v498, 112
      %v717 = vpop.permute.xlu0 %716
      %718 = vrot.lane.b32.xlu0 %v494, 48
      %v719 = vpop.permute.xlu0 %718
      %720 = vrot.lane.b32.xlu0 %v498, 48
      %v721 = vpop.permute.xlu0 %720
      %v722 = vsel %vm527, %v715, 0
      %v724 = vsel %vm527, %v717, 0
      %v726 = vsel %vm527, %v719, 0
      %v728 = vsel %vm527, %v721, 0
      %730 = vmatprep.subr.mxu0 0.0
      %731 = vmatpush1.xpose.msra.mxu0 %v726
      %732 = vmatprep.subr.mxu0 0.0
      %733 = vmatpush1.xpose.msra.mxu0 %v728
      %734 = vmatprep.subr.mxu0 0.0
      %735 = vmatpush1.xpose.msra.mxu0 0.0
      %736 = vmatprep.subr.mxu0 0.0
      %737 = vmatpush1.xpose.msra.mxu0 0.0
      %738 = vmatprep.subr.mxu0 0.0
      %739 = vmatpush1.xpose.msra.mxu0 0.0
      %740 = vmatprep.subr.mxu0 0.0
      %741 = vmatpush1.xpose.msra.mxu0 0.0
      %742 = vmatprep.subr.mxu0 0.0
      %743 = vmatpush1.xpose.msra.mxu0 0.0
      %744 = vmatprep.subr.mxu0 0.0
      %745 = vmatpush1.xpose.msra.mxu0 0.0
      %746 = vmatprep.subr.mxu0 0.0
      %747 = vmatpush1.xpose.msra.mxu0 0.0
      %748 = vmatprep.subr.mxu0 0.0
      %749 = vmatpush1.xpose.msra.mxu0 0.0
      %750 = vmatprep.subr.mxu0 0.0
      %751 = vmatpush1.xpose.msra.mxu0 0.0
      %752 = vmatprep.subr.mxu0 0.0
      %753 = vmatpush1.xpose.msra.mxu0 0.0
      %754 = vmatprep.subr.mxu0 0.0
      %755 = vmatpush1.xpose.msra.mxu0 0.0
      %756 = vmatprep.subr.mxu0 0.0
      %757 = vmatpush1.xpose.msra.mxu0 0.0
      %758 = vmatprep.subr.mxu0 0.0
      %759 = vmatpush1.xpose.msra.mxu0 0.0
      %760 = vmatprep.subr.mxu0 0.0
      %761 = vmatpush1.xpose.msra.mxu0 0.0
      %762 = vmatprep.subr.mxu0 0.0
      %763 = vmatpush1.xpose.msra.mxu0 0.0
      %764 = vmatprep.subr.mxu0 0.0
      %765 = vmatpush1.xpose.msra.mxu0 0.0
      %766 = vmatprep.subr.mxu0 0.0
      %767 = vmatpush1.xpose.msra.mxu0 0.0
      %768 = vmatprep.subr.mxu0 0.0
      %769 = vmatpush1.xpose.msra.mxu0 0.0
      %770 = vmatprep.subr.mxu0 0.0
      %771 = vmatpush1.xpose.msra.mxu0 0.0
      %772 = vmatprep.subr.mxu0 0.0
      %773 = vmatpush1.xpose.msra.mxu0 0.0
      %774 = vmatprep.subr.mxu0 0.0
      %775 = vmatpush1.xpose.msra.mxu0 0.0
      %776 = vmatprep.subr.mxu0 0.0
      %777 = vmatpush1.xpose.msra.mxu0 0.0
      %778 = vmatprep.subr.mxu0 0.0
      %779 = vmatpush1.xpose.msra.mxu0 0.0
      %780 = vmatprep.subr.mxu0 0.0
      %781 = vmatpush1.xpose.msra.mxu0 0.0
      %782 = vmatprep.subr.mxu0 0.0
      %783 = vmatpush1.xpose.msra.mxu0 0.0
      %784 = vmatprep.subr.mxu0 0.0
      %785 = vmatpush1.xpose.msra.mxu0 0.0
      %786 = vmatprep.subr.mxu0 0.0
      %787 = vmatpush1.xpose.msra.mxu0 0.0
      %788 = vmatprep.subr.mxu0 0.0
      %789 = vmatpush1.xpose.msra.mxu0 0.0
      %790 = vmatprep.subr.mxu0 0.0
      %791 = vmatpush1.xpose.msra.mxu0 0.0
      %792 = vmatprep.subr.mxu0 0.0
      %793 = vmatpush1.xpose.msra.mxu0 0.0
      %794 = vmatprep.mubr.f32.mxu0 0.0
      %795 = vmatmul.mubr.f32.gmra.mrb[0].mxu0 %v722
      %v796 = vpop.f32.mrb[0].mxu0
      %v797 = vadd.f32 %v519, %v796
      %v798 = vpop.f32.mrb[0].mxu0
      %799 = vmatprep.mubr.f32.mxu0 0.0
      %800 = vmatmul.mubr.f32.gmra.mrb[0].mxu0 %v724
      %v801 = vpop.f32.mrb[0].mxu0
      %v802 = vadd.f32 %v520, %v801
      %v803 = vpop.f32.mrb[0].mxu0
      %804 = vdwg.mxu0
      %v805 = vsel %vm527, %v797, -inf
      %806 = vmax.xlane.f32.xlu0 %v805
      %v807 = vpop.xlane.xlu0 %806
      %v808 = vsel %vm527, %v802, -inf
      %809 = vmax.xlane.f32.xlu0 %v808
      %v810 = vpop.xlane.xlu0 %809
      %v811 = vsub.f32 %v797, %v807
      %v812 = vsub.f32 %v802, %v810
      %v813 = vmul.f32 %v811, 1.442695
      %v814 = vpow.pop %v813
      %v815 = vmul.f32 %v812, 1.442695
      %v816 = vpow.pop %v815
      %v817 = vsel %vm527, %v814, 0.0
      %818 = vadd.xlane.f32.xlu0 %v817
      %v819 = vpop.xlane.xlu0 %818
      %v820 = vsel %vm527, %v816, 0.0
      %821 = vadd.xlane.f32.xlu0 %v820
      %v822 = vpop.xlane.xlu0 %821
      %v823 = vrcp.pop %v819
      %v824 = vrcp.pop %v822
      %v825 = vmul.f32 %v814, %v823
      %v826 = vmul.f32 %v816, %v824
      %829 = vrot.lane.b32.xlu0 %v496, 112
      %v830 = vpop.permute.xlu0 %829
      %831 = vrot.lane.b32.xlu0 %v500, 112
      %v832 = vpop.permute.xlu0 %831
      %v836 = vsel %vm527, %v825, 0
      %v839 = vsel %vm527, %v826, 0
      %841 = vmatprep.subr.mxu0 0.0
      %842 = vmatpush1.msra.mxu0 %v830
      %843 = vmatprep.subr.mxu0 0.0
      %844 = vmatpush1.msra.mxu0 %v832
      %845 = vmatprep.subr.mxu0 0.0
      %846 = vmatpush1.msra.mxu0 0.0
      %847 = vmatprep.subr.mxu0 0.0
      %848 = vmatpush1.msra.mxu0 0.0
      %849 = vmatprep.subr.mxu0 0.0
      %850 = vmatpush1.msra.mxu0 0.0
      %851 = vmatprep.subr.mxu0 0.0
      %852 = vmatpush1.msra.mxu0 0.0
      %853 = vmatprep.subr.mxu0 0.0
      %854 = vmatpush1.msra.mxu0 0.0
      %855 = vmatprep.subr.mxu0 0.0
      %856 = vmatpush1.msra.mxu0 0.0
      %857 = vmatprep.subr.mxu0 0.0
      %858 = vmatpush1.msra.mxu0 0.0
      %859 = vmatprep.subr.mxu0 0.0
      %860 = vmatpush1.msra.mxu0 0.0
      %861 = vmatprep.subr.mxu0 0.0
      %862 = vmatpush1.msra.mxu0 0.0
      %863 = vmatprep.subr.mxu0 0.0
      %864 = vmatpush1.msra.mxu0 0.0
      %865 = vmatprep.subr.mxu0 0.0
      %866 = vmatpush1.msra.mxu0 0.0
      %867 = vmatprep.subr.mxu0 0.0
      %868 = vmatpush1.msra.mxu0 0.0
      %869 = vmatprep.subr.mxu0 0.0
      %870 = vmatpush1.msra.mxu0 0.0
      %871 = vmatprep.subr.mxu0 0.0
      %872 = vmatpush1.msra.mxu0 0.0
      %873 = vmatprep.subr.mxu0 0.0
      %874 = vmatpush1.msra.mxu0 0.0
      %875 = vmatprep.subr.mxu0 0.0
      %876 = vmatpush1.msra.mxu0 0.0
      %877 = vmatprep.subr.mxu0 0.0
      %878 = vmatpush1.msra.mxu0 0.0
      %879 = vmatprep.subr.mxu0 0.0
      %880 = vmatpush1.msra.mxu0 0.0
      %881 = vmatprep.subr.mxu0 0.0
      %882 = vmatpush1.msra.mxu0 0.0
      %883 = vmatprep.subr.mxu0 0.0
      %884 = vmatpush1.msra.mxu0 0.0
      %885 = vmatprep.subr.mxu0 0.0
      %886 = vmatpush1.msra.mxu0 0.0
      %887 = vmatprep.subr.mxu0 0.0
      %888 = vmatpush1.msra.mxu0 0.0
      %889 = vmatprep.subr.mxu0 0.0
      %890 = vmatpush1.msra.mxu0 0.0
      %891 = vmatprep.subr.mxu0 0.0
      %892 = vmatpush1.msra.mxu0 0.0
      %893 = vmatprep.subr.mxu0 0.0
      %894 = vmatpush1.msra.mxu0 0.0
      %895 = vmatprep.subr.mxu0 0.0
      %896 = vmatpush1.msra.mxu0 0.0
      %897 = vmatprep.subr.mxu0 0.0
      %898 = vmatpush1.msra.mxu0 0.0
      %899 = vmatprep.subr.mxu0 0.0
      %900 = vmatpush1.msra.mxu0 0.0
      %901 = vmatprep.subr.mxu0 0.0
      %902 = vmatpush1.msra.mxu0 0.0
      %903 = vmatprep.subr.mxu0 0.0
      %904 = vmatpush1.msra.mxu0 0.0
      %905 = vmatprep.mubr.f32.mxu0 0.0
      %906 = vmatmul.mubr.f32.gmra.mrb[0].mxu0 %v836
      %v907 = vpop.f32.mrb[0].mxu0
      %v908 = vadd.f32 0.0, %v907
      %v909 = vpop.f32.mrb[0].mxu0
      %910 = vmatprep.mubr.f32.mxu0 0.0
      %911 = vmatmul.mubr.f32.gmra.mrb[0].mxu0 %v839
      %v912 = vpop.f32.mrb[0].mxu0
      %v913 = vadd.f32 0.0, %v912
      %v914 = vpop.f32.mrb[0].mxu0
      %915 = vdwg.mxu0
      %916 = vrot.lane.b32.xlu0 %v494, 96
      %v917 = vpop.permute.xlu0 %916
      %918 = vrot.lane.b32.xlu0 %v498, 96
      %v919 = vpop.permute.xlu0 %918
      %920 = vrot.lane.b32.xlu0 %v494, 32
      %v921 = vpop.permute.xlu0 %920
      %922 = vrot.lane.b32.xlu0 %v498, 32
      %v923 = vpop.permute.xlu0 %922
      %v924 = vsel %vm527, %v917, 0
      %v926 = vsel %vm527, %v919, 0
      %v928 = vsel %vm527, %v921, 0
      %v930 = vsel %vm527, %v923, 0
      %932 = vmatprep.subr.mxu0 0.0
      %933 = vmatpush1.xpose.msra.mxu0 %v928
      %934 = vmatprep.subr.mxu0 0.0
      %935 = vmatpush1.xpose.msra.mxu0 %v930
      %936 = vmatprep.subr.mxu0 0.0
      %937 = vmatpush1.xpose.msra.mxu0 0.0
      %938 = vmatprep.subr.mxu0 0.0
      %939 = vmatpush1.xpose.msra.mxu0 0.0
      %940 = vmatprep.subr.mxu0 0.0
      %941 = vmatpush1.xpose.msra.mxu0 0.0
      %942 = vmatprep.subr.mxu0 0.0
      %943 = vmatpush1.xpose.msra.mxu0 0.0
      %944 = vmatprep.subr.mxu0 0.0
      %945 = vmatpush1.xpose.msra.mxu0 0.0
      %946 = vmatprep.subr.mxu0 0.0
      %947 = vmatpush1.xpose.msra.mxu0 0.0
      %948 = vmatprep.subr.mxu0 0.0
      %949 = vmatpush1.xpose.msra.mxu0 0.0
      %950 = vmatprep.subr.mxu0 0.0
      %951 = vmatpush1.xpose.msra.mxu0 0.0
      %952 = vmatprep.subr.mxu0 0.0
      %953 = vmatpush1.xpose.msra.mxu0 0.0
      %954 = vmatprep.subr.mxu0 0.0
      %955 = vmatpush1.xpose.msra.mxu0 0.0
      %956 = vmatprep.subr.mxu0 0.0
      %957 = vmatpush1.xpose.msra.mxu0 0.0
      %958 = vmatprep.subr.mxu0 0.0
      %959 = vmatpush1.xpose.msra.mxu0 0.0
      %960 = vmatprep.subr.mxu0 0.0
      %961 = vmatpush1.xpose.msra.mxu0 0.0
      %962 = vmatprep.subr.mxu0 0.0
      %963 = vmatpush1.xpose.msra.mxu0 0.0
      %964 = vmatprep.subr.mxu0 0.0
      %965 = vmatpush1.xpose.msra.mxu0 0.0
      %966 = vmatprep.subr.mxu0 0.0
      %967 = vmatpush1.xpose.msra.mxu0 0.0
      %968 = vmatprep.subr.mxu0 0.0
      %969 = vmatpush1.xpose.msra.mxu0 0.0
      %970 = vmatprep.subr.mxu0 0.0
      %971 = vmatpush1.xpose.msra.mxu0 0.0
      %972 = vmatprep.subr.mxu0 0.0
      %973 = vmatpush1.xpose.msra.mxu0 0.0
      %974 = vmatprep.subr.mxu0 0.0
      %975 = vmatpush1.xpose.msra.mxu0 0.0
      %976 = vmatprep.subr.mxu0 0.0
      %977 = vmatpush1.xpose.msra.mxu0 0.0
      %978 = vmatprep.subr.mxu0 0.0
      %979 = vmatpush1.xpose.msra.mxu0 0.0
      %980 = vmatprep.subr.mxu0 0.0
      %981 = vmatpush1.xpose.msra.mxu0 0.0
      %982 = vmatprep.subr.mxu0 0.0
      %983 = vmatpush1.xpose.msra.mxu0 0.0
      %984 = vmatprep.subr.mxu0 0.0
      %985 = vmatpush1.xpose.msra.mxu0 0.0
      %986 = vmatprep.subr.mxu0 0.0
      %987 = vmatpush1.xpose.msra.mxu0 0.0
      %988 = vmatprep.subr.mxu0 0.0
      %989 = vmatpush1.xpose.msra.mxu0 0.0
      %990 = vmatprep.subr.mxu0 0.0
      %991 = vmatpush1.xpose.msra.mxu0 0.0
      %992 = vmatprep.subr.mxu0 0.0
      %993 = vmatpush1.xpose.msra.mxu0 0.0
      %994 = vmatprep.subr.mxu0 0.0
      %995 = vmatpush1.xpose.msra.mxu0 0.0
      %996 = vmatprep.mubr.f32.mxu0 0.0
      %997 = vmatmul.mubr.f32.gmra.mrb[0].mxu0 %v924
      %v998 = vpop.f32.mrb[0].mxu0
      %v999 = vadd.f32 %v519, %v998
      %v1000 = vpop.f32.mrb[0].mxu0
      %1001 = vmatprep.mubr.f32.mxu0 0.0
      %1002 = vmatmul.mubr.f32.gmra.mrb[0].mxu0 %v926
      %v1003 = vpop.f32.mrb[0].mxu0
      %v1004 = vadd.f32 %v520, %v1003
      %v1005 = vpop.f32.mrb[0].mxu0
      %1006 = vdwg.mxu0
      %v1007 = vsel %vm527, %v999, -inf
      %1008 = vmax.xlane.f32.xlu0 %v1007
      %v1009 = vpop.xlane.xlu0 %1008
      %v1010 = vsel %vm527, %v1004, -inf
      %1011 = vmax.xlane.f32.xlu0 %v1010
      %v1012 = vpop.xlane.xlu0 %1011
      %v1013 = vsub.f32 %v999, %v1009
      %v1014 = vsub.f32 %v1004, %v1012
      %v1015 = vmul.f32 %v1013, 1.442695
      %v1016 = vpow.pop %v1015
      %v1017 = vmul.f32 %v1014, 1.442695
      %v1018 = vpow.pop %v1017
      %v1019 = vsel %vm527, %v1016, 0.0
      %1020 = vadd.xlane.f32.xlu0 %v1019
      %v1021 = vpop.xlane.xlu0 %1020
      %v1022 = vsel %vm527, %v1018, 0.0
      %1023 = vadd.xlane.f32.xlu0 %v1022
      %v1024 = vpop.xlane.xlu0 %1023
      %v1025 = vrcp.pop %v1021
      %v1026 = vrcp.pop %v1024
      %v1027 = vmul.f32 %v1016, %v1025
      %v1028 = vmul.f32 %v1018, %v1026
      %1029 = vrot.lane.b32.xlu0 %v496, 96
      %v1030 = vpop.permute.xlu0 %1029
      %1031 = vrot.lane.b32.xlu0 %v500, 96
      %v1032 = vpop.permute.xlu0 %1031
      %v1036 = vsel %vm527, %v1027, 0
      %v1039 = vsel %vm527, %v1028, 0
      %1041 = vmatprep.subr.mxu0 0.0
      %1042 = vmatpush1.msra.mxu0 %v1030
      %1043 = vmatprep.subr.mxu0 0.0
      %1044 = vmatpush1.msra.mxu0 %v1032
      %1045 = vmatprep.subr.mxu0 0.0
      %1046 = vmatpush1.msra.mxu0 0.0
      %1047 = vmatprep.subr.mxu0 0.0
      %1048 = vmatpush1.msra.mxu0 0.0
      %1049 = vmatprep.subr.mxu0 0.0
      %1050 = vmatpush1.msra.mxu0 0.0
      %1051 = vmatprep.subr.mxu0 0.0
      %1052 = vmatpush1.msra.mxu0 0.0
      %1053 = vmatprep.subr.mxu0 0.0
      %1054 = vmatpush1.msra.mxu0 0.0
      %1055 = vmatprep.subr.mxu0 0.0
      %1056 = vmatpush1.msra.mxu0 0.0
      %1057 = vmatprep.subr.mxu0 0.0
      %1058 = vmatpush1.msra.mxu0 0.0
      %1059 = vmatprep.subr.mxu0 0.0
      %1060 = vmatpush1.msra.mxu0 0.0
      %1061 = vmatprep.subr.mxu0 0.0
      %1062 = vmatpush1.msra.mxu0 0.0
      %1063 = vmatprep.subr.mxu0 0.0
      %1064 = vmatpush1.msra.mxu0 0.0
      %1065 = vmatprep.subr.mxu0 0.0
      %1066 = vmatpush1.msra.mxu0 0.0
      %1067 = vmatprep.subr.mxu0 0.0
      %1068 = vmatpush1.msra.mxu0 0.0
      %1069 = vmatprep.subr.mxu0 0.0
      %1070 = vmatpush1.msra.mxu0 0.0
      %1071 = vmatprep.subr.mxu0 0.0
      %1072 = vmatpush1.msra.mxu0 0.0
      %1073 = vmatprep.subr.mxu0 0.0
      %1074 = vmatpush1.msra.mxu0 0.0
      %1075 = vmatprep.subr.mxu0 0.0
      %1076 = vmatpush1.msra.mxu0 0.0
      %1077 = vmatprep.subr.mxu0 0.0
      %1078 = vmatpush1.msra.mxu0 0.0
      %1079 = vmatprep.subr.mxu0 0.0
      %1080 = vmatpush1.msra.mxu0 0.0
      %1081 = vmatprep.subr.mxu0 0.0
      %1082 = vmatpush1.msra.mxu0 0.0
      %1083 = vmatprep.subr.mxu0 0.0
      %1084 = vmatpush1.msra.mxu0 0.0
      %1085 = vmatprep.subr.mxu0 0.0
      %1086 = vmatpush1.msra.mxu0 0.0
      %1087 = vmatprep.subr.mxu0 0.0
      %1088 = vmatpush1.msra.mxu0 0.0
      %1089 = vmatprep.subr.mxu0 0.0
      %1090 = vmatpush1.msra.mxu0 0.0
      %1091 = vmatprep.subr.mxu0 0.0
      %1092 = vmatpush1.msra.mxu0 0.0
      %1093 = vmatprep.subr.mxu0 0.0
      %1094 = vmatpush1.msra.mxu0 0.0
      %1095 = vmatprep.subr.mxu0 0.0
      %1096 = vmatpush1.msra.mxu0 0.0
      %1097 = vmatprep.subr.mxu0 0.0
      %1098 = vmatpush1.msra.mxu0 0.0
      %1099 = vmatprep.subr.mxu0 0.0
      %1100 = vmatpush1.msra.mxu0 0.0
      %1101 = vmatprep.subr.mxu0 0.0
      %1102 = vmatpush1.msra.mxu0 0.0
      %1103 = vmatprep.subr.mxu0 0.0
      %1104 = vmatpush1.msra.mxu0 0.0
      %1105 = vmatprep.mubr.f32.mxu0 0.0
      %1106 = vmatmul.mubr.f32.gmra.mrb[0].mxu0 %v1036
      %v1107 = vpop.f32.mrb[0].mxu0
      %v1108 = vadd.f32 0.0, %v1107
      %v1109 = vpop.f32.mrb[0].mxu0
      %1110 = vmatprep.mubr.f32.mxu0 0.0
      %1111 = vmatmul.mubr.f32.gmra.mrb[0].mxu0 %v1039
      %v1112 = vpop.f32.mrb[0].mxu0
      %v1113 = vadd.f32 0.0, %v1112
      %v1114 = vpop.f32.mrb[0].mxu0
      %1115 = vdwg.mxu0
      %1116 = vrot.lane.b32.xlu0 %v494, 80
      %v1117 = vpop.permute.xlu0 %1116
      %1118 = vrot.lane.b32.xlu0 %v498, 80
      %v1119 = vpop.permute.xlu0 %1118
      %1120 = vrot.lane.b32.xlu0 %v494, 16
      %v1121 = vpop.permute.xlu0 %1120
      %1122 = vrot.lane.b32.xlu0 %v498, 16
      %v1123 = vpop.permute.xlu0 %1122
      %v1124 = vsel %vm527, %v1117, 0
      %v1126 = vsel %vm527, %v1119, 0
      %v1128 = vsel %vm527, %v1121, 0
      %v1130 = vsel %vm527, %v1123, 0
      %1132 = vmatprep.subr.mxu0 0.0
      %1133 = vmatpush1.xpose.msra.mxu0 %v1128
      %1134 = vmatprep.subr.mxu0 0.0
      %1135 = vmatpush1.xpose.msra.mxu0 %v1130
      %1136 = vmatprep.subr.mxu0 0.0
      %1137 = vmatpush1.xpose.msra.mxu0 0.0
      %1138 = vmatprep.subr.mxu0 0.0
      %1139 = vmatpush1.xpose.msra.mxu0 0.0
      %1140 = vmatprep.subr.mxu0 0.0
      %1141 = vmatpush1.xpose.msra.mxu0 0.0
      %1142 = vmatprep.subr.mxu0 0.0
      %1143 = vmatpush1.xpose.msra.mxu0 0.0
      %1144 = vmatprep.subr.mxu0 0.0
      %1145 = vmatpush1.xpose.msra.mxu0 0.0
      %1146 = vmatprep.subr.mxu0 0.0
      %1147 = vmatpush1.xpose.msra.mxu0 0.0
      %1148 = vmatprep.subr.mxu0 0.0
      %1149 = vmatpush1.xpose.msra.mxu0 0.0
      %1150 = vmatprep.subr.mxu0 0.0
      %1151 = vmatpush1.xpose.msra.mxu0 0.0
      %1152 = vmatprep.subr.mxu0 0.0
      %1153 = vmatpush1.xpose.msra.mxu0 0.0
      %1154 = vmatprep.subr.mxu0 0.0
      %1155 = vmatpush1.xpose.msra.mxu0 0.0
      %1156 = vmatprep.subr.mxu0 0.0
      %1157 = vmatpush1.xpose.msra.mxu0 0.0
      %1158 = vmatprep.subr.mxu0 0.0
      %1159 = vmatpush1.xpose.msra.mxu0 0.0
      %1160 = vmatprep.subr.mxu0 0.0
      %1161 = vmatpush1.xpose.msra.mxu0 0.0
      %1162 = vmatprep.subr.mxu0 0.0
      %1163 = vmatpush1.xpose.msra.mxu0 0.0
      %1164 = vmatprep.subr.mxu0 0.0
      %1165 = vmatpush1.xpose.msra.mxu0 0.0
      %1166 = vmatprep.subr.mxu0 0.0
      %1167 = vmatpush1.xpose.msra.mxu0 0.0
      %1168 = vmatprep.subr.mxu0 0.0
      %1169 = vmatpush1.xpose.msra.mxu0 0.0
      %1170 = vmatprep.subr.mxu0 0.0
      %1171 = vmatpush1.xpose.msra.mxu0 0.0
      %1172 = vmatprep.subr.mxu0 0.0
      %1173 = vmatpush1.xpose.msra.mxu0 0.0
      %1174 = vmatprep.subr.mxu0 0.0
      %1175 = vmatpush1.xpose.msra.mxu0 0.0
      %1176 = vmatprep.subr.mxu0 0.0
      %1177 = vmatpush1.xpose.msra.mxu0 0.0
      %1178 = vmatprep.subr.mxu0 0.0
      %1179 = vmatpush1.xpose.msra.mxu0 0.0
      %1180 = vmatprep.subr.mxu0 0.0
      %1181 = vmatpush1.xpose.msra.mxu0 0.0
      %1182 = vmatprep.subr.mxu0 0.0
      %1183 = vmatpush1.xpose.msra.mxu0 0.0
      %1184 = vmatprep.subr.mxu0 0.0
      %1185 = vmatpush1.xpose.msra.mxu0 0.0
      %1186 = vmatprep.subr.mxu0 0.0
      %1187 = vmatpush1.xpose.msra.mxu0 0.0
      %1188 = vmatprep.subr.mxu0 0.0
      %1189 = vmatpush1.xpose.msra.mxu0 0.0
      %1190 = vmatprep.subr.mxu0 0.0
      %1191 = vmatpush1.xpose.msra.mxu0 0.0
      %1192 = vmatprep.subr.mxu0 0.0
      %1193 = vmatpush1.xpose.msra.mxu0 0.0
      %1194 = vmatprep.subr.mxu0 0.0
      %1195 = vmatpush1.xpose.msra.mxu0 0.0
      %1196 = vmatprep.mubr.f32.mxu0 0.0
      %1197 = vmatmul.mubr.f32.gmra.mrb[0].mxu0 %v1124
      %v1198 = vpop.f32.mrb[0].mxu0
      %v1199 = vadd.f32 %v519, %v1198
      %v1200 = vpop.f32.mrb[0].mxu0
      %1201 = vmatprep.mubr.f32.mxu0 0.0
      %1202 = vmatmul.mubr.f32.gmra.mrb[0].mxu0 %v1126
      %v1203 = vpop.f32.mrb[0].mxu0
      %v1204 = vadd.f32 %v520, %v1203
      %v1205 = vpop.f32.mrb[0].mxu0
      %1206 = vdwg.mxu0
      %v1207 = vsel %vm527, %v1199, -inf
      %1208 = vmax.xlane.f32.xlu0 %v1207
      %v1209 = vpop.xlane.xlu0 %1208
      %v1210 = vsel %vm527, %v1204, -inf
      %1211 = vmax.xlane.f32.xlu0 %v1210
      %v1212 = vpop.xlane.xlu0 %1211
      %v1213 = vsub.f32 %v1199, %v1209
      %v1214 = vsub.f32 %v1204, %v1212
      %v1215 = vmul.f32 %v1213, 1.442695
      %v1216 = vpow.pop %v1215
      %v1217 = vmul.f32 %v1214, 1.442695
      %v1218 = vpow.pop %v1217
      %v1219 = vsel %vm527, %v1216, 0.0
      %1220 = vadd.xlane.f32.xlu0 %v1219
      %v1221 = vpop.xlane.xlu0 %1220
      %v1222 = vsel %vm527, %v1218, 0.0
      %1223 = vadd.xlane.f32.xlu0 %v1222
      %v1224 = vpop.xlane.xlu0 %1223
      %v1225 = vrcp.pop %v1221
      %v1226 = vrcp.pop %v1224
      %v1227 = vmul.f32 %v1216, %v1225
      %v1228 = vmul.f32 %v1218, %v1226
      %1229 = vrot.lane.b32.xlu0 %v496, 80
      %v1230 = vpop.permute.xlu0 %1229
      %1231 = vrot.lane.b32.xlu0 %v500, 80
      %v1232 = vpop.permute.xlu0 %1231
      %v1236 = vsel %vm527, %v1227, 0
      %v1239 = vsel %vm527, %v1228, 0
      %1241 = vmatprep.subr.mxu0 0.0
      %1242 = vmatpush1.msra.mxu0 %v1230
      %1243 = vmatprep.subr.mxu0 0.0
      %1244 = vmatpush1.msra.mxu0 %v1232
      %1245 = vmatprep.subr.mxu0 0.0
      %1246 = vmatpush1.msra.mxu0 0.0
      %1247 = vmatprep.subr.mxu0 0.0
      %1248 = vmatpush1.msra.mxu0 0.0
      %1249 = vmatprep.subr.mxu0 0.0
      %1250 = vmatpush1.msra.mxu0 0.0
      %1251 = vmatprep.subr.mxu0 0.0
      %1252 = vmatpush1.msra.mxu0 0.0
      %1253 = vmatprep.subr.mxu0 0.0
      %1254 = vmatpush1.msra.mxu0 0.0
      %1255 = vmatprep.subr.mxu0 0.0
      %1256 = vmatpush1.msra.mxu0 0.0
      %1257 = vmatprep.subr.mxu0 0.0
      %1258 = vmatpush1.msra.mxu0 0.0
      %1259 = vmatprep.subr.mxu0 0.0
      %1260 = vmatpush1.msra.mxu0 0.0
      %1261 = vmatprep.subr.mxu0 0.0
      %1262 = vmatpush1.msra.mxu0 0.0
      %1263 = vmatprep.subr.mxu0 0.0
      %1264 = vmatpush1.msra.mxu0 0.0
      %1265 = vmatprep.subr.mxu0 0.0
      %1266 = vmatpush1.msra.mxu0 0.0
      %1267 = vmatprep.subr.mxu0 0.0
      %1268 = vmatpush1.msra.mxu0 0.0
      %1269 = vmatprep.subr.mxu0 0.0
      %1270 = vmatpush1.msra.mxu0 0.0
      %1271 = vmatprep.subr.mxu0 0.0
      %1272 = vmatpush1.msra.mxu0 0.0
      %1273 = vmatprep.subr.mxu0 0.0
      %1274 = vmatpush1.msra.mxu0 0.0
      %1275 = vmatprep.subr.mxu0 0.0
      %1276 = vmatpush1.msra.mxu0 0.0
      %1277 = vmatprep.subr.mxu0 0.0
      %1278 = vmatpush1.msra.mxu0 0.0
      %1279 = vmatprep.subr.mxu0 0.0
      %1280 = vmatpush1.msra.mxu0 0.0
      %1281 = vmatprep.subr.mxu0 0.0
      %1282 = vmatpush1.msra.mxu0 0.0
      %1283 = vmatprep.subr.mxu0 0.0
      %1284 = vmatpush1.msra.mxu0 0.0
      %1285 = vmatprep.subr.mxu0 0.0
      %1286 = vmatpush1.msra.mxu0 0.0
      %1287 = vmatprep.subr.mxu0 0.0
      %1288 = vmatpush1.msra.mxu0 0.0
      %1289 = vmatprep.subr.mxu0 0.0
      %1290 = vmatpush1.msra.mxu0 0.0
      %1291 = vmatprep.subr.mxu0 0.0
      %1292 = vmatpush1.msra.mxu0 0.0
      %1293 = vmatprep.subr.mxu0 0.0
      %1294 = vmatpush1.msra.mxu0 0.0
      %1295 = vmatprep.subr.mxu0 0.0
      %1296 = vmatpush1.msra.mxu0 0.0
      %1297 = vmatprep.subr.mxu0 0.0
      %1298 = vmatpush1.msra.mxu0 0.0
      %1299 = vmatprep.subr.mxu0 0.0
      %1300 = vmatpush1.msra.mxu0 0.0
      %1301 = vmatprep.subr.mxu0 0.0
      %1302 = vmatpush1.msra.mxu0 0.0
      %1303 = vmatprep.subr.mxu0 0.0
      %1304 = vmatpush1.msra.mxu0 0.0
      %1305 = vmatprep.mubr.f32.mxu0 0.0
      %1306 = vmatmul.mubr.f32.gmra.mrb[0].mxu0 %v1236
      %v1307 = vpop.f32.mrb[0].mxu0
      %v1308 = vadd.f32 0.0, %v1307
      %v1309 = vpop.f32.mrb[0].mxu0
      %1310 = vmatprep.mubr.f32.mxu0 0.0
      %1311 = vmatmul.mubr.f32.gmra.mrb[0].mxu0 %v1239
      %v1312 = vpop.f32.mrb[0].mxu0
      %v1313 = vadd.f32 0.0, %v1312
      %v1314 = vpop.f32.mrb[0].mxu0
      %1315 = vdwg.mxu0
      %1318 = vrot.lane.b32.xlu0 %v908, 16
      %v1319 = vpop.permute.xlu0 %1318
      %1320 = vrot.lane.b32.xlu0 %v913, 16
      %v1321 = vpop.permute.xlu0 %1320
      %1326 = vrot.lane.b32.xlu0 %v1108, 32
      %v1327 = vpop.permute.xlu0 %1326
      %1328 = vrot.lane.b32.xlu0 %v1113, 32
      %v1329 = vpop.permute.xlu0 %1328
      %1334 = vrot.lane.b32.xlu0 %v1308, 48
      %v1335 = vpop.permute.xlu0 %1334
      %1336 = vrot.lane.b32.xlu0 %v1313, 48
      %v1337 = vpop.permute.xlu0 %1336
      %v1340 = vsel %vm527, %v706, %v1319
      %v1341 = vsel %vm527, %v711, %v1321
      %vm1342 = vcmask 261120
      %v1343 = vsel %vm1342, %v1340, %v1327
      %v1344 = vsel %vm1342, %v1341, %v1329
      %vm1345 = vcmask 392192
      %v1346 = vsel %vm1345, %v1343, %v1335
      %v1347 = vsel %vm1345, %v1344, %v1337
      %1350 = vrot.lane.b32.xlu0 %v504, 64
      %v1351 = vpop.permute.xlu0 %1350
      %1352 = vrot.lane.b32.xlu0 %v508, 64
      %v1353 = vpop.permute.xlu0 %1352
      %v1354 = vsel %vm527, %v504, 0
      %v1356 = vsel %vm527, %v508, 0
      %v1358 = vsel %vm527, %v1351, 0
      %v1360 = vsel %vm527, %v1353, 0
      %1362 = vmatprep.subr.mxu0 0.0
      %1363 = vmatpush1.xpose.msra.mxu0 %v1358
      %1364 = vmatprep.subr.mxu0 0.0
      %1365 = vmatpush1.xpose.msra.mxu0 %v1360
      %1366 = vmatprep.subr.mxu0 0.0
      %1367 = vmatpush1.xpose.msra.mxu0 0.0
      %1368 = vmatprep.subr.mxu0 0.0
      %1369 = vmatpush1.xpose.msra.mxu0 0.0
      %1370 = vmatprep.subr.mxu0 0.0
      %1371 = vmatpush1.xpose.msra.mxu0 0.0
      %1372 = vmatprep.subr.mxu0 0.0
      %1373 = vmatpush1.xpose.msra.mxu0 0.0
      %1374 = vmatprep.subr.mxu0 0.0
      %1375 = vmatpush1.xpose.msra.mxu0 0.0
      %1376 = vmatprep.subr.mxu0 0.0
      %1377 = vmatpush1.xpose.msra.mxu0 0.0
      %1378 = vmatprep.subr.mxu0 0.0
      %1379 = vmatpush1.xpose.msra.mxu0 0.0
      %1380 = vmatprep.subr.mxu0 0.0
      %1381 = vmatpush1.xpose.msra.mxu0 0.0
      %1382 = vmatprep.subr.mxu0 0.0
      %1383 = vmatpush1.xpose.msra.mxu0 0.0
      %1384 = vmatprep.subr.mxu0 0.0
      %1385 = vmatpush1.xpose.msra.mxu0 0.0
      %1386 = vmatprep.subr.mxu0 0.0
      %1387 = vmatpush1.xpose.msra.mxu0 0.0
      %1388 = vmatprep.subr.mxu0 0.0
      %1389 = vmatpush1.xpose.msra.mxu0 0.0
      %1390 = vmatprep.subr.mxu0 0.0
      %1391 = vmatpush1.xpose.msra.mxu0 0.0
      %1392 = vmatprep.subr.mxu0 0.0
      %1393 = vmatpush1.xpose.msra.mxu0 0.0
      %1394 = vmatprep.subr.mxu0 0.0
      %1395 = vmatpush1.xpose.msra.mxu0 0.0
      %1396 = vmatprep.subr.mxu0 0.0
      %1397 = vmatpush1.xpose.msra.mxu0 0.0
      %1398 = vmatprep.subr.mxu0 0.0
      %1399 = vmatpush1.xpose.msra.mxu0 0.0
      %1400 = vmatprep.subr.mxu0 0.0
      %1401 = vmatpush1.xpose.msra.mxu0 0.0
      %1402 = vmatprep.subr.mxu0 0.0
      %1403 = vmatpush1.xpose.msra.mxu0 0.0
      %1404 = vmatprep.subr.mxu0 0.0
      %1405 = vmatpush1.xpose.msra.mxu0 0.0
      %1406 = vmatprep.subr.mxu0 0.0
      %1407 = vmatpush1.xpose.msra.mxu0 0.0
      %1408 = vmatprep.subr.mxu0 0.0
      %1409 = vmatpush1.xpose.msra.mxu0 0.0
      %1410 = vmatprep.subr.mxu0 0.0
      %1411 = vmatpush1.xpose.msra.mxu0 0.0
      %1412 = vmatprep.subr.mxu0 0.0
      %1413 = vmatpush1.xpose.msra.mxu0 0.0
      %1414 = vmatprep.subr.mxu0 0.0
      %1415 = vmatpush1.xpose.msra.mxu0 0.0
      %1416 = vmatprep.subr.mxu0 0.0
      %1417 = vmatpush1.xpose.msra.mxu0 0.0
      %1418 = vmatprep.subr.mxu0 0.0
      %1419 = vmatpush1.xpose.msra.mxu0 0.0
      %1420 = vmatprep.subr.mxu0 0.0
      %1421 = vmatpush1.xpose.msra.mxu0 0.0
      %1422 = vmatprep.subr.mxu0 0.0
      %1423 = vmatpush1.xpose.msra.mxu0 0.0
      %1424 = vmatprep.subr.mxu0 0.0
      %1425 = vmatpush1.xpose.msra.mxu0 0.0
      %1426 = vmatprep.mubr.f32.mxu0 0.0
      %1427 = vmatmul.mubr.f32.gmra.mrb[0].mxu0 %v1354
      %v1428 = vpop.f32.mrb[0].mxu0
      %v1429 = vadd.f32 %v519, %v1428
      %v1430 = vpop.f32.mrb[0].mxu0
      %1431 = vmatprep.mubr.f32.mxu0 0.0
      %1432 = vmatmul.mubr.f32.gmra.mrb[0].mxu0 %v1356
      %v1433 = vpop.f32.mrb[0].mxu0
      %v1434 = vadd.f32 %v520, %v1433
      %v1435 = vpop.f32.mrb[0].mxu0
      %1436 = vdwg.mxu0
      %v1437 = vsel %vm527, %v1429, -inf
      %1438 = vmax.xlane.f32.xlu0 %v1437
      %v1439 = vpop.xlane.xlu0 %1438
      %v1440 = vsel %vm527, %v1434, -inf
      %1441 = vmax.xlane.f32.xlu0 %v1440
      %v1442 = vpop.xlane.xlu0 %1441
      %v1443 = vsub.f32 %v1429, %v1439
      %v1444 = vsub.f32 %v1434, %v1442
      %v1445 = vmul.f32 %v1443, 1.442695
      %v1446 = vpow.pop %v1445
      %v1447 = vmul.f32 %v1444, 1.442695
      %v1448 = vpow.pop %v1447
      %v1449 = vsel %vm527, %v1446, 0.0
      %1450 = vadd.xlane.f32.xlu0 %v1449
      %v1451 = vpop.xlane.xlu0 %1450
      %v1452 = vsel %vm527, %v1448, 0.0
      %1453 = vadd.xlane.f32.xlu0 %v1452
      %v1454 = vpop.xlane.xlu0 %1453
      %v1455 = vrcp.pop %v1451
      %v1456 = vrcp.pop %v1454
      %v1457 = vmul.f32 %v1446, %v1455
      %v1458 = vmul.f32 %v1448, %v1456
      %v1460 = vsel %vm527, %v1457, 0
      %v1463 = vsel %vm527, %v1458, 0
      %1465 = vmatprep.subr.mxu0 0.0
      %1466 = vmatpush1.msra.mxu0 %v506
      %1467 = vmatprep.subr.mxu0 0.0
      %1468 = vmatpush1.msra.mxu0 %v510
      %1469 = vmatprep.subr.mxu0 0.0
      %1470 = vmatpush1.msra.mxu0 0.0
      %1471 = vmatprep.subr.mxu0 0.0
      %1472 = vmatpush1.msra.mxu0 0.0
      %1473 = vmatprep.subr.mxu0 0.0
      %1474 = vmatpush1.msra.mxu0 0.0
      %1475 = vmatprep.subr.mxu0 0.0
      %1476 = vmatpush1.msra.mxu0 0.0
      %1477 = vmatprep.subr.mxu0 0.0
      %1478 = vmatpush1.msra.mxu0 0.0
      %1479 = vmatprep.subr.mxu0 0.0
      %1480 = vmatpush1.msra.mxu0 0.0
      %1481 = vmatprep.subr.mxu0 0.0
      %1482 = vmatpush1.msra.mxu0 0.0
      %1483 = vmatprep.subr.mxu0 0.0
      %1484 = vmatpush1.msra.mxu0 0.0
      %1485 = vmatprep.subr.mxu0 0.0
      %1486 = vmatpush1.msra.mxu0 0.0
      %1487 = vmatprep.subr.mxu0 0.0
      %1488 = vmatpush1.msra.mxu0 0.0
      %1489 = vmatprep.subr.mxu0 0.0
      %1490 = vmatpush1.msra.mxu0 0.0
      %1491 = vmatprep.subr.mxu0 0.0
      %1492 = vmatpush1.msra.mxu0 0.0
      %1493 = vmatprep.subr.mxu0 0.0
      %1494 = vmatpush1.msra.mxu0 0.0
      %1495 = vmatprep.subr.mxu0 0.0
      %1496 = vmatpush1.msra.mxu0 0.0
      %1497 = vmatprep.subr.mxu0 0.0
      %1498 = vmatpush1.msra.mxu0 0.0
      %1499 = vmatprep.subr.mxu0 0.0
      %1500 = vmatpush1.msra.mxu0 0.0
      %1501 = vmatprep.subr.mxu0 0.0
      %1502 = vmatpush1.msra.mxu0 0.0
      %1503 = vmatprep.subr.mxu0 0.0
      %1504 = vmatpush1.msra.mxu0 0.0
      %1505 = vmatprep.subr.mxu0 0.0
      %1506 = vmatpush1.msra.mxu0 0.0
      %1507 = vmatprep.subr.mxu0 0.0
      %1508 = vmatpush1.msra.mxu0 0.0
      %1509 = vmatprep.subr.mxu0 0.0
      %1510 = vmatpush1.msra.mxu0 0.0
      %1511 = vmatprep.subr.mxu0 0.0
      %1512 = vmatpush1.msra.mxu0 0.0
      %1513 = vmatprep.subr.mxu0 0.0
      %1514 = vmatpush1.msra.mxu0 0.0
      %1515 = vmatprep.subr.mxu0 0.0
      %1516 = vmatpush1.msra.mxu0 0.0
      %1517 = vmatprep.subr.mxu0 0.0
      %1518 = vmatpush1.msra.mxu0 0.0
      %1519 = vmatprep.subr.mxu0 0.0
      %1520 = vmatpush1.msra.mxu0 0.0
      %1521 = vmatprep.subr.mxu0 0.0
      %1522 = vmatpush1.msra.mxu0 0.0
      %1523 = vmatprep.subr.mxu0 0.0
      %1524 = vmatpush1.msra.mxu0 0.0
      %1525 = vmatprep.subr.mxu0 0.0
      %1526 = vmatpush1.msra.mxu0 0.0
      %1527 = vmatprep.subr.mxu0 0.0
      %1528 = vmatpush1.msra.mxu0 0.0
      %1529 = vmatprep.mubr.f32.mxu0 0.0
      %1530 = vmatmul.mubr.f32.gmra.mrb[0].mxu0 %v1460
      %v1531 = vpop.f32.mrb[0].mxu0
      %v1532 = vadd.f32 0.0, %v1531
      %v1533 = vpop.f32.mrb[0].mxu0
      %1534 = vmatprep.mubr.f32.mxu0 0.0
      %1535 = vmatmul.mubr.f32.gmra.mrb[0].mxu0 %v1463
      %v1536 = vpop.f32.mrb[0].mxu0
      %v1537 = vadd.f32 0.0, %v1536
      %v1538 = vpop.f32.mrb[0].mxu0
      %1539 = vdwg.mxu0
      %1540 = vrot.lane.b32.xlu0 %v504, 112
      %v1541 = vpop.permute.xlu0 %1540
      %1542 = vrot.lane.b32.xlu0 %v508, 112
      %v1543 = vpop.permute.xlu0 %1542
      %1544 = vrot.lane.b32.xlu0 %v504, 48
      %v1545 = vpop.permute.xlu0 %1544
      %1546 = vrot.lane.b32.xlu0 %v508, 48
      %v1547 = vpop.permute.xlu0 %1546
      %v1548 = vsel %vm527, %v1541, 0
      %v1550 = vsel %vm527, %v1543, 0
      %v1552 = vsel %vm527, %v1545, 0
      %v1554 = vsel %vm527, %v1547, 0
      %1556 = vmatprep.subr.mxu0 0.0
      %1557 = vmatpush1.xpose.msra.mxu0 %v1552
      %1558 = vmatprep.subr.mxu0 0.0
      %1559 = vmatpush1.xpose.msra.mxu0 %v1554
      %1560 = vmatprep.subr.mxu0 0.0
      %1561 = vmatpush1.xpose.msra.mxu0 0.0
      %1562 = vmatprep.subr.mxu0 0.0
      %1563 = vmatpush1.xpose.msra.mxu0 0.0
      %1564 = vmatprep.subr.mxu0 0.0
      %1565 = vmatpush1.xpose.msra.mxu0 0.0
      %1566 = vmatprep.subr.mxu0 0.0
      %1567 = vmatpush1.xpose.msra.mxu0 0.0
      %1568 = vmatprep.subr.mxu0 0.0
      %1569 = vmatpush1.xpose.msra.mxu0 0.0
      %1570 = vmatprep.subr.mxu0 0.0
      %1571 = vmatpush1.xpose.msra.mxu0 0.0
      %1572 = vmatprep.subr.mxu0 0.0
      %1573 = vmatpush1.xpose.msra.mxu0 0.0
      %1574 = vmatprep.subr.mxu0 0.0
      %1575 = vmatpush1.xpose.msra.mxu0 0.0
      %1576 = vmatprep.subr.mxu0 0.0
      %1577 = vmatpush1.xpose.msra.mxu0 0.0
      %1578 = vmatprep.subr.mxu0 0.0
      %1579 = vmatpush1.xpose.msra.mxu0 0.0
      %1580 = vmatprep.subr.mxu0 0.0
      %1581 = vmatpush1.xpose.msra.mxu0 0.0
      %1582 = vmatprep.subr.mxu0 0.0
      %1583 = vmatpush1.xpose.msra.mxu0 0.0
      %1584 = vmatprep.subr.mxu0 0.0
      %1585 = vmatpush1.xpose.msra.mxu0 0.0
      %1586 = vmatprep.subr.mxu0 0.0
      %1587 = vmatpush1.xpose.msra.mxu0 0.0
      %1588 = vmatprep.subr.mxu0 0.0
      %1589 = vmatpush1.xpose.msra.mxu0 0.0
      %1590 = vmatprep.subr.mxu0 0.0
      %1591 = vmatpush1.xpose.msra.mxu0 0.0
      %1592 = vmatprep.subr.mxu0 0.0
      %1593 = vmatpush1.xpose.msra.mxu0 0.0
      %1594 = vmatprep.subr.mxu0 0.0
      %1595 = vmatpush1.xpose.msra.mxu0 0.0
      %1596 = vmatprep.subr.mxu0 0.0
      %1597 = vmatpush1.xpose.msra.mxu0 0.0
      %1598 = vmatprep.subr.mxu0 0.0
      %1599 = vmatpush1.xpose.msra.mxu0 0.0
      %1600 = vmatprep.subr.mxu0 0.0
      %1601 = vmatpush1.xpose.msra.mxu0 0.0
      %1602 = vmatprep.subr.mxu0 0.0
      %1603 = vmatpush1.xpose.msra.mxu0 0.0
      %1604 = vmatprep.subr.mxu0 0.0
      %1605 = vmatpush1.xpose.msra.mxu0 0.0
      %1606 = vmatprep.subr.mxu0 0.0
      %1607 = vmatpush1.xpose.msra.mxu0 0.0
      %1608 = vmatprep.subr.mxu0 0.0
      %1609 = vmatpush1.xpose.msra.mxu0 0.0
      %1610 = vmatprep.subr.mxu0 0.0
      %1611 = vmatpush1.xpose.msra.mxu0 0.0
      %1612 = vmatprep.subr.mxu0 0.0
      %1613 = vmatpush1.xpose.msra.mxu0 0.0
      %1614 = vmatprep.subr.mxu0 0.0
      %1615 = vmatpush1.xpose.msra.mxu0 0.0
      %1616 = vmatprep.subr.mxu0 0.0
      %1617 = vmatpush1.xpose.msra.mxu0 0.0
      %1618 = vmatprep.subr.mxu0 0.0
      %1619 = vmatpush1.xpose.msra.mxu0 0.0
      %1620 = vmatprep.mubr.f32.mxu0 0.0
      %1621 = vmatmul.mubr.f32.gmra.mrb[0].mxu0 %v1548
      %v1622 = vpop.f32.mrb[0].mxu0
      %v1623 = vadd.f32 %v519, %v1622
      %v1624 = vpop.f32.mrb[0].mxu0
      %1625 = vmatprep.mubr.f32.mxu0 0.0
      %1626 = vmatmul.mubr.f32.gmra.mrb[0].mxu0 %v1550
      %v1627 = vpop.f32.mrb[0].mxu0
      %v1628 = vadd.f32 %v520, %v1627
      %v1629 = vpop.f32.mrb[0].mxu0
      %1630 = vdwg.mxu0
      %v1631 = vsel %vm527, %v1623, -inf
      %1632 = vmax.xlane.f32.xlu0 %v1631
      %v1633 = vpop.xlane.xlu0 %1632
      %v1634 = vsel %vm527, %v1628, -inf
      %1635 = vmax.xlane.f32.xlu0 %v1634
      %v1636 = vpop.xlane.xlu0 %1635
      %v1637 = vsub.f32 %v1623, %v1633
      %v1638 = vsub.f32 %v1628, %v1636
      %v1639 = vmul.f32 %v1637, 1.442695
      %v1640 = vpow.pop %v1639
      %v1641 = vmul.f32 %v1638, 1.442695
      %v1642 = vpow.pop %v1641
      %v1643 = vsel %vm527, %v1640, 0.0
      %1644 = vadd.xlane.f32.xlu0 %v1643
      %v1645 = vpop.xlane.xlu0 %1644
      %v1646 = vsel %vm527, %v1642, 0.0
      %1647 = vadd.xlane.f32.xlu0 %v1646
      %v1648 = vpop.xlane.xlu0 %1647
      %v1649 = vrcp.pop %v1645
      %v1650 = vrcp.pop %v1648
      %v1651 = vmul.f32 %v1640, %v1649
      %v1652 = vmul.f32 %v1642, %v1650
      %1655 = vrot.lane.b32.xlu0 %v506, 112
      %v1656 = vpop.permute.xlu0 %1655
      %1657 = vrot.lane.b32.xlu0 %v510, 112
      %v1658 = vpop.permute.xlu0 %1657
      %v1662 = vsel %vm527, %v1651, 0
      %v1665 = vsel %vm527, %v1652, 0
      %1667 = vmatprep.subr.mxu0 0.0
      %1668 = vmatpush1.msra.mxu0 %v1656
      %1669 = vmatprep.subr.mxu0 0.0
      %1670 = vmatpush1.msra.mxu0 %v1658
      %1671 = vmatprep.subr.mxu0 0.0
      %1672 = vmatpush1.msra.mxu0 0.0
      %1673 = vmatprep.subr.mxu0 0.0
      %1674 = vmatpush1.msra.mxu0 0.0
      %1675 = vmatprep.subr.mxu0 0.0
      %1676 = vmatpush1.msra.mxu0 0.0
      %1677 = vmatprep.subr.mxu0 0.0
      %1678 = vmatpush1.msra.mxu0 0.0
      %1679 = vmatprep.subr.mxu0 0.0
      %1680 = vmatpush1.msra.mxu0 0.0
      %1681 = vmatprep.subr.mxu0 0.0
      %1682 = vmatpush1.msra.mxu0 0.0
      %1683 = vmatprep.subr.mxu0 0.0
      %1684 = vmatpush1.msra.mxu0 0.0
      %1685 = vmatprep.subr.mxu0 0.0
      %1686 = vmatpush1.msra.mxu0 0.0
      %1687 = vmatprep.subr.mxu0 0.0
      %1688 = vmatpush1.msra.mxu0 0.0
      %1689 = vmatprep.subr.mxu0 0.0
      %1690 = vmatpush1.msra.mxu0 0.0
      %1691 = vmatprep.subr.mxu0 0.0
      %1692 = vmatpush1.msra.mxu0 0.0
      %1693 = vmatprep.subr.mxu0 0.0
      %1694 = vmatpush1.msra.mxu0 0.0
      %1695 = vmatprep.subr.mxu0 0.0
      %1696 = vmatpush1.msra.mxu0 0.0
      %1697 = vmatprep.subr.mxu0 0.0
      %1698 = vmatpush1.msra.mxu0 0.0
      %1699 = vmatprep.subr.mxu0 0.0
      %1700 = vmatpush1.msra.mxu0 0.0
      %1701 = vmatprep.subr.mxu0 0.0
      %1702 = vmatpush1.msra.mxu0 0.0
      %1703 = vmatprep.subr.mxu0 0.0
      %1704 = vmatpush1.msra.mxu0 0.0
      %1705 = vmatprep.subr.mxu0 0.0
      %1706 = vmatpush1.msra.mxu0 0.0
      %1707 = vmatprep.subr.mxu0 0.0
      %1708 = vmatpush1.msra.mxu0 0.0
      %1709 = vmatprep.subr.mxu0 0.0
      %1710 = vmatpush1.msra.mxu0 0.0
      %1711 = vmatprep.subr.mxu0 0.0
      %1712 = vmatpush1.msra.mxu0 0.0
      %1713 = vmatprep.subr.mxu0 0.0
      %1714 = vmatpush1.msra.mxu0 0.0
      %1715 = vmatprep.subr.mxu0 0.0
      %1716 = vmatpush1.msra.mxu0 0.0
      %1717 = vmatprep.subr.mxu0 0.0
      %1718 = vmatpush1.msra.mxu0 0.0
      %1719 = vmatprep.subr.mxu0 0.0
      %1720 = vmatpush1.msra.mxu0 0.0
      %1721 = vmatprep.subr.mxu0 0.0
      %1722 = vmatpush1.msra.mxu0 0.0
      %1723 = vmatprep.subr.mxu0 0.0
      %1724 = vmatpush1.msra.mxu0 0.0
      %1725 = vmatprep.subr.mxu0 0.0
      %1726 = vmatpush1.msra.mxu0 0.0
      %1727 = vmatprep.subr.mxu0 0.0
      %1728 = vmatpush1.msra.mxu0 0.0
      %1729 = vmatprep.subr.mxu0 0.0
      %1730 = vmatpush1.msra.mxu0 0.0
      %1731 = vmatprep.mubr.f32.mxu0 0.0
      %1732 = vmatmul.mubr.f32.gmra.mrb[0].mxu0 %v1662
      %v1733 = vpop.f32.mrb[0].mxu0
      %v1734 = vadd.f32 0.0, %v1733
      %v1735 = vpop.f32.mrb[0].mxu0
      %1736 = vmatprep.mubr.f32.mxu0 0.0
      %1737 = vmatmul.mubr.f32.gmra.mrb[0].mxu0 %v1665
      %v1738 = vpop.f32.mrb[0].mxu0
      %v1739 = vadd.f32 0.0, %v1738
      %v1740 = vpop.f32.mrb[0].mxu0
      %1741 = vdwg.mxu0
      %1742 = vrot.lane.b32.xlu0 %v504, 96
      %v1743 = vpop.permute.xlu0 %1742
      %1744 = vrot.lane.b32.xlu0 %v508, 96
      %v1745 = vpop.permute.xlu0 %1744
      %1746 = vrot.lane.b32.xlu0 %v504, 32
      %v1747 = vpop.permute.xlu0 %1746
      %1748 = vrot.lane.b32.xlu0 %v508, 32
      %v1749 = vpop.permute.xlu0 %1748
      %v1750 = vsel %vm527, %v1743, 0
      %v1752 = vsel %vm527, %v1745, 0
      %v1754 = vsel %vm527, %v1747, 0
      %v1756 = vsel %vm527, %v1749, 0
      %1758 = vmatprep.subr.mxu0 0.0
      %1759 = vmatpush1.xpose.msra.mxu0 %v1754
      %1760 = vmatprep.subr.mxu0 0.0
      %1761 = vmatpush1.xpose.msra.mxu0 %v1756
      %1762 = vmatprep.subr.mxu0 0.0
      %1763 = vmatpush1.xpose.msra.mxu0 0.0
      %1764 = vmatprep.subr.mxu0 0.0
      %1765 = vmatpush1.xpose.msra.mxu0 0.0
      %1766 = vmatprep.subr.mxu0 0.0
      %1767 = vmatpush1.xpose.msra.mxu0 0.0
      %1768 = vmatprep.subr.mxu0 0.0
      %1769 = vmatpush1.xpose.msra.mxu0 0.0
      %1770 = vmatprep.subr.mxu0 0.0
      %1771 = vmatpush1.xpose.msra.mxu0 0.0
      %1772 = vmatprep.subr.mxu0 0.0
      %1773 = vmatpush1.xpose.msra.mxu0 0.0
      %1774 = vmatprep.subr.mxu0 0.0
      %1775 = vmatpush1.xpose.msra.mxu0 0.0
      %1776 = vmatprep.subr.mxu0 0.0
      %1777 = vmatpush1.xpose.msra.mxu0 0.0
      %1778 = vmatprep.subr.mxu0 0.0
      %1779 = vmatpush1.xpose.msra.mxu0 0.0
      %1780 = vmatprep.subr.mxu0 0.0
      %1781 = vmatpush1.xpose.msra.mxu0 0.0
      %1782 = vmatprep.subr.mxu0 0.0
      %1783 = vmatpush1.xpose.msra.mxu0 0.0
      %1784 = vmatprep.subr.mxu0 0.0
      %1785 = vmatpush1.xpose.msra.mxu0 0.0
      %1786 = vmatprep.subr.mxu0 0.0
      %1787 = vmatpush1.xpose.msra.mxu0 0.0
      %1788 = vmatprep.subr.mxu0 0.0
      %1789 = vmatpush1.xpose.msra.mxu0 0.0
      %1790 = vmatprep.subr.mxu0 0.0
      %1791 = vmatpush1.xpose.msra.mxu0 0.0
      %1792 = vmatprep.subr.mxu0 0.0
      %1793 = vmatpush1.xpose.msra.mxu0 0.0
      %1794 = vmatprep.subr.mxu0 0.0
      %1795 = vmatpush1.xpose.msra.mxu0 0.0
      %1796 = vmatprep.subr.mxu0 0.0
      %1797 = vmatpush1.xpose.msra.mxu0 0.0
      %1798 = vmatprep.subr.mxu0 0.0
      %1799 = vmatpush1.xpose.msra.mxu0 0.0
      %1800 = vmatprep.subr.mxu0 0.0
      %1801 = vmatpush1.xpose.msra.mxu0 0.0
      %1802 = vmatprep.subr.mxu0 0.0
      %1803 = vmatpush1.xpose.msra.mxu0 0.0
      %1804 = vmatprep.subr.mxu0 0.0
      %1805 = vmatpush1.xpose.msra.mxu0 0.0
      %1806 = vmatprep.subr.mxu0 0.0
      %1807 = vmatpush1.xpose.msra.mxu0 0.0
      %1808 = vmatprep.subr.mxu0 0.0
      %1809 = vmatpush1.xpose.msra.mxu0 0.0
      %1810 = vmatprep.subr.mxu0 0.0
      %1811 = vmatpush1.xpose.msra.mxu0 0.0
      %1812 = vmatprep.subr.mxu0 0.0
      %1813 = vmatpush1.xpose.msra.mxu0 0.0
      %1814 = vmatprep.subr.mxu0 0.0
      %1815 = vmatpush1.xpose.msra.mxu0 0.0
      %1816 = vmatprep.subr.mxu0 0.0
      %1817 = vmatpush1.xpose.msra.mxu0 0.0
      %1818 = vmatprep.subr.mxu0 0.0
      %1819 = vmatpush1.xpose.msra.mxu0 0.0
      %1820 = vmatprep.subr.mxu0 0.0
      %1821 = vmatpush1.xpose.msra.mxu0 0.0
      %1822 = vmatprep.mubr.f32.mxu0 0.0
      %1823 = vmatmul.mubr.f32.gmra.mrb[0].mxu0 %v1750
      %v1824 = vpop.f32.mrb[0].mxu0
      %v1825 = vadd.f32 %v519, %v1824
      %v1826 = vpop.f32.mrb[0].mxu0
      %1827 = vmatprep.mubr.f32.mxu0 0.0
      %1828 = vmatmul.mubr.f32.gmra.mrb[0].mxu0 %v1752
      %v1829 = vpop.f32.mrb[0].mxu0
      %v1830 = vadd.f32 %v520, %v1829
      %v1831 = vpop.f32.mrb[0].mxu0
      %1832 = vdwg.mxu0
      %v1833 = vsel %vm527, %v1825, -inf
      %1834 = vmax.xlane.f32.xlu0 %v1833
      %v1835 = vpop.xlane.xlu0 %1834
      %v1836 = vsel %vm527, %v1830, -inf
      %1837 = vmax.xlane.f32.xlu0 %v1836
      %v1838 = vpop.xlane.xlu0 %1837
      %v1839 = vsub.f32 %v1825, %v1835
      %v1840 = vsub.f32 %v1830, %v1838
      %v1841 = vmul.f32 %v1839, 1.442695
      %v1842 = vpow.pop %v1841
      %v1843 = vmul.f32 %v1840, 1.442695
      %v1844 = vpow.pop %v1843
      %v1845 = vsel %vm527, %v1842, 0.0
      %1846 = vadd.xlane.f32.xlu0 %v1845
      %v1847 = vpop.xlane.xlu0 %1846
      %v1848 = vsel %vm527, %v1844, 0.0
      %1849 = vadd.xlane.f32.xlu0 %v1848
      %v1850 = vpop.xlane.xlu0 %1849
      %v1851 = vrcp.pop %v1847
      %v1852 = vrcp.pop %v1850
      %v1853 = vmul.f32 %v1842, %v1851
      %v1854 = vmul.f32 %v1844, %v1852
      %1855 = vrot.lane.b32.xlu0 %v506, 96
      %v1856 = vpop.permute.xlu0 %1855
      %1857 = vrot.lane.b32.xlu0 %v510, 96
      %v1858 = vpop.permute.xlu0 %1857
      %v1862 = vsel %vm527, %v1853, 0
      %v1865 = vsel %vm527, %v1854, 0
      %1867 = vmatprep.subr.mxu0 0.0
      %1868 = vmatpush1.msra.mxu0 %v1856
      %1869 = vmatprep.subr.mxu0 0.0
      %1870 = vmatpush1.msra.mxu0 %v1858
      %1871 = vmatprep.subr.mxu0 0.0
      %1872 = vmatpush1.msra.mxu0 0.0
      %1873 = vmatprep.subr.mxu0 0.0
      %1874 = vmatpush1.msra.mxu0 0.0
      %1875 = vmatprep.subr.mxu0 0.0
      %1876 = vmatpush1.msra.mxu0 0.0
      %1877 = vmatprep.subr.mxu0 0.0
      %1878 = vmatpush1.msra.mxu0 0.0
      %1879 = vmatprep.subr.mxu0 0.0
      %1880 = vmatpush1.msra.mxu0 0.0
      %1881 = vmatprep.subr.mxu0 0.0
      %1882 = vmatpush1.msra.mxu0 0.0
      %1883 = vmatprep.subr.mxu0 0.0
      %1884 = vmatpush1.msra.mxu0 0.0
      %1885 = vmatprep.subr.mxu0 0.0
      %1886 = vmatpush1.msra.mxu0 0.0
      %1887 = vmatprep.subr.mxu0 0.0
      %1888 = vmatpush1.msra.mxu0 0.0
      %1889 = vmatprep.subr.mxu0 0.0
      %1890 = vmatpush1.msra.mxu0 0.0
      %1891 = vmatprep.subr.mxu0 0.0
      %1892 = vmatpush1.msra.mxu0 0.0
      %1893 = vmatprep.subr.mxu0 0.0
      %1894 = vmatpush1.msra.mxu0 0.0
      %1895 = vmatprep.subr.mxu0 0.0
      %1896 = vmatpush1.msra.mxu0 0.0
      %1897 = vmatprep.subr.mxu0 0.0
      %1898 = vmatpush1.msra.mxu0 0.0
      %1899 = vmatprep.subr.mxu0 0.0
      %1900 = vmatpush1.msra.mxu0 0.0
      %1901 = vmatprep.subr.mxu0 0.0
      %1902 = vmatpush1.msra.mxu0 0.0
      %1903 = vmatprep.subr.mxu0 0.0
      %1904 = vmatpush1.msra.mxu0 0.0
      %1905 = vmatprep.subr.mxu0 0.0
      %1906 = vmatpush1.msra.mxu0 0.0
      %1907 = vmatprep.subr.mxu0 0.0
      %1908 = vmatpush1.msra.mxu0 0.0
      %1909 = vmatprep.subr.mxu0 0.0
      %1910 = vmatpush1.msra.mxu0 0.0
      %1911 = vmatprep.subr.mxu0 0.0
      %1912 = vmatpush1.msra.mxu0 0.0
      %1913 = vmatprep.subr.mxu0 0.0
      %1914 = vmatpush1.msra.mxu0 0.0
      %1915 = vmatprep.subr.mxu0 0.0
      %1916 = vmatpush1.msra.mxu0 0.0
      %1917 = vmatprep.subr.mxu0 0.0
      %1918 = vmatpush1.msra.mxu0 0.0
      %1919 = vmatprep.subr.mxu0 0.0
      %1920 = vmatpush1.msra.mxu0 0.0
      %1921 = vmatprep.subr.mxu0 0.0
      %1922 = vmatpush1.msra.mxu0 0.0
      %1923 = vmatprep.subr.mxu0 0.0
      %1924 = vmatpush1.msra.mxu0 0.0
      %1925 = vmatprep.subr.mxu0 0.0
      %1926 = vmatpush1.msra.mxu0 0.0
      %1927 = vmatprep.subr.mxu0 0.0
      %1928 = vmatpush1.msra.mxu0 0.0
      %1929 = vmatprep.subr.mxu0 0.0
      %1930 = vmatpush1.msra.mxu0 0.0
      %1931 = vmatprep.mubr.f32.mxu0 0.0
      %1932 = vmatmul.mubr.f32.gmra.mrb[0].mxu0 %v1862
      %v1933 = vpop.f32.mrb[0].mxu0
      %v1934 = vadd.f32 0.0, %v1933
      %v1935 = vpop.f32.mrb[0].mxu0
      %1936 = vmatprep.mubr.f32.mxu0 0.0
      %1937 = vmatmul.mubr.f32.gmra.mrb[0].mxu0 %v1865
      %v1938 = vpop.f32.mrb[0].mxu0
      %v1939 = vadd.f32 0.0, %v1938
      %v1940 = vpop.f32.mrb[0].mxu0
      %1941 = vdwg.mxu0
      %1942 = vrot.lane.b32.xlu0 %v504, 80
      %v1943 = vpop.permute.xlu0 %1942
      %1944 = vrot.lane.b32.xlu0 %v508, 80
      %v1945 = vpop.permute.xlu0 %1944
      %1946 = vrot.lane.b32.xlu0 %v504, 16
      %v1947 = vpop.permute.xlu0 %1946
      %1948 = vrot.lane.b32.xlu0 %v508, 16
      %v1949 = vpop.permute.xlu0 %1948
      %v1950 = vsel %vm527, %v1943, 0
      %v1952 = vsel %vm527, %v1945, 0
      %v1954 = vsel %vm527, %v1947, 0
      %v1956 = vsel %vm527, %v1949, 0
      %1958 = vmatprep.subr.mxu0 0.0
      %1959 = vmatpush1.xpose.msra.mxu0 %v1954
      %1960 = vmatprep.subr.mxu0 0.0
      %1961 = vmatpush1.xpose.msra.mxu0 %v1956
      %1962 = vmatprep.subr.mxu0 0.0
      %1963 = vmatpush1.xpose.msra.mxu0 0.0
      %1964 = vmatprep.subr.mxu0 0.0
      %1965 = vmatpush1.xpose.msra.mxu0 0.0
      %1966 = vmatprep.subr.mxu0 0.0
      %1967 = vmatpush1.xpose.msra.mxu0 0.0
      %1968 = vmatprep.subr.mxu0 0.0
      %1969 = vmatpush1.xpose.msra.mxu0 0.0
      %1970 = vmatprep.subr.mxu0 0.0
      %1971 = vmatpush1.xpose.msra.mxu0 0.0
      %1972 = vmatprep.subr.mxu0 0.0
      %1973 = vmatpush1.xpose.msra.mxu0 0.0
      %1974 = vmatprep.subr.mxu0 0.0
      %1975 = vmatpush1.xpose.msra.mxu0 0.0
      %1976 = vmatprep.subr.mxu0 0.0
      %1977 = vmatpush1.xpose.msra.mxu0 0.0
      %1978 = vmatprep.subr.mxu0 0.0
      %1979 = vmatpush1.xpose.msra.mxu0 0.0
      %1980 = vmatprep.subr.mxu0 0.0
      %1981 = vmatpush1.xpose.msra.mxu0 0.0
      %1982 = vmatprep.subr.mxu0 0.0
      %1983 = vmatpush1.xpose.msra.mxu0 0.0
      %1984 = vmatprep.subr.mxu0 0.0
      %1985 = vmatpush1.xpose.msra.mxu0 0.0
      %1986 = vmatprep.subr.mxu0 0.0
      %1987 = vmatpush1.xpose.msra.mxu0 0.0
      %1988 = vmatprep.subr.mxu0 0.0
      %1989 = vmatpush1.xpose.msra.mxu0 0.0
      %1990 = vmatprep.subr.mxu0 0.0
      %1991 = vmatpush1.xpose.msra.mxu0 0.0
      %1992 = vmatprep.subr.mxu0 0.0
      %1993 = vmatpush1.xpose.msra.mxu0 0.0
      %1994 = vmatprep.subr.mxu0 0.0
      %1995 = vmatpush1.xpose.msra.mxu0 0.0
      %1996 = vmatprep.subr.mxu0 0.0
      %1997 = vmatpush1.xpose.msra.mxu0 0.0
      %1998 = vmatprep.subr.mxu0 0.0
      %1999 = vmatpush1.xpose.msra.mxu0 0.0
      %2000 = vmatprep.subr.mxu0 0.0
      %2001 = vmatpush1.xpose.msra.mxu0 0.0
      %2002 = vmatprep.subr.mxu0 0.0
      %2003 = vmatpush1.xpose.msra.mxu0 0.0
      %2004 = vmatprep.subr.mxu0 0.0
      %2005 = vmatpush1.xpose.msra.mxu0 0.0
      %2006 = vmatprep.subr.mxu0 0.0
      %2007 = vmatpush1.xpose.msra.mxu0 0.0
      %2008 = vmatprep.subr.mxu0 0.0
      %2009 = vmatpush1.xpose.msra.mxu0 0.0
      %2010 = vmatprep.subr.mxu0 0.0
      %2011 = vmatpush1.xpose.msra.mxu0 0.0
      %2012 = vmatprep.subr.mxu0 0.0
      %2013 = vmatpush1.xpose.msra.mxu0 0.0
      %2014 = vmatprep.subr.mxu0 0.0
      %2015 = vmatpush1.xpose.msra.mxu0 0.0
      %2016 = vmatprep.subr.mxu0 0.0
      %2017 = vmatpush1.xpose.msra.mxu0 0.0
      %2018 = vmatprep.subr.mxu0 0.0
      %2019 = vmatpush1.xpose.msra.mxu0 0.0
      %2020 = vmatprep.subr.mxu0 0.0
      %2021 = vmatpush1.xpose.msra.mxu0 0.0
      %2022 = vmatprep.mubr.f32.mxu0 0.0
      %2023 = vmatmul.mubr.f32.gmra.mrb[0].mxu0 %v1950
      %v2024 = vpop.f32.mrb[0].mxu0
      %v2025 = vadd.f32 %v519, %v2024
      %v2026 = vpop.f32.mrb[0].mxu0
      %2027 = vmatprep.mubr.f32.mxu0 0.0
      %2028 = vmatmul.mubr.f32.gmra.mrb[0].mxu0 %v1952
      %v2029 = vpop.f32.mrb[0].mxu0
      %v2030 = vadd.f32 %v520, %v2029
      %v2031 = vpop.f32.mrb[0].mxu0
      %2032 = vdwg.mxu0
      %v2033 = vsel %vm527, %v2025, -inf
      %2034 = vmax.xlane.f32.xlu0 %v2033
      %v2035 = vpop.xlane.xlu0 %2034
      %v2036 = vsel %vm527, %v2030, -inf
      %2037 = vmax.xlane.f32.xlu0 %v2036
      %v2038 = vpop.xlane.xlu0 %2037
      %v2039 = vsub.f32 %v2025, %v2035
      %v2040 = vsub.f32 %v2030, %v2038
      %v2041 = vmul.f32 %v2039, 1.442695
      %v2042 = vpow.pop %v2041
      %v2043 = vmul.f32 %v2040, 1.442695
      %v2044 = vpow.pop %v2043
      %v2045 = vsel %vm527, %v2042, 0.0
      %2046 = vadd.xlane.f32.xlu0 %v2045
      %v2047 = vpop.xlane.xlu0 %2046
      %v2048 = vsel %vm527, %v2044, 0.0
      %2049 = vadd.xlane.f32.xlu0 %v2048
      %v2050 = vpop.xlane.xlu0 %2049
      %v2051 = vrcp.pop %v2047
      %v2052 = vrcp.pop %v2050
      %v2053 = vmul.f32 %v2042, %v2051
      %v2054 = vmul.f32 %v2044, %v2052
      %2055 = vrot.lane.b32.xlu0 %v506, 80
      %v2056 = vpop.permute.xlu0 %2055
      %2057 = vrot.lane.b32.xlu0 %v510, 80
      %v2058 = vpop.permute.xlu0 %2057
      %v2062 = vsel %vm527, %v2053, 0
      %v2065 = vsel %vm527, %v2054, 0
      %2067 = vmatprep.subr.mxu0 0.0
      %2068 = vmatpush1.msra.mxu0 %v2056
      %2069 = vmatprep.subr.mxu0 0.0
      %2070 = vmatpush1.msra.mxu0 %v2058
      %2071 = vmatprep.subr.mxu0 0.0
      %2072 = vmatpush1.msra.mxu0 0.0
      %2073 = vmatprep.subr.mxu0 0.0
      %2074 = vmatpush1.msra.mxu0 0.0
      %2075 = vmatprep.subr.mxu0 0.0
      %2076 = vmatpush1.msra.mxu0 0.0
      %2077 = vmatprep.subr.mxu0 0.0
      %2078 = vmatpush1.msra.mxu0 0.0
      %2079 = vmatprep.subr.mxu0 0.0
      %2080 = vmatpush1.msra.mxu0 0.0
      %2081 = vmatprep.subr.mxu0 0.0
      %2082 = vmatpush1.msra.mxu0 0.0
      %2083 = vmatprep.subr.mxu0 0.0
      %2084 = vmatpush1.msra.mxu0 0.0
      %2085 = vmatprep.subr.mxu0 0.0
      %2086 = vmatpush1.msra.mxu0 0.0
      %2087 = vmatprep.subr.mxu0 0.0
      %2088 = vmatpush1.msra.mxu0 0.0
      %2089 = vmatprep.subr.mxu0 0.0
      %2090 = vmatpush1.msra.mxu0 0.0
      %2091 = vmatprep.subr.mxu0 0.0
      %2092 = vmatpush1.msra.mxu0 0.0
      %2093 = vmatprep.subr.mxu0 0.0
      %2094 = vmatpush1.msra.mxu0 0.0
      %2095 = vmatprep.subr.mxu0 0.0
      %2096 = vmatpush1.msra.mxu0 0.0
      %2097 = vmatprep.subr.mxu0 0.0
      %2098 = vmatpush1.msra.mxu0 0.0
      %2099 = vmatprep.subr.mxu0 0.0
      %2100 = vmatpush1.msra.mxu0 0.0
      %2101 = vmatprep.subr.mxu0 0.0
      %2102 = vmatpush1.msra.mxu0 0.0
      %2103 = vmatprep.subr.mxu0 0.0
      %2104 = vmatpush1.msra.mxu0 0.0
      %2105 = vmatprep.subr.mxu0 0.0
      %2106 = vmatpush1.msra.mxu0 0.0
      %2107 = vmatprep.subr.mxu0 0.0
      %2108 = vmatpush1.msra.mxu0 0.0
      %2109 = vmatprep.subr.mxu0 0.0
      %2110 = vmatpush1.msra.mxu0 0.0
      %2111 = vmatprep.subr.mxu0 0.0
      %2112 = vmatpush1.msra.mxu0 0.0
      %2113 = vmatprep.subr.mxu0 0.0
      %2114 = vmatpush1.msra.mxu0 0.0
      %2115 = vmatprep.subr.mxu0 0.0
      %2116 = vmatpush1.msra.mxu0 0.0
      %2117 = vmatprep.subr.mxu0 0.0
      %2118 = vmatpush1.msra.mxu0 0.0
      %2119 = vmatprep.subr.mxu0 0.0
      %2120 = vmatpush1.msra.mxu0 0.0
      %2121 = vmatprep.subr.mxu0 0.0
      %2122 = vmatpush1.msra.mxu0 0.0
      %2123 = vmatprep.subr.mxu0 0.0
      %2124 = vmatpush1.msra.mxu0 0.0
      %2125 = vmatprep.subr.mxu0 0.0
      %2126 = vmatpush1.msra.mxu0 0.0
      %2127 = vmatprep.subr.mxu0 0.0
      %2128 = vmatpush1.msra.mxu0 0.0
      %2129 = vmatprep.subr.mxu0 0.0
      %2130 = vmatpush1.msra.mxu0 0.0
      %2131 = vmatprep.mubr.f32.mxu0 0.0
      %2132 = vmatmul.mubr.f32.gmra.mrb[0].mxu0 %v2062
      %v2133 = vpop.f32.mrb[0].mxu0
      %v2134 = vadd.f32 0.0, %v2133
      %v2135 = vpop.f32.mrb[0].mxu0
      %2136 = vmatprep.mubr.f32.mxu0 0.0
      %2137 = vmatmul.mubr.f32.gmra.mrb[0].mxu0 %v2065
      %v2138 = vpop.f32.mrb[0].mxu0
      %v2139 = vadd.f32 0.0, %v2138
      %v2140 = vpop.f32.mrb[0].mxu0
      %2141 = vdwg.mxu0
      %2144 = vrot.lane.b32.xlu0 %v1734, 16
      %v2145 = vpop.permute.xlu0 %2144
      %2146 = vrot.lane.b32.xlu0 %v1739, 16
      %v2147 = vpop.permute.xlu0 %2146
      %2152 = vrot.lane.b32.xlu0 %v1934, 32
      %v2153 = vpop.permute.xlu0 %2152
      %2154 = vrot.lane.b32.xlu0 %v1939, 32
      %v2155 = vpop.permute.xlu0 %2154
      %2160 = vrot.lane.b32.xlu0 %v2134, 48
      %v2161 = vpop.permute.xlu0 %2160
      %2162 = vrot.lane.b32.xlu0 %v2139, 48
      %v2163 = vpop.permute.xlu0 %2162
      %v2166 = vsel %vm527, %v1532, %v2145
      %v2167 = vsel %vm527, %v1537, %v2147
      %v2168 = vsel %vm1342, %v2166, %v2153
      %v2169 = vsel %vm1342, %v2167, %v2155
      %v2170 = vsel %vm1345, %v2168, %v2161
      %v2171 = vsel %vm1345, %v2169, %v2163
      %v2172 = vpack.c.bf16 %v1347, %v1346
      %v2173 = vpack.c.bf16 %v2171, %v2170
      %v2174 = vld [vmem:[%s5] sm:$0xf]
      %v2175 = vld [vmem:[%s5 + $0x4] sm:$0xf]
      %v2176 = vld [vmem:[%s5 + $0x8] sm:$0xf]
      %v2177 = vld [vmem:[%s5 + $0xc] sm:$0xf]
      %v2178 = vld [vmem:[%s5 + $0x10] sm:$0xf]
      %v2179 = vld [vmem:[%s5 + $0x14] sm:$0xf]
      %v2180 = vld [vmem:[%s5 + $0x18] sm:$0xf]
      %v2181 = vld [vmem:[%s5 + $0x1c] sm:$0xf]
      %v2190 = vunpack.c.l.b16 %v2174
      %v2191 = vunpack.c.l.b16 %v2175
      %v2192 = vunpack.c.l.b16 %v2176
      %v2193 = vunpack.c.l.b16 %v2177
      %v2194 = vunpack.c.l.b16 %v2178
      %v2195 = vunpack.c.l.b16 %v2179
      %v2196 = vunpack.c.l.b16 %v2180
      %v2197 = vunpack.c.l.b16 %v2181
      %v2198 = vpack.c.b16 %v2191, %v2190
      %v2199 = vpack.c.b16 %v2193, %v2192
      %v2200 = vpack.c.b16 %v2195, %v2194
      %v2201 = vpack.c.b16 %v2197, %v2196
      %v2207 = vsel %vm321, %v2172, 0
      %v2210 = vsel %vm321, %v2173, 0
      %2212 = vmatprep.subr.bf16.mxu0 0
      %2213 = vmatpush1.bf16.msra.mxu0 %v2198
      %2214 = vmatprep.subr.bf16.mxu0 0
      %2215 = vmatpush1.bf16.msra.mxu0 %v2199
      %2216 = vmatprep.subr.bf16.mxu0 0
      %2217 = vmatpush1.bf16.msra.mxu0 %v2200
      %2218 = vmatprep.subr.bf16.mxu0 0
      %2219 = vmatpush1.bf16.msra.mxu0 %v2201
      %2220 = vmatprep.subr.bf16.mxu0 0
      %2221 = vmatpush1.bf16.msra.mxu0 0
      %2222 = vmatprep.subr.bf16.mxu0 0
      %2223 = vmatpush1.bf16.msra.mxu0 0
      %2224 = vmatprep.subr.bf16.mxu0 0
      %2225 = vmatpush1.bf16.msra.mxu0 0
      %2226 = vmatprep.subr.bf16.mxu0 0
      %2227 = vmatpush1.bf16.msra.mxu0 0
      %2228 = vmatprep.subr.bf16.mxu0 0
      %2229 = vmatpush1.bf16.msra.mxu0 0
      %2230 = vmatprep.subr.bf16.mxu0 0
      %2231 = vmatpush1.bf16.msra.mxu0 0
      %2232 = vmatprep.subr.bf16.mxu0 0
      %2233 = vmatpush1.bf16.msra.mxu0 0
      %2234 = vmatprep.subr.bf16.mxu0 0
      %2235 = vmatpush1.bf16.msra.mxu0 0
      %2236 = vmatprep.subr.bf16.mxu0 0
      %2237 = vmatpush1.bf16.msra.mxu0 0
      %2238 = vmatprep.subr.bf16.mxu0 0
      %2239 = vmatpush1.bf16.msra.mxu0 0
      %2240 = vmatprep.subr.bf16.mxu0 0
      %2241 = vmatpush1.bf16.msra.mxu0 0
      %2242 = vmatprep.subr.bf16.mxu0 0
      %2243 = vmatpush1.bf16.msra.mxu0 0
      %2244 = vmatprep.mubr.bf16.mxu0 0
      %2245 = vmatmul.mubr.bf16.gmra.mrb[0].mxu0 %v2207
      %v2246 = vpop.f32.mrb[0].mxu0
      %v2247 = vadd.f32 0.0, %v2246
      %v2248 = vpop.f32.mrb[0].mxu0
      %v2249 = vpop.f32.mrb[0].mxu0
      %v2250 = vadd.f32 0.0, %v2249
      %v2251 = vpop.f32.mrb[0].mxu0
      %2252 = vmatprep.mubr.bf16.mxu0 0
      %2253 = vmatmul.mubr.bf16.gmra.mrb[0].mxu0 %v2210
      %v2254 = vpop.f32.mrb[0].mxu0
      %v2255 = vadd.f32 0.0, %v2254
      %v2256 = vpop.f32.mrb[0].mxu0
      %v2257 = vpop.f32.mrb[0].mxu0
      %v2258 = vadd.f32 0.0, %v2257
      %v2259 = vpop.f32.mrb[0].mxu0
      %2260 = vdwg.mxu0
      %v2261 = vadd.f32 %v311, %v2247
      %v2262 = vadd.f32 %v312, %v2250
      %v2263 = vadd.f32 %v313, %v2255
      %v2264 = vadd.f32 %v314, %v2258
      %v2265 = vlaneseq
      %v2266 = vshrl.u32 %v2265, 7
      %v2267 = vsub.s32 0, %v2266
      %v2268 = vrot.slane %v319, %v2267
      %v2269 = vadd.f32 %v2261, %v2268
      %v2270 = vadd.f32 %v2262, %v2268
      %v2271 = vadd.f32 %v2263, %v2268
      %v2272 = vadd.f32 %v2264, %v2268
      %v2273 = vsel %vm321, %v2269, 0.0
      %2274 = vadd.xlane.f32.xlu0 %v2273
      %v2275 = vpop.xlane.xlu0 %2274
      %v2276 = vsel %vm321, %v2270, 0.0
      %2277 = vadd.xlane.f32.xlu0 %v2276
      %v2278 = vpop.xlane.xlu0 %2277
      %v2279 = vsel %vm321, %v2271, 0.0
      %2280 = vadd.xlane.f32.xlu0 %v2279
      %v2281 = vpop.xlane.xlu0 %2280
      %v2282 = vsel %vm321, %v2272, 0.0
      %2283 = vadd.xlane.f32.xlu0 %v2282
      %v2284 = vpop.xlane.xlu0 %2283
      %v2285 = vmul.f32 %v2275, %v334
      %v2286 = vmul.f32 %v2278, %v334
      %v2287 = vmul.f32 %v2281, %v334
      %v2288 = vmul.f32 %v2284, %v334
      %v2289 = vsub.f32 %v2269, %v2285
      %v2290 = vsub.f32 %v2270, %v2286
      %v2291 = vsub.f32 %v2271, %v2287
      %v2292 = vsub.f32 %v2272, %v2288
      %v2293 = vmul.f32 %v2289, %v2289
      %v2294 = vmul.f32 %v2290, %v2290
      %v2295 = vmul.f32 %v2291, %v2291
      %v2296 = vmul.f32 %v2292, %v2292
      %v2297 = vsel %vm321, %v2293, 0.0
      %2298 = vadd.xlane.f32.xlu0 %v2297
      %v2299 = vpop.xlane.xlu0 %2298
      %v2300 = vsel %vm321, %v2294, 0.0
      %2301 = vadd.xlane.f32.xlu0 %v2300
      %v2302 = vpop.xlane.xlu0 %2301
      %v2303 = vsel %vm321, %v2295, 0.0
      %2304 = vadd.xlane.f32.xlu0 %v2303
      %v2305 = vpop.xlane.xlu0 %2304
      %v2306 = vsel %vm321, %v2296, 0.0
      %2307 = vadd.xlane.f32.xlu0 %v2306
      %v2308 = vpop.xlane.xlu0 %2307
      %v2309 = vmul.f32 %v2299, %v334
      %v2310 = vmul.f32 %v2302, %v334
      %v2311 = vmul.f32 %v2305, %v334
      %v2312 = vmul.f32 %v2308, %v334
      %v2313 = vadd.f32 %v2309, 1e-05
      %v2314 = vadd.f32 %v2310, 1e-05
      %v2315 = vadd.f32 %v2311, 1e-05
      %v2316 = vadd.f32 %v2312, 1e-05
      %v2317 = vrsqrt.pop %v2313
      %v2318 = vrsqrt.pop %v2314
      %v2319 = vrsqrt.pop %v2315
      %v2320 = vrsqrt.pop %v2316
      %v2321 = vmul.f32 %v2289, %v2317
      %v2322 = vmul.f32 %v2290, %v2318
      %v2323 = vmul.f32 %v2291, %v2319
      %v2324 = vmul.f32 %v2292, %v2320
      %v2325 = vlaneseq
      %v2326 = vshrl.u32 %v2325, 7
      %v2327 = vsub.s32 0, %v2326
      %v2328 = vrot.slane %v317, %v2327
      %v2329 = vmul.f32 %v2321, %v2328
      %v2330 = vmul.f32 %v2322, %v2328
      %v2331 = vmul.f32 %v2323, %v2328
      %v2332 = vmul.f32 %v2324, %v2328
      %v2333 = vlaneseq
      %v2334 = vshrl.u32 %v2333, 7
      %v2335 = vsub.s32 0, %v2334
      %v2336 = vrot.slane %v318, %v2335
      %v2337 = vadd.f32 %v2329, %v2336
      %v2338 = vadd.f32 %v2330, %v2336
      %v2339 = vadd.f32 %v2331, %v2336
      %v2340 = vadd.f32 %v2332, %v2336
      %v2341 = vpack.c.bf16 %v2338, %v2337
      %v2342 = vpack.c.bf16 %v2340, %v2339
      %v2343 = vld [vmem:[%s6] sm:$0xff]
      %v2344 = vld [vmem:[%s6 + $0x8] sm:$0xff]
      %v2345 = vld [vmem:[%s6 + $0x10] sm:$0xff]
      %v2346 = vld [vmem:[%s6 + $0x18] sm:$0xff]
      %v2347 = vld [vmem:[%s6 + $0x20] sm:$0xff]
      %v2348 = vld [vmem:[%s6 + $0x28] sm:$0xff]
      %v2349 = vld [vmem:[%s6 + $0x30] sm:$0xff]
      %v2350 = vld [vmem:[%s6 + $0x38] sm:$0xff]
      %v2351 = vld [vmem:[%s3] sm:$0x3]
      %v2353 = vlaneseq
      %v2354 = vshrl.u32 %v2353, 7
      %v2355 = vsub.s32 0, %v2354
      %v2356 = vrot.slane %v2351, %v2355
      %v2357 = vlaneseq
      %v2358 = vshrl.u32 %v2357, 7
      %v2359 = vsub.s32 1, %v2358
      %v2360 = vrot.slane %v2351, %v2359
      %v2371 = vunpack.c.l.b16 %v2343
      %v2372 = vunpack.c.h.b16 %v2343
      %v2373 = vunpack.c.l.b16 %v2344
      %v2374 = vunpack.c.h.b16 %v2344
      %v2375 = vunpack.c.l.b16 %v2345
      %v2376 = vunpack.c.h.b16 %v2345
      %v2377 = vunpack.c.l.b16 %v2346
      %v2378 = vunpack.c.h.b16 %v2346
      %v2379 = vunpack.c.l.b16 %v2347
      %v2380 = vunpack.c.h.b16 %v2347
      %v2381 = vunpack.c.l.b16 %v2348
      %v2382 = vunpack.c.h.b16 %v2348
      %v2383 = vunpack.c.l.b16 %v2349
      %v2384 = vunpack.c.h.b16 %v2349
      %v2385 = vunpack.c.l.b16 %v2350
      %v2386 = vunpack.c.h.b16 %v2350
      %v2387 = vpack.c.b16 %v2373, %v2371
      %v2388 = vpack.c.b16 %v2374, %v2372
      %v2389 = vpack.c.b16 %v2377, %v2375
      %v2390 = vpack.c.b16 %v2378, %v2376
      %v2391 = vpack.c.b16 %v2381, %v2379
      %v2392 = vpack.c.b16 %v2382, %v2380
      %v2393 = vpack.c.b16 %v2385, %v2383
      %v2394 = vpack.c.b16 %v2386, %v2384
      %v2404 = vsel %vm321, %v2341, 0
      %v2407 = vsel %vm321, %v2342, 0
      %2409 = vmatprep.subr.bf16.mxu0 %v2388
      %2410 = vmatpush1.bf16.msra.mxu0 %v2387
      %2411 = vmatprep.subr.bf16.mxu0 %v2390
      %2412 = vmatpush1.bf16.msra.mxu0 %v2389
      %2413 = vmatprep.subr.bf16.mxu0 %v2392
      %2414 = vmatpush1.bf16.msra.mxu0 %v2391
      %2415 = vmatprep.subr.bf16.mxu0 %v2394
      %2416 = vmatpush1.bf16.msra.mxu0 %v2393
      %2417 = vmatprep.subr.bf16.mxu0 0
      %2418 = vmatpush1.bf16.msra.mxu0 0
      %2419 = vmatprep.subr.bf16.mxu0 0
      %2420 = vmatpush1.bf16.msra.mxu0 0
      %2421 = vmatprep.subr.bf16.mxu0 0
      %2422 = vmatpush1.bf16.msra.mxu0 0
      %2423 = vmatprep.subr.bf16.mxu0 0
      %2424 = vmatpush1.bf16.msra.mxu0 0
      %2425 = vmatprep.subr.bf16.mxu0 0
      %2426 = vmatpush1.bf16.msra.mxu0 0
      %2427 = vmatprep.subr.bf16.mxu0 0
      %2428 = vmatpush1.bf16.msra.mxu0 0
      %2429 = vmatprep.subr.bf16.mxu0 0
      %2430 = vmatpush1.bf16.msra.mxu0 0
      %2431 = vmatprep.subr.bf16.mxu0 0
      %2432 = vmatpush1.bf16.msra.mxu0 0
      %2433 = vmatprep.subr.bf16.mxu0 0
      %2434 = vmatpush1.bf16.msra.mxu0 0
      %2435 = vmatprep.subr.bf16.mxu0 0
      %2436 = vmatpush1.bf16.msra.mxu0 0
      %2437 = vmatprep.subr.bf16.mxu0 0
      %2438 = vmatpush1.bf16.msra.mxu0 0
      %2439 = vmatprep.subr.bf16.mxu0 0
      %2440 = vmatpush1.bf16.msra.mxu0 0
      %2441 = vmatprep.mubr.bf16.mxu0 0
      %2442 = vmatmul.mubr.bf16.gmra.mrb[0].mxu0 %v2404
      %v2443 = vpop.f32.mrb[0].mxu0
      %v2444 = vadd.f32 %v2356, %v2443
      %v2445 = vpop.f32.mrb[0].mxu0
      %v2446 = vadd.f32 %v2360, %v2445
      %v2447 = vpop.f32.mrb[0].mxu0
      %v2448 = vadd.f32 %v2356, %v2447
      %v2449 = vpop.f32.mrb[0].mxu0
      %v2450 = vadd.f32 %v2360, %v2449
      %2451 = vmatprep.mubr.bf16.mxu0 0
      %2452 = vmatmul.mubr.bf16.gmra.mrb[0].mxu0 %v2407
      %v2453 = vpop.f32.mrb[0].mxu0
      %v2454 = vadd.f32 %v2356, %v2453
      %v2455 = vpop.f32.mrb[0].mxu0
      %v2456 = vadd.f32 %v2360, %v2455
      %v2457 = vpop.f32.mrb[0].mxu0
      %v2458 = vadd.f32 %v2356, %v2457
      %v2459 = vpop.f32.mrb[0].mxu0
      %v2460 = vadd.f32 %v2360, %v2459
      %2461 = vdwg.mxu0
      %v2462 = vmul.f32 %v2444, 1.702
      %v2463 = vmul.f32 %v2446, 1.702
      %v2464 = vmul.f32 %v2448, 1.702
      %v2465 = vmul.f32 %v2450, 1.702
      %v2466 = vmul.f32 %v2454, 1.702
      %v2467 = vmul.f32 %v2456, 1.702
      %v2468 = vmul.f32 %v2458, 1.702
      %v2469 = vmul.f32 %v2460, 1.702
      %v2470 = vxor.u32 %v2462, 2147483648
      %v2471 = vxor.u32 %v2463, 2147483648
      %v2472 = vxor.u32 %v2464, 2147483648
      %v2473 = vxor.u32 %v2465, 2147483648
      %v2474 = vxor.u32 %v2466, 2147483648
      %v2475 = vxor.u32 %v2467, 2147483648
      %v2476 = vxor.u32 %v2468, 2147483648
      %v2477 = vxor.u32 %v2469, 2147483648
      %v2478 = vmul.f32 %v2470, 1.442695
      %v2479 = vpow.pop %v2478
      %v2480 = vmul.f32 %v2471, 1.442695
      %v2481 = vpow.pop %v2480
      %v2482 = vmul.f32 %v2472, 1.442695
      %v2483 = vpow.pop %v2482
      %v2484 = vmul.f32 %v2473, 1.442695
      %v2485 = vpow.pop %v2484
      %v2486 = vmul.f32 %v2474, 1.442695
      %v2487 = vpow.pop %v2486
      %v2488 = vmul.f32 %v2475, 1.442695
      %v2489 = vpow.pop %v2488
      %v2490 = vmul.f32 %v2476, 1.442695
      %v2491 = vpow.pop %v2490
      %v2492 = vmul.f32 %v2477, 1.442695
      %v2493 = vpow.pop %v2492
      %v2494 = vadd.f32 %v2479, 1.0
      %v2495 = vadd.f32 %v2481, 1.0
      %v2496 = vadd.f32 %v2483, 1.0
      %v2497 = vadd.f32 %v2485, 1.0
      %v2498 = vadd.f32 %v2487, 1.0
      %v2499 = vadd.f32 %v2489, 1.0
      %v2500 = vadd.f32 %v2491, 1.0
      %v2501 = vadd.f32 %v2493, 1.0
      %v2502 = vrcp.pop %v2494
      %v2503 = vmul.f32 1.0, %v2502
      %v2504 = vrcp.pop %v2495
      %v2505 = vmul.f32 1.0, %v2504
      %v2506 = vrcp.pop %v2496
      %v2507 = vmul.f32 1.0, %v2506
      %v2508 = vrcp.pop %v2497
      %v2509 = vmul.f32 1.0, %v2508
      %v2510 = vrcp.pop %v2498
      %v2511 = vmul.f32 1.0, %v2510
      %v2512 = vrcp.pop %v2499
      %v2513 = vmul.f32 1.0, %v2512
      %v2514 = vrcp.pop %v2500
      %v2515 = vmul.f32 1.0, %v2514
      %v2516 = vrcp.pop %v2501
      %v2517 = vmul.f32 1.0, %v2516
      %v2518 = vmul.f32 %v2444, %v2503
      %v2519 = vmul.f32 %v2446, %v2505
      %v2520 = vmul.f32 %v2448, %v2507
      %v2521 = vmul.f32 %v2450, %v2509
      %v2522 = vmul.f32 %v2454, %v2511
      %v2523 = vmul.f32 %v2456, %v2513
      %v2524 = vmul.f32 %v2458, %v2515
      %v2525 = vmul.f32 %v2460, %v2517
      %v2526 = vpack.c.bf16 %v2520, %v2518
      %v2527 = vpack.c.bf16 %v2521, %v2519
      %v2528 = vpack.c.bf16 %v2524, %v2522
      %v2529 = vpack.c.bf16 %v2525, %v2523
      %v2530 = vld [vmem:[%s7] sm:$0xf]
      %v2531 = vld [vmem:[%s7 + $0x4] sm:$0xf]
      %v2532 = vld [vmem:[%s7 + $0x8] sm:$0xf]
      %v2533 = vld [vmem:[%s7 + $0xc] sm:$0xf]
      %v2534 = vld [vmem:[%s7 + $0x10] sm:$0xf]
      %v2535 = vld [vmem:[%s7 + $0x14] sm:$0xf]
      %v2536 = vld [vmem:[%s7 + $0x18] sm:$0xf]
      %v2537 = vld [vmem:[%s7 + $0x1c] sm:$0xf]
      %v2538 = vld [vmem:[%s7 + $0x20] sm:$0xf]
      %v2539 = vld [vmem:[%s7 + $0x24] sm:$0xf]
      %v2540 = vld [vmem:[%s7 + $0x28] sm:$0xf]
      %v2541 = vld [vmem:[%s7 + $0x2c] sm:$0xf]
      %v2542 = vld [vmem:[%s7 + $0x30] sm:$0xf]
      %v2543 = vld [vmem:[%s7 + $0x34] sm:$0xf]
      %v2544 = vld [vmem:[%s7 + $0x38] sm:$0xf]
      %v2545 = vld [vmem:[%s7 + $0x3c] sm:$0xf]
      %v2546 = vld [vmem:[%s7 + $0x40] sm:$0xf]
      %v2547 = vld [vmem:[%s7 + $0x44] sm:$0xf]
      %v2548 = vld [vmem:[%s7 + $0x48] sm:$0xf]
      %v2549 = vld [vmem:[%s7 + $0x4c] sm:$0xf]
      %v2550 = vld [vmem:[%s7 + $0x50] sm:$0xf]
      %v2551 = vld [vmem:[%s7 + $0x54] sm:$0xf]
      %v2552 = vld [vmem:[%s7 + $0x58] sm:$0xf]
      %v2553 = vld [vmem:[%s7 + $0x5c] sm:$0xf]
      %v2554 = vld [vmem:[%s7 + $0x60] sm:$0xf]
      %v2555 = vld [vmem:[%s7 + $0x64] sm:$0xf]
      %v2556 = vld [vmem:[%s7 + $0x68] sm:$0xf]
      %v2557 = vld [vmem:[%s7 + $0x6c] sm:$0xf]
      %v2558 = vld [vmem:[%s7 + $0x70] sm:$0xf]
      %v2559 = vld [vmem:[%s7 + $0x74] sm:$0xf]
      %v2560 = vld [vmem:[%s7 + $0x78] sm:$0xf]
      %v2561 = vld [vmem:[%s7 + $0x7c] sm:$0xf]
      %v2562 = vlaneseq
      %v2563 = vshrl.u32 %v2562, 7
      %v2564 = vsub.s32 0, %v2563
      %v2565 = vrot.slane %v320, %v2564
      %v2598 = vunpack.c.l.b16 %v2530
      %v2599 = vunpack.c.l.b16 %v2531
      %v2600 = vunpack.c.l.b16 %v2532
      %v2601 = vunpack.c.l.b16 %v2533
      %v2602 = vunpack.c.l.b16 %v2534
      %v2603 = vunpack.c.l.b16 %v2535
      %v2604 = vunpack.c.l.b16 %v2536
      %v2605 = vunpack.c.l.b16 %v2537
      %v2606 = vunpack.c.l.b16 %v2538
      %v2607 = vunpack.c.l.b16 %v2539
      %v2608 = vunpack.c.l.b16 %v2540
      %v2609 = vunpack.c.l.b16 %v2541
      %v2610 = vunpack.c.l.b16 %v2542
      %v2611 = vunpack.c.l.b16 %v2543
      %v2612 = vunpack.c.l.b16 %v2544
      %v2613 = vunpack.c.l.b16 %v2545
      %v2614 = vunpack.c.l.b16 %v2546
      %v2615 = vunpack.c.l.b16 %v2547
      %v2616 = vunpack.c.l.b16 %v2548
      %v2617 = vunpack.c.l.b16 %v2549
      %v2618 = vunpack.c.l.b16 %v2550
      %v2619 = vunpack.c.l.b16 %v2551
      %v2620 = vunpack.c.l.b16 %v2552
      %v2621 = vunpack.c.l.b16 %v2553
      %v2622 = vunpack.c.l.b16 %v2554
      %v2623 = vunpack.c.l.b16 %v2555
      %v2624 = vunpack.c.l.b16 %v2556
      %v2625 = vunpack.c.l.b16 %v2557
      %v2626 = vunpack.c.l.b16 %v2558
      %v2627 = vunpack.c.l.b16 %v2559
      %v2628 = vunpack.c.l.b16 %v2560
      %v2629 = vunpack.c.l.b16 %v2561
      %v2630 = vpack.c.b16 %v2599, %v2598
      %v2631 = vpack.c.b16 %v2601, %v2600
      %v2632 = vpack.c.b16 %v2603, %v2602
      %v2633 = vpack.c.b16 %v2605, %v2604
      %v2634 = vpack.c.b16 %v2607, %v2606
      %v2635 = vpack.c.b16 %v2609, %v2608
      %v2636 = vpack.c.b16 %v2611, %v2610
      %v2637 = vpack.c.b16 %v2613, %v2612
      %v2638 = vpack.c.b16 %v2615, %v2614
      %v2639 = vpack.c.b16 %v2617, %v2616
      %v2640 = vpack.c.b16 %v2619, %v2618
      %v2641 = vpack.c.b16 %v2621, %v2620
      %v2642 = vpack.c.b16 %v2623, %v2622
      %v2643 = vpack.c.b16 %v2625, %v2624
      %v2644 = vpack.c.b16 %v2627, %v2626
      %v2645 = vpack.c.b16 %v2629, %v2628
      %2662 = vmatprep.subr.bf16.mxu0 0
      %2663 = vmatpush1.bf16.msra.mxu0 %v2630
      %2664 = vmatprep.subr.bf16.mxu0 0
      %2665 = vmatpush1.bf16.msra.mxu0 %v2631
      %2666 = vmatprep.subr.bf16.mxu0 0
      %2667 = vmatpush1.bf16.msra.mxu0 %v2632
      %2668 = vmatprep.subr.bf16.mxu0 0
      %2669 = vmatpush1.bf16.msra.mxu0 %v2633
      %2670 = vmatprep.subr.bf16.mxu0 0
      %2671 = vmatpush1.bf16.msra.mxu0 %v2634
      %2672 = vmatprep.subr.bf16.mxu0 0
      %2673 = vmatpush1.bf16.msra.mxu0 %v2635
      %2674 = vmatprep.subr.bf16.mxu0 0
      %2675 = vmatpush1.bf16.msra.mxu0 %v2636
      %2676 = vmatprep.subr.bf16.mxu0 0
      %2677 = vmatpush1.bf16.msra.mxu0 %v2637
      %2678 = vmatprep.subr.bf16.mxu0 0
      %2679 = vmatpush1.bf16.msra.mxu0 %v2638
      %2680 = vmatprep.subr.bf16.mxu0 0
      %2681 = vmatpush1.bf16.msra.mxu0 %v2639
      %2682 = vmatprep.subr.bf16.mxu0 0
      %2683 = vmatpush1.bf16.msra.mxu0 %v2640
      %2684 = vmatprep.subr.bf16.mxu0 0
      %2685 = vmatpush1.bf16.msra.mxu0 %v2641
      %2686 = vmatprep.subr.bf16.mxu0 0
      %2687 = vmatpush1.bf16.msra.mxu0 %v2642
      %2688 = vmatprep.subr.bf16.mxu0 0
      %2689 = vmatpush1.bf16.msra.mxu0 %v2643
      %2690 = vmatprep.subr.bf16.mxu0 0
      %2691 = vmatpush1.bf16.msra.mxu0 %v2644
      %2692 = vmatprep.subr.bf16.mxu0 0
      %2693 = vmatpush1.bf16.msra.mxu0 %v2645
      %2694 = vmatprep.mubr.bf16.mxu0 %v2527
      %2695 = vmatmul.mubr.bf16.gmra.mrb[0].mxu0 %v2526
      %v2696 = vpop.f32.mrb[0].mxu0
      %v2697 = vadd.f32 %v2565, %v2696
      %v2698 = vpop.f32.mrb[0].mxu0
      %v2699 = vpop.f32.mrb[0].mxu0
      %v2700 = vadd.f32 %v2565, %v2699
      %v2701 = vpop.f32.mrb[0].mxu0
      %2702 = vmatprep.mubr.bf16.mxu0 %v2529
      %2703 = vmatmul.mubr.bf16.gmra.mrb[0].mxu0 %v2528
      %v2704 = vpop.f32.mrb[0].mxu0
      %v2705 = vadd.f32 %v2565, %v2704
      %v2706 = vpop.f32.mrb[0].mxu0
      %v2707 = vpop.f32.mrb[0].mxu0
      %v2708 = vadd.f32 %v2565, %v2707
      %v2709 = vpop.f32.mrb[0].mxu0
      %2710 = vdwg.mxu0
      %v2711 = vadd.f32 %v2269, %v2697
      %v2712 = vadd.f32 %v2270, %v2700
      %v2713 = vadd.f32 %v2271, %v2705
      %v2714 = vadd.f32 %v2272, %v2708
      %v2715 = vpack.c.bf16 %v2712, %v2711
      %v2716 = vpack.c.bf16 %v2714, %v2713
      %v2719 = vunpack.c.l.b16 %v2715
      %v2720 = vunpack.c.h.b16 %v2715
      %v2721 = vunpack.c.l.b16 %v2716
      %v2722 = vunpack.c.h.b16 %v2716
      %v2723 = vpack.c.b16 %v2719, %v2719
      %v2724 = vpack.c.b16 %v2720, %v2720
      %v2725 = vpack.c.b16 %v2721, %v2721
      %v2726 = vpack.c.b16 %v2722, %v2722
      %vm2731 = vcmask 519168
      %2732 = vst.msk [vmem:[%s305] sm:$0xf] %vm2731, %v2723
      %2733 = vst.msk [vmem:[%s305 + $0x4] sm:$0xf] %vm2731, %v2724
      %2734 = vst.msk [vmem:[%s305 + $0x8] sm:$0xf] %vm2731, %v2725
      %2735 = vst.msk [vmem:[%s305 + $0xc] sm:$0xf] %vm2731, %v2726
      %p2736 = scmp.lt.s32.totalorder %s19, 1
      %s2737 = scalar_select %p2736, %s19, 1
      %s2738 = smul.addr %s2737, 4
      %s2739 = smul.addr %s2738, 4
      %s2740 = scalar_lea.vmem %s8, %s2739
      // Predicated region
      $region53: #{custom_clip_forward.5} parent=51 // pred_check
        %p2741 = pneg %p210
      $region54: #{custom_clip_forward.5} parent=51 // pred_check_branch
        %2743 = sbr.rel (%p2741) target = $region56
      $region55: #{custom_clip_forward.5} parent=51 // pred_region
        _
      $region56: #{custom_clip_forward.5} parent=51 // pred_fallthru
        _
    $region52: #{custom_clip_forward.5} parent=5 // pred_fallthru
      _
    %p2744 = scmp.le.s32.totalorder 2, %s14
    // Predicated region
    $region57: #{custom_clip_forward.5} parent=5 // pred_check
      %p2745 = pneg %p2744
    $region58: #{custom_clip_forward.5} parent=5 // pred_check_branch
      %2747 = sbr.rel (%p2745) target = $region60
    $region59: #{custom_clip_forward.5} parent=5 // pred_region
      %s2748 = ssub.s32 %s14, 2
      // Predicated region
      $region61: #{custom_clip_forward.5} parent=59 // pred_check
        %p2749 = pneg %p216
      $region62: #{custom_clip_forward.5} parent=59 // pred_check_branch
        %2751 = sbr.rel (%p2749) target = $region64
      $region63: #{custom_clip_forward.5} parent=59 // pred_region
        %p2752 = scmp.lt.s32.totalorder %s20, 1
        %s2753 = scalar_select %p2752, %s20, 1
        %s2754 = smul.addr %s2753, 4
        %s2755 = smul.addr %s2754, 4
        %s2756 = scalar_lea.vmem %s8, %s2755
      $region64: #{custom_clip_forward.5} parent=59 // pred_fallthru
        _
    $region60: #{custom_clip_forward.5} parent=5 // pred_fallthru
      _
  $region6: #{custom_clip_forward.5} parent=0 // loop_footer
    %s18 = sadd.s32 1, %s14
  $region7: #{custom_clip_forward.5} parent=0 // loop_footer_branch
    %13 = sbr.rel target = $region3
  $region8: #{custom_clip_forward.5} parent=0 // loop_exit
    _

// kernel: custom_clip_forward.9
$region0: #{custom_clip_forward.9}
  #allocation0 [shape = 'u32[]', space=smem, size = 0x4, offset = 0x4, fixed_abs, tag = 'smem constant byte address 0x4 - core index']
  #allocation1 [shape = 'u32[144,128]{1,0:T(1,128)}', space=vmem, size = 0x12000, scoped, tag = 'internal scratch']
  #allocation2 [shape = 'f32[1,1]{1,0:T(1,128)S(6)}', space=smem, size = 0x200, scoped, tag = 'scoped memory for custom_clip_forward.9']
  %s0 = inlined_call_operand.vmem [shape: bf16[2,64], index: 0, kind: input, shape index: {}]
  %s1 = inlined_call_operand.vmem [shape: f32[2,64], index: 1, kind: input, shape index: {}]
  %s2 = inlined_call_operand.vmem [shape: bf16[64,64], index: 2, kind: input, shape index: {}]
  %s3 = inlined_call_operand.vmem [shape: f32[4,64], index: 3, kind: input, shape index: {}]
  %s4 = inlined_call_operand.<no memory space> [shape: f32[1,1], index: 4, kind: input, shape index: {}]
  %s5 = inlined_call_operand.hbm [shape: f32[2,4], index: 5, kind: output, shape index: {}]
  %s6 = sld [smem:[#allocation0]]
  $region30: #{custom_clip_forward.9} parent=0
    _
  %s8 = ssub.s32 1, %s6
  %s9 = scalar_select 0, %s8, %s6
  %10 = sst [smem:[#allocation2]] %s4
  $region1: #{custom_clip_forward.9} parent=0
    #allocation3 [shape = 'u8[1024]{0}', space=vmem, size = 0x400, scoped, tag = 'output window, operand 0, single buffered']
    #allocation4 [shape = 's32[1]{0}', space=sflag, size = 0x4, scoped, tag = 'scoped memory for custom_clip_forward.9']
    %11 = vsyncpa [#allocation4], 0
    // Predicated region
    $region2: #{custom_clip_forward.9} parent=1 // pred_check
      _
    $region3: #{custom_clip_forward.9} parent=1 // pred_check_branch
      %13 = sbr.rel (0) target = $region5
    $region4: #{custom_clip_forward.9} parent=1 // pred_region
      _
    $region5: #{custom_clip_forward.9} parent=1 // pred_fallthru
      _
    // Predicated region
    $region6: #{custom_clip_forward.9} parent=1 // pred_check
      _
    $region7: #{custom_clip_forward.9} parent=1 // pred_check_branch
      %15 = sbr.rel (0) target = $region9
    $region8: #{custom_clip_forward.9} parent=1 // pred_region
      _
    $region9: #{custom_clip_forward.9} parent=1 // pred_fallthru
      _
    // Predicated region
    $region10: #{custom_clip_forward.9} parent=1 // pred_check
      _
    $region11: #{custom_clip_forward.9} parent=1 // pred_check_branch
      %17 = sbr.rel (0) target = $region13
    $region12: #{custom_clip_forward.9} parent=1 // pred_region
      _
    $region13: #{custom_clip_forward.9} parent=1 // pred_fallthru
      _
    // Predicated region
    $region14: #{custom_clip_forward.9} parent=1 // pred_check
      _
    $region15: #{custom_clip_forward.9} parent=1 // pred_check_branch
      %19 = sbr.rel (0) target = $region17
    $region16: #{custom_clip_forward.9} parent=1 // pred_region
      _
    $region17: #{custom_clip_forward.9} parent=1 // pred_fallthru
      _
    // Predicated region
    $region18: #{custom_clip_forward.9} parent=1 // pred_check
      _
    $region19: #{custom_clip_forward.9} parent=1 // pred_check_branch
      %21 = sbr.rel (0) target = $region21
    $region20: #{custom_clip_forward.9} parent=1 // pred_region
      _
    $region21: #{custom_clip_forward.9} parent=1 // pred_fallthru
      _
    %v23 = vld [vmem:[%s0] sm:$0x1]
    %v24 = vunpack.c.l.bf16 %v23
    %v25 = vld [vmem:[%s1] sm:$0x1]
    %v26 = vld [vmem:[%s1 + $0x1] sm:$0x1]
    %vm27 = vcmask 517120
    %v28 = vsel %vm27, %v24, 0.0
    %29 = vadd.xlane.f32.xlu0 %v28
    %v30 = vpop.xlane.xlu0 %29
    %v31 = vrcp.pop 64.0
    %v32 = vmul.f32 %v30, %v31
    %v33 = vsub.f32 %v24, %v32
    %v34 = vmul.f32 %v33, %v33
    %v35 = vsel %vm27, %v34, 0.0
    %36 = vadd.xlane.f32.xlu0 %v35
    %v37 = vpop.xlane.xlu0 %36
    %v38 = vmul.f32 %v37, %v31
    %v39 = vadd.f32 %v38, 1e-05
    %v40 = vrsqrt.pop %v39
    %v41 = vmul.f32 %v33, %v40
    %v42 = vlaneseq
    %v43 = vshrl.u32 %v42, 7
    %v44 = vsub.s32 0, %v43
    %v45 = vrot.slane %v25, %v44
    %v46 = vmul.f32 %v41, %v45
    %v47 = vlaneseq
    %v48 = vshrl.u32 %v47, 7
    %v49 = vsub.s32 0, %v48
    %v50 = vrot.slane %v26, %v49
    %v51 = vadd.f32 %v46, %v50
    %v52 = vpack.c.bf16 %v51, %v51
    %v53 = vld [vmem:[%s2] sm:$0xf]
    %v54 = vld [vmem:[%s2 + $0x4] sm:$0xf]
    %v55 = vld [vmem:[%s2 + $0x8] sm:$0xf]
    %v56 = vld [vmem:[%s2 + $0xc] sm:$0xf]
    %v57 = vld [vmem:[%s2 + $0x10] sm:$0xf]
    %v58 = vld [vmem:[%s2 + $0x14] sm:$0xf]
    %v59 = vld [vmem:[%s2 + $0x18] sm:$0xf]
    %v60 = vld [vmem:[%s2 + $0x1c] sm:$0xf]
    %v69 = vunpack.c.l.b16 %v53
    %v70 = vunpack.c.l.b16 %v54
    %v71 = vunpack.c.l.b16 %v55
    %v72 = vunpack.c.l.b16 %v56
    %v73 = vunpack.c.l.b16 %v57
    %v74 = vunpack.c.l.b16 %v58
    %v75 = vunpack.c.l.b16 %v59
    %v76 = vunpack.c.l.b16 %v60
    %v77 = vpack.c.b16 %v70, %v69
    %v78 = vpack.c.b16 %v72, %v71
    %v79 = vpack.c.b16 %v74, %v73
    %v80 = vpack.c.b16 %v76, %v75
    %vm85 = vcmask 523264
    %v87 = vsel %vm85, %v52, 0
    %89 = vmatprep.subr.bf16.mxu0 0
    %90 = vmatpush1.bf16.msra.mxu0 %v77
    %91 = vmatprep.subr.bf16.mxu0 0
    %92 = vmatpush1.bf16.msra.mxu0 %v78
    %93 = vmatprep.subr.bf16.mxu0 0
    %94 = vmatpush1.bf16.msra.mxu0 %v79
    %95 = vmatprep.subr.bf16.mxu0 0
    %96 = vmatpush1.bf16.msra.mxu0 %v80
    %97 = vmatprep.subr.bf16.mxu0 0
    %98 = vmatpush1.bf16.msra.mxu0 0
    %99 = vmatprep.subr.bf16.mxu0 0
    %100 = vmatpush1.bf16.msra.mxu0 0
    %101 = vmatprep.subr.bf16.mxu0 0
    %102 = vmatpush1.bf16.msra.mxu0 0
    %103 = vmatprep.subr.bf16.mxu0 0
    %104 = vmatpush1.bf16.msra.mxu0 0
    %105 = vmatprep.subr.bf16.mxu0 0
    %106 = vmatpush1.bf16.msra.mxu0 0
    %107 = vmatprep.subr.bf16.mxu0 0
    %108 = vmatpush1.bf16.msra.mxu0 0
    %109 = vmatprep.subr.bf16.mxu0 0
    %110 = vmatpush1.bf16.msra.mxu0 0
    %111 = vmatprep.subr.bf16.mxu0 0
    %112 = vmatpush1.bf16.msra.mxu0 0
    %113 = vmatprep.subr.bf16.mxu0 0
    %114 = vmatpush1.bf16.msra.mxu0 0
    %115 = vmatprep.subr.bf16.mxu0 0
    %116 = vmatpush1.bf16.msra.mxu0 0
    %117 = vmatprep.subr.bf16.mxu0 0
    %118 = vmatpush1.bf16.msra.mxu0 0
    %119 = vmatprep.subr.bf16.mxu0 0
    %120 = vmatpush1.bf16.msra.mxu0 0
    %121 = vmatprep.mubr.bf16.mxu0 0
    %122 = vmatmul.mubr.bf16.gmra.mrb[0].mxu0 %v87
    %v123 = vpop.f32.mrb[0].mxu0
    %v124 = vadd.f32 0.0, %v123
    %v125 = vpop.f32.mrb[0].mxu0
    %v126 = vpop.f32.mrb[0].mxu0
    %v127 = vpop.f32.mrb[0].mxu0
    %128 = vdwg.mxu0
    %v129 = vmul.f32 %v124, %v124
    %v130 = vsel %vm27, %v129, 0.0
    %131 = vadd.xlane.f32.xlu0 %v130
    %v132 = vpop.xlane.xlu0 %131
    %v133 = vadd.f32 %v132, 1e-12
    %v134 = vrsqrt.pop %v133
    %v135 = vmul.f32 %v124, %v134
    %s136 = sld [smem:[#allocation2]]
    %v137 = vld [vmem:[%s3] sm:$0xf]
    %v139 = vsel %vm85, %v135, 0
    %v142 = vsel %vm85, %v137, 0
    %144 = vmatprep.subr.mxu0 0.0
    %145 = vmatpush1.xpose.msra.mxu0 %v142
    %146 = vmatprep.subr.mxu0 0.0
    %147 = vmatpush1.xpose.msra.mxu0 0.0
    %148 = vmatprep.subr.mxu0 0.0
    %149 = vmatpush1.xpose.msra.mxu0 0.0
    %150 = vmatprep.subr.mxu0 0.0
    %151 = vmatpush1.xpose.msra.mxu0 0.0
    %152 = vmatprep.subr.mxu0 0.0
    %153 = vmatpush1.xpose.msra.mxu0 0.0
    %154 = vmatprep.subr.mxu0 0.0
    %155 = vmatpush1.xpose.msra.mxu0 0.0
    %156 = vmatprep.subr.mxu0 0.0
    %157 = vmatpush1.xpose.msra.mxu0 0.0
    %158 = vmatprep.subr.mxu0 0.0
    %159 = vmatpush1.xpose.msra.mxu0 0.0
    %160 = vmatprep.subr.mxu0 0.0
    %161 = vmatpush1.xpose.msra.mxu0 0.0
    %162 = vmatprep.subr.mxu0 0.0
    %163 = vmatpush1.xpose.msra.mxu0 0.0
    %164 = vmatprep.subr.mxu0 0.0
    %165 = vmatpush1.xpose.msra.mxu0 0.0
    %166 = vmatprep.subr.mxu0 0.0
    %167 = vmatpush1.xpose.msra.mxu0 0.0
    %168 = vmatprep.subr.mxu0 0.0
    %169 = vmatpush1.xpose.msra.mxu0 0.0
    %170 = vmatprep.subr.mxu0 0.0
    %171 = vmatpush1.xpose.msra.mxu0 0.0
    %172 = vmatprep.subr.mxu0 0.0
    %173 = vmatpush1.xpose.msra.mxu0 0.0
    %174 = vmatprep.subr.mxu0 0.0
    %175 = vmatpush1.xpose.msra.mxu0 0.0
    %176 = vmatprep.subr.mxu0 0.0
    %177 = vmatpush1.xpose.msra.mxu0 0.0
    %178 = vmatprep.subr.mxu0 0.0
    %179 = vmatpush1.xpose.msra.mxu0 0.0
    %180 = vmatprep.subr.mxu0 0.0
    %181 = vmatpush1.xpose.msra.mxu0 0.0
    %182 = vmatprep.subr.mxu0 0.0
    %183 = vmatpush1.xpose.msra.mxu0 0.0
    %184 = vmatprep.subr.mxu0 0.0
    %185 = vmatpush1.xpose.msra.mxu0 0.0
    %186 = vmatprep.subr.mxu0 0.0
    %187 = vmatpush1.xpose.msra.mxu0 0.0
    %188 = vmatprep.subr.mxu0 0.0
    %189 = vmatpush1.xpose.msra.mxu0 0.0
    %190 = vmatprep.subr.mxu0 0.0
    %191 = vmatpush1.xpose.msra.mxu0 0.0
    %192 = vmatprep.subr.mxu0 0.0
    %193 = vmatpush1.xpose.msra.mxu0 0.0
    %194 = vmatprep.subr.mxu0 0.0
    %195 = vmatpush1.xpose.msra.mxu0 0.0
    %196 = vmatprep.subr.mxu0 0.0
    %197 = vmatpush1.xpose.msra.mxu0 0.0
    %198 = vmatprep.subr.mxu0 0.0
    %199 = vmatpush1.xpose.msra.mxu0 0.0
    %200 = vmatprep.subr.mxu0 0.0
    %201 = vmatpush1.xpose.msra.mxu0 0.0
    %202 = vmatprep.subr.mxu0 0.0
    %203 = vmatpush1.xpose.msra.mxu0 0.0
    %204 = vmatprep.subr.mxu0 0.0
    %205 = vmatpush1.xpose.msra.mxu0 0.0
    %206 = vmatprep.subr.mxu0 0.0
    %207 = vmatpush1.xpose.msra.mxu0 0.0
    %208 = vmatprep.mubr.f32.mxu0 0.0
    %209 = vmatmul.mubr.f32.gmra.mrb[0].mxu0 %v139
    %v210 = vpop.f32.mrb[0].mxu0
    %v211 = vadd.f32 0.0, %v210
    %v212 = vpop.f32.mrb[0].mxu0
    %213 = vdwg.mxu0
    %v214 = vstv %s136
    %v215 = vmul.f32 %v214, %v211
    %vm216 = vcmask 25600
    %217 = vst.msk [vmem:[#allocation3] sm:$0x3] %vm216, %v215
    // Predicated region
    $region22: #{custom_clip_forward.9} parent=1 // pred_check
      _
    $region23: #{custom_clip_forward.9} parent=1 // pred_check_branch
      %219 = sbr.rel (0) target = $region25
    $region24: #{custom_clip_forward.9} parent=1 // pred_region
      %s221 = ssub.s32 32, 32
      %222 = vsyncadd [#allocation4], %s221
      %s224 = sshll.u32 [#allocation3], 4
      %s225 = int_to_ptr.vmem [resolvable:$true] %s224
      %227 = dma.vmem_to_hbm [thread:$0]  %s225, 32, %s5, [#allocation4]
    $region25: #{custom_clip_forward.9} parent=1 // pred_fallthru
      _
    // Predicated region
    $region26: #{custom_clip_forward.9} parent=1 // pred_check
      _
    $region27: #{custom_clip_forward.9} parent=1 // pred_check_branch
      %229 = sbr.rel (0) target = $region29
    $region28: #{custom_clip_forward.9} parent=1 // pred_region
      %230 = dma.done [#allocation4], 32
    $region29: #{custom_clip_forward.9} parent=1 // pred_fallthru
      _
    %231 = vsyncpa [#allocation4], 1

</llo_original>
